<compile_context>
chip_gen: v5e
topology: v5e:2x2
jax: 0.10.0
libtpu: 0.0.40
codegen_flags: <defaults>
</compile_context>

<pallas_src>
import functools

import numpy as np
import jax
import jax.numpy as jnp
from jax import lax
from jax.experimental import pallas as pl
from jax.experimental.pallas import tpu as pltpu

EPS = 1e-5  # BatchNorm2d default eps


# ------------------------- host-side constant builders -----------------------

def _round_up(x, m):
    return (x + m - 1) // m * m


def _bilinear_up1d(n):
    """PyTorch bilinear x2 upsample, align_corners=False, as a (2n, n) matrix."""
    out = 2 * n
    i = np.arange(out, dtype=np.float64)
    src = np.maximum((i + 0.5) * 0.5 - 0.5, 0.0)
    lo = np.clip(np.floor(src).astype(np.int64), 0, n - 1)
    hi = np.minimum(lo + 1, n - 1)
    frac = src - lo
    U = np.zeros((out, n), dtype=np.float64)
    U[np.arange(out), lo] += 1.0 - frac
    U[np.arange(out), hi] += frac
    return U


def _refl(k, n):
    if k < 0:
        return -k
    if k >= n:
        return 2 * n - 2 - k
    return k


def _w_operator(w):
    """(W, 2W+2) operator: right-multiplying a (rows, W) activation applies the
    bilinear x2 upsample along W with reflect-pad(1) folded in."""
    U = _bilinear_up1d(w)                        # (2w, w)
    ow = 2 * w
    wp = ow + 2
    rows = [_refl(j - 1, ow) for j in range(wp)]
    A = U[rows, :]                               # (wp, w)
    return jnp.asarray(A.T.astype(np.float32))   # (w, wp)


def _h_taps(h):
    """Per padded output row i in [0, 2H+2): (lo, hi, a, b) such that
    padded_row_i = a*row[lo] + b*row[hi] (bilinear x2 along H + reflect-pad)."""
    U = _bilinear_up1d(h)                        # (2h, h)
    oh = 2 * h
    taps = []
    for i in range(oh + 2):
        row = U[_refl(i - 1, oh)]
        nz = np.nonzero(row)[0]
        if len(nz) == 1:
            lo = hi = int(nz[0])
            a, b = float(row[lo]), 0.0
        else:
            lo, hi = int(nz[0]), int(nz[-1])
            a, b = float(row[lo]), float(row[hi])
        taps.append((lo, hi, a, b))
    return tuple(taps)


def _interior_mask(oh, ow, bt, seg, n_out):
    """(1, n_out) mask: 1 on interior (true output) pixels of every batch
    segment, 0 on reflect borders / aprons / inter-batch gaps / lane padding."""
    hp, wp = oh + 2, ow + 2
    m1 = np.zeros((hp, wp), dtype=np.float32)
    m1[1:oh + 1, 1:ow + 1] = 1.0
    m = np.zeros((n_out,), dtype=np.float32)
    for b in range(bt):
        m[b * seg:b * seg + hp * wp] = m1.reshape(-1)
    return jnp.asarray(m.reshape(1, n_out))


# ------------------------------ fused Pallas kernel ---------------------------

def up_fused_kernel(x_ref, awt_ref, mask_ref, w1_ref, b1_ref, w2_ref, s2_ref,
                    t2_ref, o_ref, y1_ref, buf_ref,
                    *, bt, cin, h, wp, npix, seg, apron, n_out, h_taps):
    """Whole Up.forward for `bt` batch elements, activations resident in VMEM.

    x_ref:    (bt*H*Cin, W)   rows ordered (batch-in-tile, h, channel)
    awt_ref:  (W, Wp)         W-direction upsample + reflect operator (f32)
    mask_ref: (1, n_out)      interior mask (== conv2 zero padding)
    w1_ref:   (9, Cin, Cin)   per-tap conv1 weights (bf16), b1_ref: (Cin, 1)
    w2_ref:   (9, Cpad, Cin)  per-tap conv2 weights (bf16), s2/t2: (Cpad, 1)
    o_ref:    (Cpad, n_out)   padded-layout output (interior sliced in wrapper)
    y1_ref:   (bt*H*Cin, Wp)  f32 scratch: W-upsampled rows
    buf_ref:  (Cin, buf_lanes) bf16 scratch: flat padded activation, batch on lanes
    """
    rows_per_b = h * cin

    # Aprons / inter-batch gaps / lane padding must be zero: they implement
    # conv2's zero padding and keep garbage out of the masked border math.
    # (Deliberately re-zeroed every grid step -- see review correctness note.)
    buf_ref[...] = jnp.zeros_like(buf_ref)

    # ---- bilinear x2 upsample + reflect-pad(1), separable ---------------------
    # W direction: one small (H*Cin, W) @ (W, Wp) matmul per batch element.
    for b in range(bt):
        r0 = b * rows_per_b
        y1_ref[r0:r0 + rows_per_b, :] = jnp.dot(
            x_ref[r0:r0 + rows_per_b, :], awt_ref[...],
            preferred_element_type=jnp.float32)

    # H direction (+ reflect): each padded output row is a 2-tap combination of
    # two W-upsampled source rows; scatter straight into the flat conv buffer
    # (channels on sublanes, flattened padded spatial stacked per batch on lanes).
    for b in range(bt):
        r0 = b * rows_per_b
        base = b * seg + apron
        for i, (lo, hi, a, bb) in enumerate(h_taps):
            row = a * y1_ref[r0 + lo * cin:r0 + (lo + 1) * cin, :]
            if hi != lo:
                row = row + bb * y1_ref[r0 + hi * cin:r0 + (hi + 1) * cin, :]
            buf_ref[:, base + i * wp:base + (i + 1) * wp] = row.astype(jnp.bfloat16)

    # ---- 3x3 conv as 9 accumulated bf16 matmuls off shifted buf slices --------
    def conv3x3(w_ref):
        acc = None
        for kh in range(3):
            for kw in range(3):
                k = kh * 3 + kw
                off = kh * wp + kw
                part = jnp.dot(w_ref[k], buf_ref[:, off:off + n_out],
                               preferred_element_type=jnp.float32)
                acc = part if acc is None else acc + part
        return acc

    # conv1: Cin->Cin, reflect padding (already materialized in buf), + bias.
    # The interior mask zeroes the garbage border / gap columns, which is exactly
    # the zero padding conv2 needs.
    h1 = ((conv3x3(w1_ref) + b1_ref[...]) * mask_ref[...]).astype(jnp.bfloat16)
    for b in range(bt):
        buf_ref[:, b * seg + apron:b * seg + apron + npix] = (
            h1[:, b * seg:b * seg + npix])

    # conv2: Cin->Cout (padded to mult of 8), zero padding, + folded BatchNorm.
    o_ref[...] = conv3x3(w2_ref) * s2_ref[...] + t2_ref[...]


# ---------------------------------- wrapper -----------------------------------

def up_forward(params, x, *, batch_tile=None):
    """Up.forward: x (B, Cin, H, W) NCHW -> (B, Cout, 2H, 2W) NCHW."""
    B, Cin, H, W = x.shape
    OH, OW = 2 * H, 2 * W
    Hp, Wp = OH + 2, OW + 2
    npix = Hp * Wp
    apron = Wp + 1
    seg = npix + 2 * apron            # per-batch lane segment in the flat buffer
    Cout = params["w2"].shape[0]
    Cpad = _round_up(Cout, 8)

    bt = B if batch_tile is None else batch_tile
    assert B % bt == 0, "batch must be divisible by batch_tile"
    G = B // bt

    n_out = _round_up(bt * seg, 128)                    # lane-dense output width
    buf_lanes = _round_up(n_out + 2 * apron, 128)

    # ---- constants / parameter repack (tiny; constant-folded under jit) -------
    awt = _w_operator(W)                                # (W, Wp) f32
    h_taps = _h_taps(H)
    mask = _interior_mask(OH, OW, bt, seg, n_out)       # (1, n_out) f32

    # per-tap weight blocks (9, out_ch, in_ch), bf16 for the MXU
    w1t = jnp.transpose(params["w1"], (2, 3, 0, 1)).reshape(9, Cin, Cin)
    w1t = w1t.astype(jnp.bfloat16)
    w2t = jnp.transpose(params["w2"], (2, 3, 0, 1)).reshape(9, Cout, Cin)
    w2t = jnp.pad(w2t, ((0, 0), (0, Cpad - Cout), (0, 0))).astype(jnp.bfloat16)
    b1 = params["b1"].reshape(Cin, 1).astype(jnp.float32)

    # fold BatchNorm (eval mode) into per-channel scale / shift
    s2 = params["gamma"] / jnp.sqrt(params["running_var"] + EPS)
    t2 = params["beta"] + (params["b2"] - params["running_mean"]) * s2
    s2 = jnp.pad(s2, (0, Cpad - Cout)).reshape(Cpad, 1).astype(jnp.float32)
    t2 = jnp.pad(t2, (0, Cpad - Cout)).reshape(Cpad, 1).astype(jnp.float32)

    # input rows ordered (batch-in-tile, h, channel) so the kernel's W-matmul and
    # H-step row slices are contiguous, sublane-aligned slices
    x_rows = x.astype(jnp.float32).transpose(0, 2, 1, 3).reshape(
        G, bt * H * Cin, W)

    kern = functools.partial(up_fused_kernel, bt=bt, cin=Cin, h=H, wp=Wp,
                             npix=npix, seg=seg, apron=apron, n_out=n_out,
                             h_taps=h_taps)

    flops = 2 * B * (H * Cin * W * Wp
                     + 9 * Cin * Cin * npix
                     + 9 * Cpad * Cin * npix)
    bytes_accessed = (x_rows.size * 4 + G * Cpad * n_out * 4
                      + (w1t.size + w2t.size) * 2
                      + (awt.size + mask.size) * 4)

    out = pl.pallas_call(
        kern,
        out_shape=jax.ShapeDtypeStruct((G, Cpad, n_out), jnp.float32),
        grid=(G,),
        in_specs=[
            pl.BlockSpec((None, bt * H * Cin, W), lambda g: (g, 0, 0)),
            pl.BlockSpec((W, Wp), lambda g: (0, 0)),
            pl.BlockSpec((1, n_out), lambda g: (0, 0)),
            pl.BlockSpec((9, Cin, Cin), lambda g: (0, 0, 0)),
            pl.BlockSpec((Cin, 1), lambda g: (0, 0)),
            pl.BlockSpec((9, Cpad, Cin), lambda g: (0, 0, 0)),
            pl.BlockSpec((Cpad, 1), lambda g: (0, 0)),
            pl.BlockSpec((Cpad, 1), lambda g: (0, 0)),
        ],
        out_specs=pl.BlockSpec((None, Cpad, n_out), lambda g: (g, 0, 0)),
        scratch_shapes=[
            pltpu.VMEM((bt * H * Cin, Wp), jnp.float32),
            pltpu.VMEM((Cin, buf_lanes), jnp.bfloat16),
        ],
        compiler_params=pltpu.CompilerParams(
            dimension_semantics=("parallel",),
            vmem_limit_bytes=32 * 1024 * 1024),
        cost_estimate=pl.CostEstimate(flops=flops, transcendentals=0,
                                      bytes_accessed=bytes_accessed),
    )(x_rows, awt, mask, w1t, b1, w2t, s2, t2)

    # Extract the true outputs: column b*seg + p of grid step g is padded-grid
    # pixel p of batch g*bt + b.
    # TODO(synk): when this feeds another fused kernel, consume the padded
    # layout directly instead of re-slicing through HBM here.
    out = out[:, :Cout, :bt * seg].reshape(G, Cout, bt, seg)[..., :npix]
    out = out.reshape(G, Cout, bt, Hp, Wp).transpose(0, 2, 1, 3, 4)
    out = out.reshape(B, Cout, Hp, Wp)
    return out[:, :, 1:OH + 1, 1:OW + 1]


# ------------------------------ parameter creation ----------------------------

def init_up_params(key, cin, cout):
    ks = jax.random.split(key, 8)
    return {
        # self.up[1]: Conv2d(cin, cin, 3, padding=1, padding_mode='reflect')
        "w1": 0.2 * jax.random.normal(ks[0], (cin, cin, 3, 3), jnp.float32),
        "b1": 0.1 * jax.random.normal(ks[1], (cin,), jnp.float32),
        # self.conv: Conv2d(cin, cout, 3, padding=1) + BatchNorm2d(cout) (eval)
        "w2": 0.2 * jax.random.normal(ks[2], (cout, cin, 3, 3), jnp.float32),
        "b2": 0.1 * jax.random.normal(ks[3], (cout,), jnp.float32),
        "gamma": 1.0 + 0.1 * jax.random.normal(ks[4], (cout,), jnp.float32),
        "beta": 0.1 * jax.random.normal(ks[5], (cout,), jnp.float32),
        "running_mean": 0.1 * jax.random.normal(ks[6], (cout,), jnp.float32),
        "running_var": 1.0 + 0.1 * jax.random.uniform(ks[7], (cout,), jnp.float32),
    }


# ------------------------------- pure-JAX reference ---------------------------

def up_reference(params, x):
    B, Cin, H, W = x.shape
    Cout = params["w2"].shape[0]
    Uh = jnp.asarray(_bilinear_up1d(H).astype(np.float32))
    Uw = jnp.asarray(_bilinear_up1d(W).astype(np.float32))
    up = jnp.einsum("ph,qw,bchw->bcpq", Uh, Uw, x,
                    precision=lax.Precision.HIGHEST)
    xr = jnp.pad(up, ((0, 0), (0, 0), (1, 1), (1, 1)), mode="reflect")
    h = lax.conv_general_dilated(xr, params["w1"], (1, 1), "VALID",
                                 dimension_numbers=("NCHW", "OIHW", "NCHW"),
                                 precision=lax.Precision.HIGHEST)
    h = h + params["b1"].reshape(1, Cin, 1, 1)
    h = lax.conv_general_dilated(h, params["w2"], (1, 1), ((1, 1), (1, 1)),
                                 dimension_numbers=("NCHW", "OIHW", "NCHW"),
                                 precision=lax.Precision.HIGHEST)
    h = h + params["b2"].reshape(1, Cout, 1, 1)
    s = params["gamma"] / jnp.sqrt(params["running_var"] + EPS)
    return ((h - params["running_mean"].reshape(1, Cout, 1, 1))
            * s.reshape(1, Cout, 1, 1)
            + params["beta"].reshape(1, Cout, 1, 1))


# ------------------------------------ main -------------------------------------

if __name__ == "__main__":
    B, Cin, Cout, H, W = 2, 8, 4, 16, 16

    root = jax.random.PRNGKey(0)
    k_param, k_input = jax.random.split(root)
    params = init_up_params(k_param, Cin, Cout)
    x = jax.random.normal(k_input, (B, Cin, H, W), jnp.float32)

    # batch_tile=None collapses the whole batch into one grid step (best for the
    # single-TensorCore v5e/v6e); on v7x pass batch_tile=B//2 so both cores run.
    fwd = jax.jit(functools.partial(up_forward, batch_tile=None))
    y = fwd(params, x)
    jax.block_until_ready(y)

    assert y.shape == (B, Cout, 2 * H, 2 * W), y.shape
    assert y.dtype == jnp.float32

    y_ref = up_reference(params, x)
    # bf16 MXU operands in the convolutions -> slightly looser tolerance than
    # the pure-f32 variant.
    np.testing.assert_allclose(np.asarray(y), np.asarray(y_ref),
                               atol=4e-2, rtol=4e-2)

    print("KERNEL_OK")
</pallas_src>

<mosaic_0001>
module attributes {stable_mosaic.version = 11 : i64} {
  func.func @up_fused_kernel(%arg0: i32, %arg1: memref<1x256x16xf32, #tpu.memory_space<vmem>>, %arg2: memref<16x34xf32, #tpu.memory_space<vmem>>, %arg3: memref<1x2560xf32, #tpu.memory_space<vmem>>, %arg4: memref<9x8x8xbf16, #tpu.memory_space<vmem>>, %arg5: memref<8x1xf32, #tpu.memory_space<vmem>>, %arg6: memref<9x8x8xbf16, #tpu.memory_space<vmem>>, %arg7: memref<8x1xf32, #tpu.memory_space<vmem>>, %arg8: memref<8x1xf32, #tpu.memory_space<vmem>>, %arg9: memref<1x8x2560xf32, #tpu.memory_space<vmem>>, %arg10: memref<256x34xf32, #tpu.memory_space<vmem>>, %arg11: memref<8x2688xbf16, #tpu.memory_space<vmem>>) attributes {dimension_semantics = [#tpu.dimension_semantics<parallel>], iteration_bounds = array<i64: 1>, scalar_prefetch = 0 : i64, scratch_operands = 2 : i64, tpu.core_type = #tpu.core_type<tc>, window_params = [{transform_indices = @transform_0, window_bounds = array<i64: 1, 256, 16>}, {pipeline_mode = #tpu.pipeline_mode<synchronous>, transform_indices = @transform_1, window_bounds = array<i64: 16, 34>}, {pipeline_mode = #tpu.pipeline_mode<synchronous>, transform_indices = @transform_2, window_bounds = array<i64: 1, 2560>}, {pipeline_mode = #tpu.pipeline_mode<synchronous>, transform_indices = @transform_3, window_bounds = array<i64: 9, 8, 8>}, {pipeline_mode = #tpu.pipeline_mode<synchronous>, transform_indices = @transform_4, window_bounds = array<i64: 8, 1>}, {pipeline_mode = #tpu.pipeline_mode<synchronous>, transform_indices = @transform_5, window_bounds = array<i64: 9, 8, 8>}, {pipeline_mode = #tpu.pipeline_mode<synchronous>, transform_indices = @transform_6, window_bounds = array<i64: 8, 1>}, {pipeline_mode = #tpu.pipeline_mode<synchronous>, transform_indices = @transform_7, window_bounds = array<i64: 8, 1>}, {transform_indices = @transform_8, window_bounds = array<i64: 1, 8, 2560>}]} {
    %cst = arith.constant 0.000000e+00 : bf16
    %0 = vector.broadcast %cst : bf16 to vector<8x2688xbf16>
    %c0 = arith.constant 0 : index
    %c0_0 = arith.constant 0 : index
    %1 = vector.load %arg11[%c0, %c0_0] : memref<8x2688xbf16, #tpu.memory_space<vmem>>, vector<8x2688xbf16>
    tpu.vector_store %arg11[%c0, %c0_0], %0 {strides = array<i32>} : memref<8x2688xbf16, #tpu.memory_space<vmem>>, vector<8x2688xbf16>,
    %c0_1 = arith.constant 0 : index
    %c0_2 = arith.constant 0 : index
    %c0_3 = arith.constant 0 : index
    %2 = vector.load %arg1[%c0_1, %c0_2, %c0_3] : memref<1x256x16xf32, #tpu.memory_space<vmem>>, vector<1x128x16xf32>
    %3 = vector.shape_cast %2 : vector<1x128x16xf32> to vector<128x16xf32>
    %c0_4 = arith.constant 0 : index
    %c0_5 = arith.constant 0 : index
    %4 = vector.load %arg2[%c0_4, %c0_5] : memref<16x34xf32, #tpu.memory_space<vmem>>, vector<16x34xf32>
    %cst_6 = arith.constant dense<0.000000e+00> : vector<128x34xf32>
    %5 = tpu.matmul %3, %4, %cst_6 {dimension_numbers = #tpu.dot_dimension_numbers<[1], [0], [0], [1], [0, 0, 1, 1], [], []>} : vector<128x16xf32>, vector<16x34xf32>, vector<128x34xf32> -> vector<128x34xf32>
    %c0_7 = arith.constant 0 : index
    %c0_8 = arith.constant 0 : index
    %6 = vector.load %arg10[%c0_7, %c0_8] : memref<256x34xf32, #tpu.memory_space<vmem>>, vector<128x34xf32>
    tpu.vector_store %arg10[%c0_7, %c0_8], %5 {strides = array<i32>} : memref<256x34xf32, #tpu.memory_space<vmem>>, vector<128x34xf32>,
    %c0_9 = arith.constant 0 : index
    %c128 = arith.constant 128 : index
    %c0_10 = arith.constant 0 : index
    %7 = vector.load %arg1[%c0_9, %c128, %c0_10] : memref<1x256x16xf32, #tpu.memory_space<vmem>>, vector<1x128x16xf32>
    %8 = vector.shape_cast %7 : vector<1x128x16xf32> to vector<128x16xf32>
    %c0_11 = arith.constant 0 : index
    %c0_12 = arith.constant 0 : index
    %9 = vector.load %arg2[%c0_11, %c0_12] : memref<16x34xf32, #tpu.memory_space<vmem>>, vector<16x34xf32>
    %cst_13 = arith.constant dense<0.000000e+00> : vector<128x34xf32>
    %10 = tpu.matmul %8, %9, %cst_13 {dimension_numbers = #tpu.dot_dimension_numbers<[1], [0], [0], [1], [0, 0, 1, 1], [], []>} : vector<128x16xf32>, vector<16x34xf32>, vector<128x34xf32> -> vector<128x34xf32>
    %c128_14 = arith.constant 128 : index
    %c0_15 = arith.constant 0 : index
    %11 = vector.load %arg10[%c128_14, %c0_15] : memref<256x34xf32, #tpu.memory_space<vmem>>, vector<128x34xf32>
    tpu.vector_store %arg10[%c128_14, %c0_15], %10 {strides = array<i32>} : memref<256x34xf32, #tpu.memory_space<vmem>>, vector<128x34xf32>,
    %c0_16 = arith.constant 0 : index
    %c0_17 = arith.constant 0 : index
    %12 = vector.load %arg10[%c0_16, %c0_17] : memref<256x34xf32, #tpu.memory_space<vmem>>, vector<8x34xf32>
    %cst_18 = arith.constant 7.500000e-01 : f32
    %13 = vector.broadcast %cst_18 : f32 to vector<8x34xf32>
    %14 = arith.mulf %13, %12 : vector<8x34xf32>
    %c8 = arith.constant 8 : index
    %c0_19 = arith.constant 0 : index
    %15 = vector.load %arg10[%c8, %c0_19] : memref<256x34xf32, #tpu.memory_space<vmem>>, vector<8x34xf32>
    %cst_20 = arith.constant 2.500000e-01 : f32
    %16 = vector.broadcast %cst_20 : f32 to vector<8x34xf32>
    %17 = arith.mulf %16, %15 : vector<8x34xf32>
    %18 = arith.addf %14, %17 : vector<8x34xf32>
    %19 = arith.truncf %18 : vector<8x34xf32> to vector<8x34xbf16>
    %c0_21 = arith.constant 0 : index
    %c35 = arith.constant 35 : index
    %20 = vector.load %arg11[%c0_21, %c35] : memref<8x2688xbf16, #tpu.memory_space<vmem>>, vector<8x34xbf16>
    tpu.vector_store %arg11[%c0_21, %c35], %19 {strides = array<i32>} : memref<8x2688xbf16, #tpu.memory_space<vmem>>, vector<8x34xbf16>,
    %c0_22 = arith.constant 0 : index
    %c0_23 = arith.constant 0 : index
    %21 = vector.load %arg10[%c0_22, %c0_23] : memref<256x34xf32, #tpu.memory_space<vmem>>, vector<8x34xf32>
    %cst_24 = arith.constant 1.000000e+00 : f32
    %22 = vector.broadcast %cst_24 : f32 to vector<8x34xf32>
    %23 = arith.mulf %22, %21 : vector<8x34xf32>
    %24 = arith.truncf %23 : vector<8x34xf32> to vector<8x34xbf16>
    %c0_25 = arith.constant 0 : index
    %c69 = arith.constant 69 : index
    %25 = vector.load %arg11[%c0_25, %c69] : memref<8x2688xbf16, #tpu.memory_space<vmem>>, vector<8x34xbf16>
    tpu.vector_store %arg11[%c0_25, %c69], %24 {strides = array<i32>} : memref<8x2688xbf16, #tpu.memory_space<vmem>>, vector<8x34xbf16>,
    %c0_26 = arith.constant 0 : index
    %c0_27 = arith.constant 0 : index
    %26 = vector.load %arg10[%c0_26, %c0_27] : memref<256x34xf32, #tpu.memory_space<vmem>>, vector<8x34xf32>
    %cst_28 = arith.constant 7.500000e-01 : f32
    %27 = vector.broadcast %cst_28 : f32 to vector<8x34xf32>
    %28 = arith.mulf %27, %26 : vector<8x34xf32>
    %c8_29 = arith.constant 8 : index
    %c0_30 = arith.constant 0 : index
    %29 = vector.load %arg10[%c8_29, %c0_30] : memref<256x34xf32, #tpu.memory_space<vmem>>, vector<8x34xf32>
    %cst_31 = arith.constant 2.500000e-01 : f32
    %30 = vector.broadcast %cst_31 : f32 to vector<8x34xf32>
    %31 = arith.mulf %30, %29 : vector<8x34xf32>
    %32 = arith.addf %28, %31 : vector<8x34xf32>
    %33 = arith.truncf %32 : vector<8x34xf32> to vector<8x34xbf16>
    %c0_32 = arith.constant 0 : index
    %c103 = arith.constant 103 : index
    %34 = vector.load %arg11[%c0_32, %c103] : memref<8x2688xbf16, #tpu.memory_space<vmem>>, vector<8x34xbf16>
    tpu.vector_store %arg11[%c0_32, %c103], %33 {strides = array<i32>} : memref<8x2688xbf16, #tpu.memory_space<vmem>>, vector<8x34xbf16>,
    %c0_33 = arith.constant 0 : index
    %c0_34 = arith.constant 0 : index
    %35 = vector.load %arg10[%c0_33, %c0_34] : memref<256x34xf32, #tpu.memory_space<vmem>>, vector<8x34xf32>
    %cst_35 = arith.constant 2.500000e-01 : f32
    %36 = vector.broadcast %cst_35 : f32 to vector<8x34xf32>
    %37 = arith.mulf %36, %35 : vector<8x34xf32>
    %c8_36 = arith.constant 8 : index
    %c0_37 = arith.constant 0 : index
    %38 = vector.load %arg10[%c8_36, %c0_37] : memref<256x34xf32, #tpu.memory_space<vmem>>, vector<8x34xf32>
    %cst_38 = arith.constant 7.500000e-01 : f32
    %39 = vector.broadcast %cst_38 : f32 to vector<8x34xf32>
    %40 = arith.mulf %39, %38 : vector<8x34xf32>
    %41 = arith.addf %37, %40 : vector<8x34xf32>
    %42 = arith.truncf %41 : vector<8x34xf32> to vector<8x34xbf16>
    %c0_39 = arith.constant 0 : index
    %c137 = arith.constant 137 : index
    %43 = vector.load %arg11[%c0_39, %c137] : memref<8x2688xbf16, #tpu.memory_space<vmem>>, vector<8x34xbf16>
    tpu.vector_store %arg11[%c0_39, %c137], %42 {strides = array<i32>} : memref<8x2688xbf16, #tpu.memory_space<vmem>>, vector<8x34xbf16>,
    %c8_40 = arith.constant 8 : index
    %c0_41 = arith.constant 0 : index
    %44 = vector.load %arg10[%c8_40, %c0_41] : memref<256x34xf32, #tpu.memory_space<vmem>>, vector<8x34xf32>
    %cst_42 = arith.constant 7.500000e-01 : f32
    %45 = vector.broadcast %cst_42 : f32 to vector<8x34xf32>
    %46 = arith.mulf %45, %44 : vector<8x34xf32>
    %c16 = arith.constant 16 : index
    %c0_43 = arith.constant 0 : index
    %47 = vector.load %arg10[%c16, %c0_43] : memref<256x34xf32, #tpu.memory_space<vmem>>, vector<8x34xf32>
    %cst_44 = arith.constant 2.500000e-01 : f32
    %48 = vector.broadcast %cst_44 : f32 to vector<8x34xf32>
    %49 = arith.mulf %48, %47 : vector<8x34xf32>
    %50 = arith.addf %46, %49 : vector<8x34xf32>
    %51 = arith.truncf %50 : vector<8x34xf32> to vector<8x34xbf16>
    %c0_45 = arith.constant 0 : index
    %c171 = arith.constant 171 : index
    %52 = vector.load %arg11[%c0_45, %c171] : memref<8x2688xbf16, #tpu.memory_space<vmem>>, vector<8x34xbf16>
    tpu.vector_store %arg11[%c0_45, %c171], %51 {strides = array<i32>} : memref<8x2688xbf16, #tpu.memory_space<vmem>>, vector<8x34xbf16>,
    %c8_46 = arith.constant 8 : index
    %c0_47 = arith.constant 0 : index
    %53 = vector.load %arg10[%c8_46, %c0_47] : memref<256x34xf32, #tpu.memory_space<vmem>>, vector<8x34xf32>
    %cst_48 = arith.constant 2.500000e-01 : f32
    %54 = vector.broadcast %cst_48 : f32 to vector<8x34xf32>
    %55 = arith.mulf %54, %53 : vector<8x34xf32>
    %c16_49 = arith.constant 16 : index
    %c0_50 = arith.constant 0 : index
    %56 = vector.load %arg10[%c16_49, %c0_50] : memref<256x34xf32, #tpu.memory_space<vmem>>, vector<8x34xf32>
    %cst_51 = arith.constant 7.500000e-01 : f32
    %57 = vector.broadcast %cst_51 : f32 to vector<8x34xf32>
    %58 = arith.mulf %57, %56 : vector<8x34xf32>
    %59 = arith.addf %55, %58 : vector<8x34xf32>
    %60 = arith.truncf %59 : vector<8x34xf32> to vector<8x34xbf16>
    %c0_52 = arith.constant 0 : index
    %c205 = arith.constant 205 : index
    %61 = vector.load %arg11[%c0_52, %c205] : memref<8x2688xbf16, #tpu.memory_space<vmem>>, vector<8x34xbf16>
    tpu.vector_store %arg11[%c0_52, %c205], %60 {strides = array<i32>} : memref<8x2688xbf16, #tpu.memory_space<vmem>>, vector<8x34xbf16>,
    %c16_53 = arith.constant 16 : index
    %c0_54 = arith.constant 0 : index
    %62 = vector.load %arg10[%c16_53, %c0_54] : memref<256x34xf32, #tpu.memory_space<vmem>>, vector<8x34xf32>
    %cst_55 = arith.constant 7.500000e-01 : f32
    %63 = vector.broadcast %cst_55 : f32 to vector<8x34xf32>
    %64 = arith.mulf %63, %62 : vector<8x34xf32>
    %c24 = arith.constant 24 : index
    %c0_56 = arith.constant 0 : index
    %65 = vector.load %arg10[%c24, %c0_56] : memref<256x34xf32, #tpu.memory_space<vmem>>, vector<8x34xf32>
    %cst_57 = arith.constant 2.500000e-01 : f32
    %66 = vector.broadcast %cst_57 : f32 to vector<8x34xf32>
    %67 = arith.mulf %66, %65 : vector<8x34xf32>
    %68 = arith.addf %64, %67 : vector<8x34xf32>
    %69 = arith.truncf %68 : vector<8x34xf32> to vector<8x34xbf16>
    %c0_58 = arith.constant 0 : index
    %c239 = arith.constant 239 : index
    %70 = vector.load %arg11[%c0_58, %c239] : memref<8x2688xbf16, #tpu.memory_space<vmem>>, vector<8x34xbf16>
    tpu.vector_store %arg11[%c0_58, %c239], %69 {strides = array<i32>} : memref<8x2688xbf16, #tpu.memory_space<vmem>>, vector<8x34xbf16>,
    %c16_59 = arith.constant 16 : index
    %c0_60 = arith.constant 0 : index
    %71 = vector.load %arg10[%c16_59, %c0_60] : memref<256x34xf32, #tpu.memory_space<vmem>>, vector<8x34xf32>
    %cst_61 = arith.constant 2.500000e-01 : f32
    %72 = vector.broadcast %cst_61 : f32 to vector<8x34xf32>
    %73 = arith.mulf %72, %71 : vector<8x34xf32>
    %c24_62 = arith.constant 24 : index
    %c0_63 = arith.constant 0 : index
    %74 = vector.load %arg10[%c24_62, %c0_63] : memref<256x34xf32, #tpu.memory_space<vmem>>, vector<8x34xf32>
    %cst_64 = arith.constant 7.500000e-01 : f32
    %75 = vector.broadcast %cst_64 : f32 to vector<8x34xf32>
    %76 = arith.mulf %75, %74 : vector<8x34xf32>
    %77 = arith.addf %73, %76 : vector<8x34xf32>
    %78 = arith.truncf %77 : vector<8x34xf32> to vector<8x34xbf16>
    %c0_65 = arith.constant 0 : index
    %c273 = arith.constant 273 : index
    %79 = vector.load %arg11[%c0_65, %c273] : memref<8x2688xbf16, #tpu.memory_space<vmem>>, vector<8x34xbf16>
    tpu.vector_store %arg11[%c0_65, %c273], %78 {strides = array<i32>} : memref<8x2688xbf16, #tpu.memory_space<vmem>>, vector<8x34xbf16>,
    %c24_66 = arith.constant 24 : index
    %c0_67 = arith.constant 0 : index
    %80 = vector.load %arg10[%c24_66, %c0_67] : memref<256x34xf32, #tpu.memory_space<vmem>>, vector<8x34xf32>
    %cst_68 = arith.constant 7.500000e-01 : f32
    %81 = vector.broadcast %cst_68 : f32 to vector<8x34xf32>
    %82 = arith.mulf %81, %80 : vector<8x34xf32>
    %c32 = arith.constant 32 : index
    %c0_69 = arith.constant 0 : index
    %83 = vector.load %arg10[%c32, %c0_69] : memref<256x34xf32, #tpu.memory_space<vmem>>, vector<8x34xf32>
    %cst_70 = arith.constant 2.500000e-01 : f32
    %84 = vector.broadcast %cst_70 : f32 to vector<8x34xf32>
    %85 = arith.mulf %84, %83 : vector<8x34xf32>
    %86 = arith.addf %82, %85 : vector<8x34xf32>
    %87 = arith.truncf %86 : vector<8x34xf32> to vector<8x34xbf16>
    %c0_71 = arith.constant 0 : index
    %c307 = arith.constant 307 : index
    %88 = vector.load %arg11[%c0_71, %c307] : memref<8x2688xbf16, #tpu.memory_space<vmem>>, vector<8x34xbf16>
    tpu.vector_store %arg11[%c0_71, %c307], %87 {strides = array<i32>} : memref<8x2688xbf16, #tpu.memory_space<vmem>>, vector<8x34xbf16>,
    %c24_72 = arith.constant 24 : index
    %c0_73 = arith.constant 0 : index
    %89 = vector.load %arg10[%c24_72, %c0_73] : memref<256x34xf32, #tpu.memory_space<vmem>>, vector<8x34xf32>
    %cst_74 = arith.constant 2.500000e-01 : f32
    %90 = vector.broadcast %cst_74 : f32 to vector<8x34xf32>
    %91 = arith.mulf %90, %89 : vector<8x34xf32>
    %c32_75 = arith.constant 32 : index
    %c0_76 = arith.constant 0 : index
    %92 = vector.load %arg10[%c32_75, %c0_76] : memref<256x34xf32, #tpu.memory_space<vmem>>, vector<8x34xf32>
    %cst_77 = arith.constant 7.500000e-01 : f32
    %93 = vector.broadcast %cst_77 : f32 to vector<8x34xf32>
    %94 = arith.mulf %93, %92 : vector<8x34xf32>
    %95 = arith.addf %91, %94 : vector<8x34xf32>
    %96 = arith.truncf %95 : vector<8x34xf32> to vector<8x34xbf16>
    %c0_78 = arith.constant 0 : index
    %c341 = arith.constant 341 : index
    %97 = vector.load %arg11[%c0_78, %c341] : memref<8x2688xbf16, #tpu.memory_space<vmem>>, vector<8x34xbf16>
    tpu.vector_store %arg11[%c0_78, %c341], %96 {strides = array<i32>} : memref<8x2688xbf16, #tpu.memory_space<vmem>>, vector<8x34xbf16>,
    %c32_79 = arith.constant 32 : index
    %c0_80 = arith.constant 0 : index
    %98 = vector.load %arg10[%c32_79, %c0_80] : memref<256x34xf32, #tpu.memory_space<vmem>>, vector<8x34xf32>
    %cst_81 = arith.constant 7.500000e-01 : f32
    %99 = vector.broadcast %cst_81 : f32 to vector<8x34xf32>
    %100 = arith.mulf %99, %98 : vector<8x34xf32>
    %c40 = arith.constant 40 : index
    %c0_82 = arith.constant 0 : index
    %101 = vector.load %arg10[%c40, %c0_82] : memref<256x34xf32, #tpu.memory_space<vmem>>, vector<8x34xf32>
    %cst_83 = arith.constant 2.500000e-01 : f32
    %102 = vector.broadcast %cst_83 : f32 to vector<8x34xf32>
    %103 = arith.mulf %102, %101 : vector<8x34xf32>
    %104 = arith.addf %100, %103 : vector<8x34xf32>
    %105 = arith.truncf %104 : vector<8x34xf32> to vector<8x34xbf16>
    %c0_84 = arith.constant 0 : index
    %c375 = arith.constant 375 : index
    %106 = vector.load %arg11[%c0_84, %c375] : memref<8x2688xbf16, #tpu.memory_space<vmem>>, vector<8x34xbf16>
    tpu.vector_store %arg11[%c0_84, %c375], %105 {strides = array<i32>} : memref<8x2688xbf16, #tpu.memory_space<vmem>>, vector<8x34xbf16>,
    %c32_85 = arith.constant 32 : index
    %c0_86 = arith.constant 0 : index
    %107 = vector.load %arg10[%c32_85, %c0_86] : memref<256x34xf32, #tpu.memory_space<vmem>>, vector<8x34xf32>
    %cst_87 = arith.constant 2.500000e-01 : f32
    %108 = vector.broadcast %cst_87 : f32 to vector<8x34xf32>
    %109 = arith.mulf %108, %107 : vector<8x34xf32>
    %c40_88 = arith.constant 40 : index
    %c0_89 = arith.constant 0 : index
    %110 = vector.load %arg10[%c40_88, %c0_89] : memref<256x34xf32, #tpu.memory_space<vmem>>, vector<8x34xf32>
    %cst_90 = arith.constant 7.500000e-01 : f32
    %111 = vector.broadcast %cst_90 : f32 to vector<8x34xf32>
    %112 = arith.mulf %111, %110 : vector<8x34xf32>
    %113 = arith.addf %109, %112 : vector<8x34xf32>
    %114 = arith.truncf %113 : vector<8x34xf32> to vector<8x34xbf16>
    %c0_91 = arith.constant 0 : index
    %c409 = arith.constant 409 : index
    %115 = vector.load %arg11[%c0_91, %c409] : memref<8x2688xbf16, #tpu.memory_space<vmem>>, vector<8x34xbf16>
    tpu.vector_store %arg11[%c0_91, %c409], %114 {strides = array<i32>} : memref<8x2688xbf16, #tpu.memory_space<vmem>>, vector<8x34xbf16>,
    %c40_92 = arith.constant 40 : index
    %c0_93 = arith.constant 0 : index
    %116 = vector.load %arg10[%c40_92, %c0_93] : memref<256x34xf32, #tpu.memory_space<vmem>>, vector<8x34xf32>
    %cst_94 = arith.constant 7.500000e-01 : f32
    %117 = vector.broadcast %cst_94 : f32 to vector<8x34xf32>
    %118 = arith.mulf %117, %116 : vector<8x34xf32>
    %c48 = arith.constant 48 : index
    %c0_95 = arith.constant 0 : index
    %119 = vector.load %arg10[%c48, %c0_95] : memref<256x34xf32, #tpu.memory_space<vmem>>, vector<8x34xf32>
    %cst_96 = arith.constant 2.500000e-01 : f32
    %120 = vector.broadcast %cst_96 : f32 to vector<8x34xf32>
    %121 = arith.mulf %120, %119 : vector<8x34xf32>
    %122 = arith.addf %118, %121 : vector<8x34xf32>
    %123 = arith.truncf %122 : vector<8x34xf32> to vector<8x34xbf16>
    %c0_97 = arith.constant 0 : index
    %c443 = arith.constant 443 : index
    %124 = vector.load %arg11[%c0_97, %c443] : memref<8x2688xbf16, #tpu.memory_space<vmem>>, vector<8x34xbf16>
    tpu.vector_store %arg11[%c0_97, %c443], %123 {strides = array<i32>} : memref<8x2688xbf16, #tpu.memory_space<vmem>>, vector<8x34xbf16>,
    %c40_98 = arith.constant 40 : index
    %c0_99 = arith.constant 0 : index
    %125 = vector.load %arg10[%c40_98, %c0_99] : memref<256x34xf32, #tpu.memory_space<vmem>>, vector<8x34xf32>
    %cst_100 = arith.constant 2.500000e-01 : f32
    %126 = vector.broadcast %cst_100 : f32 to vector<8x34xf32>
    %127 = arith.mulf %126, %125 : vector<8x34xf32>
    %c48_101 = arith.constant 48 : index
    %c0_102 = arith.constant 0 : index
    %128 = vector.load %arg10[%c48_101, %c0_102] : memref<256x34xf32, #tpu.memory_space<vmem>>, vector<8x34xf32>
    %cst_103 = arith.constant 7.500000e-01 : f32
    %129 = vector.broadcast %cst_103 : f32 to vector<8x34xf32>
    %130 = arith.mulf %129, %128 : vector<8x34xf32>
    %131 = arith.addf %127, %130 : vector<8x34xf32>
    %132 = arith.truncf %131 : vector<8x34xf32> to vector<8x34xbf16>
    %c0_104 = arith.constant 0 : index
    %c477 = arith.constant 477 : index
    %133 = vector.load %arg11[%c0_104, %c477] : memref<8x2688xbf16, #tpu.memory_space<vmem>>, vector<8x34xbf16>
    tpu.vector_store %arg11[%c0_104, %c477], %132 {strides = array<i32>} : memref<8x2688xbf16, #tpu.memory_space<vmem>>, vector<8x34xbf16>,
    %c48_105 = arith.constant 48 : index
    %c0_106 = arith.constant 0 : index
    %134 = vector.load %arg10[%c48_105, %c0_106] : memref<256x34xf32, #tpu.memory_space<vmem>>, vector<8x34xf32>
    %cst_107 = arith.constant 7.500000e-01 : f32
    %135 = vector.broadcast %cst_107 : f32 to vector<8x34xf32>
    %136 = arith.mulf %135, %134 : vector<8x34xf32>
    %c56 = arith.constant 56 : index
    %c0_108 = arith.constant 0 : index
    %137 = vector.load %arg10[%c56, %c0_108] : memref<256x34xf32, #tpu.memory_space<vmem>>, vector<8x34xf32>
    %cst_109 = arith.constant 2.500000e-01 : f32
    %138 = vector.broadcast %cst_109 : f32 to vector<8x34xf32>
    %139 = arith.mulf %138, %137 : vector<8x34xf32>
    %140 = arith.addf %136, %139 : vector<8x34xf32>
    %141 = arith.truncf %140 : vector<8x34xf32> to vector<8x34xbf16>
    %c0_110 = arith.constant 0 : index
    %c511 = arith.constant 511 : index
    %142 = vector.load %arg11[%c0_110, %c511] : memref<8x2688xbf16, #tpu.memory_space<vmem>>, vector<8x34xbf16>
    tpu.vector_store %arg11[%c0_110, %c511], %141 {strides = array<i32>} : memref<8x2688xbf16, #tpu.memory_space<vmem>>, vector<8x34xbf16>,
    %c48_111 = arith.constant 48 : index
    %c0_112 = arith.constant 0 : index
    %143 = vector.load %arg10[%c48_111, %c0_112] : memref<256x34xf32, #tpu.memory_space<vmem>>, vector<8x34xf32>
    %cst_113 = arith.constant 2.500000e-01 : f32
    %144 = vector.broadcast %cst_113 : f32 to vector<8x34xf32>
    %145 = arith.mulf %144, %143 : vector<8x34xf32>
    %c56_114 = arith.constant 56 : index
    %c0_115 = arith.constant 0 : index
    %146 = vector.load %arg10[%c56_114, %c0_115] : memref<256x34xf32, #tpu.memory_space<vmem>>, vector<8x34xf32>
    %cst_116 = arith.constant 7.500000e-01 : f32
    %147 = vector.broadcast %cst_116 : f32 to vector<8x34xf32>
    %148 = arith.mulf %147, %146 : vector<8x34xf32>
    %149 = arith.addf %145, %148 : vector<8x34xf32>
    %150 = arith.truncf %149 : vector<8x34xf32> to vector<8x34xbf16>
    %c0_117 = arith.constant 0 : index
    %c545 = arith.constant 545 : index
    %151 = vector.load %arg11[%c0_117, %c545] : memref<8x2688xbf16, #tpu.memory_space<vmem>>, vector<8x34xbf16>
    tpu.vector_store %arg11[%c0_117, %c545], %150 {strides = array<i32>} : memref<8x2688xbf16, #tpu.memory_space<vmem>>, vector<8x34xbf16>,
    %c56_118 = arith.constant 56 : index
    %c0_119 = arith.constant 0 : index
    %152 = vector.load %arg10[%c56_118, %c0_119] : memref<256x34xf32, #tpu.memory_space<vmem>>, vector<8x34xf32>
    %cst_120 = arith.constant 7.500000e-01 : f32
    %153 = vector.broadcast %cst_120 : f32 to vector<8x34xf32>
    %154 = arith.mulf %153, %152 : vector<8x34xf32>
    %c64 = arith.constant 64 : index
    %c0_121 = arith.constant 0 : index
    %155 = vector.load %arg10[%c64, %c0_121] : memref<256x34xf32, #tpu.memory_space<vmem>>, vector<8x34xf32>
    %cst_122 = arith.constant 2.500000e-01 : f32
    %156 = vector.broadcast %cst_122 : f32 to vector<8x34xf32>
    %157 = arith.mulf %156, %155 : vector<8x34xf32>
    %158 = arith.addf %154, %157 : vector<8x34xf32>
    %159 = arith.truncf %158 : vector<8x34xf32> to vector<8x34xbf16>
    %c0_123 = arith.constant 0 : index
    %c579 = arith.constant 579 : index
    %160 = vector.load %arg11[%c0_123, %c579] : memref<8x2688xbf16, #tpu.memory_space<vmem>>, vector<8x34xbf16>
    tpu.vector_store %arg11[%c0_123, %c579], %159 {strides = array<i32>} : memref<8x2688xbf16, #tpu.memory_space<vmem>>, vector<8x34xbf16>,
    %c56_124 = arith.constant 56 : index
    %c0_125 = arith.constant 0 : index
    %161 = vector.load %arg10[%c56_124, %c0_125] : memref<256x34xf32, #tpu.memory_space<vmem>>, vector<8x34xf32>
    %cst_126 = arith.constant 2.500000e-01 : f32
    %162 = vector.broadcast %cst_126 : f32 to vector<8x34xf32>
    %163 = arith.mulf %162, %161 : vector<8x34xf32>
    %c64_127 = arith.constant 64 : index
    %c0_128 = arith.constant 0 : index
    %164 = vector.load %arg10[%c64_127, %c0_128] : memref<256x34xf32, #tpu.memory_space<vmem>>, vector<8x34xf32>
    %cst_129 = arith.constant 7.500000e-01 : f32
    %165 = vector.broadcast %cst_129 : f32 to vector<8x34xf32>
    %166 = arith.mulf %165, %164 : vector<8x34xf32>
    %167 = arith.addf %163, %166 : vector<8x34xf32>
    %168 = arith.truncf %167 : vector<8x34xf32> to vector<8x34xbf16>
    %c0_130 = arith.constant 0 : index
    %c613 = arith.constant 613 : index
    %169 = vector.load %arg11[%c0_130, %c613] : memref<8x2688xbf16, #tpu.memory_space<vmem>>, vector<8x34xbf16>
    tpu.vector_store %arg11[%c0_130, %c613], %168 {strides = array<i32>} : memref<8x2688xbf16, #tpu.memory_space<vmem>>, vector<8x34xbf16>,
    %c64_131 = arith.constant 64 : index
    %c0_132 = arith.constant 0 : index
    %170 = vector.load %arg10[%c64_131, %c0_132] : memref<256x34xf32, #tpu.memory_space<vmem>>, vector<8x34xf32>
    %cst_133 = arith.constant 7.500000e-01 : f32
    %171 = vector.broadcast %cst_133 : f32 to vector<8x34xf32>
    %172 = arith.mulf %171, %170 : vector<8x34xf32>
    %c72 = arith.constant 72 : index
    %c0_134 = arith.constant 0 : index
    %173 = vector.load %arg10[%c72, %c0_134] : memref<256x34xf32, #tpu.memory_space<vmem>>, vector<8x34xf32>
    %cst_135 = arith.constant 2.500000e-01 : f32
    %174 = vector.broadcast %cst_135 : f32 to vector<8x34xf32>
    %175 = arith.mulf %174, %173 : vector<8x34xf32>
    %176 = arith.addf %172, %175 : vector<8x34xf32>
    %177 = arith.truncf %176 : vector<8x34xf32> to vector<8x34xbf16>
    %c0_136 = arith.constant 0 : index
    %c647 = arith.constant 647 : index
    %178 = vector.load %arg11[%c0_136, %c647] : memref<8x2688xbf16, #tpu.memory_space<vmem>>, vector<8x34xbf16>
    tpu.vector_store %arg11[%c0_136, %c647], %177 {strides = array<i32>} : memref<8x2688xbf16, #tpu.memory_space<vmem>>, vector<8x34xbf16>,
    %c64_137 = arith.constant 64 : index
    %c0_138 = arith.constant 0 : index
    %179 = vector.load %arg10[%c64_137, %c0_138] : memref<256x34xf32, #tpu.memory_space<vmem>>, vector<8x34xf32>
    %cst_139 = arith.constant 2.500000e-01 : f32
    %180 = vector.broadcast %cst_139 : f32 to vector<8x34xf32>
    %181 = arith.mulf %180, %179 : vector<8x34xf32>
    %c72_140 = arith.constant 72 : index
    %c0_141 = arith.constant 0 : index
    %182 = vector.load %arg10[%c72_140, %c0_141] : memref<256x34xf32, #tpu.memory_space<vmem>>, vector<8x34xf32>
    %cst_142 = arith.constant 7.500000e-01 : f32
    %183 = vector.broadcast %cst_142 : f32 to vector<8x34xf32>
    %184 = arith.mulf %183, %182 : vector<8x34xf32>
    %185 = arith.addf %181, %184 : vector<8x34xf32>
    %186 = arith.truncf %185 : vector<8x34xf32> to vector<8x34xbf16>
    %c0_143 = arith.constant 0 : index
    %c681 = arith.constant 681 : index
    %187 = vector.load %arg11[%c0_143, %c681] : memref<8x2688xbf16, #tpu.memory_space<vmem>>, vector<8x34xbf16>
    tpu.vector_store %arg11[%c0_143, %c681], %186 {strides = array<i32>} : memref<8x2688xbf16, #tpu.memory_space<vmem>>, vector<8x34xbf16>,
    %c72_144 = arith.constant 72 : index
    %c0_145 = arith.constant 0 : index
    %188 = vector.load %arg10[%c72_144, %c0_145] : memref<256x34xf32, #tpu.memory_space<vmem>>, vector<8x34xf32>
    %cst_146 = arith.constant 7.500000e-01 : f32
    %189 = vector.broadcast %cst_146 : f32 to vector<8x34xf32>
    %190 = arith.mulf %189, %188 : vector<8x34xf32>
    %c80 = arith.constant 80 : index
    %c0_147 = arith.constant 0 : index
    %191 = vector.load %arg10[%c80, %c0_147] : memref<256x34xf32, #tpu.memory_space<vmem>>, vector<8x34xf32>
    %cst_148 = arith.constant 2.500000e-01 : f32
    %192 = vector.broadcast %cst_148 : f32 to vector<8x34xf32>
    %193 = arith.mulf %192, %191 : vector<8x34xf32>
    %194 = arith.addf %190, %193 : vector<8x34xf32>
    %195 = arith.truncf %194 : vector<8x34xf32> to vector<8x34xbf16>
    %c0_149 = arith.constant 0 : index
    %c715 = arith.constant 715 : index
    %196 = vector.load %arg11[%c0_149, %c715] : memref<8x2688xbf16, #tpu.memory_space<vmem>>, vector<8x34xbf16>
    tpu.vector_store %arg11[%c0_149, %c715], %195 {strides = array<i32>} : memref<8x2688xbf16, #tpu.memory_space<vmem>>, vector<8x34xbf16>,
    %c72_150 = arith.constant 72 : index
    %c0_151 = arith.constant 0 : index
    %197 = vector.load %arg10[%c72_150, %c0_151] : memref<256x34xf32, #tpu.memory_space<vmem>>, vector<8x34xf32>
    %cst_152 = arith.constant 2.500000e-01 : f32
    %198 = vector.broadcast %cst_152 : f32 to vector<8x34xf32>
    %199 = arith.mulf %198, %197 : vector<8x34xf32>
    %c80_153 = arith.constant 80 : index
    %c0_154 = arith.constant 0 : index
    %200 = vector.load %arg10[%c80_153, %c0_154] : memref<256x34xf32, #tpu.memory_space<vmem>>, vector<8x34xf32>
    %cst_155 = arith.constant 7.500000e-01 : f32
    %201 = vector.broadcast %cst_155 : f32 to vector<8x34xf32>
    %202 = arith.mulf %201, %200 : vector<8x34xf32>
    %203 = arith.addf %199, %202 : vector<8x34xf32>
    %204 = arith.truncf %203 : vector<8x34xf32> to vector<8x34xbf16>
    %c0_156 = arith.constant 0 : index
    %c749 = arith.constant 749 : index
    %205 = vector.load %arg11[%c0_156, %c749] : memref<8x2688xbf16, #tpu.memory_space<vmem>>, vector<8x34xbf16>
    tpu.vector_store %arg11[%c0_156, %c749], %204 {strides = array<i32>} : memref<8x2688xbf16, #tpu.memory_space<vmem>>, vector<8x34xbf16>,
    %c80_157 = arith.constant 80 : index
    %c0_158 = arith.constant 0 : index
    %206 = vector.load %arg10[%c80_157, %c0_158] : memref<256x34xf32, #tpu.memory_space<vmem>>, vector<8x34xf32>
    %cst_159 = arith.constant 7.500000e-01 : f32
    %207 = vector.broadcast %cst_159 : f32 to vector<8x34xf32>
    %208 = arith.mulf %207, %206 : vector<8x34xf32>
    %c88 = arith.constant 88 : index
    %c0_160 = arith.constant 0 : index
    %209 = vector.load %arg10[%c88, %c0_160] : memref<256x34xf32, #tpu.memory_space<vmem>>, vector<8x34xf32>
    %cst_161 = arith.constant 2.500000e-01 : f32
    %210 = vector.broadcast %cst_161 : f32 to vector<8x34xf32>
    %211 = arith.mulf %210, %209 : vector<8x34xf32>
    %212 = arith.addf %208, %211 : vector<8x34xf32>
    %213 = arith.truncf %212 : vector<8x34xf32> to vector<8x34xbf16>
    %c0_162 = arith.constant 0 : index
    %c783 = arith.constant 783 : index
    %214 = vector.load %arg11[%c0_162, %c783] : memref<8x2688xbf16, #tpu.memory_space<vmem>>, vector<8x34xbf16>
    tpu.vector_store %arg11[%c0_162, %c783], %213 {strides = array<i32>} : memref<8x2688xbf16, #tpu.memory_space<vmem>>, vector<8x34xbf16>,
    %c80_163 = arith.constant 80 : index
    %c0_164 = arith.constant 0 : index
    %215 = vector.load %arg10[%c80_163, %c0_164] : memref<256x34xf32, #tpu.memory_space<vmem>>, vector<8x34xf32>
    %cst_165 = arith.constant 2.500000e-01 : f32
    %216 = vector.broadcast %cst_165 : f32 to vector<8x34xf32>
    %217 = arith.mulf %216, %215 : vector<8x34xf32>
    %c88_166 = arith.constant 88 : index
    %c0_167 = arith.constant 0 : index
    %218 = vector.load %arg10[%c88_166, %c0_167] : memref<256x34xf32, #tpu.memory_space<vmem>>, vector<8x34xf32>
    %cst_168 = arith.constant 7.500000e-01 : f32
    %219 = vector.broadcast %cst_168 : f32 to vector<8x34xf32>
    %220 = arith.mulf %219, %218 : vector<8x34xf32>
    %221 = arith.addf %217, %220 : vector<8x34xf32>
    %222 = arith.truncf %221 : vector<8x34xf32> to vector<8x34xbf16>
    %c0_169 = arith.constant 0 : index
    %c817 = arith.constant 817 : index
    %223 = vector.load %arg11[%c0_169, %c817] : memref<8x2688xbf16, #tpu.memory_space<vmem>>, vector<8x34xbf16>
    tpu.vector_store %arg11[%c0_169, %c817], %222 {strides = array<i32>} : memref<8x2688xbf16, #tpu.memory_space<vmem>>, vector<8x34xbf16>,
    %c88_170 = arith.constant 88 : index
    %c0_171 = arith.constant 0 : index
    %224 = vector.load %arg10[%c88_170, %c0_171] : memref<256x34xf32, #tpu.memory_space<vmem>>, vector<8x34xf32>
    %cst_172 = arith.constant 7.500000e-01 : f32
    %225 = vector.broadcast %cst_172 : f32 to vector<8x34xf32>
    %226 = arith.mulf %225, %224 : vector<8x34xf32>
    %c96 = arith.constant 96 : index
    %c0_173 = arith.constant 0 : index
    %227 = vector.load %arg10[%c96, %c0_173] : memref<256x34xf32, #tpu.memory_space<vmem>>, vector<8x34xf32>
    %cst_174 = arith.constant 2.500000e-01 : f32
    %228 = vector.broadcast %cst_174 : f32 to vector<8x34xf32>
    %229 = arith.mulf %228, %227 : vector<8x34xf32>
    %230 = arith.addf %226, %229 : vector<8x34xf32>
    %231 = arith.truncf %230 : vector<8x34xf32> to vector<8x34xbf16>
    %c0_175 = arith.constant 0 : index
    %c851 = arith.constant 851 : index
    %232 = vector.load %arg11[%c0_175, %c851] : memref<8x2688xbf16, #tpu.memory_space<vmem>>, vector<8x34xbf16>
    tpu.vector_store %arg11[%c0_175, %c851], %231 {strides = array<i32>} : memref<8x2688xbf16, #tpu.memory_space<vmem>>, vector<8x34xbf16>,
    %c88_176 = arith.constant 88 : index
    %c0_177 = arith.constant 0 : index
    %233 = vector.load %arg10[%c88_176, %c0_177] : memref<256x34xf32, #tpu.memory_space<vmem>>, vector<8x34xf32>
    %cst_178 = arith.constant 2.500000e-01 : f32
    %234 = vector.broadcast %cst_178 : f32 to vector<8x34xf32>
    %235 = arith.mulf %234, %233 : vector<8x34xf32>
    %c96_179 = arith.constant 96 : index
    %c0_180 = arith.constant 0 : index
    %236 = vector.load %arg10[%c96_179, %c0_180] : memref<256x34xf32, #tpu.memory_space<vmem>>, vector<8x34xf32>
    %cst_181 = arith.constant 7.500000e-01 : f32
    %237 = vector.broadcast %cst_181 : f32 to vector<8x34xf32>
    %238 = arith.mulf %237, %236 : vector<8x34xf32>
    %239 = arith.addf %235, %238 : vector<8x34xf32>
    %240 = arith.truncf %239 : vector<8x34xf32> to vector<8x34xbf16>
    %c0_182 = arith.constant 0 : index
    %c885 = arith.constant 885 : index
    %241 = vector.load %arg11[%c0_182, %c885] : memref<8x2688xbf16, #tpu.memory_space<vmem>>, vector<8x34xbf16>
    tpu.vector_store %arg11[%c0_182, %c885], %240 {strides = array<i32>} : memref<8x2688xbf16, #tpu.memory_space<vmem>>, vector<8x34xbf16>,
    %c96_183 = arith.constant 96 : index
    %c0_184 = arith.constant 0 : index
    %242 = vector.load %arg10[%c96_183, %c0_184] : memref<256x34xf32, #tpu.memory_space<vmem>>, vector<8x34xf32>
    %cst_185 = arith.constant 7.500000e-01 : f32
    %243 = vector.broadcast %cst_185 : f32 to vector<8x34xf32>
    %244 = arith.mulf %243, %242 : vector<8x34xf32>
    %c104 = arith.constant 104 : index
    %c0_186 = arith.constant 0 : index
    %245 = vector.load %arg10[%c104, %c0_186] : memref<256x34xf32, #tpu.memory_space<vmem>>, vector<8x34xf32>
    %cst_187 = arith.constant 2.500000e-01 : f32
    %246 = vector.broadcast %cst_187 : f32 to vector<8x34xf32>
    %247 = arith.mulf %246, %245 : vector<8x34xf32>
    %248 = arith.addf %244, %247 : vector<8x34xf32>
    %249 = arith.truncf %248 : vector<8x34xf32> to vector<8x34xbf16>
    %c0_188 = arith.constant 0 : index
    %c919 = arith.constant 919 : index
    %250 = vector.load %arg11[%c0_188, %c919] : memref<8x2688xbf16, #tpu.memory_space<vmem>>, vector<8x34xbf16>
    tpu.vector_store %arg11[%c0_188, %c919], %249 {strides = array<i32>} : memref<8x2688xbf16, #tpu.memory_space<vmem>>, vector<8x34xbf16>,
    %c96_189 = arith.constant 96 : index
    %c0_190 = arith.constant 0 : index
    %251 = vector.load %arg10[%c96_189, %c0_190] : memref<256x34xf32, #tpu.memory_space<vmem>>, vector<8x34xf32>
    %cst_191 = arith.constant 2.500000e-01 : f32
    %252 = vector.broadcast %cst_191 : f32 to vector<8x34xf32>
    %253 = arith.mulf %252, %251 : vector<8x34xf32>
    %c104_192 = arith.constant 104 : index
    %c0_193 = arith.constant 0 : index
    %254 = vector.load %arg10[%c104_192, %c0_193] : memref<256x34xf32, #tpu.memory_space<vmem>>, vector<8x34xf32>
    %cst_194 = arith.constant 7.500000e-01 : f32
    %255 = vector.broadcast %cst_194 : f32 to vector<8x34xf32>
    %256 = arith.mulf %255, %254 : vector<8x34xf32>
    %257 = arith.addf %253, %256 : vector<8x34xf32>
    %258 = arith.truncf %257 : vector<8x34xf32> to vector<8x34xbf16>
    %c0_195 = arith.constant 0 : index
    %c953 = arith.constant 953 : index
    %259 = vector.load %arg11[%c0_195, %c953] : memref<8x2688xbf16, #tpu.memory_space<vmem>>, vector<8x34xbf16>
    tpu.vector_store %arg11[%c0_195, %c953], %258 {strides = array<i32>} : memref<8x2688xbf16, #tpu.memory_space<vmem>>, vector<8x34xbf16>,
    %c104_196 = arith.constant 104 : index
    %c0_197 = arith.constant 0 : index
    %260 = vector.load %arg10[%c104_196, %c0_197] : memref<256x34xf32, #tpu.memory_space<vmem>>, vector<8x34xf32>
    %cst_198 = arith.constant 7.500000e-01 : f32
    %261 = vector.broadcast %cst_198 : f32 to vector<8x34xf32>
    %262 = arith.mulf %261, %260 : vector<8x34xf32>
    %c112 = arith.constant 112 : index
    %c0_199 = arith.constant 0 : index
    %263 = vector.load %arg10[%c112, %c0_199] : memref<256x34xf32, #tpu.memory_space<vmem>>, vector<8x34xf32>
    %cst_200 = arith.constant 2.500000e-01 : f32
    %264 = vector.broadcast %cst_200 : f32 to vector<8x34xf32>
    %265 = arith.mulf %264, %263 : vector<8x34xf32>
    %266 = arith.addf %262, %265 : vector<8x34xf32>
    %267 = arith.truncf %266 : vector<8x34xf32> to vector<8x34xbf16>
    %c0_201 = arith.constant 0 : index
    %c987 = arith.constant 987 : index
    %268 = vector.load %arg11[%c0_201, %c987] : memref<8x2688xbf16, #tpu.memory_space<vmem>>, vector<8x34xbf16>
    tpu.vector_store %arg11[%c0_201, %c987], %267 {strides = array<i32>} : memref<8x2688xbf16, #tpu.memory_space<vmem>>, vector<8x34xbf16>,
    %c104_202 = arith.constant 104 : index
    %c0_203 = arith.constant 0 : index
    %269 = vector.load %arg10[%c104_202, %c0_203] : memref<256x34xf32, #tpu.memory_space<vmem>>, vector<8x34xf32>
    %cst_204 = arith.constant 2.500000e-01 : f32
    %270 = vector.broadcast %cst_204 : f32 to vector<8x34xf32>
    %271 = arith.mulf %270, %269 : vector<8x34xf32>
    %c112_205 = arith.constant 112 : index
    %c0_206 = arith.constant 0 : index
    %272 = vector.load %arg10[%c112_205, %c0_206] : memref<256x34xf32, #tpu.memory_space<vmem>>, vector<8x34xf32>
    %cst_207 = arith.constant 7.500000e-01 : f32
    %273 = vector.broadcast %cst_207 : f32 to vector<8x34xf32>
    %274 = arith.mulf %273, %272 : vector<8x34xf32>
    %275 = arith.addf %271, %274 : vector<8x34xf32>
    %276 = arith.truncf %275 : vector<8x34xf32> to vector<8x34xbf16>
    %c0_208 = arith.constant 0 : index
    %c1021 = arith.constant 1021 : index
    %277 = vector.load %arg11[%c0_208, %c1021] : memref<8x2688xbf16, #tpu.memory_space<vmem>>, vector<8x34xbf16>
    tpu.vector_store %arg11[%c0_208, %c1021], %276 {strides = array<i32>} : memref<8x2688xbf16, #tpu.memory_space<vmem>>, vector<8x34xbf16>,
    %c112_209 = arith.constant 112 : index
    %c0_210 = arith.constant 0 : index
    %278 = vector.load %arg10[%c112_209, %c0_210] : memref<256x34xf32, #tpu.memory_space<vmem>>, vector<8x34xf32>
    %cst_211 = arith.constant 7.500000e-01 : f32
    %279 = vector.broadcast %cst_211 : f32 to vector<8x34xf32>
    %280 = arith.mulf %279, %278 : vector<8x34xf32>
    %c120 = arith.constant 120 : index
    %c0_212 = arith.constant 0 : index
    %281 = vector.load %arg10[%c120, %c0_212] : memref<256x34xf32, #tpu.memory_space<vmem>>, vector<8x34xf32>
    %cst_213 = arith.constant 2.500000e-01 : f32
    %282 = vector.broadcast %cst_213 : f32 to vector<8x34xf32>
    %283 = arith.mulf %282, %281 : vector<8x34xf32>
    %284 = arith.addf %280, %283 : vector<8x34xf32>
    %285 = arith.truncf %284 : vector<8x34xf32> to vector<8x34xbf16>
    %c0_214 = arith.constant 0 : index
    %c1055 = arith.constant 1055 : index
    %286 = vector.load %arg11[%c0_214, %c1055] : memref<8x2688xbf16, #tpu.memory_space<vmem>>, vector<8x34xbf16>
    tpu.vector_store %arg11[%c0_214, %c1055], %285 {strides = array<i32>} : memref<8x2688xbf16, #tpu.memory_space<vmem>>, vector<8x34xbf16>,
    %c112_215 = arith.constant 112 : index
    %c0_216 = arith.constant 0 : index
    %287 = vector.load %arg10[%c112_215, %c0_216] : memref<256x34xf32, #tpu.memory_space<vmem>>, vector<8x34xf32>
    %cst_217 = arith.constant 2.500000e-01 : f32
    %288 = vector.broadcast %cst_217 : f32 to vector<8x34xf32>
    %289 = arith.mulf %288, %287 : vector<8x34xf32>
    %c120_218 = arith.constant 120 : index
    %c0_219 = arith.constant 0 : index
    %290 = vector.load %arg10[%c120_218, %c0_219] : memref<256x34xf32, #tpu.memory_space<vmem>>, vector<8x34xf32>
    %cst_220 = arith.constant 7.500000e-01 : f32
    %291 = vector.broadcast %cst_220 : f32 to vector<8x34xf32>
    %292 = arith.mulf %291, %290 : vector<8x34xf32>
    %293 = arith.addf %289, %292 : vector<8x34xf32>
    %294 = arith.truncf %293 : vector<8x34xf32> to vector<8x34xbf16>
    %c0_221 = arith.constant 0 : index
    %c1089 = arith.constant 1089 : index
    %295 = vector.load %arg11[%c0_221, %c1089] : memref<8x2688xbf16, #tpu.memory_space<vmem>>, vector<8x34xbf16>
    tpu.vector_store %arg11[%c0_221, %c1089], %294 {strides = array<i32>} : memref<8x2688xbf16, #tpu.memory_space<vmem>>, vector<8x34xbf16>,
    %c120_222 = arith.constant 120 : index
    %c0_223 = arith.constant 0 : index
    %296 = vector.load %arg10[%c120_222, %c0_223] : memref<256x34xf32, #tpu.memory_space<vmem>>, vector<8x34xf32>
    %cst_224 = arith.constant 1.000000e+00 : f32
    %297 = vector.broadcast %cst_224 : f32 to vector<8x34xf32>
    %298 = arith.mulf %297, %296 : vector<8x34xf32>
    %299 = arith.truncf %298 : vector<8x34xf32> to vector<8x34xbf16>
    %c0_225 = arith.constant 0 : index
    %c1123 = arith.constant 1123 : index
    %300 = vector.load %arg11[%c0_225, %c1123] : memref<8x2688xbf16, #tpu.memory_space<vmem>>, vector<8x34xbf16>
    tpu.vector_store %arg11[%c0_225, %c1123], %299 {strides = array<i32>} : memref<8x2688xbf16, #tpu.memory_space<vmem>>, vector<8x34xbf16>,
    %c112_226 = arith.constant 112 : index
    %c0_227 = arith.constant 0 : index
    %301 = vector.load %arg10[%c112_226, %c0_227] : memref<256x34xf32, #tpu.memory_space<vmem>>, vector<8x34xf32>
    %cst_228 = arith.constant 2.500000e-01 : f32
    %302 = vector.broadcast %cst_228 : f32 to vector<8x34xf32>
    %303 = arith.mulf %302, %301 : vector<8x34xf32>
    %c120_229 = arith.constant 120 : index
    %c0_230 = arith.constant 0 : index
    %304 = vector.load %arg10[%c120_229, %c0_230] : memref<256x34xf32, #tpu.memory_space<vmem>>, vector<8x34xf32>
    %cst_231 = arith.constant 7.500000e-01 : f32
    %305 = vector.broadcast %cst_231 : f32 to vector<8x34xf32>
    %306 = arith.mulf %305, %304 : vector<8x34xf32>
    %307 = arith.addf %303, %306 : vector<8x34xf32>
    %308 = arith.truncf %307 : vector<8x34xf32> to vector<8x34xbf16>
    %c0_232 = arith.constant 0 : index
    %c1157 = arith.constant 1157 : index
    %309 = vector.load %arg11[%c0_232, %c1157] : memref<8x2688xbf16, #tpu.memory_space<vmem>>, vector<8x34xbf16>
    tpu.vector_store %arg11[%c0_232, %c1157], %308 {strides = array<i32>} : memref<8x2688xbf16, #tpu.memory_space<vmem>>, vector<8x34xbf16>,
    %c128_233 = arith.constant 128 : index
    %c0_234 = arith.constant 0 : index
    %310 = vector.load %arg10[%c128_233, %c0_234] : memref<256x34xf32, #tpu.memory_space<vmem>>, vector<8x34xf32>
    %cst_235 = arith.constant 7.500000e-01 : f32
    %311 = vector.broadcast %cst_235 : f32 to vector<8x34xf32>
    %312 = arith.mulf %311, %310 : vector<8x34xf32>
    %c136 = arith.constant 136 : index
    %c0_236 = arith.constant 0 : index
    %313 = vector.load %arg10[%c136, %c0_236] : memref<256x34xf32, #tpu.memory_space<vmem>>, vector<8x34xf32>
    %cst_237 = arith.constant 2.500000e-01 : f32
    %314 = vector.broadcast %cst_237 : f32 to vector<8x34xf32>
    %315 = arith.mulf %314, %313 : vector<8x34xf32>
    %316 = arith.addf %312, %315 : vector<8x34xf32>
    %317 = arith.truncf %316 : vector<8x34xf32> to vector<8x34xbf16>
    %c0_238 = arith.constant 0 : index
    %c1261 = arith.constant 1261 : index
    %318 = vector.load %arg11[%c0_238, %c1261] : memref<8x2688xbf16, #tpu.memory_space<vmem>>, vector<8x34xbf16>
    tpu.vector_store %arg11[%c0_238, %c1261], %317 {strides = array<i32>} : memref<8x2688xbf16, #tpu.memory_space<vmem>>, vector<8x34xbf16>,
    %c128_239 = arith.constant 128 : index
    %c0_240 = arith.constant 0 : index
    %319 = vector.load %arg10[%c128_239, %c0_240] : memref<256x34xf32, #tpu.memory_space<vmem>>, vector<8x34xf32>
    %cst_241 = arith.constant 1.000000e+00 : f32
    %320 = vector.broadcast %cst_241 : f32 to vector<8x34xf32>
    %321 = arith.mulf %320, %319 : vector<8x34xf32>
    %322 = arith.truncf %321 : vector<8x34xf32> to vector<8x34xbf16>
    %c0_242 = arith.constant 0 : index
    %c1295 = arith.constant 1295 : index
    %323 = vector.load %arg11[%c0_242, %c1295] : memref<8x2688xbf16, #tpu.memory_space<vmem>>, vector<8x34xbf16>
    tpu.vector_store %arg11[%c0_242, %c1295], %322 {strides = array<i32>} : memref<8x2688xbf16, #tpu.memory_space<vmem>>, vector<8x34xbf16>,
    %c128_243 = arith.constant 128 : index
    %c0_244 = arith.constant 0 : index
    %324 = vector.load %arg10[%c128_243, %c0_244] : memref<256x34xf32, #tpu.memory_space<vmem>>, vector<8x34xf32>
    %cst_245 = arith.constant 7.500000e-01 : f32
    %325 = vector.broadcast %cst_245 : f32 to vector<8x34xf32>
    %326 = arith.mulf %325, %324 : vector<8x34xf32>
    %c136_246 = arith.constant 136 : index
    %c0_247 = arith.constant 0 : index
    %327 = vector.load %arg10[%c136_246, %c0_247] : memref<256x34xf32, #tpu.memory_space<vmem>>, vector<8x34xf32>
    %cst_248 = arith.constant 2.500000e-01 : f32
    %328 = vector.broadcast %cst_248 : f32 to vector<8x34xf32>
    %329 = arith.mulf %328, %327 : vector<8x34xf32>
    %330 = arith.addf %326, %329 : vector<8x34xf32>
    %331 = arith.truncf %330 : vector<8x34xf32> to vector<8x34xbf16>
    %c0_249 = arith.constant 0 : index
    %c1329 = arith.constant 1329 : index
    %332 = vector.load %arg11[%c0_249, %c1329] : memref<8x2688xbf16, #tpu.memory_space<vmem>>, vector<8x34xbf16>
    tpu.vector_store %arg11[%c0_249, %c1329], %331 {strides = array<i32>} : memref<8x2688xbf16, #tpu.memory_space<vmem>>, vector<8x34xbf16>,
    %c128_250 = arith.constant 128 : index
    %c0_251 = arith.constant 0 : index
    %333 = vector.load %arg10[%c128_250, %c0_251] : memref<256x34xf32, #tpu.memory_space<vmem>>, vector<8x34xf32>
    %cst_252 = arith.constant 2.500000e-01 : f32
    %334 = vector.broadcast %cst_252 : f32 to vector<8x34xf32>
    %335 = arith.mulf %334, %333 : vector<8x34xf32>
    %c136_253 = arith.constant 136 : index
    %c0_254 = arith.constant 0 : index
    %336 = vector.load %arg10[%c136_253, %c0_254] : memref<256x34xf32, #tpu.memory_space<vmem>>, vector<8x34xf32>
    %cst_255 = arith.constant 7.500000e-01 : f32
    %337 = vector.broadcast %cst_255 : f32 to vector<8x34xf32>
    %338 = arith.mulf %337, %336 : vector<8x34xf32>
    %339 = arith.addf %335, %338 : vector<8x34xf32>
    %340 = arith.truncf %339 : vector<8x34xf32> to vector<8x34xbf16>
    %c0_256 = arith.constant 0 : index
    %c1363 = arith.constant 1363 : index
    %341 = vector.load %arg11[%c0_256, %c1363] : memref<8x2688xbf16, #tpu.memory_space<vmem>>, vector<8x34xbf16>
    tpu.vector_store %arg11[%c0_256, %c1363], %340 {strides = array<i32>} : memref<8x2688xbf16, #tpu.memory_space<vmem>>, vector<8x34xbf16>,
    %c136_257 = arith.constant 136 : index
    %c0_258 = arith.constant 0 : index
    %342 = vector.load %arg10[%c136_257, %c0_258] : memref<256x34xf32, #tpu.memory_space<vmem>>, vector<8x34xf32>
    %cst_259 = arith.constant 7.500000e-01 : f32
    %343 = vector.broadcast %cst_259 : f32 to vector<8x34xf32>
    %344 = arith.mulf %343, %342 : vector<8x34xf32>
    %c144 = arith.constant 144 : index
    %c0_260 = arith.constant 0 : index
    %345 = vector.load %arg10[%c144, %c0_260] : memref<256x34xf32, #tpu.memory_space<vmem>>, vector<8x34xf32>
    %cst_261 = arith.constant 2.500000e-01 : f32
    %346 = vector.broadcast %cst_261 : f32 to vector<8x34xf32>
    %347 = arith.mulf %346, %345 : vector<8x34xf32>
    %348 = arith.addf %344, %347 : vector<8x34xf32>
    %349 = arith.truncf %348 : vector<8x34xf32> to vector<8x34xbf16>
    %c0_262 = arith.constant 0 : index
    %c1397 = arith.constant 1397 : index
    %350 = vector.load %arg11[%c0_262, %c1397] : memref<8x2688xbf16, #tpu.memory_space<vmem>>, vector<8x34xbf16>
    tpu.vector_store %arg11[%c0_262, %c1397], %349 {strides = array<i32>} : memref<8x2688xbf16, #tpu.memory_space<vmem>>, vector<8x34xbf16>,
    %c136_263 = arith.constant 136 : index
    %c0_264 = arith.constant 0 : index
    %351 = vector.load %arg10[%c136_263, %c0_264] : memref<256x34xf32, #tpu.memory_space<vmem>>, vector<8x34xf32>
    %cst_265 = arith.constant 2.500000e-01 : f32
    %352 = vector.broadcast %cst_265 : f32 to vector<8x34xf32>
    %353 = arith.mulf %352, %351 : vector<8x34xf32>
    %c144_266 = arith.constant 144 : index
    %c0_267 = arith.constant 0 : index
    %354 = vector.load %arg10[%c144_266, %c0_267] : memref<256x34xf32, #tpu.memory_space<vmem>>, vector<8x34xf32>
    %cst_268 = arith.constant 7.500000e-01 : f32
    %355 = vector.broadcast %cst_268 : f32 to vector<8x34xf32>
    %356 = arith.mulf %355, %354 : vector<8x34xf32>
    %357 = arith.addf %353, %356 : vector<8x34xf32>
    %358 = arith.truncf %357 : vector<8x34xf32> to vector<8x34xbf16>
    %c0_269 = arith.constant 0 : index
    %c1431 = arith.constant 1431 : index
    %359 = vector.load %arg11[%c0_269, %c1431] : memref<8x2688xbf16, #tpu.memory_space<vmem>>, vector<8x34xbf16>
    tpu.vector_store %arg11[%c0_269, %c1431], %358 {strides = array<i32>} : memref<8x2688xbf16, #tpu.memory_space<vmem>>, vector<8x34xbf16>,
    %c144_270 = arith.constant 144 : index
    %c0_271 = arith.constant 0 : index
    %360 = vector.load %arg10[%c144_270, %c0_271] : memref<256x34xf32, #tpu.memory_space<vmem>>, vector<8x34xf32>
    %cst_272 = arith.constant 7.500000e-01 : f32
    %361 = vector.broadcast %cst_272 : f32 to vector<8x34xf32>
    %362 = arith.mulf %361, %360 : vector<8x34xf32>
    %c152 = arith.constant 152 : index
    %c0_273 = arith.constant 0 : index
    %363 = vector.load %arg10[%c152, %c0_273] : memref<256x34xf32, #tpu.memory_space<vmem>>, vector<8x34xf32>
    %cst_274 = arith.constant 2.500000e-01 : f32
    %364 = vector.broadcast %cst_274 : f32 to vector<8x34xf32>
    %365 = arith.mulf %364, %363 : vector<8x34xf32>
    %366 = arith.addf %362, %365 : vector<8x34xf32>
    %367 = arith.truncf %366 : vector<8x34xf32> to vector<8x34xbf16>
    %c0_275 = arith.constant 0 : index
    %c1465 = arith.constant 1465 : index
    %368 = vector.load %arg11[%c0_275, %c1465] : memref<8x2688xbf16, #tpu.memory_space<vmem>>, vector<8x34xbf16>
    tpu.vector_store %arg11[%c0_275, %c1465], %367 {strides = array<i32>} : memref<8x2688xbf16, #tpu.memory_space<vmem>>, vector<8x34xbf16>,
    %c144_276 = arith.constant 144 : index
    %c0_277 = arith.constant 0 : index
    %369 = vector.load %arg10[%c144_276, %c0_277] : memref<256x34xf32, #tpu.memory_space<vmem>>, vector<8x34xf32>
    %cst_278 = arith.constant 2.500000e-01 : f32
    %370 = vector.broadcast %cst_278 : f32 to vector<8x34xf32>
    %371 = arith.mulf %370, %369 : vector<8x34xf32>
    %c152_279 = arith.constant 152 : index
    %c0_280 = arith.constant 0 : index
    %372 = vector.load %arg10[%c152_279, %c0_280] : memref<256x34xf32, #tpu.memory_space<vmem>>, vector<8x34xf32>
    %cst_281 = arith.constant 7.500000e-01 : f32
    %373 = vector.broadcast %cst_281 : f32 to vector<8x34xf32>
    %374 = arith.mulf %373, %372 : vector<8x34xf32>
    %375 = arith.addf %371, %374 : vector<8x34xf32>
    %376 = arith.truncf %375 : vector<8x34xf32> to vector<8x34xbf16>
    %c0_282 = arith.constant 0 : index
    %c1499 = arith.constant 1499 : index
    %377 = vector.load %arg11[%c0_282, %c1499] : memref<8x2688xbf16, #tpu.memory_space<vmem>>, vector<8x34xbf16>
    tpu.vector_store %arg11[%c0_282, %c1499], %376 {strides = array<i32>} : memref<8x2688xbf16, #tpu.memory_space<vmem>>, vector<8x34xbf16>,
    %c152_283 = arith.constant 152 : index
    %c0_284 = arith.constant 0 : index
    %378 = vector.load %arg10[%c152_283, %c0_284] : memref<256x34xf32, #tpu.memory_space<vmem>>, vector<8x34xf32>
    %cst_285 = arith.constant 7.500000e-01 : f32
    %379 = vector.broadcast %cst_285 : f32 to vector<8x34xf32>
    %380 = arith.mulf %379, %378 : vector<8x34xf32>
    %c160 = arith.constant 160 : index
    %c0_286 = arith.constant 0 : index
    %381 = vector.load %arg10[%c160, %c0_286] : memref<256x34xf32, #tpu.memory_space<vmem>>, vector<8x34xf32>
    %cst_287 = arith.constant 2.500000e-01 : f32
    %382 = vector.broadcast %cst_287 : f32 to vector<8x34xf32>
    %383 = arith.mulf %382, %381 : vector<8x34xf32>
    %384 = arith.addf %380, %383 : vector<8x34xf32>
    %385 = arith.truncf %384 : vector<8x34xf32> to vector<8x34xbf16>
    %c0_288 = arith.constant 0 : index
    %c1533 = arith.constant 1533 : index
    %386 = vector.load %arg11[%c0_288, %c1533] : memref<8x2688xbf16, #tpu.memory_space<vmem>>, vector<8x34xbf16>
    tpu.vector_store %arg11[%c0_288, %c1533], %385 {strides = array<i32>} : memref<8x2688xbf16, #tpu.memory_space<vmem>>, vector<8x34xbf16>,
    %c152_289 = arith.constant 152 : index
    %c0_290 = arith.constant 0 : index
    %387 = vector.load %arg10[%c152_289, %c0_290] : memref<256x34xf32, #tpu.memory_space<vmem>>, vector<8x34xf32>
    %cst_291 = arith.constant 2.500000e-01 : f32
    %388 = vector.broadcast %cst_291 : f32 to vector<8x34xf32>
    %389 = arith.mulf %388, %387 : vector<8x34xf32>
    %c160_292 = arith.constant 160 : index
    %c0_293 = arith.constant 0 : index
    %390 = vector.load %arg10[%c160_292, %c0_293] : memref<256x34xf32, #tpu.memory_space<vmem>>, vector<8x34xf32>
    %cst_294 = arith.constant 7.500000e-01 : f32
    %391 = vector.broadcast %cst_294 : f32 to vector<8x34xf32>
    %392 = arith.mulf %391, %390 : vector<8x34xf32>
    %393 = arith.addf %389, %392 : vector<8x34xf32>
    %394 = arith.truncf %393 : vector<8x34xf32> to vector<8x34xbf16>
    %c0_295 = arith.constant 0 : index
    %c1567 = arith.constant 1567 : index
    %395 = vector.load %arg11[%c0_295, %c1567] : memref<8x2688xbf16, #tpu.memory_space<vmem>>, vector<8x34xbf16>
    tpu.vector_store %arg11[%c0_295, %c1567], %394 {strides = array<i32>} : memref<8x2688xbf16, #tpu.memory_space<vmem>>, vector<8x34xbf16>,
    %c160_296 = arith.constant 160 : index
    %c0_297 = arith.constant 0 : index
    %396 = vector.load %arg10[%c160_296, %c0_297] : memref<256x34xf32, #tpu.memory_space<vmem>>, vector<8x34xf32>
    %cst_298 = arith.constant 7.500000e-01 : f32
    %397 = vector.broadcast %cst_298 : f32 to vector<8x34xf32>
    %398 = arith.mulf %397, %396 : vector<8x34xf32>
    %c168 = arith.constant 168 : index
    %c0_299 = arith.constant 0 : index
    %399 = vector.load %arg10[%c168, %c0_299] : memref<256x34xf32, #tpu.memory_space<vmem>>, vector<8x34xf32>
    %cst_300 = arith.constant 2.500000e-01 : f32
    %400 = vector.broadcast %cst_300 : f32 to vector<8x34xf32>
    %401 = arith.mulf %400, %399 : vector<8x34xf32>
    %402 = arith.addf %398, %401 : vector<8x34xf32>
    %403 = arith.truncf %402 : vector<8x34xf32> to vector<8x34xbf16>
    %c0_301 = arith.constant 0 : index
    %c1601 = arith.constant 1601 : index
    %404 = vector.load %arg11[%c0_301, %c1601] : memref<8x2688xbf16, #tpu.memory_space<vmem>>, vector<8x34xbf16>
    tpu.vector_store %arg11[%c0_301, %c1601], %403 {strides = array<i32>} : memref<8x2688xbf16, #tpu.memory_space<vmem>>, vector<8x34xbf16>,
    %c160_302 = arith.constant 160 : index
    %c0_303 = arith.constant 0 : index
    %405 = vector.load %arg10[%c160_302, %c0_303] : memref<256x34xf32, #tpu.memory_space<vmem>>, vector<8x34xf32>
    %cst_304 = arith.constant 2.500000e-01 : f32
    %406 = vector.broadcast %cst_304 : f32 to vector<8x34xf32>
    %407 = arith.mulf %406, %405 : vector<8x34xf32>
    %c168_305 = arith.constant 168 : index
    %c0_306 = arith.constant 0 : index
    %408 = vector.load %arg10[%c168_305, %c0_306] : memref<256x34xf32, #tpu.memory_space<vmem>>, vector<8x34xf32>
    %cst_307 = arith.constant 7.500000e-01 : f32
    %409 = vector.broadcast %cst_307 : f32 to vector<8x34xf32>
    %410 = arith.mulf %409, %408 : vector<8x34xf32>
    %411 = arith.addf %407, %410 : vector<8x34xf32>
    %412 = arith.truncf %411 : vector<8x34xf32> to vector<8x34xbf16>
    %c0_308 = arith.constant 0 : index
    %c1635 = arith.constant 1635 : index
    %413 = vector.load %arg11[%c0_308, %c1635] : memref<8x2688xbf16, #tpu.memory_space<vmem>>, vector<8x34xbf16>
    tpu.vector_store %arg11[%c0_308, %c1635], %412 {strides = array<i32>} : memref<8x2688xbf16, #tpu.memory_space<vmem>>, vector<8x34xbf16>,
    %c168_309 = arith.constant 168 : index
    %c0_310 = arith.constant 0 : index
    %414 = vector.load %arg10[%c168_309, %c0_310] : memref<256x34xf32, #tpu.memory_space<vmem>>, vector<8x34xf32>
    %cst_311 = arith.constant 7.500000e-01 : f32
    %415 = vector.broadcast %cst_311 : f32 to vector<8x34xf32>
    %416 = arith.mulf %415, %414 : vector<8x34xf32>
    %c176 = arith.constant 176 : index
    %c0_312 = arith.constant 0 : index
    %417 = vector.load %arg10[%c176, %c0_312] : memref<256x34xf32, #tpu.memory_space<vmem>>, vector<8x34xf32>
    %cst_313 = arith.constant 2.500000e-01 : f32
    %418 = vector.broadcast %cst_313 : f32 to vector<8x34xf32>
    %419 = arith.mulf %418, %417 : vector<8x34xf32>
    %420 = arith.addf %416, %419 : vector<8x34xf32>
    %421 = arith.truncf %420 : vector<8x34xf32> to vector<8x34xbf16>
    %c0_314 = arith.constant 0 : index
    %c1669 = arith.constant 1669 : index
    %422 = vector.load %arg11[%c0_314, %c1669] : memref<8x2688xbf16, #tpu.memory_space<vmem>>, vector<8x34xbf16>
    tpu.vector_store %arg11[%c0_314, %c1669], %421 {strides = array<i32>} : memref<8x2688xbf16, #tpu.memory_space<vmem>>, vector<8x34xbf16>,
    %c168_315 = arith.constant 168 : index
    %c0_316 = arith.constant 0 : index
    %423 = vector.load %arg10[%c168_315, %c0_316] : memref<256x34xf32, #tpu.memory_space<vmem>>, vector<8x34xf32>
    %cst_317 = arith.constant 2.500000e-01 : f32
    %424 = vector.broadcast %cst_317 : f32 to vector<8x34xf32>
    %425 = arith.mulf %424, %423 : vector<8x34xf32>
    %c176_318 = arith.constant 176 : index
    %c0_319 = arith.constant 0 : index
    %426 = vector.load %arg10[%c176_318, %c0_319] : memref<256x34xf32, #tpu.memory_space<vmem>>, vector<8x34xf32>
    %cst_320 = arith.constant 7.500000e-01 : f32
    %427 = vector.broadcast %cst_320 : f32 to vector<8x34xf32>
    %428 = arith.mulf %427, %426 : vector<8x34xf32>
    %429 = arith.addf %425, %428 : vector<8x34xf32>
    %430 = arith.truncf %429 : vector<8x34xf32> to vector<8x34xbf16>
    %c0_321 = arith.constant 0 : index
    %c1703 = arith.constant 1703 : index
    %431 = vector.load %arg11[%c0_321, %c1703] : memref<8x2688xbf16, #tpu.memory_space<vmem>>, vector<8x34xbf16>
    tpu.vector_store %arg11[%c0_321, %c1703], %430 {strides = array<i32>} : memref<8x2688xbf16, #tpu.memory_space<vmem>>, vector<8x34xbf16>,
    %c176_322 = arith.constant 176 : index
    %c0_323 = arith.constant 0 : index
    %432 = vector.load %arg10[%c176_322, %c0_323] : memref<256x34xf32, #tpu.memory_space<vmem>>, vector<8x34xf32>
    %cst_324 = arith.constant 7.500000e-01 : f32
    %433 = vector.broadcast %cst_324 : f32 to vector<8x34xf32>
    %434 = arith.mulf %433, %432 : vector<8x34xf32>
    %c184 = arith.constant 184 : index
    %c0_325 = arith.constant 0 : index
    %435 = vector.load %arg10[%c184, %c0_325] : memref<256x34xf32, #tpu.memory_space<vmem>>, vector<8x34xf32>
    %cst_326 = arith.constant 2.500000e-01 : f32
    %436 = vector.broadcast %cst_326 : f32 to vector<8x34xf32>
    %437 = arith.mulf %436, %435 : vector<8x34xf32>
    %438 = arith.addf %434, %437 : vector<8x34xf32>
    %439 = arith.truncf %438 : vector<8x34xf32> to vector<8x34xbf16>
    %c0_327 = arith.constant 0 : index
    %c1737 = arith.constant 1737 : index
    %440 = vector.load %arg11[%c0_327, %c1737] : memref<8x2688xbf16, #tpu.memory_space<vmem>>, vector<8x34xbf16>
    tpu.vector_store %arg11[%c0_327, %c1737], %439 {strides = array<i32>} : memref<8x2688xbf16, #tpu.memory_space<vmem>>, vector<8x34xbf16>,
    %c176_328 = arith.constant 176 : index
    %c0_329 = arith.constant 0 : index
    %441 = vector.load %arg10[%c176_328, %c0_329] : memref<256x34xf32, #tpu.memory_space<vmem>>, vector<8x34xf32>
    %cst_330 = arith.constant 2.500000e-01 : f32
    %442 = vector.broadcast %cst_330 : f32 to vector<8x34xf32>
    %443 = arith.mulf %442, %441 : vector<8x34xf32>
    %c184_331 = arith.constant 184 : index
    %c0_332 = arith.constant 0 : index
    %444 = vector.load %arg10[%c184_331, %c0_332] : memref<256x34xf32, #tpu.memory_space<vmem>>, vector<8x34xf32>
    %cst_333 = arith.constant 7.500000e-01 : f32
    %445 = vector.broadcast %cst_333 : f32 to vector<8x34xf32>
    %446 = arith.mulf %445, %444 : vector<8x34xf32>
    %447 = arith.addf %443, %446 : vector<8x34xf32>
    %448 = arith.truncf %447 : vector<8x34xf32> to vector<8x34xbf16>
    %c0_334 = arith.constant 0 : index
    %c1771 = arith.constant 1771 : index
    %449 = vector.load %arg11[%c0_334, %c1771] : memref<8x2688xbf16, #tpu.memory_space<vmem>>, vector<8x34xbf16>
    tpu.vector_store %arg11[%c0_334, %c1771], %448 {strides = array<i32>} : memref<8x2688xbf16, #tpu.memory_space<vmem>>, vector<8x34xbf16>,
    %c184_335 = arith.constant 184 : index
    %c0_336 = arith.constant 0 : index
    %450 = vector.load %arg10[%c184_335, %c0_336] : memref<256x34xf32, #tpu.memory_space<vmem>>, vector<8x34xf32>
    %cst_337 = arith.constant 7.500000e-01 : f32
    %451 = vector.broadcast %cst_337 : f32 to vector<8x34xf32>
    %452 = arith.mulf %451, %450 : vector<8x34xf32>
    %c192 = arith.constant 192 : index
    %c0_338 = arith.constant 0 : index
    %453 = vector.load %arg10[%c192, %c0_338] : memref<256x34xf32, #tpu.memory_space<vmem>>, vector<8x34xf32>
    %cst_339 = arith.constant 2.500000e-01 : f32
    %454 = vector.broadcast %cst_339 : f32 to vector<8x34xf32>
    %455 = arith.mulf %454, %453 : vector<8x34xf32>
    %456 = arith.addf %452, %455 : vector<8x34xf32>
    %457 = arith.truncf %456 : vector<8x34xf32> to vector<8x34xbf16>
    %c0_340 = arith.constant 0 : index
    %c1805 = arith.constant 1805 : index
    %458 = vector.load %arg11[%c0_340, %c1805] : memref<8x2688xbf16, #tpu.memory_space<vmem>>, vector<8x34xbf16>
    tpu.vector_store %arg11[%c0_340, %c1805], %457 {strides = array<i32>} : memref<8x2688xbf16, #tpu.memory_space<vmem>>, vector<8x34xbf16>,
    %c184_341 = arith.constant 184 : index
    %c0_342 = arith.constant 0 : index
    %459 = vector.load %arg10[%c184_341, %c0_342] : memref<256x34xf32, #tpu.memory_space<vmem>>, vector<8x34xf32>
    %cst_343 = arith.constant 2.500000e-01 : f32
    %460 = vector.broadcast %cst_343 : f32 to vector<8x34xf32>
    %461 = arith.mulf %460, %459 : vector<8x34xf32>
    %c192_344 = arith.constant 192 : index
    %c0_345 = arith.constant 0 : index
    %462 = vector.load %arg10[%c192_344, %c0_345] : memref<256x34xf32, #tpu.memory_space<vmem>>, vector<8x34xf32>
    %cst_346 = arith.constant 7.500000e-01 : f32
    %463 = vector.broadcast %cst_346 : f32 to vector<8x34xf32>
    %464 = arith.mulf %463, %462 : vector<8x34xf32>
    %465 = arith.addf %461, %464 : vector<8x34xf32>
    %466 = arith.truncf %465 : vector<8x34xf32> to vector<8x34xbf16>
    %c0_347 = arith.constant 0 : index
    %c1839 = arith.constant 1839 : index
    %467 = vector.load %arg11[%c0_347, %c1839] : memref<8x2688xbf16, #tpu.memory_space<vmem>>, vector<8x34xbf16>
    tpu.vector_store %arg11[%c0_347, %c1839], %466 {strides = array<i32>} : memref<8x2688xbf16, #tpu.memory_space<vmem>>, vector<8x34xbf16>,
    %c192_348 = arith.constant 192 : index
    %c0_349 = arith.constant 0 : index
    %468 = vector.load %arg10[%c192_348, %c0_349] : memref<256x34xf32, #tpu.memory_space<vmem>>, vector<8x34xf32>
    %cst_350 = arith.constant 7.500000e-01 : f32
    %469 = vector.broadcast %cst_350 : f32 to vector<8x34xf32>
    %470 = arith.mulf %469, %468 : vector<8x34xf32>
    %c200 = arith.constant 200 : index
    %c0_351 = arith.constant 0 : index
    %471 = vector.load %arg10[%c200, %c0_351] : memref<256x34xf32, #tpu.memory_space<vmem>>, vector<8x34xf32>
    %cst_352 = arith.constant 2.500000e-01 : f32
    %472 = vector.broadcast %cst_352 : f32 to vector<8x34xf32>
    %473 = arith.mulf %472, %471 : vector<8x34xf32>
    %474 = arith.addf %470, %473 : vector<8x34xf32>
    %475 = arith.truncf %474 : vector<8x34xf32> to vector<8x34xbf16>
    %c0_353 = arith.constant 0 : index
    %c1873 = arith.constant 1873 : index
    %476 = vector.load %arg11[%c0_353, %c1873] : memref<8x2688xbf16, #tpu.memory_space<vmem>>, vector<8x34xbf16>
    tpu.vector_store %arg11[%c0_353, %c1873], %475 {strides = array<i32>} : memref<8x2688xbf16, #tpu.memory_space<vmem>>, vector<8x34xbf16>,
    %c192_354 = arith.constant 192 : index
    %c0_355 = arith.constant 0 : index
    %477 = vector.load %arg10[%c192_354, %c0_355] : memref<256x34xf32, #tpu.memory_space<vmem>>, vector<8x34xf32>
    %cst_356 = arith.constant 2.500000e-01 : f32
    %478 = vector.broadcast %cst_356 : f32 to vector<8x34xf32>
    %479 = arith.mulf %478, %477 : vector<8x34xf32>
    %c200_357 = arith.constant 200 : index
    %c0_358 = arith.constant 0 : index
    %480 = vector.load %arg10[%c200_357, %c0_358] : memref<256x34xf32, #tpu.memory_space<vmem>>, vector<8x34xf32>
    %cst_359 = arith.constant 7.500000e-01 : f32
    %481 = vector.broadcast %cst_359 : f32 to vector<8x34xf32>
    %482 = arith.mulf %481, %480 : vector<8x34xf32>
    %483 = arith.addf %479, %482 : vector<8x34xf32>
    %484 = arith.truncf %483 : vector<8x34xf32> to vector<8x34xbf16>
    %c0_360 = arith.constant 0 : index
    %c1907 = arith.constant 1907 : index
    %485 = vector.load %arg11[%c0_360, %c1907] : memref<8x2688xbf16, #tpu.memory_space<vmem>>, vector<8x34xbf16>
    tpu.vector_store %arg11[%c0_360, %c1907], %484 {strides = array<i32>} : memref<8x2688xbf16, #tpu.memory_space<vmem>>, vector<8x34xbf16>,
    %c200_361 = arith.constant 200 : index
    %c0_362 = arith.constant 0 : index
    %486 = vector.load %arg10[%c200_361, %c0_362] : memref<256x34xf32, #tpu.memory_space<vmem>>, vector<8x34xf32>
    %cst_363 = arith.constant 7.500000e-01 : f32
    %487 = vector.broadcast %cst_363 : f32 to vector<8x34xf32>
    %488 = arith.mulf %487, %486 : vector<8x34xf32>
    %c208 = arith.constant 208 : index
    %c0_364 = arith.constant 0 : index
    %489 = vector.load %arg10[%c208, %c0_364] : memref<256x34xf32, #tpu.memory_space<vmem>>, vector<8x34xf32>
    %cst_365 = arith.constant 2.500000e-01 : f32
    %490 = vector.broadcast %cst_365 : f32 to vector<8x34xf32>
    %491 = arith.mulf %490, %489 : vector<8x34xf32>
    %492 = arith.addf %488, %491 : vector<8x34xf32>
    %493 = arith.truncf %492 : vector<8x34xf32> to vector<8x34xbf16>
    %c0_366 = arith.constant 0 : index
    %c1941 = arith.constant 1941 : index
    %494 = vector.load %arg11[%c0_366, %c1941] : memref<8x2688xbf16, #tpu.memory_space<vmem>>, vector<8x34xbf16>
    tpu.vector_store %arg11[%c0_366, %c1941], %493 {strides = array<i32>} : memref<8x2688xbf16, #tpu.memory_space<vmem>>, vector<8x34xbf16>,
    %c200_367 = arith.constant 200 : index
    %c0_368 = arith.constant 0 : index
    %495 = vector.load %arg10[%c200_367, %c0_368] : memref<256x34xf32, #tpu.memory_space<vmem>>, vector<8x34xf32>
    %cst_369 = arith.constant 2.500000e-01 : f32
    %496 = vector.broadcast %cst_369 : f32 to vector<8x34xf32>
    %497 = arith.mulf %496, %495 : vector<8x34xf32>
    %c208_370 = arith.constant 208 : index
    %c0_371 = arith.constant 0 : index
    %498 = vector.load %arg10[%c208_370, %c0_371] : memref<256x34xf32, #tpu.memory_space<vmem>>, vector<8x34xf32>
    %cst_372 = arith.constant 7.500000e-01 : f32
    %499 = vector.broadcast %cst_372 : f32 to vector<8x34xf32>
    %500 = arith.mulf %499, %498 : vector<8x34xf32>
    %501 = arith.addf %497, %500 : vector<8x34xf32>
    %502 = arith.truncf %501 : vector<8x34xf32> to vector<8x34xbf16>
    %c0_373 = arith.constant 0 : index
    %c1975 = arith.constant 1975 : index
    %503 = vector.load %arg11[%c0_373, %c1975] : memref<8x2688xbf16, #tpu.memory_space<vmem>>, vector<8x34xbf16>
    tpu.vector_store %arg11[%c0_373, %c1975], %502 {strides = array<i32>} : memref<8x2688xbf16, #tpu.memory_space<vmem>>, vector<8x34xbf16>,
    %c208_374 = arith.constant 208 : index
    %c0_375 = arith.constant 0 : index
    %504 = vector.load %arg10[%c208_374, %c0_375] : memref<256x34xf32, #tpu.memory_space<vmem>>, vector<8x34xf32>
    %cst_376 = arith.constant 7.500000e-01 : f32
    %505 = vector.broadcast %cst_376 : f32 to vector<8x34xf32>
    %506 = arith.mulf %505, %504 : vector<8x34xf32>
    %c216 = arith.constant 216 : index
    %c0_377 = arith.constant 0 : index
    %507 = vector.load %arg10[%c216, %c0_377] : memref<256x34xf32, #tpu.memory_space<vmem>>, vector<8x34xf32>
    %cst_378 = arith.constant 2.500000e-01 : f32
    %508 = vector.broadcast %cst_378 : f32 to vector<8x34xf32>
    %509 = arith.mulf %508, %507 : vector<8x34xf32>
    %510 = arith.addf %506, %509 : vector<8x34xf32>
    %511 = arith.truncf %510 : vector<8x34xf32> to vector<8x34xbf16>
    %c0_379 = arith.constant 0 : index
    %c2009 = arith.constant 2009 : index
    %512 = vector.load %arg11[%c0_379, %c2009] : memref<8x2688xbf16, #tpu.memory_space<vmem>>, vector<8x34xbf16>
    tpu.vector_store %arg11[%c0_379, %c2009], %511 {strides = array<i32>} : memref<8x2688xbf16, #tpu.memory_space<vmem>>, vector<8x34xbf16>,
    %c208_380 = arith.constant 208 : index
    %c0_381 = arith.constant 0 : index
    %513 = vector.load %arg10[%c208_380, %c0_381] : memref<256x34xf32, #tpu.memory_space<vmem>>, vector<8x34xf32>
    %cst_382 = arith.constant 2.500000e-01 : f32
    %514 = vector.broadcast %cst_382 : f32 to vector<8x34xf32>
    %515 = arith.mulf %514, %513 : vector<8x34xf32>
    %c216_383 = arith.constant 216 : index
    %c0_384 = arith.constant 0 : index
    %516 = vector.load %arg10[%c216_383, %c0_384] : memref<256x34xf32, #tpu.memory_space<vmem>>, vector<8x34xf32>
    %cst_385 = arith.constant 7.500000e-01 : f32
    %517 = vector.broadcast %cst_385 : f32 to vector<8x34xf32>
    %518 = arith.mulf %517, %516 : vector<8x34xf32>
    %519 = arith.addf %515, %518 : vector<8x34xf32>
    %520 = arith.truncf %519 : vector<8x34xf32> to vector<8x34xbf16>
    %c0_386 = arith.constant 0 : index
    %c2043 = arith.constant 2043 : index
    %521 = vector.load %arg11[%c0_386, %c2043] : memref<8x2688xbf16, #tpu.memory_space<vmem>>, vector<8x34xbf16>
    tpu.vector_store %arg11[%c0_386, %c2043], %520 {strides = array<i32>} : memref<8x2688xbf16, #tpu.memory_space<vmem>>, vector<8x34xbf16>,
    %c216_387 = arith.constant 216 : index
    %c0_388 = arith.constant 0 : index
    %522 = vector.load %arg10[%c216_387, %c0_388] : memref<256x34xf32, #tpu.memory_space<vmem>>, vector<8x34xf32>
    %cst_389 = arith.constant 7.500000e-01 : f32
    %523 = vector.broadcast %cst_389 : f32 to vector<8x34xf32>
    %524 = arith.mulf %523, %522 : vector<8x34xf32>
    %c224 = arith.constant 224 : index
    %c0_390 = arith.constant 0 : index
    %525 = vector.load %arg10[%c224, %c0_390] : memref<256x34xf32, #tpu.memory_space<vmem>>, vector<8x34xf32>
    %cst_391 = arith.constant 2.500000e-01 : f32
    %526 = vector.broadcast %cst_391 : f32 to vector<8x34xf32>
    %527 = arith.mulf %526, %525 : vector<8x34xf32>
    %528 = arith.addf %524, %527 : vector<8x34xf32>
    %529 = arith.truncf %528 : vector<8x34xf32> to vector<8x34xbf16>
    %c0_392 = arith.constant 0 : index
    %c2077 = arith.constant 2077 : index
    %530 = vector.load %arg11[%c0_392, %c2077] : memref<8x2688xbf16, #tpu.memory_space<vmem>>, vector<8x34xbf16>
    tpu.vector_store %arg11[%c0_392, %c2077], %529 {strides = array<i32>} : memref<8x2688xbf16, #tpu.memory_space<vmem>>, vector<8x34xbf16>,
    %c216_393 = arith.constant 216 : index
    %c0_394 = arith.constant 0 : index
    %531 = vector.load %arg10[%c216_393, %c0_394] : memref<256x34xf32, #tpu.memory_space<vmem>>, vector<8x34xf32>
    %cst_395 = arith.constant 2.500000e-01 : f32
    %532 = vector.broadcast %cst_395 : f32 to vector<8x34xf32>
    %533 = arith.mulf %532, %531 : vector<8x34xf32>
    %c224_396 = arith.constant 224 : index
    %c0_397 = arith.constant 0 : index
    %534 = vector.load %arg10[%c224_396, %c0_397] : memref<256x34xf32, #tpu.memory_space<vmem>>, vector<8x34xf32>
    %cst_398 = arith.constant 7.500000e-01 : f32
    %535 = vector.broadcast %cst_398 : f32 to vector<8x34xf32>
    %536 = arith.mulf %535, %534 : vector<8x34xf32>
    %537 = arith.addf %533, %536 : vector<8x34xf32>
    %538 = arith.truncf %537 : vector<8x34xf32> to vector<8x34xbf16>
    %c0_399 = arith.constant 0 : index
    %c2111 = arith.constant 2111 : index
    %539 = vector.load %arg11[%c0_399, %c2111] : memref<8x2688xbf16, #tpu.memory_space<vmem>>, vector<8x34xbf16>
    tpu.vector_store %arg11[%c0_399, %c2111], %538 {strides = array<i32>} : memref<8x2688xbf16, #tpu.memory_space<vmem>>, vector<8x34xbf16>,
    %c224_400 = arith.constant 224 : index
    %c0_401 = arith.constant 0 : index
    %540 = vector.load %arg10[%c224_400, %c0_401] : memref<256x34xf32, #tpu.memory_space<vmem>>, vector<8x34xf32>
    %cst_402 = arith.constant 7.500000e-01 : f32
    %541 = vector.broadcast %cst_402 : f32 to vector<8x34xf32>
    %542 = arith.mulf %541, %540 : vector<8x34xf32>
    %c232 = arith.constant 232 : index
    %c0_403 = arith.constant 0 : index
    %543 = vector.load %arg10[%c232, %c0_403] : memref<256x34xf32, #tpu.memory_space<vmem>>, vector<8x34xf32>
    %cst_404 = arith.constant 2.500000e-01 : f32
    %544 = vector.broadcast %cst_404 : f32 to vector<8x34xf32>
    %545 = arith.mulf %544, %543 : vector<8x34xf32>
    %546 = arith.addf %542, %545 : vector<8x34xf32>
    %547 = arith.truncf %546 : vector<8x34xf32> to vector<8x34xbf16>
    %c0_405 = arith.constant 0 : index
    %c2145 = arith.constant 2145 : index
    %548 = vector.load %arg11[%c0_405, %c2145] : memref<8x2688xbf16, #tpu.memory_space<vmem>>, vector<8x34xbf16>
    tpu.vector_store %arg11[%c0_405, %c2145], %547 {strides = array<i32>} : memref<8x2688xbf16, #tpu.memory_space<vmem>>, vector<8x34xbf16>,
    %c224_406 = arith.constant 224 : index
    %c0_407 = arith.constant 0 : index
    %549 = vector.load %arg10[%c224_406, %c0_407] : memref<256x34xf32, #tpu.memory_space<vmem>>, vector<8x34xf32>
    %cst_408 = arith.constant 2.500000e-01 : f32
    %550 = vector.broadcast %cst_408 : f32 to vector<8x34xf32>
    %551 = arith.mulf %550, %549 : vector<8x34xf32>
    %c232_409 = arith.constant 232 : index
    %c0_410 = arith.constant 0 : index
    %552 = vector.load %arg10[%c232_409, %c0_410] : memref<256x34xf32, #tpu.memory_space<vmem>>, vector<8x34xf32>
    %cst_411 = arith.constant 7.500000e-01 : f32
    %553 = vector.broadcast %cst_411 : f32 to vector<8x34xf32>
    %554 = arith.mulf %553, %552 : vector<8x34xf32>
    %555 = arith.addf %551, %554 : vector<8x34xf32>
    %556 = arith.truncf %555 : vector<8x34xf32> to vector<8x34xbf16>
    %c0_412 = arith.constant 0 : index
    %c2179 = arith.constant 2179 : index
    %557 = vector.load %arg11[%c0_412, %c2179] : memref<8x2688xbf16, #tpu.memory_space<vmem>>, vector<8x34xbf16>
    tpu.vector_store %arg11[%c0_412, %c2179], %556 {strides = array<i32>} : memref<8x2688xbf16, #tpu.memory_space<vmem>>, vector<8x34xbf16>,
    %c232_413 = arith.constant 232 : index
    %c0_414 = arith.constant 0 : index
    %558 = vector.load %arg10[%c232_413, %c0_414] : memref<256x34xf32, #tpu.memory_space<vmem>>, vector<8x34xf32>
    %cst_415 = arith.constant 7.500000e-01 : f32
    %559 = vector.broadcast %cst_415 : f32 to vector<8x34xf32>
    %560 = arith.mulf %559, %558 : vector<8x34xf32>
    %c240 = arith.constant 240 : index
    %c0_416 = arith.constant 0 : index
    %561 = vector.load %arg10[%c240, %c0_416] : memref<256x34xf32, #tpu.memory_space<vmem>>, vector<8x34xf32>
    %cst_417 = arith.constant 2.500000e-01 : f32
    %562 = vector.broadcast %cst_417 : f32 to vector<8x34xf32>
    %563 = arith.mulf %562, %561 : vector<8x34xf32>
    %564 = arith.addf %560, %563 : vector<8x34xf32>
    %565 = arith.truncf %564 : vector<8x34xf32> to vector<8x34xbf16>
    %c0_418 = arith.constant 0 : index
    %c2213 = arith.constant 2213 : index
    %566 = vector.load %arg11[%c0_418, %c2213] : memref<8x2688xbf16, #tpu.memory_space<vmem>>, vector<8x34xbf16>
    tpu.vector_store %arg11[%c0_418, %c2213], %565 {strides = array<i32>} : memref<8x2688xbf16, #tpu.memory_space<vmem>>, vector<8x34xbf16>,
    %c232_419 = arith.constant 232 : index
    %c0_420 = arith.constant 0 : index
    %567 = vector.load %arg10[%c232_419, %c0_420] : memref<256x34xf32, #tpu.memory_space<vmem>>, vector<8x34xf32>
    %cst_421 = arith.constant 2.500000e-01 : f32
    %568 = vector.broadcast %cst_421 : f32 to vector<8x34xf32>
    %569 = arith.mulf %568, %567 : vector<8x34xf32>
    %c240_422 = arith.constant 240 : index
    %c0_423 = arith.constant 0 : index
    %570 = vector.load %arg10[%c240_422, %c0_423] : memref<256x34xf32, #tpu.memory_space<vmem>>, vector<8x34xf32>
    %cst_424 = arith.constant 7.500000e-01 : f32
    %571 = vector.broadcast %cst_424 : f32 to vector<8x34xf32>
    %572 = arith.mulf %571, %570 : vector<8x34xf32>
    %573 = arith.addf %569, %572 : vector<8x34xf32>
    %574 = arith.truncf %573 : vector<8x34xf32> to vector<8x34xbf16>
    %c0_425 = arith.constant 0 : index
    %c2247 = arith.constant 2247 : index
    %575 = vector.load %arg11[%c0_425, %c2247] : memref<8x2688xbf16, #tpu.memory_space<vmem>>, vector<8x34xbf16>
    tpu.vector_store %arg11[%c0_425, %c2247], %574 {strides = array<i32>} : memref<8x2688xbf16, #tpu.memory_space<vmem>>, vector<8x34xbf16>,
    %c240_426 = arith.constant 240 : index
    %c0_427 = arith.constant 0 : index
    %576 = vector.load %arg10[%c240_426, %c0_427] : memref<256x34xf32, #tpu.memory_space<vmem>>, vector<8x34xf32>
    %cst_428 = arith.constant 7.500000e-01 : f32
    %577 = vector.broadcast %cst_428 : f32 to vector<8x34xf32>
    %578 = arith.mulf %577, %576 : vector<8x34xf32>
    %c248 = arith.constant 248 : index
    %c0_429 = arith.constant 0 : index
    %579 = vector.load %arg10[%c248, %c0_429] : memref<256x34xf32, #tpu.memory_space<vmem>>, vector<8x34xf32>
    %cst_430 = arith.constant 2.500000e-01 : f32
    %580 = vector.broadcast %cst_430 : f32 to vector<8x34xf32>
    %581 = arith.mulf %580, %579 : vector<8x34xf32>
    %582 = arith.addf %578, %581 : vector<8x34xf32>
    %583 = arith.truncf %582 : vector<8x34xf32> to vector<8x34xbf16>
    %c0_431 = arith.constant 0 : index
    %c2281 = arith.constant 2281 : index
    %584 = vector.load %arg11[%c0_431, %c2281] : memref<8x2688xbf16, #tpu.memory_space<vmem>>, vector<8x34xbf16>
    tpu.vector_store %arg11[%c0_431, %c2281], %583 {strides = array<i32>} : memref<8x2688xbf16, #tpu.memory_space<vmem>>, vector<8x34xbf16>,
    %c240_432 = arith.constant 240 : index
    %c0_433 = arith.constant 0 : index
    %585 = vector.load %arg10[%c240_432, %c0_433] : memref<256x34xf32, #tpu.memory_space<vmem>>, vector<8x34xf32>
    %cst_434 = arith.constant 2.500000e-01 : f32
    %586 = vector.broadcast %cst_434 : f32 to vector<8x34xf32>
    %587 = arith.mulf %586, %585 : vector<8x34xf32>
    %c248_435 = arith.constant 248 : index
    %c0_436 = arith.constant 0 : index
    %588 = vector.load %arg10[%c248_435, %c0_436] : memref<256x34xf32, #tpu.memory_space<vmem>>, vector<8x34xf32>
    %cst_437 = arith.constant 7.500000e-01 : f32
    %589 = vector.broadcast %cst_437 : f32 to vector<8x34xf32>
    %590 = arith.mulf %589, %588 : vector<8x34xf32>
    %591 = arith.addf %587, %590 : vector<8x34xf32>
    %592 = arith.truncf %591 : vector<8x34xf32> to vector<8x34xbf16>
    %c0_438 = arith.constant 0 : index
    %c2315 = arith.constant 2315 : index
    %593 = vector.load %arg11[%c0_438, %c2315] : memref<8x2688xbf16, #tpu.memory_space<vmem>>, vector<8x34xbf16>
    tpu.vector_store %arg11[%c0_438, %c2315], %592 {strides = array<i32>} : memref<8x2688xbf16, #tpu.memory_space<vmem>>, vector<8x34xbf16>,
    %c248_439 = arith.constant 248 : index
    %c0_440 = arith.constant 0 : index
    %594 = vector.load %arg10[%c248_439, %c0_440] : memref<256x34xf32, #tpu.memory_space<vmem>>, vector<8x34xf32>
    %cst_441 = arith.constant 1.000000e+00 : f32
    %595 = vector.broadcast %cst_441 : f32 to vector<8x34xf32>
    %596 = arith.mulf %595, %594 : vector<8x34xf32>
    %597 = arith.truncf %596 : vector<8x34xf32> to vector<8x34xbf16>
    %c0_442 = arith.constant 0 : index
    %c2349 = arith.constant 2349 : index
    %598 = vector.load %arg11[%c0_442, %c2349] : memref<8x2688xbf16, #tpu.memory_space<vmem>>, vector<8x34xbf16>
    tpu.vector_store %arg11[%c0_442, %c2349], %597 {strides = array<i32>} : memref<8x2688xbf16, #tpu.memory_space<vmem>>, vector<8x34xbf16>,
    %c240_443 = arith.constant 240 : index
    %c0_444 = arith.constant 0 : index
    %599 = vector.load %arg10[%c240_443, %c0_444] : memref<256x34xf32, #tpu.memory_space<vmem>>, vector<8x34xf32>
    %cst_445 = arith.constant 2.500000e-01 : f32
    %600 = vector.broadcast %cst_445 : f32 to vector<8x34xf32>
    %601 = arith.mulf %600, %599 : vector<8x34xf32>
    %c248_446 = arith.constant 248 : index
    %c0_447 = arith.constant 0 : index
    %602 = vector.load %arg10[%c248_446, %c0_447] : memref<256x34xf32, #tpu.memory_space<vmem>>, vector<8x34xf32>
    %cst_448 = arith.constant 7.500000e-01 : f32
    %603 = vector.broadcast %cst_448 : f32 to vector<8x34xf32>
    %604 = arith.mulf %603, %602 : vector<8x34xf32>
    %605 = arith.addf %601, %604 : vector<8x34xf32>
    %606 = arith.truncf %605 : vector<8x34xf32> to vector<8x34xbf16>
    %c0_449 = arith.constant 0 : index
    %c2383 = arith.constant 2383 : index
    %607 = vector.load %arg11[%c0_449, %c2383] : memref<8x2688xbf16, #tpu.memory_space<vmem>>, vector<8x34xbf16>
    tpu.vector_store %arg11[%c0_449, %c2383], %606 {strides = array<i32>} : memref<8x2688xbf16, #tpu.memory_space<vmem>>, vector<8x34xbf16>,
    %c0_450 = arith.constant 0 : index
    %c0_451 = arith.constant 0 : index
    %c0_452 = arith.constant 0 : index
    %608 = vector.load %arg4[%c0_450, %c0_451, %c0_452] : memref<9x8x8xbf16, #tpu.memory_space<vmem>>, vector<1x8x8xbf16>
    %609 = vector.shape_cast %608 : vector<1x8x8xbf16> to vector<8x8xbf16>
    %c0_453 = arith.constant 0 : index
    %c0_454 = arith.constant 0 : index
    %610 = vector.load %arg11[%c0_453, %c0_454] : memref<8x2688xbf16, #tpu.memory_space<vmem>>, vector<8x2560xbf16>
    %cst_455 = arith.constant dense<0.000000e+00> : vector<8x2560xf32>
    %611 = tpu.matmul %609, %610, %cst_455 {dimension_numbers = #tpu.dot_dimension_numbers<[1], [0], [0], [1], [0, 0, 1, 1], [], []>} : vector<8x8xbf16>, vector<8x2560xbf16>, vector<8x2560xf32> -> vector<8x2560xf32>
    %c1 = arith.constant 1 : index
    %c0_456 = arith.constant 0 : index
    %c0_457 = arith.constant 0 : index
    %612 = vector.load %arg4[%c1, %c0_456, %c0_457] : memref<9x8x8xbf16, #tpu.memory_space<vmem>>, vector<1x8x8xbf16>
    %613 = vector.shape_cast %612 : vector<1x8x8xbf16> to vector<8x8xbf16>
    %c0_458 = arith.constant 0 : index
    %c1_459 = arith.constant 1 : index
    %614 = vector.load %arg11[%c0_458, %c1_459] : memref<8x2688xbf16, #tpu.memory_space<vmem>>, vector<8x2560xbf16>
    %cst_460 = arith.constant dense<0.000000e+00> : vector<8x2560xf32>
    %615 = tpu.matmul %613, %614, %cst_460 {dimension_numbers = #tpu.dot_dimension_numbers<[1], [0], [0], [1], [0, 0, 1, 1], [], []>} : vector<8x8xbf16>, vector<8x2560xbf16>, vector<8x2560xf32> -> vector<8x2560xf32>
    %616 = arith.addf %611, %615 : vector<8x2560xf32>
    %c2 = arith.constant 2 : index
    %c0_461 = arith.constant 0 : index
    %c0_462 = arith.constant 0 : index
    %617 = vector.load %arg4[%c2, %c0_461, %c0_462] : memref<9x8x8xbf16, #tpu.memory_space<vmem>>, vector<1x8x8xbf16>
    %618 = vector.shape_cast %617 : vector<1x8x8xbf16> to vector<8x8xbf16>
    %c0_463 = arith.constant 0 : index
    %c2_464 = arith.constant 2 : index
    %619 = vector.load %arg11[%c0_463, %c2_464] : memref<8x2688xbf16, #tpu.memory_space<vmem>>, vector<8x2560xbf16>
    %cst_465 = arith.constant dense<0.000000e+00> : vector<8x2560xf32>
    %620 = tpu.matmul %618, %619, %cst_465 {dimension_numbers = #tpu.dot_dimension_numbers<[1], [0], [0], [1], [0, 0, 1, 1], [], []>} : vector<8x8xbf16>, vector<8x2560xbf16>, vector<8x2560xf32> -> vector<8x2560xf32>
    %621 = arith.addf %616, %620 : vector<8x2560xf32>
    %c3 = arith.constant 3 : index
    %c0_466 = arith.constant 0 : index
    %c0_467 = arith.constant 0 : index
    %622 = vector.load %arg4[%c3, %c0_466, %c0_467] : memref<9x8x8xbf16, #tpu.memory_space<vmem>>, vector<1x8x8xbf16>
    %623 = vector.shape_cast %622 : vector<1x8x8xbf16> to vector<8x8xbf16>
    %c0_468 = arith.constant 0 : index
    %c34 = arith.constant 34 : index
    %624 = vector.load %arg11[%c0_468, %c34] : memref<8x2688xbf16, #tpu.memory_space<vmem>>, vector<8x2560xbf16>
    %cst_469 = arith.constant dense<0.000000e+00> : vector<8x2560xf32>
    %625 = tpu.matmul %623, %624, %cst_469 {dimension_numbers = #tpu.dot_dimension_numbers<[1], [0], [0], [1], [0, 0, 1, 1], [], []>} : vector<8x8xbf16>, vector<8x2560xbf16>, vector<8x2560xf32> -> vector<8x2560xf32>
    %626 = arith.addf %621, %625 : vector<8x2560xf32>
    %c4 = arith.constant 4 : index
    %c0_470 = arith.constant 0 : index
    %c0_471 = arith.constant 0 : index
    %627 = vector.load %arg4[%c4, %c0_470, %c0_471] : memref<9x8x8xbf16, #tpu.memory_space<vmem>>, vector<1x8x8xbf16>
    %628 = vector.shape_cast %627 : vector<1x8x8xbf16> to vector<8x8xbf16>
    %c0_472 = arith.constant 0 : index
    %c35_473 = arith.constant 35 : index
    %629 = vector.load %arg11[%c0_472, %c35_473] : memref<8x2688xbf16, #tpu.memory_space<vmem>>, vector<8x2560xbf16>
    %cst_474 = arith.constant dense<0.000000e+00> : vector<8x2560xf32>
    %630 = tpu.matmul %628, %629, %cst_474 {dimension_numbers = #tpu.dot_dimension_numbers<[1], [0], [0], [1], [0, 0, 1, 1], [], []>} : vector<8x8xbf16>, vector<8x2560xbf16>, vector<8x2560xf32> -> vector<8x2560xf32>
    %631 = arith.addf %626, %630 : vector<8x2560xf32>
    %c5 = arith.constant 5 : index
    %c0_475 = arith.constant 0 : index
    %c0_476 = arith.constant 0 : index
    %632 = vector.load %arg4[%c5, %c0_475, %c0_476] : memref<9x8x8xbf16, #tpu.memory_space<vmem>>, vector<1x8x8xbf16>
    %633 = vector.shape_cast %632 : vector<1x8x8xbf16> to vector<8x8xbf16>
    %c0_477 = arith.constant 0 : index
    %c36 = arith.constant 36 : index
    %634 = vector.load %arg11[%c0_477, %c36] : memref<8x2688xbf16, #tpu.memory_space<vmem>>, vector<8x2560xbf16>
    %cst_478 = arith.constant dense<0.000000e+00> : vector<8x2560xf32>
    %635 = tpu.matmul %633, %634, %cst_478 {dimension_numbers = #tpu.dot_dimension_numbers<[1], [0], [0], [1], [0, 0, 1, 1], [], []>} : vector<8x8xbf16>, vector<8x2560xbf16>, vector<8x2560xf32> -> vector<8x2560xf32>
    %636 = arith.addf %631, %635 : vector<8x2560xf32>
    %c6 = arith.constant 6 : index
    %c0_479 = arith.constant 0 : index
    %c0_480 = arith.constant 0 : index
    %637 = vector.load %arg4[%c6, %c0_479, %c0_480] : memref<9x8x8xbf16, #tpu.memory_space<vmem>>, vector<1x8x8xbf16>
    %638 = vector.shape_cast %637 : vector<1x8x8xbf16> to vector<8x8xbf16>
    %c0_481 = arith.constant 0 : index
    %c68 = arith.constant 68 : index
    %639 = vector.load %arg11[%c0_481, %c68] : memref<8x2688xbf16, #tpu.memory_space<vmem>>, vector<8x2560xbf16>
    %cst_482 = arith.constant dense<0.000000e+00> : vector<8x2560xf32>
    %640 = tpu.matmul %638, %639, %cst_482 {dimension_numbers = #tpu.dot_dimension_numbers<[1], [0], [0], [1], [0, 0, 1, 1], [], []>} : vector<8x8xbf16>, vector<8x2560xbf16>, vector<8x2560xf32> -> vector<8x2560xf32>
    %641 = arith.addf %636, %640 : vector<8x2560xf32>
    %c7 = arith.constant 7 : index
    %c0_483 = arith.constant 0 : index
    %c0_484 = arith.constant 0 : index
    %642 = vector.load %arg4[%c7, %c0_483, %c0_484] : memref<9x8x8xbf16, #tpu.memory_space<vmem>>, vector<1x8x8xbf16>
    %643 = vector.shape_cast %642 : vector<1x8x8xbf16> to vector<8x8xbf16>
    %c0_485 = arith.constant 0 : index
    %c69_486 = arith.constant 69 : index
    %644 = vector.load %arg11[%c0_485, %c69_486] : memref<8x2688xbf16, #tpu.memory_space<vmem>>, vector<8x2560xbf16>
    %cst_487 = arith.constant dense<0.000000e+00> : vector<8x2560xf32>
    %645 = tpu.matmul %643, %644, %cst_487 {dimension_numbers = #tpu.dot_dimension_numbers<[1], [0], [0], [1], [0, 0, 1, 1], [], []>} : vector<8x8xbf16>, vector<8x2560xbf16>, vector<8x2560xf32> -> vector<8x2560xf32>
    %646 = arith.addf %641, %645 : vector<8x2560xf32>
    %c8_488 = arith.constant 8 : index
    %c0_489 = arith.constant 0 : index
    %c0_490 = arith.constant 0 : index
    %647 = vector.load %arg4[%c8_488, %c0_489, %c0_490] : memref<9x8x8xbf16, #tpu.memory_space<vmem>>, vector<1x8x8xbf16>
    %648 = vector.shape_cast %647 : vector<1x8x8xbf16> to vector<8x8xbf16>
    %c0_491 = arith.constant 0 : index
    %c70 = arith.constant 70 : index
    %649 = vector.load %arg11[%c0_491, %c70] : memref<8x2688xbf16, #tpu.memory_space<vmem>>, vector<8x2560xbf16>
    %cst_492 = arith.constant dense<0.000000e+00> : vector<8x2560xf32>
    %650 = tpu.matmul %648, %649, %cst_492 {dimension_numbers = #tpu.dot_dimension_numbers<[1], [0], [0], [1], [0, 0, 1, 1], [], []>} : vector<8x8xbf16>, vector<8x2560xbf16>, vector<8x2560xf32> -> vector<8x2560xf32>
    %651 = arith.addf %646, %650 : vector<8x2560xf32>
    %c0_493 = arith.constant 0 : index
    %c0_494 = arith.constant 0 : index
    %652 = vector.load %arg5[%c0_493, %c0_494] : memref<8x1xf32, #tpu.memory_space<vmem>>, vector<8x1xf32>
    %653 = vector.broadcast %652 : vector<8x1xf32> to vector<8x2560xf32>
    %654 = arith.addf %651, %653 : vector<8x2560xf32>
    %c0_495 = arith.constant 0 : index
    %c0_496 = arith.constant 0 : index
    %655 = vector.load %arg3[%c0_495, %c0_496] : memref<1x2560xf32, #tpu.memory_space<vmem>>, vector<1x2560xf32>
    %656 = vector.broadcast %655 : vector<1x2560xf32> to vector<8x2560xf32>
    %657 = arith.mulf %654, %656 : vector<8x2560xf32>
    %658 = arith.truncf %657 : vector<8x2560xf32> to vector<8x2560xbf16>
    %659 = vector.extract_strided_slice %658 {offsets = [0, 0], sizes = [8, 1156], strides = [1, 1]} : vector<8x2560xbf16> to vector<8x1156xbf16>
    %c0_497 = arith.constant 0 : index
    %c35_498 = arith.constant 35 : index
    %660 = vector.load %arg11[%c0_497, %c35_498] : memref<8x2688xbf16, #tpu.memory_space<vmem>>, vector<8x1156xbf16>
    tpu.vector_store %arg11[%c0_497, %c35_498], %659 {strides = array<i32>} : memref<8x2688xbf16, #tpu.memory_space<vmem>>, vector<8x1156xbf16>,
    %661 = vector.extract_strided_slice %658 {offsets = [0, 1226], sizes = [8, 1156], strides = [1, 1]} : vector<8x2560xbf16> to vector<8x1156xbf16>
    %c0_499 = arith.constant 0 : index
    %c1261_500 = arith.constant 1261 : index
    %662 = vector.load %arg11[%c0_499, %c1261_500] : memref<8x2688xbf16, #tpu.memory_space<vmem>>, vector<8x1156xbf16>
    tpu.vector_store %arg11[%c0_499, %c1261_500], %661 {strides = array<i32>} : memref<8x2688xbf16, #tpu.memory_space<vmem>>, vector<8x1156xbf16>,
    %c0_501 = arith.constant 0 : index
    %c0_502 = arith.constant 0 : index
    %c0_503 = arith.constant 0 : index
    %663 = vector.load %arg6[%c0_501, %c0_502, %c0_503] : memref<9x8x8xbf16, #tpu.memory_space<vmem>>, vector<1x8x8xbf16>
    %664 = vector.shape_cast %663 : vector<1x8x8xbf16> to vector<8x8xbf16>
    %c0_504 = arith.constant 0 : index
    %c0_505 = arith.constant 0 : index
    %665 = vector.load %arg11[%c0_504, %c0_505] : memref<8x2688xbf16, #tpu.memory_space<vmem>>, vector<8x2560xbf16>
    %cst_506 = arith.constant dense<0.000000e+00> : vector<8x2560xf32>
    %666 = tpu.matmul %664, %665, %cst_506 {dimension_numbers = #tpu.dot_dimension_numbers<[1], [0], [0], [1], [0, 0, 1, 1], [], []>} : vector<8x8xbf16>, vector<8x2560xbf16>, vector<8x2560xf32> -> vector<8x2560xf32>
    %c1_507 = arith.constant 1 : index
    %c0_508 = arith.constant 0 : index
    %c0_509 = arith.constant 0 : index
    %667 = vector.load %arg6[%c1_507, %c0_508, %c0_509] : memref<9x8x8xbf16, #tpu.memory_space<vmem>>, vector<1x8x8xbf16>
    %668 = vector.shape_cast %667 : vector<1x8x8xbf16> to vector<8x8xbf16>
    %c0_510 = arith.constant 0 : index
    %c1_511 = arith.constant 1 : index
    %669 = vector.load %arg11[%c0_510, %c1_511] : memref<8x2688xbf16, #tpu.memory_space<vmem>>, vector<8x2560xbf16>
    %cst_512 = arith.constant dense<0.000000e+00> : vector<8x2560xf32>
    %670 = tpu.matmul %668, %669, %cst_512 {dimension_numbers = #tpu.dot_dimension_numbers<[1], [0], [0], [1], [0, 0, 1, 1], [], []>} : vector<8x8xbf16>, vector<8x2560xbf16>, vector<8x2560xf32> -> vector<8x2560xf32>
    %671 = arith.addf %666, %670 : vector<8x2560xf32>
    %c2_513 = arith.constant 2 : index
    %c0_514 = arith.constant 0 : index
    %c0_515 = arith.constant 0 : index
    %672 = vector.load %arg6[%c2_513, %c0_514, %c0_515] : memref<9x8x8xbf16, #tpu.memory_space<vmem>>, vector<1x8x8xbf16>
    %673 = vector.shape_cast %672 : vector<1x8x8xbf16> to vector<8x8xbf16>
    %c0_516 = arith.constant 0 : index
    %c2_517 = arith.constant 2 : index
    %674 = vector.load %arg11[%c0_516, %c2_517] : memref<8x2688xbf16, #tpu.memory_space<vmem>>, vector<8x2560xbf16>
    %cst_518 = arith.constant dense<0.000000e+00> : vector<8x2560xf32>
    %675 = tpu.matmul %673, %674, %cst_518 {dimension_numbers = #tpu.dot_dimension_numbers<[1], [0], [0], [1], [0, 0, 1, 1], [], []>} : vector<8x8xbf16>, vector<8x2560xbf16>, vector<8x2560xf32> -> vector<8x2560xf32>
    %676 = arith.addf %671, %675 : vector<8x2560xf32>
    %c3_519 = arith.constant 3 : index
    %c0_520 = arith.constant 0 : index
    %c0_521 = arith.constant 0 : index
    %677 = vector.load %arg6[%c3_519, %c0_520, %c0_521] : memref<9x8x8xbf16, #tpu.memory_space<vmem>>, vector<1x8x8xbf16>
    %678 = vector.shape_cast %677 : vector<1x8x8xbf16> to vector<8x8xbf16>
    %c0_522 = arith.constant 0 : index
    %c34_523 = arith.constant 34 : index
    %679 = vector.load %arg11[%c0_522, %c34_523] : memref<8x2688xbf16, #tpu.memory_space<vmem>>, vector<8x2560xbf16>
    %cst_524 = arith.constant dense<0.000000e+00> : vector<8x2560xf32>
    %680 = tpu.matmul %678, %679, %cst_524 {dimension_numbers = #tpu.dot_dimension_numbers<[1], [0], [0], [1], [0, 0, 1, 1], [], []>} : vector<8x8xbf16>, vector<8x2560xbf16>, vector<8x2560xf32> -> vector<8x2560xf32>
    %681 = arith.addf %676, %680 : vector<8x2560xf32>
    %c4_525 = arith.constant 4 : index
    %c0_526 = arith.constant 0 : index
    %c0_527 = arith.constant 0 : index
    %682 = vector.load %arg6[%c4_525, %c0_526, %c0_527] : memref<9x8x8xbf16, #tpu.memory_space<vmem>>, vector<1x8x8xbf16>
    %683 = vector.shape_cast %682 : vector<1x8x8xbf16> to vector<8x8xbf16>
    %c0_528 = arith.constant 0 : index
    %c35_529 = arith.constant 35 : index
    %684 = vector.load %arg11[%c0_528, %c35_529] : memref<8x2688xbf16, #tpu.memory_space<vmem>>, vector<8x2560xbf16>
    %cst_530 = arith.constant dense<0.000000e+00> : vector<8x2560xf32>
    %685 = tpu.matmul %683, %684, %cst_530 {dimension_numbers = #tpu.dot_dimension_numbers<[1], [0], [0], [1], [0, 0, 1, 1], [], []>} : vector<8x8xbf16>, vector<8x2560xbf16>, vector<8x2560xf32> -> vector<8x2560xf32>
    %686 = arith.addf %681, %685 : vector<8x2560xf32>
    %c5_531 = arith.constant 5 : index
    %c0_532 = arith.constant 0 : index
    %c0_533 = arith.constant 0 : index
    %687 = vector.load %arg6[%c5_531, %c0_532, %c0_533] : memref<9x8x8xbf16, #tpu.memory_space<vmem>>, vector<1x8x8xbf16>
    %688 = vector.shape_cast %687 : vector<1x8x8xbf16> to vector<8x8xbf16>
    %c0_534 = arith.constant 0 : index
    %c36_535 = arith.constant 36 : index
    %689 = vector.load %arg11[%c0_534, %c36_535] : memref<8x2688xbf16, #tpu.memory_space<vmem>>, vector<8x2560xbf16>
    %cst_536 = arith.constant dense<0.000000e+00> : vector<8x2560xf32>
    %690 = tpu.matmul %688, %689, %cst_536 {dimension_numbers = #tpu.dot_dimension_numbers<[1], [0], [0], [1], [0, 0, 1, 1], [], []>} : vector<8x8xbf16>, vector<8x2560xbf16>, vector<8x2560xf32> -> vector<8x2560xf32>
    %691 = arith.addf %686, %690 : vector<8x2560xf32>
    %c6_537 = arith.constant 6 : index
    %c0_538 = arith.constant 0 : index
    %c0_539 = arith.constant 0 : index
    %692 = vector.load %arg6[%c6_537, %c0_538, %c0_539] : memref<9x8x8xbf16, #tpu.memory_space<vmem>>, vector<1x8x8xbf16>
    %693 = vector.shape_cast %692 : vector<1x8x8xbf16> to vector<8x8xbf16>
    %c0_540 = arith.constant 0 : index
    %c68_541 = arith.constant 68 : index
    %694 = vector.load %arg11[%c0_540, %c68_541] : memref<8x2688xbf16, #tpu.memory_space<vmem>>, vector<8x2560xbf16>
    %cst_542 = arith.constant dense<0.000000e+00> : vector<8x2560xf32>
    %695 = tpu.matmul %693, %694, %cst_542 {dimension_numbers = #tpu.dot_dimension_numbers<[1], [0], [0], [1], [0, 0, 1, 1], [], []>} : vector<8x8xbf16>, vector<8x2560xbf16>, vector<8x2560xf32> -> vector<8x2560xf32>
    %696 = arith.addf %691, %695 : vector<8x2560xf32>
    %c7_543 = arith.constant 7 : index
    %c0_544 = arith.constant 0 : index
    %c0_545 = arith.constant 0 : index
    %697 = vector.load %arg6[%c7_543, %c0_544, %c0_545] : memref<9x8x8xbf16, #tpu.memory_space<vmem>>, vector<1x8x8xbf16>
    %698 = vector.shape_cast %697 : vector<1x8x8xbf16> to vector<8x8xbf16>
    %c0_546 = arith.constant 0 : index
    %c69_547 = arith.constant 69 : index
    %699 = vector.load %arg11[%c0_546, %c69_547] : memref<8x2688xbf16, #tpu.memory_space<vmem>>, vector<8x2560xbf16>
    %cst_548 = arith.constant dense<0.000000e+00> : vector<8x2560xf32>
    %700 = tpu.matmul %698, %699, %cst_548 {dimension_numbers = #tpu.dot_dimension_numbers<[1], [0], [0], [1], [0, 0, 1, 1], [], []>} : vector<8x8xbf16>, vector<8x2560xbf16>, vector<8x2560xf32> -> vector<8x2560xf32>
    %701 = arith.addf %696, %700 : vector<8x2560xf32>
    %c8_549 = arith.constant 8 : index
    %c0_550 = arith.constant 0 : index
    %c0_551 = arith.constant 0 : index
    %702 = vector.load %arg6[%c8_549, %c0_550, %c0_551] : memref<9x8x8xbf16, #tpu.memory_space<vmem>>, vector<1x8x8xbf16>
    %703 = vector.shape_cast %702 : vector<1x8x8xbf16> to vector<8x8xbf16>
    %c0_552 = arith.constant 0 : index
    %c70_553 = arith.constant 70 : index
    %704 = vector.load %arg11[%c0_552, %c70_553] : memref<8x2688xbf16, #tpu.memory_space<vmem>>, vector<8x2560xbf16>
    %cst_554 = arith.constant dense<0.000000e+00> : vector<8x2560xf32>
    %705 = tpu.matmul %703, %704, %cst_554 {dimension_numbers = #tpu.dot_dimension_numbers<[1], [0], [0], [1], [0, 0, 1, 1], [], []>} : vector<8x8xbf16>, vector<8x2560xbf16>, vector<8x2560xf32> -> vector<8x2560xf32>
    %706 = arith.addf %701, %705 : vector<8x2560xf32>
    %c0_555 = arith.constant 0 : index
    %c0_556 = arith.constant 0 : index
    %707 = vector.load %arg7[%c0_555, %c0_556] : memref<8x1xf32, #tpu.memory_space<vmem>>, vector<8x1xf32>
    %708 = vector.broadcast %707 : vector<8x1xf32> to vector<8x2560xf32>
    %709 = arith.mulf %706, %708 : vector<8x2560xf32>
    %c0_557 = arith.constant 0 : index
    %c0_558 = arith.constant 0 : index
    %710 = vector.load %arg8[%c0_557, %c0_558] : memref<8x1xf32, #tpu.memory_space<vmem>>, vector<8x1xf32>
    %711 = vector.broadcast %710 : vector<8x1xf32> to vector<8x2560xf32>
    %712 = arith.addf %709, %711 : vector<8x2560xf32>
    %c0_559 = arith.constant 0 : index
    %c0_560 = arith.constant 0 : index
    %c0_561 = arith.constant 0 : index
    %713 = vector.load %arg9[%c0_559, %c0_560, %c0_561] : memref<1x8x2560xf32, #tpu.memory_space<vmem>>, vector<1x8x2560xf32>
    %714 = vector.shape_cast %713 : vector<1x8x2560xf32> to vector<8x2560xf32>
    %715 = vector.shape_cast %712 : vector<8x2560xf32> to vector<1x8x2560xf32>
    tpu.vector_store %arg9[%c0_559, %c0_560, %c0_561], %715 {strides = array<i32>} : memref<1x8x2560xf32, #tpu.memory_space<vmem>>, vector<1x8x2560xf32>,
    return
  }
  func.func @transform_0(%arg0: i32) -> (i32, i32, i32) {
    %c0_i32 = arith.constant 0 : i32
    %c0_i32_0 = arith.constant 0 : i32
    %c0_i32_1 = arith.constant 0 : i32
    return %arg0, %c0_i32, %c0_i32_0 : i32, i32, i32
  }
  func.func @transform_1(%arg0: i32) -> (i32, i32) {
    %c0_i32 = arith.constant 0 : i32
    %c0_i32_0 = arith.constant 0 : i32
    %c0_i32_1 = arith.constant 0 : i32
    return %c0_i32, %c0_i32_0 : i32, i32
  }
  func.func @transform_2(%arg0: i32) -> (i32, i32) {
    %c0_i32 = arith.constant 0 : i32
    %c0_i32_0 = arith.constant 0 : i32
    %c0_i32_1 = arith.constant 0 : i32
    return %c0_i32, %c0_i32_0 : i32, i32
  }
  func.func @transform_3(%arg0: i32) -> (i32, i32, i32) {
    %c0_i32 = arith.constant 0 : i32
    %c0_i32_0 = arith.constant 0 : i32
    %c0_i32_1 = arith.constant 0 : i32
    %c0_i32_2 = arith.constant 0 : i32
    return %c0_i32, %c0_i32_0, %c0_i32_1 : i32, i32, i32
  }
  func.func @transform_4(%arg0: i32) -> (i32, i32) {
    %c0_i32 = arith.constant 0 : i32
    %c0_i32_0 = arith.constant 0 : i32
    %c0_i32_1 = arith.constant 0 : i32
    return %c0_i32, %c0_i32_0 : i32, i32
  }
  func.func @transform_5(%arg0: i32) -> (i32, i32, i32) {
    %c0_i32 = arith.constant 0 : i32
    %c0_i32_0 = arith.constant 0 : i32
    %c0_i32_1 = arith.constant 0 : i32
    %c0_i32_2 = arith.constant 0 : i32
    return %c0_i32, %c0_i32_0, %c0_i32_1 : i32, i32, i32
  }
  func.func @transform_6(%arg0: i32) -> (i32, i32) {
    %c0_i32 = arith.constant 0 : i32
    %c0_i32_0 = arith.constant 0 : i32
    %c0_i32_1 = arith.constant 0 : i32
    return %c0_i32, %c0_i32_0 : i32, i32
  }
  func.func @transform_7(%arg0: i32) -> (i32, i32) {
    %c0_i32 = arith.constant 0 : i32
    %c0_i32_0 = arith.constant 0 : i32
    %c0_i32_1 = arith.constant 0 : i32
    return %c0_i32, %c0_i32_0 : i32, i32
  }
  func.func @transform_8(%arg0: i32) -> (i32, i32, i32) {
    %c0_i32 = arith.constant 0 : i32
    %c0_i32_0 = arith.constant 0 : i32
    %c0_i32_1 = arith.constant 0 : i32
    return %arg0, %c0_i32, %c0_i32_0 : i32, i32, i32
  }
}

</mosaic_0001>

<llo_original>
// kernel: up_forward.1
$region0: #{up_forward.1}
  #allocation0 [shape = 'u32[]', space=smem, size = 0x4, offset = 0x4, fixed_abs, tag = 'smem constant byte address 0x4 - core index']
  #allocation1 [shape = 'u32[72,128]{1,0:T(1,128)}', space=vmem, size = 0x9000, scoped, tag = 'internal scratch']
  #allocation2 [shape = 'f32[256,34]{1,0:T(8,128)}', space=vmem, size = 0x20000, scoped, tag = 'scratch operand']
  #allocation3 [shape = 'bf16[8,2688]{1,0:T(8,128)(2,1)}', space=vmem, size = 0xa800, scoped, tag = 'scratch operand']
  %s0 = inlined_call_operand.vmem [shape: f32[1,256,16], index: 0, kind: input, shape index: {}]
  %s1 = inlined_call_operand.vmem [shape: f32[16,34], index: 1, kind: input, shape index: {}]
  %s2 = inlined_call_operand.vmem [shape: f32[1,2560], index: 2, kind: input, shape index: {}]
  %s3 = inlined_call_operand.vmem [shape: bf16[9,8,8], index: 3, kind: input, shape index: {}]
  %s4 = inlined_call_operand.vmem [shape: f32[8,1], index: 4, kind: input, shape index: {}]
  %s5 = inlined_call_operand.vmem [shape: bf16[9,8,8], index: 5, kind: input, shape index: {}]
  %s6 = inlined_call_operand.vmem [shape: f32[8,1], index: 6, kind: input, shape index: {}]
  %s7 = inlined_call_operand.vmem [shape: f32[8,1], index: 7, kind: input, shape index: {}]
  %s8 = inlined_call_operand.vmem [shape: f32[1,8,2560], index: 8, kind: output, shape index: {}]
  %s9 = sld [smem:[#allocation0]]
  $region42: #{up_forward.1} parent=0
    _
  %s11 = ssub.s32 1, %s9
  %s12 = scalar_select 0, %s11, %s9
  // Predicated region
  $region2: #{up_forward.1} parent=0 // pred_check
    _
  $region3: #{up_forward.1} parent=0 // pred_check_branch
    %14 = sbr.rel (0) target = $region5
  $region4: #{up_forward.1} parent=0 // pred_region
    _
  $region5: #{up_forward.1} parent=0 // pred_fallthru
    _
  // Predicated region
  $region6: #{up_forward.1} parent=0 // pred_check
    _
  $region7: #{up_forward.1} parent=0 // pred_check_branch
    %16 = sbr.rel (0) target = $region9
  $region8: #{up_forward.1} parent=0 // pred_region
    _
  $region9: #{up_forward.1} parent=0 // pred_fallthru
    _
  // Predicated region
  $region10: #{up_forward.1} parent=0 // pred_check
    _
  $region11: #{up_forward.1} parent=0 // pred_check_branch
    %18 = sbr.rel (0) target = $region13
  $region12: #{up_forward.1} parent=0 // pred_region
    _
  $region13: #{up_forward.1} parent=0 // pred_fallthru
    _
  // Predicated region
  $region14: #{up_forward.1} parent=0 // pred_check
    _
  $region15: #{up_forward.1} parent=0 // pred_check_branch
    %20 = sbr.rel (0) target = $region17
  $region16: #{up_forward.1} parent=0 // pred_region
    _
  $region17: #{up_forward.1} parent=0 // pred_fallthru
    _
  // Predicated region
  $region18: #{up_forward.1} parent=0 // pred_check
    _
  $region19: #{up_forward.1} parent=0 // pred_check_branch
    %22 = sbr.rel (0) target = $region21
  $region20: #{up_forward.1} parent=0 // pred_region
    _
  $region21: #{up_forward.1} parent=0 // pred_fallthru
    _
  // Predicated region
  $region22: #{up_forward.1} parent=0 // pred_check
    _
  $region23: #{up_forward.1} parent=0 // pred_check_branch
    %24 = sbr.rel (0) target = $region25
  $region24: #{up_forward.1} parent=0 // pred_region
    _
  $region25: #{up_forward.1} parent=0 // pred_fallthru
    _
  // Predicated region
  $region26: #{up_forward.1} parent=0 // pred_check
    _
  $region27: #{up_forward.1} parent=0 // pred_check_branch
    %26 = sbr.rel (0) target = $region29
  $region28: #{up_forward.1} parent=0 // pred_region
    _
  $region29: #{up_forward.1} parent=0 // pred_fallthru
    _
  // Predicated region
  $region30: #{up_forward.1} parent=0 // pred_check
    _
  $region31: #{up_forward.1} parent=0 // pred_check_branch
    %28 = sbr.rel (0) target = $region33
  $region32: #{up_forward.1} parent=0 // pred_region
    _
  $region33: #{up_forward.1} parent=0 // pred_fallthru
    _
  %30 = vst [vmem:[#allocation3] sm:$0xff] 0
  %31 = vst [vmem:[#allocation3 + $0x8] sm:$0xff] 0
  %32 = vst [vmem:[#allocation3 + $0x10] sm:$0xff] 0
  %33 = vst [vmem:[#allocation3 + $0x18] sm:$0xff] 0
  %34 = vst [vmem:[#allocation3 + $0x20] sm:$0xff] 0
  %35 = vst [vmem:[#allocation3 + $0x28] sm:$0xff] 0
  %36 = vst [vmem:[#allocation3 + $0x30] sm:$0xff] 0
  %37 = vst [vmem:[#allocation3 + $0x38] sm:$0xff] 0
  %38 = vst [vmem:[#allocation3 + $0x40] sm:$0xff] 0
  %39 = vst [vmem:[#allocation3 + $0x48] sm:$0xff] 0
  %40 = vst [vmem:[#allocation3 + $0x50] sm:$0xf] 0
  %v41 = vld [vmem:[%s0] sm:$0xff]
  %v42 = vld [vmem:[%s0 + $0x8] sm:$0xff]
  %v43 = vld [vmem:[%s0 + $0x10] sm:$0xff]
  %v44 = vld [vmem:[%s0 + $0x18] sm:$0xff]
  %v45 = vld [vmem:[%s0 + $0x20] sm:$0xff]
  %v46 = vld [vmem:[%s0 + $0x28] sm:$0xff]
  %v47 = vld [vmem:[%s0 + $0x30] sm:$0xff]
  %v48 = vld [vmem:[%s0 + $0x38] sm:$0xff]
  %v49 = vld [vmem:[%s0 + $0x40] sm:$0xff]
  %v50 = vld [vmem:[%s0 + $0x48] sm:$0xff]
  %v51 = vld [vmem:[%s0 + $0x50] sm:$0xff]
  %v52 = vld [vmem:[%s0 + $0x58] sm:$0xff]
  %v53 = vld [vmem:[%s0 + $0x60] sm:$0xff]
  %v54 = vld [vmem:[%s0 + $0x68] sm:$0xff]
  %v55 = vld [vmem:[%s0 + $0x70] sm:$0xff]
  %v56 = vld [vmem:[%s0 + $0x78] sm:$0xff]
  %v57 = vld [vmem:[%s1] sm:$0xff]
  %v58 = vld [vmem:[%s1 + $0x8] sm:$0xff]
  %vm59 = vcmask 130048
  %v61 = vsel %vm59, %v41, 0
  %v64 = vsel %vm59, %v42, 0
  %v67 = vsel %vm59, %v43, 0
  %v70 = vsel %vm59, %v44, 0
  %v73 = vsel %vm59, %v45, 0
  %v76 = vsel %vm59, %v46, 0
  %v79 = vsel %vm59, %v47, 0
  %v82 = vsel %vm59, %v48, 0
  %v85 = vsel %vm59, %v49, 0
  %v88 = vsel %vm59, %v50, 0
  %v91 = vsel %vm59, %v51, 0
  %v94 = vsel %vm59, %v52, 0
  %v97 = vsel %vm59, %v53, 0
  %v100 = vsel %vm59, %v54, 0
  %v103 = vsel %vm59, %v55, 0
  %v106 = vsel %vm59, %v56, 0
  %108 = vmatpush.msra.mxu0 0.0
  %109 = vmatpush.msra.mxu0 0.0
  %110 = vmatpush.msra.mxu0 0.0
  %111 = vmatpush.msra.mxu0 0.0
  %112 = vmatpush.msra.mxu0 0.0
  %113 = vmatpush.msra.mxu0 0.0
  %114 = vmatpush.msra.mxu0 0.0
  %115 = vmatpush.msra.mxu0 0.0
  %116 = vmatpush.msra.mxu0 0.0
  %117 = vmatpush.msra.mxu0 0.0
  %118 = vmatpush.msra.mxu0 0.0
  %119 = vmatpush.msra.mxu0 0.0
  %120 = vmatpush.msra.mxu0 0.0
  %121 = vmatpush.msra.mxu0 0.0
  %122 = vmatpush.msra.mxu0 %v58
  %123 = vmatpush.msra.mxu0 %v57
  %124 = vmatmul.f32.gmra.mxu0 %v61
  %v125 = vpop.f32.mrf.mxu0
  %v126 = vadd.f32 0.0, %v125
  %127 = vmatmul.f32.gmra.mxu0 %v64
  %v128 = vpop.f32.mrf.mxu0
  %v129 = vadd.f32 0.0, %v128
  %130 = vmatmul.f32.gmra.mxu0 %v67
  %v131 = vpop.f32.mrf.mxu0
  %v132 = vadd.f32 0.0, %v131
  %133 = vmatmul.f32.gmra.mxu0 %v70
  %v134 = vpop.f32.mrf.mxu0
  %v135 = vadd.f32 0.0, %v134
  %136 = vmatmul.f32.gmra.mxu0 %v73
  %v137 = vpop.f32.mrf.mxu0
  %v138 = vadd.f32 0.0, %v137
  %139 = vmatmul.f32.gmra.mxu0 %v76
  %v140 = vpop.f32.mrf.mxu0
  %v141 = vadd.f32 0.0, %v140
  %142 = vmatmul.f32.gmra.mxu0 %v79
  %v143 = vpop.f32.mrf.mxu0
  %v144 = vadd.f32 0.0, %v143
  %145 = vmatmul.f32.gmra.mxu0 %v82
  %v146 = vpop.f32.mrf.mxu0
  %v147 = vadd.f32 0.0, %v146
  %148 = vmatmul.f32.gmra.mxu0 %v85
  %v149 = vpop.f32.mrf.mxu0
  %v150 = vadd.f32 0.0, %v149
  %151 = vmatmul.f32.gmra.mxu0 %v88
  %v152 = vpop.f32.mrf.mxu0
  %v153 = vadd.f32 0.0, %v152
  %154 = vmatmul.f32.gmra.mxu0 %v91
  %v155 = vpop.f32.mrf.mxu0
  %v156 = vadd.f32 0.0, %v155
  %157 = vmatmul.f32.gmra.mxu0 %v94
  %v158 = vpop.f32.mrf.mxu0
  %v159 = vadd.f32 0.0, %v158
  %160 = vmatmul.f32.gmra.mxu0 %v97
  %v161 = vpop.f32.mrf.mxu0
  %v162 = vadd.f32 0.0, %v161
  %163 = vmatmul.f32.gmra.mxu0 %v100
  %v164 = vpop.f32.mrf.mxu0
  %v165 = vadd.f32 0.0, %v164
  %166 = vmatmul.f32.gmra.mxu0 %v103
  %v167 = vpop.f32.mrf.mxu0
  %v168 = vadd.f32 0.0, %v167
  %169 = vmatmul.f32.gmra.mxu0 %v106
  %v170 = vpop.f32.mrf.mxu0
  %v171 = vadd.f32 0.0, %v170
  %172 = vdwg.mxu0
  %vm173 = vcmask 277504
  %174 = vst.msk [vmem:[#allocation2] sm:$0xff] %vm173, %v126
  %175 = vst.msk [vmem:[#allocation2 + $0x8] sm:$0xff] %vm173, %v129
  %176 = vst.msk [vmem:[#allocation2 + $0x10] sm:$0xff] %vm173, %v132
  %177 = vst.msk [vmem:[#allocation2 + $0x18] sm:$0xff] %vm173, %v135
  %178 = vst.msk [vmem:[#allocation2 + $0x20] sm:$0xff] %vm173, %v138
  %179 = vst.msk [vmem:[#allocation2 + $0x28] sm:$0xff] %vm173, %v141
  %180 = vst.msk [vmem:[#allocation2 + $0x30] sm:$0xff] %vm173, %v144
  %181 = vst.msk [vmem:[#allocation2 + $0x38] sm:$0xff] %vm173, %v147
  %182 = vst.msk [vmem:[#allocation2 + $0x40] sm:$0xff] %vm173, %v150
  %183 = vst.msk [vmem:[#allocation2 + $0x48] sm:$0xff] %vm173, %v153
  %184 = vst.msk [vmem:[#allocation2 + $0x50] sm:$0xff] %vm173, %v156
  %185 = vst.msk [vmem:[#allocation2 + $0x58] sm:$0xff] %vm173, %v159
  %186 = vst.msk [vmem:[#allocation2 + $0x60] sm:$0xff] %vm173, %v162
  %187 = vst.msk [vmem:[#allocation2 + $0x68] sm:$0xff] %vm173, %v165
  %188 = vst.msk [vmem:[#allocation2 + $0x70] sm:$0xff] %vm173, %v168
  %189 = vst.msk [vmem:[#allocation2 + $0x78] sm:$0xff] %vm173, %v171
  %v190 = vld [vmem:[%s0 + $0x80] sm:$0xff]
  %v191 = vld [vmem:[%s0 + $0x88] sm:$0xff]
  %v192 = vld [vmem:[%s0 + $0x90] sm:$0xff]
  %v193 = vld [vmem:[%s0 + $0x98] sm:$0xff]
  %v194 = vld [vmem:[%s0 + $0xa0] sm:$0xff]
  %v195 = vld [vmem:[%s0 + $0xa8] sm:$0xff]
  %v196 = vld [vmem:[%s0 + $0xb0] sm:$0xff]
  %v197 = vld [vmem:[%s0 + $0xb8] sm:$0xff]
  %v198 = vld [vmem:[%s0 + $0xc0] sm:$0xff]
  %v199 = vld [vmem:[%s0 + $0xc8] sm:$0xff]
  %v200 = vld [vmem:[%s0 + $0xd0] sm:$0xff]
  %v201 = vld [vmem:[%s0 + $0xd8] sm:$0xff]
  %v202 = vld [vmem:[%s0 + $0xe0] sm:$0xff]
  %v203 = vld [vmem:[%s0 + $0xe8] sm:$0xff]
  %v204 = vld [vmem:[%s0 + $0xf0] sm:$0xff]
  %v205 = vld [vmem:[%s0 + $0xf8] sm:$0xff]
  %v206 = vld [vmem:[%s1] sm:$0xff]
  %v207 = vld [vmem:[%s1 + $0x8] sm:$0xff]
  %v209 = vsel %vm59, %v190, 0
  %v212 = vsel %vm59, %v191, 0
  %v215 = vsel %vm59, %v192, 0
  %v218 = vsel %vm59, %v193, 0
  %v221 = vsel %vm59, %v194, 0
  %v224 = vsel %vm59, %v195, 0
  %v227 = vsel %vm59, %v196, 0
  %v230 = vsel %vm59, %v197, 0
  %v233 = vsel %vm59, %v198, 0
  %v236 = vsel %vm59, %v199, 0
  %v239 = vsel %vm59, %v200, 0
  %v242 = vsel %vm59, %v201, 0
  %v245 = vsel %vm59, %v202, 0
  %v248 = vsel %vm59, %v203, 0
  %v251 = vsel %vm59, %v204, 0
  %v254 = vsel %vm59, %v205, 0
  %256 = vmatpush.msra.mxu0 0.0
  %257 = vmatpush.msra.mxu0 0.0
  %258 = vmatpush.msra.mxu0 0.0
  %259 = vmatpush.msra.mxu0 0.0
  %260 = vmatpush.msra.mxu0 0.0
  %261 = vmatpush.msra.mxu0 0.0
  %262 = vmatpush.msra.mxu0 0.0
  %263 = vmatpush.msra.mxu0 0.0
  %264 = vmatpush.msra.mxu0 0.0
  %265 = vmatpush.msra.mxu0 0.0
  %266 = vmatpush.msra.mxu0 0.0
  %267 = vmatpush.msra.mxu0 0.0
  %268 = vmatpush.msra.mxu0 0.0
  %269 = vmatpush.msra.mxu0 0.0
  %270 = vmatpush.msra.mxu0 %v207
  %271 = vmatpush.msra.mxu0 %v206
  %272 = vmatmul.f32.gmra.mxu0 %v209
  %v273 = vpop.f32.mrf.mxu0
  %v274 = vadd.f32 0.0, %v273
  %275 = vmatmul.f32.gmra.mxu0 %v212
  %v276 = vpop.f32.mrf.mxu0
  %v277 = vadd.f32 0.0, %v276
  %278 = vmatmul.f32.gmra.mxu0 %v215
  %v279 = vpop.f32.mrf.mxu0
  %v280 = vadd.f32 0.0, %v279
  %281 = vmatmul.f32.gmra.mxu0 %v218
  %v282 = vpop.f32.mrf.mxu0
  %v283 = vadd.f32 0.0, %v282
  %284 = vmatmul.f32.gmra.mxu0 %v221
  %v285 = vpop.f32.mrf.mxu0
  %v286 = vadd.f32 0.0, %v285
  %287 = vmatmul.f32.gmra.mxu0 %v224
  %v288 = vpop.f32.mrf.mxu0
  %v289 = vadd.f32 0.0, %v288
  %290 = vmatmul.f32.gmra.mxu0 %v227
  %v291 = vpop.f32.mrf.mxu0
  %v292 = vadd.f32 0.0, %v291
  %293 = vmatmul.f32.gmra.mxu0 %v230
  %v294 = vpop.f32.mrf.mxu0
  %v295 = vadd.f32 0.0, %v294
  %296 = vmatmul.f32.gmra.mxu0 %v233
  %v297 = vpop.f32.mrf.mxu0
  %v298 = vadd.f32 0.0, %v297
  %299 = vmatmul.f32.gmra.mxu0 %v236
  %v300 = vpop.f32.mrf.mxu0
  %v301 = vadd.f32 0.0, %v300
  %302 = vmatmul.f32.gmra.mxu0 %v239
  %v303 = vpop.f32.mrf.mxu0
  %v304 = vadd.f32 0.0, %v303
  %305 = vmatmul.f32.gmra.mxu0 %v242
  %v306 = vpop.f32.mrf.mxu0
  %v307 = vadd.f32 0.0, %v306
  %308 = vmatmul.f32.gmra.mxu0 %v245
  %v309 = vpop.f32.mrf.mxu0
  %v310 = vadd.f32 0.0, %v309
  %311 = vmatmul.f32.gmra.mxu0 %v248
  %v312 = vpop.f32.mrf.mxu0
  %v313 = vadd.f32 0.0, %v312
  %314 = vmatmul.f32.gmra.mxu0 %v251
  %v315 = vpop.f32.mrf.mxu0
  %v316 = vadd.f32 0.0, %v315
  %317 = vmatmul.f32.gmra.mxu0 %v254
  %v318 = vpop.f32.mrf.mxu0
  %v319 = vadd.f32 0.0, %v318
  %320 = vdwg.mxu0
  %321 = vst.msk [vmem:[#allocation2 + $0x80] sm:$0xff] %vm173, %v274
  %322 = vst.msk [vmem:[#allocation2 + $0x88] sm:$0xff] %vm173, %v277
  %323 = vst.msk [vmem:[#allocation2 + $0x90] sm:$0xff] %vm173, %v280
  %324 = vst.msk [vmem:[#allocation2 + $0x98] sm:$0xff] %vm173, %v283
  %325 = vst.msk [vmem:[#allocation2 + $0xa0] sm:$0xff] %vm173, %v286
  %326 = vst.msk [vmem:[#allocation2 + $0xa8] sm:$0xff] %vm173, %v289
  %327 = vst.msk [vmem:[#allocation2 + $0xb0] sm:$0xff] %vm173, %v292
  %328 = vst.msk [vmem:[#allocation2 + $0xb8] sm:$0xff] %vm173, %v295
  %329 = vst.msk [vmem:[#allocation2 + $0xc0] sm:$0xff] %vm173, %v298
  %330 = vst.msk [vmem:[#allocation2 + $0xc8] sm:$0xff] %vm173, %v301
  %331 = vst.msk [vmem:[#allocation2 + $0xd0] sm:$0xff] %vm173, %v304
  %332 = vst.msk [vmem:[#allocation2 + $0xd8] sm:$0xff] %vm173, %v307
  %333 = vst.msk [vmem:[#allocation2 + $0xe0] sm:$0xff] %vm173, %v310
  %334 = vst.msk [vmem:[#allocation2 + $0xe8] sm:$0xff] %vm173, %v313
  %335 = vst.msk [vmem:[#allocation2 + $0xf0] sm:$0xff] %vm173, %v316
  %336 = vst.msk [vmem:[#allocation2 + $0xf8] sm:$0xff] %vm173, %v319
  %v337 = vld [vmem:[#allocation2] sm:$0xff]
  %v338 = vmul.f32 %v337, 0.75
  %v339 = vld [vmem:[#allocation2 + $0x8] sm:$0xff]
  %v340 = vmul.f32 %v339, 0.25
  %v341 = vadd.f32 %v338, %v340
  %v342 = vpack.c.bf16 %v341, %v341
  %344 = vrot.lane.b32.xlu0 %v342, 35
  %v345 = vpop.permute.xlu0 %344
  %vm347 = vcmask 560408
  %348 = vst.msk [vmem:[#allocation3] sm:$0xf] %vm347, %v345
  %v349 = vld [vmem:[#allocation2] sm:$0xff]
  %v350 = vpack.c.bf16 %v349, %v349
  %352 = vrot.lane.b32.xlu0 %v350, 69
  %v353 = vpop.permute.xlu0 %352
  %vm355 = vcmask 839208
  %356 = vst.msk [vmem:[#allocation3] sm:$0xf] %vm355, %v353
  %v357 = vld [vmem:[#allocation2] sm:$0xff]
  %v358 = vmul.f32 %v357, 0.75
  %v359 = vld [vmem:[#allocation2 + $0x8] sm:$0xff]
  %v360 = vmul.f32 %v359, 0.25
  %v361 = vadd.f32 %v358, %v360
  %v362 = vpack.c.bf16 %v361, %v361
  %364 = vrot.lane.b32.xlu0 %v362, 103
  %v365 = vpop.permute.xlu0 %364
  %v366 = vrot.slane %v365, 4
  %vm367 = vcmask 842752
  %v368 = vsel %vm367, %v366, %v365
  %vm370 = vcmask 1044280
  %vm371 = vcmask 72708
  %vm372 = vmor %vm371, %vm370
  %373 = vst.msk [vmem:[#allocation3] sm:$0xff] %vm372, %v368
  %v374 = vld [vmem:[#allocation2] sm:$0xff]
  %v375 = vmul.f32 %v374, 0.25
  %v376 = vld [vmem:[#allocation2 + $0x8] sm:$0xff]
  %v377 = vmul.f32 %v376, 0.75
  %v378 = vadd.f32 %v375, %v377
  %v379 = vpack.c.bf16 %v378, %v378
  %381 = vrot.lane.b32.xlu0 %v379, 9
  %v382 = vpop.permute.xlu0 %381
  %vm384 = vcmask 347208
  %385 = vst.msk [vmem:[#allocation3 + $0x4] sm:$0xf] %vm384, %v382
  %v386 = vld [vmem:[#allocation2 + $0x8] sm:$0xff]
  %v387 = vmul.f32 %v386, 0.75
  %v388 = vld [vmem:[#allocation2 + $0x10] sm:$0xff]
  %v389 = vmul.f32 %v388, 0.25
  %v390 = vadd.f32 %v387, %v389
  %v391 = vpack.c.bf16 %v390, %v390
  %393 = vrot.lane.b32.xlu0 %v391, 43
  %v394 = vpop.permute.xlu0 %393
  %vm396 = vcmask 626008
  %397 = vst.msk [vmem:[#allocation3 + $0x4] sm:$0xf] %vm396, %v394
  %v398 = vld [vmem:[#allocation2 + $0x8] sm:$0xff]
  %v399 = vmul.f32 %v398, 0.25
  %v400 = vld [vmem:[#allocation2 + $0x10] sm:$0xff]
  %v401 = vmul.f32 %v400, 0.75
  %v402 = vadd.f32 %v399, %v401
  %v403 = vpack.c.bf16 %v402, %v402
  %405 = vrot.lane.b32.xlu0 %v403, 77
  %v406 = vpop.permute.xlu0 %405
  %vm408 = vcmask 904808
  %409 = vst.msk [vmem:[#allocation3 + $0x4] sm:$0xf] %vm408, %v406
  %v410 = vld [vmem:[#allocation2 + $0x10] sm:$0xff]
  %v411 = vmul.f32 %v410, 0.75
  %v412 = vld [vmem:[#allocation2 + $0x18] sm:$0xff]
  %v413 = vmul.f32 %v412, 0.25
  %v414 = vadd.f32 %v411, %v413
  %v415 = vpack.c.bf16 %v414, %v414
  %417 = vrot.lane.b32.xlu0 %v415, 111
  %v418 = vpop.permute.xlu0 %417
  %v419 = vrot.slane %v418, 4
  %vm420 = vcmask 908288
  %v421 = vsel %vm420, %v419, %v418
  %vm423 = vcmask 1044344
  %vm424 = vcmask 138244
  %vm425 = vmor %vm424, %vm423
  %426 = vst.msk [vmem:[#allocation3 + $0x4] sm:$0xff] %vm425, %v421
  %v427 = vld [vmem:[#allocation2 + $0x10] sm:$0xff]
  %v428 = vmul.f32 %v427, 0.25
  %v429 = vld [vmem:[#allocation2 + $0x18] sm:$0xff]
  %v430 = vmul.f32 %v429, 0.75
  %v431 = vadd.f32 %v428, %v430
  %v432 = vpack.c.bf16 %v431, %v431
  %434 = vrot.lane.b32.xlu0 %v432, 17
  %v435 = vpop.permute.xlu0 %434
  %vm437 = vcmask 412808
  %438 = vst.msk [vmem:[#allocation3 + $0x8] sm:$0xf] %vm437, %v435
  %v439 = vld [vmem:[#allocation2 + $0x18] sm:$0xff]
  %v440 = vmul.f32 %v439, 0.75
  %v441 = vld [vmem:[#allocation2 + $0x20] sm:$0xff]
  %v442 = vmul.f32 %v441, 0.25
  %v443 = vadd.f32 %v440, %v442
  %v444 = vpack.c.bf16 %v443, %v443
  %446 = vrot.lane.b32.xlu0 %v444, 51
  %v447 = vpop.permute.xlu0 %446
  %vm449 = vcmask 691608
  %450 = vst.msk [vmem:[#allocation3 + $0x8] sm:$0xf] %vm449, %v447
  %v451 = vld [vmem:[#allocation2 + $0x18] sm:$0xff]
  %v452 = vmul.f32 %v451, 0.25
  %v453 = vld [vmem:[#allocation2 + $0x20] sm:$0xff]
  %v454 = vmul.f32 %v453, 0.75
  %v455 = vadd.f32 %v452, %v454
  %v456 = vpack.c.bf16 %v455, %v455
  %458 = vrot.lane.b32.xlu0 %v456, 85
  %v459 = vpop.permute.xlu0 %458
  %vm461 = vcmask 970408
  %462 = vst.msk [vmem:[#allocation3 + $0x8] sm:$0xf] %vm461, %v459
  %v463 = vld [vmem:[#allocation2 + $0x20] sm:$0xff]
  %v464 = vmul.f32 %v463, 0.75
  %v465 = vld [vmem:[#allocation2 + $0x28] sm:$0xff]
  %v466 = vmul.f32 %v465, 0.25
  %v467 = vadd.f32 %v464, %v466
  %v468 = vpack.c.bf16 %v467, %v467
  %470 = vrot.lane.b32.xlu0 %v468, 119
  %v471 = vpop.permute.xlu0 %470
  %v472 = vrot.slane %v471, 4
  %vm473 = vcmask 973824
  %v474 = vsel %vm473, %v472, %v471
  %vm476 = vcmask 1044408
  %vm477 = vcmask 203780
  %vm478 = vmor %vm477, %vm476
  %479 = vst.msk [vmem:[#allocation3 + $0x8] sm:$0xff] %vm478, %v474
  %v480 = vld [vmem:[#allocation2 + $0x20] sm:$0xff]
  %v481 = vmul.f32 %v480, 0.25
  %v482 = vld [vmem:[#allocation2 + $0x28] sm:$0xff]
  %v483 = vmul.f32 %v482, 0.75
  %v484 = vadd.f32 %v481, %v483
  %v485 = vpack.c.bf16 %v484, %v484
  %487 = vrot.lane.b32.xlu0 %v485, 25
  %v488 = vpop.permute.xlu0 %487
  %vm490 = vcmask 478408
  %491 = vst.msk [vmem:[#allocation3 + $0xc] sm:$0xf] %vm490, %v488
  %v492 = vld [vmem:[#allocation2 + $0x28] sm:$0xff]
  %v493 = vmul.f32 %v492, 0.75
  %v494 = vld [vmem:[#allocation2 + $0x30] sm:$0xff]
  %v495 = vmul.f32 %v494, 0.25
  %v496 = vadd.f32 %v493, %v495
  %v497 = vpack.c.bf16 %v496, %v496
  %499 = vrot.lane.b32.xlu0 %v497, 59
  %v500 = vpop.permute.xlu0 %499
  %vm502 = vcmask 757208
  %503 = vst.msk [vmem:[#allocation3 + $0xc] sm:$0xf] %vm502, %v500
  %v504 = vld [vmem:[#allocation2 + $0x28] sm:$0xff]
  %v505 = vmul.f32 %v504, 0.25
  %v506 = vld [vmem:[#allocation2 + $0x30] sm:$0xff]
  %v507 = vmul.f32 %v506, 0.75
  %v508 = vadd.f32 %v505, %v507
  %v509 = vpack.c.bf16 %v508, %v508
  %511 = vrot.lane.b32.xlu0 %v509, 93
  %v512 = vpop.permute.xlu0 %511
  %vm514 = vcmask 1036008
  %515 = vst.msk [vmem:[#allocation3 + $0xc] sm:$0xf] %vm514, %v512
  %v516 = vld [vmem:[#allocation2 + $0x30] sm:$0xff]
  %v517 = vmul.f32 %v516, 0.75
  %v518 = vld [vmem:[#allocation2 + $0x38] sm:$0xff]
  %v519 = vmul.f32 %v518, 0.25
  %v520 = vadd.f32 %v517, %v519
  %v521 = vpack.c.bf16 %v520, %v520
  %523 = vrot.lane.b32.xlu0 %v521, 127
  %v524 = vpop.permute.xlu0 %523
  %v525 = vrot.slane %v524, 4
  %vm526 = vcmask 1039360
  %v527 = vsel %vm526, %v525, %v524
  %vm529 = vcmask 1044472
  %vm530 = vcmask 269316
  %vm531 = vmor %vm530, %vm529
  %532 = vst.msk [vmem:[#allocation3 + $0xc] sm:$0xff] %vm531, %v527
  %v533 = vld [vmem:[#allocation2 + $0x30] sm:$0xff]
  %v534 = vmul.f32 %v533, 0.25
  %v535 = vld [vmem:[#allocation2 + $0x38] sm:$0xff]
  %v536 = vmul.f32 %v535, 0.75
  %v537 = vadd.f32 %v534, %v536
  %v538 = vpack.c.bf16 %v537, %v537
  %540 = vrot.lane.b32.xlu0 %v538, 33
  %v541 = vpop.permute.xlu0 %540
  %vm543 = vcmask 544008
  %544 = vst.msk [vmem:[#allocation3 + $0x10] sm:$0xf] %vm543, %v541
  %v545 = vld [vmem:[#allocation2 + $0x38] sm:$0xff]
  %v546 = vmul.f32 %v545, 0.75
  %v547 = vld [vmem:[#allocation2 + $0x40] sm:$0xff]
  %v548 = vmul.f32 %v547, 0.25
  %v549 = vadd.f32 %v546, %v548
  %v550 = vpack.c.bf16 %v549, %v549
  %552 = vrot.lane.b32.xlu0 %v550, 67
  %v553 = vpop.permute.xlu0 %552
  %vm555 = vcmask 822808
  %556 = vst.msk [vmem:[#allocation3 + $0x10] sm:$0xf] %vm555, %v553
  %v557 = vld [vmem:[#allocation2 + $0x38] sm:$0xff]
  %v558 = vmul.f32 %v557, 0.25
  %v559 = vld [vmem:[#allocation2 + $0x40] sm:$0xff]
  %v560 = vmul.f32 %v559, 0.75
  %v561 = vadd.f32 %v558, %v560
  %v562 = vpack.c.bf16 %v561, %v561
  %564 = vrot.lane.b32.xlu0 %v562, 101
  %v565 = vpop.permute.xlu0 %564
  %v566 = vrot.slane %v565, 4
  %vm567 = vcmask 826368
  %v568 = vsel %vm567, %v566, %v565
  %vm570 = vcmask 1044264
  %vm571 = vcmask 56324
  %vm572 = vmor %vm571, %vm570
  %573 = vst.msk [vmem:[#allocation3 + $0x10] sm:$0xff] %vm572, %v568
  %v574 = vld [vmem:[#allocation2 + $0x40] sm:$0xff]
  %v575 = vmul.f32 %v574, 0.75
  %v576 = vld [vmem:[#allocation2 + $0x48] sm:$0xff]
  %v577 = vmul.f32 %v576, 0.25
  %v578 = vadd.f32 %v575, %v577
  %v579 = vpack.c.bf16 %v578, %v578
  %581 = vrot.lane.b32.xlu0 %v579, 7
  %v582 = vpop.permute.xlu0 %581
  %vm584 = vcmask 330808
  %585 = vst.msk [vmem:[#allocation3 + $0x14] sm:$0xf] %vm584, %v582
  %v586 = vld [vmem:[#allocation2 + $0x40] sm:$0xff]
  %v587 = vmul.f32 %v586, 0.25
  %v588 = vld [vmem:[#allocation2 + $0x48] sm:$0xff]
  %v589 = vmul.f32 %v588, 0.75
  %v590 = vadd.f32 %v587, %v589
  %v591 = vpack.c.bf16 %v590, %v590
  %593 = vrot.lane.b32.xlu0 %v591, 41
  %v594 = vpop.permute.xlu0 %593
  %vm596 = vcmask 609608
  %597 = vst.msk [vmem:[#allocation3 + $0x14] sm:$0xf] %vm596, %v594
  %v598 = vld [vmem:[#allocation2 + $0x48] sm:$0xff]
  %v599 = vmul.f32 %v598, 0.75
  %v600 = vld [vmem:[#allocation2 + $0x50] sm:$0xff]
  %v601 = vmul.f32 %v600, 0.25
  %v602 = vadd.f32 %v599, %v601
  %v603 = vpack.c.bf16 %v602, %v602
  %605 = vrot.lane.b32.xlu0 %v603, 75
  %v606 = vpop.permute.xlu0 %605
  %vm608 = vcmask 888408
  %609 = vst.msk [vmem:[#allocation3 + $0x14] sm:$0xf] %vm608, %v606
  %v610 = vld [vmem:[#allocation2 + $0x48] sm:$0xff]
  %v611 = vmul.f32 %v610, 0.25
  %v612 = vld [vmem:[#allocation2 + $0x50] sm:$0xff]
  %v613 = vmul.f32 %v612, 0.75
  %v614 = vadd.f32 %v611, %v613
  %v615 = vpack.c.bf16 %v614, %v614
  %617 = vrot.lane.b32.xlu0 %v615, 109
  %v618 = vpop.permute.xlu0 %617
  %v619 = vrot.slane %v618, 4
  %vm620 = vcmask 891904
  %v621 = vsel %vm620, %v619, %v618
  %vm623 = vcmask 1044328
  %vm624 = vcmask 121860
  %vm625 = vmor %vm624, %vm623
  %626 = vst.msk [vmem:[#allocation3 + $0x14] sm:$0xff] %vm625, %v621
  %v627 = vld [vmem:[#allocation2 + $0x50] sm:$0xff]
  %v628 = vmul.f32 %v627, 0.75
  %v629 = vld [vmem:[#allocation2 + $0x58] sm:$0xff]
  %v630 = vmul.f32 %v629, 0.25
  %v631 = vadd.f32 %v628, %v630
  %v632 = vpack.c.bf16 %v631, %v631
  %634 = vrot.lane.b32.xlu0 %v632, 15
  %v635 = vpop.permute.xlu0 %634
  %vm637 = vcmask 396408
  %638 = vst.msk [vmem:[#allocation3 + $0x18] sm:$0xf] %vm637, %v635
  %v639 = vld [vmem:[#allocation2 + $0x50] sm:$0xff]
  %v640 = vmul.f32 %v639, 0.25
  %v641 = vld [vmem:[#allocation2 + $0x58] sm:$0xff]
  %v642 = vmul.f32 %v641, 0.75
  %v643 = vadd.f32 %v640, %v642
  %v644 = vpack.c.bf16 %v643, %v643
  %646 = vrot.lane.b32.xlu0 %v644, 49
  %v647 = vpop.permute.xlu0 %646
  %vm649 = vcmask 675208
  %650 = vst.msk [vmem:[#allocation3 + $0x18] sm:$0xf] %vm649, %v647
  %v651 = vld [vmem:[#allocation2 + $0x58] sm:$0xff]
  %v652 = vmul.f32 %v651, 0.75
  %v653 = vld [vmem:[#allocation2 + $0x60] sm:$0xff]
  %v654 = vmul.f32 %v653, 0.25
  %v655 = vadd.f32 %v652, %v654
  %v656 = vpack.c.bf16 %v655, %v655
  %658 = vrot.lane.b32.xlu0 %v656, 83
  %v659 = vpop.permute.xlu0 %658
  %vm661 = vcmask 954008
  %662 = vst.msk [vmem:[#allocation3 + $0x18] sm:$0xf] %vm661, %v659
  %v663 = vld [vmem:[#allocation2 + $0x58] sm:$0xff]
  %v664 = vmul.f32 %v663, 0.25
  %v665 = vld [vmem:[#allocation2 + $0x60] sm:$0xff]
  %v666 = vmul.f32 %v665, 0.75
  %v667 = vadd.f32 %v664, %v666
  %v668 = vpack.c.bf16 %v667, %v667
  %670 = vrot.lane.b32.xlu0 %v668, 117
  %v671 = vpop.permute.xlu0 %670
  %v672 = vrot.slane %v671, 4
  %vm673 = vcmask 957440
  %v674 = vsel %vm673, %v672, %v671
  %vm676 = vcmask 1044392
  %vm677 = vcmask 187396
  %vm678 = vmor %vm677, %vm676
  %679 = vst.msk [vmem:[#allocation3 + $0x18] sm:$0xff] %vm678, %v674
  %v680 = vld [vmem:[#allocation2 + $0x60] sm:$0xff]
  %v681 = vmul.f32 %v680, 0.75
  %v682 = vld [vmem:[#allocation2 + $0x68] sm:$0xff]
  %v683 = vmul.f32 %v682, 0.25
  %v684 = vadd.f32 %v681, %v683
  %v685 = vpack.c.bf16 %v684, %v684
  %687 = vrot.lane.b32.xlu0 %v685, 23
  %v688 = vpop.permute.xlu0 %687
  %vm690 = vcmask 462008
  %691 = vst.msk [vmem:[#allocation3 + $0x1c] sm:$0xf] %vm690, %v688
  %v692 = vld [vmem:[#allocation2 + $0x60] sm:$0xff]
  %v693 = vmul.f32 %v692, 0.25
  %v694 = vld [vmem:[#allocation2 + $0x68] sm:$0xff]
  %v695 = vmul.f32 %v694, 0.75
  %v696 = vadd.f32 %v693, %v695
  %v697 = vpack.c.bf16 %v696, %v696
  %699 = vrot.lane.b32.xlu0 %v697, 57
  %v700 = vpop.permute.xlu0 %699
  %vm702 = vcmask 740808
  %703 = vst.msk [vmem:[#allocation3 + $0x1c] sm:$0xf] %vm702, %v700
  %v704 = vld [vmem:[#allocation2 + $0x68] sm:$0xff]
  %v705 = vmul.f32 %v704, 0.75
  %v706 = vld [vmem:[#allocation2 + $0x70] sm:$0xff]
  %v707 = vmul.f32 %v706, 0.25
  %v708 = vadd.f32 %v705, %v707
  %v709 = vpack.c.bf16 %v708, %v708
  %711 = vrot.lane.b32.xlu0 %v709, 91
  %v712 = vpop.permute.xlu0 %711
  %vm714 = vcmask 1019608
  %715 = vst.msk [vmem:[#allocation3 + $0x1c] sm:$0xf] %vm714, %v712
  %v716 = vld [vmem:[#allocation2 + $0x68] sm:$0xff]
  %v717 = vmul.f32 %v716, 0.25
  %v718 = vld [vmem:[#allocation2 + $0x70] sm:$0xff]
  %v719 = vmul.f32 %v718, 0.75
  %v720 = vadd.f32 %v717, %v719
  %v721 = vpack.c.bf16 %v720, %v720
  %723 = vrot.lane.b32.xlu0 %v721, 125
  %v724 = vpop.permute.xlu0 %723
  %v725 = vrot.slane %v724, 4
  %vm726 = vcmask 1022976
  %v727 = vsel %vm726, %v725, %v724
  %vm729 = vcmask 1044456
  %vm730 = vcmask 252932
  %vm731 = vmor %vm730, %vm729
  %732 = vst.msk [vmem:[#allocation3 + $0x1c] sm:$0xff] %vm731, %v727
  %v733 = vld [vmem:[#allocation2 + $0x70] sm:$0xff]
  %v734 = vmul.f32 %v733, 0.75
  %v735 = vld [vmem:[#allocation2 + $0x78] sm:$0xff]
  %v736 = vmul.f32 %v735, 0.25
  %v737 = vadd.f32 %v734, %v736
  %v738 = vpack.c.bf16 %v737, %v737
  %740 = vrot.lane.b32.xlu0 %v738, 31
  %v741 = vpop.permute.xlu0 %740
  %vm743 = vcmask 527608
  %744 = vst.msk [vmem:[#allocation3 + $0x20] sm:$0xf] %vm743, %v741
  %v745 = vld [vmem:[#allocation2 + $0x70] sm:$0xff]
  %v746 = vmul.f32 %v745, 0.25
  %v747 = vld [vmem:[#allocation2 + $0x78] sm:$0xff]
  %v748 = vmul.f32 %v747, 0.75
  %v749 = vadd.f32 %v746, %v748
  %v750 = vpack.c.bf16 %v749, %v749
  %752 = vrot.lane.b32.xlu0 %v750, 65
  %v753 = vpop.permute.xlu0 %752
  %vm755 = vcmask 806408
  %756 = vst.msk [vmem:[#allocation3 + $0x20] sm:$0xf] %vm755, %v753
  %v757 = vld [vmem:[#allocation2 + $0x78] sm:$0xff]
  %v758 = vpack.c.bf16 %v757, %v757
  %760 = vrot.lane.b32.xlu0 %v758, 99
  %v761 = vpop.permute.xlu0 %760
  %v762 = vrot.slane %v761, 4
  %vm763 = vcmask 809984
  %v764 = vsel %vm763, %v762, %v761
  %vm766 = vcmask 1044248
  %vm767 = vcmask 39940
  %vm768 = vmor %vm767, %vm766
  %769 = vst.msk [vmem:[#allocation3 + $0x20] sm:$0xff] %vm768, %v764
  %v770 = vld [vmem:[#allocation2 + $0x70] sm:$0xff]
  %v771 = vmul.f32 %v770, 0.25
  %v772 = vld [vmem:[#allocation2 + $0x78] sm:$0xff]
  %v773 = vmul.f32 %v772, 0.75
  %v774 = vadd.f32 %v771, %v773
  %v775 = vpack.c.bf16 %v774, %v774
  %777 = vrot.lane.b32.xlu0 %v775, 5
  %v778 = vpop.permute.xlu0 %777
  %vm780 = vcmask 314408
  %781 = vst.msk [vmem:[#allocation3 + $0x24] sm:$0xf] %vm780, %v778
  %v782 = vld [vmem:[#allocation2 + $0x80] sm:$0xff]
  %v783 = vmul.f32 %v782, 0.75
  %v784 = vld [vmem:[#allocation2 + $0x88] sm:$0xff]
  %v785 = vmul.f32 %v784, 0.25
  %v786 = vadd.f32 %v783, %v785
  %v787 = vpack.c.bf16 %v786, %v786
  %789 = vrot.lane.b32.xlu0 %v787, 109
  %v790 = vpop.permute.xlu0 %789
  %v791 = vrot.slane %v790, 4
  %v792 = vsel %vm620, %v791, %v790
  %794 = vst.msk [vmem:[#allocation3 + $0x24] sm:$0xff] %vm625, %v792
  %v795 = vld [vmem:[#allocation2 + $0x80] sm:$0xff]
  %v796 = vpack.c.bf16 %v795, %v795
  %798 = vrot.lane.b32.xlu0 %v796, 15
  %v799 = vpop.permute.xlu0 %798
  %801 = vst.msk [vmem:[#allocation3 + $0x28] sm:$0xf] %vm637, %v799
  %v802 = vld [vmem:[#allocation2 + $0x80] sm:$0xff]
  %v803 = vmul.f32 %v802, 0.75
  %v804 = vld [vmem:[#allocation2 + $0x88] sm:$0xff]
  %v805 = vmul.f32 %v804, 0.25
  %v806 = vadd.f32 %v803, %v805
  %v807 = vpack.c.bf16 %v806, %v806
  %809 = vrot.lane.b32.xlu0 %v807, 49
  %v810 = vpop.permute.xlu0 %809
  %812 = vst.msk [vmem:[#allocation3 + $0x28] sm:$0xf] %vm649, %v810
  %v813 = vld [vmem:[#allocation2 + $0x80] sm:$0xff]
  %v814 = vmul.f32 %v813, 0.25
  %v815 = vld [vmem:[#allocation2 + $0x88] sm:$0xff]
  %v816 = vmul.f32 %v815, 0.75
  %v817 = vadd.f32 %v814, %v816
  %v818 = vpack.c.bf16 %v817, %v817
  %820 = vrot.lane.b32.xlu0 %v818, 83
  %v821 = vpop.permute.xlu0 %820
  %823 = vst.msk [vmem:[#allocation3 + $0x28] sm:$0xf] %vm661, %v821
  %v824 = vld [vmem:[#allocation2 + $0x88] sm:$0xff]
  %v825 = vmul.f32 %v824, 0.75
  %v826 = vld [vmem:[#allocation2 + $0x90] sm:$0xff]
  %v827 = vmul.f32 %v826, 0.25
  %v828 = vadd.f32 %v825, %v827
  %v829 = vpack.c.bf16 %v828, %v828
  %831 = vrot.lane.b32.xlu0 %v829, 117
  %v832 = vpop.permute.xlu0 %831
  %v833 = vrot.slane %v832, 4
  %v834 = vsel %vm673, %v833, %v832
  %836 = vst.msk [vmem:[#allocation3 + $0x28] sm:$0xff] %vm678, %v834
  %v837 = vld [vmem:[#allocation2 + $0x88] sm:$0xff]
  %v838 = vmul.f32 %v837, 0.25
  %v839 = vld [vmem:[#allocation2 + $0x90] sm:$0xff]
  %v840 = vmul.f32 %v839, 0.75
  %v841 = vadd.f32 %v838, %v840
  %v842 = vpack.c.bf16 %v841, %v841
  %844 = vrot.lane.b32.xlu0 %v842, 23
  %v845 = vpop.permute.xlu0 %844
  %847 = vst.msk [vmem:[#allocation3 + $0x2c] sm:$0xf] %vm690, %v845
  %v848 = vld [vmem:[#allocation2 + $0x90] sm:$0xff]
  %v849 = vmul.f32 %v848, 0.75
  %v850 = vld [vmem:[#allocation2 + $0x98] sm:$0xff]
  %v851 = vmul.f32 %v850, 0.25
  %v852 = vadd.f32 %v849, %v851
  %v853 = vpack.c.bf16 %v852, %v852
  %855 = vrot.lane.b32.xlu0 %v853, 57
  %v856 = vpop.permute.xlu0 %855
  %858 = vst.msk [vmem:[#allocation3 + $0x2c] sm:$0xf] %vm702, %v856
  %v859 = vld [vmem:[#allocation2 + $0x90] sm:$0xff]
  %v860 = vmul.f32 %v859, 0.25
  %v861 = vld [vmem:[#allocation2 + $0x98] sm:$0xff]
  %v862 = vmul.f32 %v861, 0.75
  %v863 = vadd.f32 %v860, %v862
  %v864 = vpack.c.bf16 %v863, %v863
  %866 = vrot.lane.b32.xlu0 %v864, 91
  %v867 = vpop.permute.xlu0 %866
  %869 = vst.msk [vmem:[#allocation3 + $0x2c] sm:$0xf] %vm714, %v867
  %v870 = vld [vmem:[#allocation2 + $0x98] sm:$0xff]
  %v871 = vmul.f32 %v870, 0.75
  %v872 = vld [vmem:[#allocation2 + $0xa0] sm:$0xff]
  %v873 = vmul.f32 %v872, 0.25
  %v874 = vadd.f32 %v871, %v873
  %v875 = vpack.c.bf16 %v874, %v874
  %877 = vrot.lane.b32.xlu0 %v875, 125
  %v878 = vpop.permute.xlu0 %877
  %v879 = vrot.slane %v878, 4
  %v880 = vsel %vm726, %v879, %v878
  %882 = vst.msk [vmem:[#allocation3 + $0x2c] sm:$0xff] %vm731, %v880
  %v883 = vld [vmem:[#allocation2 + $0x98] sm:$0xff]
  %v884 = vmul.f32 %v883, 0.25
  %v885 = vld [vmem:[#allocation2 + $0xa0] sm:$0xff]
  %v886 = vmul.f32 %v885, 0.75
  %v887 = vadd.f32 %v884, %v886
  %v888 = vpack.c.bf16 %v887, %v887
  %890 = vrot.lane.b32.xlu0 %v888, 31
  %v891 = vpop.permute.xlu0 %890
  %893 = vst.msk [vmem:[#allocation3 + $0x30] sm:$0xf] %vm743, %v891
  %v894 = vld [vmem:[#allocation2 + $0xa0] sm:$0xff]
  %v895 = vmul.f32 %v894, 0.75
  %v896 = vld [vmem:[#allocation2 + $0xa8] sm:$0xff]
  %v897 = vmul.f32 %v896, 0.25
  %v898 = vadd.f32 %v895, %v897
  %v899 = vpack.c.bf16 %v898, %v898
  %901 = vrot.lane.b32.xlu0 %v899, 65
  %v902 = vpop.permute.xlu0 %901
  %904 = vst.msk [vmem:[#allocation3 + $0x30] sm:$0xf] %vm755, %v902
  %v905 = vld [vmem:[#allocation2 + $0xa0] sm:$0xff]
  %v906 = vmul.f32 %v905, 0.25
  %v907 = vld [vmem:[#allocation2 + $0xa8] sm:$0xff]
  %v908 = vmul.f32 %v907, 0.75
  %v909 = vadd.f32 %v906, %v908
  %v910 = vpack.c.bf16 %v909, %v909
  %912 = vrot.lane.b32.xlu0 %v910, 99
  %v913 = vpop.permute.xlu0 %912
  %v914 = vrot.slane %v913, 4
  %v915 = vsel %vm763, %v914, %v913
  %917 = vst.msk [vmem:[#allocation3 + $0x30] sm:$0xff] %vm768, %v915
  %v918 = vld [vmem:[#allocation2 + $0xa8] sm:$0xff]
  %v919 = vmul.f32 %v918, 0.75
  %v920 = vld [vmem:[#allocation2 + $0xb0] sm:$0xff]
  %v921 = vmul.f32 %v920, 0.25
  %v922 = vadd.f32 %v919, %v921
  %v923 = vpack.c.bf16 %v922, %v922
  %925 = vrot.lane.b32.xlu0 %v923, 5
  %v926 = vpop.permute.xlu0 %925
  %928 = vst.msk [vmem:[#allocation3 + $0x34] sm:$0xf] %vm780, %v926
  %v929 = vld [vmem:[#allocation2 + $0xa8] sm:$0xff]
  %v930 = vmul.f32 %v929, 0.25
  %v931 = vld [vmem:[#allocation2 + $0xb0] sm:$0xff]
  %v932 = vmul.f32 %v931, 0.75
  %v933 = vadd.f32 %v930, %v932
  %v934 = vpack.c.bf16 %v933, %v933
  %936 = vrot.lane.b32.xlu0 %v934, 39
  %v937 = vpop.permute.xlu0 %936
  %vm939 = vcmask 593208
  %940 = vst.msk [vmem:[#allocation3 + $0x34] sm:$0xf] %vm939, %v937
  %v941 = vld [vmem:[#allocation2 + $0xb0] sm:$0xff]
  %v942 = vmul.f32 %v941, 0.75
  %v943 = vld [vmem:[#allocation2 + $0xb8] sm:$0xff]
  %v944 = vmul.f32 %v943, 0.25
  %v945 = vadd.f32 %v942, %v944
  %v946 = vpack.c.bf16 %v945, %v945
  %948 = vrot.lane.b32.xlu0 %v946, 73
  %v949 = vpop.permute.xlu0 %948
  %vm951 = vcmask 872008
  %952 = vst.msk [vmem:[#allocation3 + $0x34] sm:$0xf] %vm951, %v949
  %v953 = vld [vmem:[#allocation2 + $0xb0] sm:$0xff]
  %v954 = vmul.f32 %v953, 0.25
  %v955 = vld [vmem:[#allocation2 + $0xb8] sm:$0xff]
  %v956 = vmul.f32 %v955, 0.75
  %v957 = vadd.f32 %v954, %v956
  %v958 = vpack.c.bf16 %v957, %v957
  %960 = vrot.lane.b32.xlu0 %v958, 107
  %v961 = vpop.permute.xlu0 %960
  %v962 = vrot.slane %v961, 4
  %vm963 = vcmask 875520
  %v964 = vsel %vm963, %v962, %v961
  %vm966 = vcmask 1044312
  %vm967 = vcmask 105476
  %vm968 = vmor %vm967, %vm966
  %969 = vst.msk [vmem:[#allocation3 + $0x34] sm:$0xff] %vm968, %v964
  %v970 = vld [vmem:[#allocation2 + $0xb8] sm:$0xff]
  %v971 = vmul.f32 %v970, 0.75
  %v972 = vld [vmem:[#allocation2 + $0xc0] sm:$0xff]
  %v973 = vmul.f32 %v972, 0.25
  %v974 = vadd.f32 %v971, %v973
  %v975 = vpack.c.bf16 %v974, %v974
  %977 = vrot.lane.b32.xlu0 %v975, 13
  %v978 = vpop.permute.xlu0 %977
  %vm980 = vcmask 380008
  %981 = vst.msk [vmem:[#allocation3 + $0x38] sm:$0xf] %vm980, %v978
  %v982 = vld [vmem:[#allocation2 + $0xb8] sm:$0xff]
  %v983 = vmul.f32 %v982, 0.25
  %v984 = vld [vmem:[#allocation2 + $0xc0] sm:$0xff]
  %v985 = vmul.f32 %v984, 0.75
  %v986 = vadd.f32 %v983, %v985
  %v987 = vpack.c.bf16 %v986, %v986
  %989 = vrot.lane.b32.xlu0 %v987, 47
  %v990 = vpop.permute.xlu0 %989
  %vm992 = vcmask 658808
  %993 = vst.msk [vmem:[#allocation3 + $0x38] sm:$0xf] %vm992, %v990
  %v994 = vld [vmem:[#allocation2 + $0xc0] sm:$0xff]
  %v995 = vmul.f32 %v994, 0.75
  %v996 = vld [vmem:[#allocation2 + $0xc8] sm:$0xff]
  %v997 = vmul.f32 %v996, 0.25
  %v998 = vadd.f32 %v995, %v997
  %v999 = vpack.c.bf16 %v998, %v998
  %1001 = vrot.lane.b32.xlu0 %v999, 81
  %v1002 = vpop.permute.xlu0 %1001
  %vm1004 = vcmask 937608
  %1005 = vst.msk [vmem:[#allocation3 + $0x38] sm:$0xf] %vm1004, %v1002
  %v1006 = vld [vmem:[#allocation2 + $0xc0] sm:$0xff]
  %v1007 = vmul.f32 %v1006, 0.25
  %v1008 = vld [vmem:[#allocation2 + $0xc8] sm:$0xff]
  %v1009 = vmul.f32 %v1008, 0.75
  %v1010 = vadd.f32 %v1007, %v1009
  %v1011 = vpack.c.bf16 %v1010, %v1010
  %1013 = vrot.lane.b32.xlu0 %v1011, 115
  %v1014 = vpop.permute.xlu0 %1013
  %v1015 = vrot.slane %v1014, 4
  %vm1016 = vcmask 941056
  %v1017 = vsel %vm1016, %v1015, %v1014
  %vm1019 = vcmask 1044376
  %vm1020 = vcmask 171012
  %vm1021 = vmor %vm1020, %vm1019
  %1022 = vst.msk [vmem:[#allocation3 + $0x38] sm:$0xff] %vm1021, %v1017
  %v1023 = vld [vmem:[#allocation2 + $0xc8] sm:$0xff]
  %v1024 = vmul.f32 %v1023, 0.75
  %v1025 = vld [vmem:[#allocation2 + $0xd0] sm:$0xff]
  %v1026 = vmul.f32 %v1025, 0.25
  %v1027 = vadd.f32 %v1024, %v1026
  %v1028 = vpack.c.bf16 %v1027, %v1027
  %1030 = vrot.lane.b32.xlu0 %v1028, 21
  %v1031 = vpop.permute.xlu0 %1030
  %vm1033 = vcmask 445608
  %1034 = vst.msk [vmem:[#allocation3 + $0x3c] sm:$0xf] %vm1033, %v1031
  %v1035 = vld [vmem:[#allocation2 + $0xc8] sm:$0xff]
  %v1036 = vmul.f32 %v1035, 0.25
  %v1037 = vld [vmem:[#allocation2 + $0xd0] sm:$0xff]
  %v1038 = vmul.f32 %v1037, 0.75
  %v1039 = vadd.f32 %v1036, %v1038
  %v1040 = vpack.c.bf16 %v1039, %v1039
  %1042 = vrot.lane.b32.xlu0 %v1040, 55
  %v1043 = vpop.permute.xlu0 %1042
  %vm1045 = vcmask 724408
  %1046 = vst.msk [vmem:[#allocation3 + $0x3c] sm:$0xf] %vm1045, %v1043
  %v1047 = vld [vmem:[#allocation2 + $0xd0] sm:$0xff]
  %v1048 = vmul.f32 %v1047, 0.75
  %v1049 = vld [vmem:[#allocation2 + $0xd8] sm:$0xff]
  %v1050 = vmul.f32 %v1049, 0.25
  %v1051 = vadd.f32 %v1048, %v1050
  %v1052 = vpack.c.bf16 %v1051, %v1051
  %1054 = vrot.lane.b32.xlu0 %v1052, 89
  %v1055 = vpop.permute.xlu0 %1054
  %vm1057 = vcmask 1003208
  %1058 = vst.msk [vmem:[#allocation3 + $0x3c] sm:$0xf] %vm1057, %v1055
  %v1059 = vld [vmem:[#allocation2 + $0xd0] sm:$0xff]
  %v1060 = vmul.f32 %v1059, 0.25
  %v1061 = vld [vmem:[#allocation2 + $0xd8] sm:$0xff]
  %v1062 = vmul.f32 %v1061, 0.75
  %v1063 = vadd.f32 %v1060, %v1062
  %v1064 = vpack.c.bf16 %v1063, %v1063
  %1066 = vrot.lane.b32.xlu0 %v1064, 123
  %v1067 = vpop.permute.xlu0 %1066
  %v1068 = vrot.slane %v1067, 4
  %vm1069 = vcmask 1006592
  %v1070 = vsel %vm1069, %v1068, %v1067
  %vm1072 = vcmask 1044440
  %vm1073 = vcmask 236548
  %vm1074 = vmor %vm1073, %vm1072
  %1075 = vst.msk [vmem:[#allocation3 + $0x3c] sm:$0xff] %vm1074, %v1070
  %v1076 = vld [vmem:[#allocation2 + $0xd8] sm:$0xff]
  %v1077 = vmul.f32 %v1076, 0.75
  %v1078 = vld [vmem:[#allocation2 + $0xe0] sm:$0xff]
  %v1079 = vmul.f32 %v1078, 0.25
  %v1080 = vadd.f32 %v1077, %v1079
  %v1081 = vpack.c.bf16 %v1080, %v1080
  %1083 = vrot.lane.b32.xlu0 %v1081, 29
  %v1084 = vpop.permute.xlu0 %1083
  %vm1086 = vcmask 511208
  %1087 = vst.msk [vmem:[#allocation3 + $0x40] sm:$0xf] %vm1086, %v1084
  %v1088 = vld [vmem:[#allocation2 + $0xd8] sm:$0xff]
  %v1089 = vmul.f32 %v1088, 0.25
  %v1090 = vld [vmem:[#allocation2 + $0xe0] sm:$0xff]
  %v1091 = vmul.f32 %v1090, 0.75
  %v1092 = vadd.f32 %v1089, %v1091
  %v1093 = vpack.c.bf16 %v1092, %v1092
  %1095 = vrot.lane.b32.xlu0 %v1093, 63
  %v1096 = vpop.permute.xlu0 %1095
  %vm1098 = vcmask 790008
  %1099 = vst.msk [vmem:[#allocation3 + $0x40] sm:$0xf] %vm1098, %v1096
  %v1100 = vld [vmem:[#allocation2 + $0xe0] sm:$0xff]
  %v1101 = vmul.f32 %v1100, 0.75
  %v1102 = vld [vmem:[#allocation2 + $0xe8] sm:$0xff]
  %v1103 = vmul.f32 %v1102, 0.25
  %v1104 = vadd.f32 %v1101, %v1103
  %v1105 = vpack.c.bf16 %v1104, %v1104
  %1107 = vrot.lane.b32.xlu0 %v1105, 97
  %v1108 = vpop.permute.xlu0 %1107
  %v1109 = vrot.slane %v1108, 4
  %vm1110 = vcmask 793600
  %v1111 = vsel %vm1110, %v1109, %v1108
  %vm1113 = vcmask 1044232
  %vm1114 = vcmask 23556
  %vm1115 = vmor %vm1114, %vm1113
  %1116 = vst.msk [vmem:[#allocation3 + $0x40] sm:$0xff] %vm1115, %v1111
  %v1117 = vld [vmem:[#allocation2 + $0xe0] sm:$0xff]
  %v1118 = vmul.f32 %v1117, 0.25
  %v1119 = vld [vmem:[#allocation2 + $0xe8] sm:$0xff]
  %v1120 = vmul.f32 %v1119, 0.75
  %v1121 = vadd.f32 %v1118, %v1120
  %v1122 = vpack.c.bf16 %v1121, %v1121
  %1124 = vrot.lane.b32.xlu0 %v1122, 3
  %v1125 = vpop.permute.xlu0 %1124
  %vm1127 = vcmask 298008
  %1128 = vst.msk [vmem:[#allocation3 + $0x44] sm:$0xf] %vm1127, %v1125
  %v1129 = vld [vmem:[#allocation2 + $0xe8] sm:$0xff]
  %v1130 = vmul.f32 %v1129, 0.75
  %v1131 = vld [vmem:[#allocation2 + $0xf0] sm:$0xff]
  %v1132 = vmul.f32 %v1131, 0.25
  %v1133 = vadd.f32 %v1130, %v1132
  %v1134 = vpack.c.bf16 %v1133, %v1133
  %1136 = vrot.lane.b32.xlu0 %v1134, 37
  %v1137 = vpop.permute.xlu0 %1136
  %vm1139 = vcmask 576808
  %1140 = vst.msk [vmem:[#allocation3 + $0x44] sm:$0xf] %vm1139, %v1137
  %v1141 = vld [vmem:[#allocation2 + $0xe8] sm:$0xff]
  %v1142 = vmul.f32 %v1141, 0.25
  %v1143 = vld [vmem:[#allocation2 + $0xf0] sm:$0xff]
  %v1144 = vmul.f32 %v1143, 0.75
  %v1145 = vadd.f32 %v1142, %v1144
  %v1146 = vpack.c.bf16 %v1145, %v1145
  %1148 = vrot.lane.b32.xlu0 %v1146, 71
  %v1149 = vpop.permute.xlu0 %1148
  %vm1151 = vcmask 855608
  %1152 = vst.msk [vmem:[#allocation3 + $0x44] sm:$0xf] %vm1151, %v1149
  %v1153 = vld [vmem:[#allocation2 + $0xf0] sm:$0xff]
  %v1154 = vmul.f32 %v1153, 0.75
  %v1155 = vld [vmem:[#allocation2 + $0xf8] sm:$0xff]
  %v1156 = vmul.f32 %v1155, 0.25
  %v1157 = vadd.f32 %v1154, %v1156
  %v1158 = vpack.c.bf16 %v1157, %v1157
  %1160 = vrot.lane.b32.xlu0 %v1158, 105
  %v1161 = vpop.permute.xlu0 %1160
  %v1162 = vrot.slane %v1161, 4
  %vm1163 = vcmask 859136
  %v1164 = vsel %vm1163, %v1162, %v1161
  %vm1166 = vcmask 1044296
  %vm1167 = vcmask 89092
  %vm1168 = vmor %vm1167, %vm1166
  %1169 = vst.msk [vmem:[#allocation3 + $0x44] sm:$0xff] %vm1168, %v1164
  %v1170 = vld [vmem:[#allocation2 + $0xf0] sm:$0xff]
  %v1171 = vmul.f32 %v1170, 0.25
  %v1172 = vld [vmem:[#allocation2 + $0xf8] sm:$0xff]
  %v1173 = vmul.f32 %v1172, 0.75
  %v1174 = vadd.f32 %v1171, %v1173
  %v1175 = vpack.c.bf16 %v1174, %v1174
  %1177 = vrot.lane.b32.xlu0 %v1175, 11
  %v1178 = vpop.permute.xlu0 %1177
  %vm1180 = vcmask 363608
  %1181 = vst.msk [vmem:[#allocation3 + $0x48] sm:$0xf] %vm1180, %v1178
  %v1182 = vld [vmem:[#allocation2 + $0xf8] sm:$0xff]
  %v1183 = vpack.c.bf16 %v1182, %v1182
  %1185 = vrot.lane.b32.xlu0 %v1183, 45
  %v1186 = vpop.permute.xlu0 %1185
  %vm1188 = vcmask 642408
  %1189 = vst.msk [vmem:[#allocation3 + $0x48] sm:$0xf] %vm1188, %v1186
  %v1190 = vld [vmem:[#allocation2 + $0xf0] sm:$0xff]
  %v1191 = vmul.f32 %v1190, 0.25
  %v1192 = vld [vmem:[#allocation2 + $0xf8] sm:$0xff]
  %v1193 = vmul.f32 %v1192, 0.75
  %v1194 = vadd.f32 %v1191, %v1193
  %v1195 = vpack.c.bf16 %v1194, %v1194
  %1197 = vrot.lane.b32.xlu0 %v1195, 79
  %v1198 = vpop.permute.xlu0 %1197
  %vm1200 = vcmask 921208
  %1201 = vst.msk [vmem:[#allocation3 + $0x48] sm:$0xf] %vm1200, %v1198
  %v1202 = vld [vmem:[%s3] sm:$0xf]
  %v1203 = vld [vmem:[#allocation3] sm:$0xff]
  %v1204 = vld [vmem:[#allocation3 + $0x8] sm:$0xff]
  %v1205 = vld [vmem:[#allocation3 + $0x10] sm:$0xff]
  %v1206 = vld [vmem:[#allocation3 + $0x18] sm:$0xff]
  %v1207 = vld [vmem:[#allocation3 + $0x20] sm:$0xff]
  %v1208 = vld [vmem:[#allocation3 + $0x28] sm:$0xff]
  %v1209 = vld [vmem:[#allocation3 + $0x30] sm:$0xff]
  %v1210 = vld [vmem:[#allocation3 + $0x38] sm:$0xff]
  %v1211 = vld [vmem:[#allocation3 + $0x40] sm:$0xff]
  %v1212 = vld [vmem:[#allocation3 + $0x48] sm:$0xff]
  %s1213 = scalar_lea.vmem %s3, 4
  %v1214 = vld [vmem:[%s1213] sm:$0xf]
  %v1215 = vld [vmem:[#allocation3] sm:$0xff]
  %v1216 = vld [vmem:[#allocation3 + $0x8] sm:$0xff]
  %v1217 = vld [vmem:[#allocation3 + $0x10] sm:$0xff]
  %v1218 = vld [vmem:[#allocation3 + $0x18] sm:$0xff]
  %v1219 = vld [vmem:[#allocation3 + $0x20] sm:$0xff]
  %v1220 = vld [vmem:[#allocation3 + $0x28] sm:$0xff]
  %v1221 = vld [vmem:[#allocation3 + $0x30] sm:$0xff]
  %v1222 = vld [vmem:[#allocation3 + $0x38] sm:$0xff]
  %v1223 = vld [vmem:[#allocation3 + $0x40] sm:$0xff]
  %v1224 = vld [vmem:[#allocation3 + $0x48] sm:$0xff]
  %v1225 = vld [vmem:[#allocation3 + $0x50] sm:$0xf]
  %v1237 = vunpack.c.l.b16 %v1215
  %v1238 = vunpack.c.h.b16 %v1215
  %v1239 = vunpack.c.l.b16 %v1216
  %v1240 = vunpack.c.h.b16 %v1216
  %v1241 = vunpack.c.l.b16 %v1217
  %v1242 = vunpack.c.h.b16 %v1217
  %v1243 = vunpack.c.l.b16 %v1218
  %v1244 = vunpack.c.h.b16 %v1218
  %v1245 = vunpack.c.l.b16 %v1219
  %v1246 = vunpack.c.h.b16 %v1219
  %v1247 = vunpack.c.l.b16 %v1220
  %v1248 = vunpack.c.h.b16 %v1220
  %v1249 = vunpack.c.l.b16 %v1221
  %v1250 = vunpack.c.h.b16 %v1221
  %v1251 = vunpack.c.l.b16 %v1222
  %v1252 = vunpack.c.h.b16 %v1222
  %v1253 = vunpack.c.l.b16 %v1223
  %v1254 = vunpack.c.h.b16 %v1223
  %v1255 = vunpack.c.l.b16 %v1224
  %v1256 = vunpack.c.h.b16 %v1224
  %v1257 = vunpack.c.l.b16 %v1225
  %v1258 = vpack.c.b16 %v1237, %v1237
  %v1259 = vpack.c.b16 %v1238, %v1238
  %v1260 = vpack.c.b16 %v1239, %v1239
  %v1261 = vpack.c.b16 %v1240, %v1240
  %v1262 = vpack.c.b16 %v1241, %v1241
  %v1263 = vpack.c.b16 %v1242, %v1242
  %v1264 = vpack.c.b16 %v1243, %v1243
  %v1265 = vpack.c.b16 %v1244, %v1244
  %v1266 = vpack.c.b16 %v1245, %v1245
  %v1267 = vpack.c.b16 %v1246, %v1246
  %v1268 = vpack.c.b16 %v1247, %v1247
  %v1269 = vpack.c.b16 %v1248, %v1248
  %v1270 = vpack.c.b16 %v1249, %v1249
  %v1271 = vpack.c.b16 %v1250, %v1250
  %v1272 = vpack.c.b16 %v1251, %v1251
  %v1273 = vpack.c.b16 %v1252, %v1252
  %v1274 = vpack.c.b16 %v1253, %v1253
  %v1275 = vpack.c.b16 %v1254, %v1254
  %v1276 = vpack.c.b16 %v1255, %v1255
  %v1277 = vpack.c.b16 %v1256, %v1256
  %v1278 = vpack.c.b16 %v1257, %v1257
  %1279 = vrot.lane.b32.xlu0 %v1258, 127
  %v1280 = vpop.permute.xlu0 %1279
  %1281 = vrot.lane.b32.xlu0 %v1259, 127
  %v1282 = vpop.permute.xlu0 %1281
  %1283 = vrot.lane.b32.xlu0 %v1260, 127
  %v1284 = vpop.permute.xlu0 %1283
  %1285 = vrot.lane.b32.xlu0 %v1261, 127
  %v1286 = vpop.permute.xlu0 %1285
  %1287 = vrot.lane.b32.xlu0 %v1262, 127
  %v1288 = vpop.permute.xlu0 %1287
  %1289 = vrot.lane.b32.xlu0 %v1263, 127
  %v1290 = vpop.permute.xlu0 %1289
  %1291 = vrot.lane.b32.xlu0 %v1264, 127
  %v1292 = vpop.permute.xlu0 %1291
  %1293 = vrot.lane.b32.xlu0 %v1265, 127
  %v1294 = vpop.permute.xlu0 %1293
  %1295 = vrot.lane.b32.xlu0 %v1266, 127
  %v1296 = vpop.permute.xlu0 %1295
  %1297 = vrot.lane.b32.xlu0 %v1267, 127
  %v1298 = vpop.permute.xlu0 %1297
  %1299 = vrot.lane.b32.xlu0 %v1268, 127
  %v1300 = vpop.permute.xlu0 %1299
  %1301 = vrot.lane.b32.xlu0 %v1269, 127
  %v1302 = vpop.permute.xlu0 %1301
  %1303 = vrot.lane.b32.xlu0 %v1270, 127
  %v1304 = vpop.permute.xlu0 %1303
  %1305 = vrot.lane.b32.xlu0 %v1271, 127
  %v1306 = vpop.permute.xlu0 %1305
  %1307 = vrot.lane.b32.xlu0 %v1272, 127
  %v1308 = vpop.permute.xlu0 %1307
  %1309 = vrot.lane.b32.xlu0 %v1273, 127
  %v1310 = vpop.permute.xlu0 %1309
  %1311 = vrot.lane.b32.xlu0 %v1274, 127
  %v1312 = vpop.permute.xlu0 %1311
  %1313 = vrot.lane.b32.xlu0 %v1275, 127
  %v1314 = vpop.permute.xlu0 %1313
  %1315 = vrot.lane.b32.xlu0 %v1276, 127
  %v1316 = vpop.permute.xlu0 %1315
  %1317 = vrot.lane.b32.xlu0 %v1277, 127
  %v1318 = vpop.permute.xlu0 %1317
  %1319 = vrot.lane.b32.xlu0 %v1278, 127
  %v1320 = vpop.permute.xlu0 %1319
  %v1321 = vsel %vm526, %v1280, %v1282
  %v1322 = vsel %vm526, %v1282, %v1284
  %v1323 = vsel %vm526, %v1284, %v1286
  %v1324 = vsel %vm526, %v1286, %v1288
  %v1325 = vsel %vm526, %v1288, %v1290
  %v1326 = vsel %vm526, %v1290, %v1292
  %v1327 = vsel %vm526, %v1292, %v1294
  %v1328 = vsel %vm526, %v1294, %v1296
  %v1329 = vsel %vm526, %v1296, %v1298
  %v1330 = vsel %vm526, %v1298, %v1300
  %v1331 = vsel %vm526, %v1300, %v1302
  %v1332 = vsel %vm526, %v1302, %v1304
  %v1333 = vsel %vm526, %v1304, %v1306
  %v1334 = vsel %vm526, %v1306, %v1308
  %v1335 = vsel %vm526, %v1308, %v1310
  %v1336 = vsel %vm526, %v1310, %v1312
  %v1337 = vsel %vm526, %v1312, %v1314
  %v1338 = vsel %vm526, %v1314, %v1316
  %v1339 = vsel %vm526, %v1316, %v1318
  %v1340 = vsel %vm526, %v1318, %v1320
  %vm1341 = vcmask 64512
  %v1343 = vsel %vm1341, %v1214, 0
  %vm1345 = vcmask 1043456
  %v1347 = vsel %vm1345, %v1321, 0
  %v1350 = vsel %vm1345, %v1322, 0
  %v1353 = vsel %vm1345, %v1323, 0
  %v1356 = vsel %vm1345, %v1324, 0
  %v1359 = vsel %vm1345, %v1325, 0
  %v1362 = vsel %vm1345, %v1326, 0
  %v1365 = vsel %vm1345, %v1327, 0
  %v1368 = vsel %vm1345, %v1328, 0
  %v1371 = vsel %vm1345, %v1329, 0
  %v1374 = vsel %vm1345, %v1330, 0
  %v1377 = vsel %vm1345, %v1331, 0
  %v1380 = vsel %vm1345, %v1332, 0
  %v1383 = vsel %vm1345, %v1333, 0
  %v1386 = vsel %vm1345, %v1334, 0
  %v1389 = vsel %vm1345, %v1335, 0
  %v1392 = vsel %vm1345, %v1336, 0
  %v1395 = vsel %vm1345, %v1337, 0
  %v1398 = vsel %vm1345, %v1338, 0
  %v1401 = vsel %vm1345, %v1339, 0
  %v1404 = vsel %vm1345, %v1340, 0
  %1406 = vmatpush.bf16.msra.mxu0 0
  %1407 = vmatpush.bf16.msra.mxu0 0
  %1408 = vmatpush.bf16.msra.mxu0 0
  %1409 = vmatpush.bf16.msra.mxu0 0
  %1410 = vmatpush.bf16.msra.mxu0 0
  %1411 = vmatpush.bf16.msra.mxu0 0
  %1412 = vmatpush.bf16.msra.mxu0 0
  %1413 = vmatpush.bf16.msra.mxu0 %v1347
  %1414 = vmatmul.bf16.gmra.mxu0 %v1343
  %v1415 = vpop.f32.mrf.mxu0
  %v1416 = vadd.f32 0.0, %v1415
  %v1417 = vpop.f32.mrf.mxu0
  %1418 = vdwg.mxu0
  %1419 = vmatpush.bf16.msra.mxu0 0
  %1420 = vmatpush.bf16.msra.mxu0 0
  %1421 = vmatpush.bf16.msra.mxu0 0
  %1422 = vmatpush.bf16.msra.mxu0 0
  %1423 = vmatpush.bf16.msra.mxu0 0
  %1424 = vmatpush.bf16.msra.mxu0 0
  %1425 = vmatpush.bf16.msra.mxu0 0
  %1426 = vmatpush.bf16.msra.mxu0 %v1350
  %1427 = vmatmul.bf16.gmra.mxu0 %v1343
  %v1428 = vpop.f32.mrf.mxu0
  %v1429 = vadd.f32 0.0, %v1428
  %v1430 = vpop.f32.mrf.mxu0
  %1431 = vdwg.mxu0
  %1432 = vmatpush.bf16.msra.mxu0 0
  %1433 = vmatpush.bf16.msra.mxu0 0
  %1434 = vmatpush.bf16.msra.mxu0 0
  %1435 = vmatpush.bf16.msra.mxu0 0
  %1436 = vmatpush.bf16.msra.mxu0 0
  %1437 = vmatpush.bf16.msra.mxu0 0
  %1438 = vmatpush.bf16.msra.mxu0 0
  %1439 = vmatpush.bf16.msra.mxu0 %v1353
  %1440 = vmatmul.bf16.gmra.mxu0 %v1343
  %v1441 = vpop.f32.mrf.mxu0
  %v1442 = vadd.f32 0.0, %v1441
  %v1443 = vpop.f32.mrf.mxu0
  %1444 = vdwg.mxu0
  %1445 = vmatpush.bf16.msra.mxu0 0
  %1446 = vmatpush.bf16.msra.mxu0 0
  %1447 = vmatpush.bf16.msra.mxu0 0
  %1448 = vmatpush.bf16.msra.mxu0 0
  %1449 = vmatpush.bf16.msra.mxu0 0
  %1450 = vmatpush.bf16.msra.mxu0 0
  %1451 = vmatpush.bf16.msra.mxu0 0
  %1452 = vmatpush.bf16.msra.mxu0 %v1356
  %1453 = vmatmul.bf16.gmra.mxu0 %v1343
  %v1454 = vpop.f32.mrf.mxu0
  %v1455 = vadd.f32 0.0, %v1454
  %v1456 = vpop.f32.mrf.mxu0
  %1457 = vdwg.mxu0
  %1458 = vmatpush.bf16.msra.mxu0 0
  %1459 = vmatpush.bf16.msra.mxu0 0
  %1460 = vmatpush.bf16.msra.mxu0 0
  %1461 = vmatpush.bf16.msra.mxu0 0
  %1462 = vmatpush.bf16.msra.mxu0 0
  %1463 = vmatpush.bf16.msra.mxu0 0
  %1464 = vmatpush.bf16.msra.mxu0 0
  %1465 = vmatpush.bf16.msra.mxu0 %v1359
  %1466 = vmatmul.bf16.gmra.mxu0 %v1343
  %v1467 = vpop.f32.mrf.mxu0
  %v1468 = vadd.f32 0.0, %v1467
  %v1469 = vpop.f32.mrf.mxu0
  %1470 = vdwg.mxu0
  %1471 = vmatpush.bf16.msra.mxu0 0
  %1472 = vmatpush.bf16.msra.mxu0 0
  %1473 = vmatpush.bf16.msra.mxu0 0
  %1474 = vmatpush.bf16.msra.mxu0 0
  %1475 = vmatpush.bf16.msra.mxu0 0
  %1476 = vmatpush.bf16.msra.mxu0 0
  %1477 = vmatpush.bf16.msra.mxu0 0
  %1478 = vmatpush.bf16.msra.mxu0 %v1362
  %1479 = vmatmul.bf16.gmra.mxu0 %v1343
  %v1480 = vpop.f32.mrf.mxu0
  %v1481 = vadd.f32 0.0, %v1480
  %v1482 = vpop.f32.mrf.mxu0
  %1483 = vdwg.mxu0
  %1484 = vmatpush.bf16.msra.mxu0 0
  %1485 = vmatpush.bf16.msra.mxu0 0
  %1486 = vmatpush.bf16.msra.mxu0 0
  %1487 = vmatpush.bf16.msra.mxu0 0
  %1488 = vmatpush.bf16.msra.mxu0 0
  %1489 = vmatpush.bf16.msra.mxu0 0
  %1490 = vmatpush.bf16.msra.mxu0 0
  %1491 = vmatpush.bf16.msra.mxu0 %v1365
  %1492 = vmatmul.bf16.gmra.mxu0 %v1343
  %v1493 = vpop.f32.mrf.mxu0
  %v1494 = vadd.f32 0.0, %v1493
  %v1495 = vpop.f32.mrf.mxu0
  %1496 = vdwg.mxu0
  %1497 = vmatpush.bf16.msra.mxu0 0
  %1498 = vmatpush.bf16.msra.mxu0 0
  %1499 = vmatpush.bf16.msra.mxu0 0
  %1500 = vmatpush.bf16.msra.mxu0 0
  %1501 = vmatpush.bf16.msra.mxu0 0
  %1502 = vmatpush.bf16.msra.mxu0 0
  %1503 = vmatpush.bf16.msra.mxu0 0
  %1504 = vmatpush.bf16.msra.mxu0 %v1368
  %1505 = vmatmul.bf16.gmra.mxu0 %v1343
  %v1506 = vpop.f32.mrf.mxu0
  %v1507 = vadd.f32 0.0, %v1506
  %v1508 = vpop.f32.mrf.mxu0
  %1509 = vdwg.mxu0
  %1510 = vmatpush.bf16.msra.mxu0 0
  %1511 = vmatpush.bf16.msra.mxu0 0
  %1512 = vmatpush.bf16.msra.mxu0 0
  %1513 = vmatpush.bf16.msra.mxu0 0
  %1514 = vmatpush.bf16.msra.mxu0 0
  %1515 = vmatpush.bf16.msra.mxu0 0
  %1516 = vmatpush.bf16.msra.mxu0 0
  %1517 = vmatpush.bf16.msra.mxu0 %v1371
  %1518 = vmatmul.bf16.gmra.mxu0 %v1343
  %v1519 = vpop.f32.mrf.mxu0
  %v1520 = vadd.f32 0.0, %v1519
  %v1521 = vpop.f32.mrf.mxu0
  %1522 = vdwg.mxu0
  %1523 = vmatpush.bf16.msra.mxu0 0
  %1524 = vmatpush.bf16.msra.mxu0 0
  %1525 = vmatpush.bf16.msra.mxu0 0
  %1526 = vmatpush.bf16.msra.mxu0 0
  %1527 = vmatpush.bf16.msra.mxu0 0
  %1528 = vmatpush.bf16.msra.mxu0 0
  %1529 = vmatpush.bf16.msra.mxu0 0
  %1530 = vmatpush.bf16.msra.mxu0 %v1374
  %1531 = vmatmul.bf16.gmra.mxu0 %v1343
  %v1532 = vpop.f32.mrf.mxu0
  %v1533 = vadd.f32 0.0, %v1532
  %v1534 = vpop.f32.mrf.mxu0
  %1535 = vdwg.mxu0
  %1536 = vmatpush.bf16.msra.mxu0 0
  %1537 = vmatpush.bf16.msra.mxu0 0
  %1538 = vmatpush.bf16.msra.mxu0 0
  %1539 = vmatpush.bf16.msra.mxu0 0
  %1540 = vmatpush.bf16.msra.mxu0 0
  %1541 = vmatpush.bf16.msra.mxu0 0
  %1542 = vmatpush.bf16.msra.mxu0 0
  %1543 = vmatpush.bf16.msra.mxu0 %v1377
  %1544 = vmatmul.bf16.gmra.mxu0 %v1343
  %v1545 = vpop.f32.mrf.mxu0
  %v1546 = vadd.f32 0.0, %v1545
  %v1547 = vpop.f32.mrf.mxu0
  %1548 = vdwg.mxu0
  %1549 = vmatpush.bf16.msra.mxu0 0
  %1550 = vmatpush.bf16.msra.mxu0 0
  %1551 = vmatpush.bf16.msra.mxu0 0
  %1552 = vmatpush.bf16.msra.mxu0 0
  %1553 = vmatpush.bf16.msra.mxu0 0
  %1554 = vmatpush.bf16.msra.mxu0 0
  %1555 = vmatpush.bf16.msra.mxu0 0
  %1556 = vmatpush.bf16.msra.mxu0 %v1380
  %1557 = vmatmul.bf16.gmra.mxu0 %v1343
  %v1558 = vpop.f32.mrf.mxu0
  %v1559 = vadd.f32 0.0, %v1558
  %v1560 = vpop.f32.mrf.mxu0
  %1561 = vdwg.mxu0
  %1562 = vmatpush.bf16.msra.mxu0 0
  %1563 = vmatpush.bf16.msra.mxu0 0
  %1564 = vmatpush.bf16.msra.mxu0 0
  %1565 = vmatpush.bf16.msra.mxu0 0
  %1566 = vmatpush.bf16.msra.mxu0 0
  %1567 = vmatpush.bf16.msra.mxu0 0
  %1568 = vmatpush.bf16.msra.mxu0 0
  %1569 = vmatpush.bf16.msra.mxu0 %v1383
  %1570 = vmatmul.bf16.gmra.mxu0 %v1343
  %v1571 = vpop.f32.mrf.mxu0
  %v1572 = vadd.f32 0.0, %v1571
  %v1573 = vpop.f32.mrf.mxu0
  %1574 = vdwg.mxu0
  %1575 = vmatpush.bf16.msra.mxu0 0
  %1576 = vmatpush.bf16.msra.mxu0 0
  %1577 = vmatpush.bf16.msra.mxu0 0
  %1578 = vmatpush.bf16.msra.mxu0 0
  %1579 = vmatpush.bf16.msra.mxu0 0
  %1580 = vmatpush.bf16.msra.mxu0 0
  %1581 = vmatpush.bf16.msra.mxu0 0
  %1582 = vmatpush.bf16.msra.mxu0 %v1386
  %1583 = vmatmul.bf16.gmra.mxu0 %v1343
  %v1584 = vpop.f32.mrf.mxu0
  %v1585 = vadd.f32 0.0, %v1584
  %v1586 = vpop.f32.mrf.mxu0
  %1587 = vdwg.mxu0
  %1588 = vmatpush.bf16.msra.mxu0 0
  %1589 = vmatpush.bf16.msra.mxu0 0
  %1590 = vmatpush.bf16.msra.mxu0 0
  %1591 = vmatpush.bf16.msra.mxu0 0
  %1592 = vmatpush.bf16.msra.mxu0 0
  %1593 = vmatpush.bf16.msra.mxu0 0
  %1594 = vmatpush.bf16.msra.mxu0 0
  %1595 = vmatpush.bf16.msra.mxu0 %v1389
  %1596 = vmatmul.bf16.gmra.mxu0 %v1343
  %v1597 = vpop.f32.mrf.mxu0
  %v1598 = vadd.f32 0.0, %v1597
  %v1599 = vpop.f32.mrf.mxu0
  %1600 = vdwg.mxu0
  %1601 = vmatpush.bf16.msra.mxu0 0
  %1602 = vmatpush.bf16.msra.mxu0 0
  %1603 = vmatpush.bf16.msra.mxu0 0
  %1604 = vmatpush.bf16.msra.mxu0 0
  %1605 = vmatpush.bf16.msra.mxu0 0
  %1606 = vmatpush.bf16.msra.mxu0 0
  %1607 = vmatpush.bf16.msra.mxu0 0
  %1608 = vmatpush.bf16.msra.mxu0 %v1392
  %1609 = vmatmul.bf16.gmra.mxu0 %v1343
  %v1610 = vpop.f32.mrf.mxu0
  %v1611 = vadd.f32 0.0, %v1610
  %v1612 = vpop.f32.mrf.mxu0
  %1613 = vdwg.mxu0
  %1614 = vmatpush.bf16.msra.mxu0 0
  %1615 = vmatpush.bf16.msra.mxu0 0
  %1616 = vmatpush.bf16.msra.mxu0 0
  %1617 = vmatpush.bf16.msra.mxu0 0
  %1618 = vmatpush.bf16.msra.mxu0 0
  %1619 = vmatpush.bf16.msra.mxu0 0
  %1620 = vmatpush.bf16.msra.mxu0 0
  %1621 = vmatpush.bf16.msra.mxu0 %v1395
  %1622 = vmatmul.bf16.gmra.mxu0 %v1343
  %v1623 = vpop.f32.mrf.mxu0
  %v1624 = vadd.f32 0.0, %v1623
  %v1625 = vpop.f32.mrf.mxu0
  %1626 = vdwg.mxu0
  %1627 = vmatpush.bf16.msra.mxu0 0
  %1628 = vmatpush.bf16.msra.mxu0 0
  %1629 = vmatpush.bf16.msra.mxu0 0
  %1630 = vmatpush.bf16.msra.mxu0 0
  %1631 = vmatpush.bf16.msra.mxu0 0
  %1632 = vmatpush.bf16.msra.mxu0 0
  %1633 = vmatpush.bf16.msra.mxu0 0
  %1634 = vmatpush.bf16.msra.mxu0 %v1398
  %1635 = vmatmul.bf16.gmra.mxu0 %v1343
  %v1636 = vpop.f32.mrf.mxu0
  %v1637 = vadd.f32 0.0, %v1636
  %v1638 = vpop.f32.mrf.mxu0
  %1639 = vdwg.mxu0
  %1640 = vmatpush.bf16.msra.mxu0 0
  %1641 = vmatpush.bf16.msra.mxu0 0
  %1642 = vmatpush.bf16.msra.mxu0 0
  %1643 = vmatpush.bf16.msra.mxu0 0
  %1644 = vmatpush.bf16.msra.mxu0 0
  %1645 = vmatpush.bf16.msra.mxu0 0
  %1646 = vmatpush.bf16.msra.mxu0 0
  %1647 = vmatpush.bf16.msra.mxu0 %v1401
  %1648 = vmatmul.bf16.gmra.mxu0 %v1343
  %v1649 = vpop.f32.mrf.mxu0
  %v1650 = vadd.f32 0.0, %v1649
  %v1651 = vpop.f32.mrf.mxu0
  %1652 = vdwg.mxu0
  %1653 = vmatpush.bf16.msra.mxu0 0
  %1654 = vmatpush.bf16.msra.mxu0 0
  %1655 = vmatpush.bf16.msra.mxu0 0
  %1656 = vmatpush.bf16.msra.mxu0 0
  %1657 = vmatpush.bf16.msra.mxu0 0
  %1658 = vmatpush.bf16.msra.mxu0 0
  %1659 = vmatpush.bf16.msra.mxu0 0
  %1660 = vmatpush.bf16.msra.mxu0 %v1404
  %1661 = vmatmul.bf16.gmra.mxu0 %v1343
  %v1662 = vpop.f32.mrf.mxu0
  %v1663 = vadd.f32 0.0, %v1662
  %v1664 = vpop.f32.mrf.mxu0
  %1665 = vdwg.mxu0
  %v1676 = vunpack.c.l.b16 %v1203
  %v1677 = vunpack.c.h.b16 %v1203
  %v1678 = vunpack.c.l.b16 %v1204
  %v1679 = vunpack.c.h.b16 %v1204
  %v1680 = vunpack.c.l.b16 %v1205
  %v1681 = vunpack.c.h.b16 %v1205
  %v1682 = vunpack.c.l.b16 %v1206
  %v1683 = vunpack.c.h.b16 %v1206
  %v1684 = vunpack.c.l.b16 %v1207
  %v1685 = vunpack.c.h.b16 %v1207
  %v1686 = vunpack.c.l.b16 %v1208
  %v1687 = vunpack.c.h.b16 %v1208
  %v1688 = vunpack.c.l.b16 %v1209
  %v1689 = vunpack.c.h.b16 %v1209
  %v1690 = vunpack.c.l.b16 %v1210
  %v1691 = vunpack.c.h.b16 %v1210
  %v1692 = vunpack.c.l.b16 %v1211
  %v1693 = vunpack.c.h.b16 %v1211
  %v1694 = vunpack.c.l.b16 %v1212
  %v1695 = vunpack.c.h.b16 %v1212
  %v1696 = vpack.c.b16 %v1676, %v1676
  %v1697 = vpack.c.b16 %v1677, %v1677
  %v1698 = vpack.c.b16 %v1678, %v1678
  %v1699 = vpack.c.b16 %v1679, %v1679
  %v1700 = vpack.c.b16 %v1680, %v1680
  %v1701 = vpack.c.b16 %v1681, %v1681
  %v1702 = vpack.c.b16 %v1682, %v1682
  %v1703 = vpack.c.b16 %v1683, %v1683
  %v1704 = vpack.c.b16 %v1684, %v1684
  %v1705 = vpack.c.b16 %v1685, %v1685
  %v1706 = vpack.c.b16 %v1686, %v1686
  %v1707 = vpack.c.b16 %v1687, %v1687
  %v1708 = vpack.c.b16 %v1688, %v1688
  %v1709 = vpack.c.b16 %v1689, %v1689
  %v1710 = vpack.c.b16 %v1690, %v1690
  %v1711 = vpack.c.b16 %v1691, %v1691
  %v1712 = vpack.c.b16 %v1692, %v1692
  %v1713 = vpack.c.b16 %v1693, %v1693
  %v1714 = vpack.c.b16 %v1694, %v1694
  %v1715 = vpack.c.b16 %v1695, %v1695
  %v1717 = vsel %vm1341, %v1202, 0
  %v1720 = vsel %vm1345, %v1696, 0
  %v1723 = vsel %vm1345, %v1697, 0
  %v1726 = vsel %vm1345, %v1698, 0
  %v1729 = vsel %vm1345, %v1699, 0
  %v1732 = vsel %vm1345, %v1700, 0
  %v1735 = vsel %vm1345, %v1701, 0
  %v1738 = vsel %vm1345, %v1702, 0
  %v1741 = vsel %vm1345, %v1703, 0
  %v1744 = vsel %vm1345, %v1704, 0
  %v1747 = vsel %vm1345, %v1705, 0
  %v1750 = vsel %vm1345, %v1706, 0
  %v1753 = vsel %vm1345, %v1707, 0
  %v1756 = vsel %vm1345, %v1708, 0
  %v1759 = vsel %vm1345, %v1709, 0
  %v1762 = vsel %vm1345, %v1710, 0
  %v1765 = vsel %vm1345, %v1711, 0
  %v1768 = vsel %vm1345, %v1712, 0
  %v1771 = vsel %vm1345, %v1713, 0
  %v1774 = vsel %vm1345, %v1714, 0
  %v1777 = vsel %vm1345, %v1715, 0
  %1779 = vmatpush.bf16.msra.mxu0 0
  %1780 = vmatpush.bf16.msra.mxu0 0
  %1781 = vmatpush.bf16.msra.mxu0 0
  %1782 = vmatpush.bf16.msra.mxu0 0
  %1783 = vmatpush.bf16.msra.mxu0 0
  %1784 = vmatpush.bf16.msra.mxu0 0
  %1785 = vmatpush.bf16.msra.mxu0 0
  %1786 = vmatpush.bf16.msra.mxu0 %v1720
  %1787 = vmatmul.bf16.gmra.mxu0 %v1717
  %v1788 = vpop.f32.mrf.mxu0
  %v1789 = vadd.f32 %v1416, %v1788
  %v1790 = vpop.f32.mrf.mxu0
  %1791 = vdwg.mxu0
  %1792 = vmatpush.bf16.msra.mxu0 0
  %1793 = vmatpush.bf16.msra.mxu0 0
  %1794 = vmatpush.bf16.msra.mxu0 0
  %1795 = vmatpush.bf16.msra.mxu0 0
  %1796 = vmatpush.bf16.msra.mxu0 0
  %1797 = vmatpush.bf16.msra.mxu0 0
  %1798 = vmatpush.bf16.msra.mxu0 0
  %1799 = vmatpush.bf16.msra.mxu0 %v1723
  %1800 = vmatmul.bf16.gmra.mxu0 %v1717
  %v1801 = vpop.f32.mrf.mxu0
  %v1802 = vadd.f32 %v1429, %v1801
  %v1803 = vpop.f32.mrf.mxu0
  %1804 = vdwg.mxu0
  %1805 = vmatpush.bf16.msra.mxu0 0
  %1806 = vmatpush.bf16.msra.mxu0 0
  %1807 = vmatpush.bf16.msra.mxu0 0
  %1808 = vmatpush.bf16.msra.mxu0 0
  %1809 = vmatpush.bf16.msra.mxu0 0
  %1810 = vmatpush.bf16.msra.mxu0 0
  %1811 = vmatpush.bf16.msra.mxu0 0
  %1812 = vmatpush.bf16.msra.mxu0 %v1726
  %1813 = vmatmul.bf16.gmra.mxu0 %v1717
  %v1814 = vpop.f32.mrf.mxu0
  %v1815 = vadd.f32 %v1442, %v1814
  %v1816 = vpop.f32.mrf.mxu0
  %1817 = vdwg.mxu0
  %1818 = vmatpush.bf16.msra.mxu0 0
  %1819 = vmatpush.bf16.msra.mxu0 0
  %1820 = vmatpush.bf16.msra.mxu0 0
  %1821 = vmatpush.bf16.msra.mxu0 0
  %1822 = vmatpush.bf16.msra.mxu0 0
  %1823 = vmatpush.bf16.msra.mxu0 0
  %1824 = vmatpush.bf16.msra.mxu0 0
  %1825 = vmatpush.bf16.msra.mxu0 %v1729
  %1826 = vmatmul.bf16.gmra.mxu0 %v1717
  %v1827 = vpop.f32.mrf.mxu0
  %v1828 = vadd.f32 %v1455, %v1827
  %v1829 = vpop.f32.mrf.mxu0
  %1830 = vdwg.mxu0
  %1831 = vmatpush.bf16.msra.mxu0 0
  %1832 = vmatpush.bf16.msra.mxu0 0
  %1833 = vmatpush.bf16.msra.mxu0 0
  %1834 = vmatpush.bf16.msra.mxu0 0
  %1835 = vmatpush.bf16.msra.mxu0 0
  %1836 = vmatpush.bf16.msra.mxu0 0
  %1837 = vmatpush.bf16.msra.mxu0 0
  %1838 = vmatpush.bf16.msra.mxu0 %v1732
  %1839 = vmatmul.bf16.gmra.mxu0 %v1717
  %v1840 = vpop.f32.mrf.mxu0
  %v1841 = vadd.f32 %v1468, %v1840
  %v1842 = vpop.f32.mrf.mxu0
  %1843 = vdwg.mxu0
  %1844 = vmatpush.bf16.msra.mxu0 0
  %1845 = vmatpush.bf16.msra.mxu0 0
  %1846 = vmatpush.bf16.msra.mxu0 0
  %1847 = vmatpush.bf16.msra.mxu0 0
  %1848 = vmatpush.bf16.msra.mxu0 0
  %1849 = vmatpush.bf16.msra.mxu0 0
  %1850 = vmatpush.bf16.msra.mxu0 0
  %1851 = vmatpush.bf16.msra.mxu0 %v1735
  %1852 = vmatmul.bf16.gmra.mxu0 %v1717
  %v1853 = vpop.f32.mrf.mxu0
  %v1854 = vadd.f32 %v1481, %v1853
  %v1855 = vpop.f32.mrf.mxu0
  %1856 = vdwg.mxu0
  %1857 = vmatpush.bf16.msra.mxu0 0
  %1858 = vmatpush.bf16.msra.mxu0 0
  %1859 = vmatpush.bf16.msra.mxu0 0
  %1860 = vmatpush.bf16.msra.mxu0 0
  %1861 = vmatpush.bf16.msra.mxu0 0
  %1862 = vmatpush.bf16.msra.mxu0 0
  %1863 = vmatpush.bf16.msra.mxu0 0
  %1864 = vmatpush.bf16.msra.mxu0 %v1738
  %1865 = vmatmul.bf16.gmra.mxu0 %v1717
  %v1866 = vpop.f32.mrf.mxu0
  %v1867 = vadd.f32 %v1494, %v1866
  %v1868 = vpop.f32.mrf.mxu0
  %1869 = vdwg.mxu0
  %1870 = vmatpush.bf16.msra.mxu0 0
  %1871 = vmatpush.bf16.msra.mxu0 0
  %1872 = vmatpush.bf16.msra.mxu0 0
  %1873 = vmatpush.bf16.msra.mxu0 0
  %1874 = vmatpush.bf16.msra.mxu0 0
  %1875 = vmatpush.bf16.msra.mxu0 0
  %1876 = vmatpush.bf16.msra.mxu0 0
  %1877 = vmatpush.bf16.msra.mxu0 %v1741
  %1878 = vmatmul.bf16.gmra.mxu0 %v1717
  %v1879 = vpop.f32.mrf.mxu0
  %v1880 = vadd.f32 %v1507, %v1879
  %v1881 = vpop.f32.mrf.mxu0
  %1882 = vdwg.mxu0
  %1883 = vmatpush.bf16.msra.mxu0 0
  %1884 = vmatpush.bf16.msra.mxu0 0
  %1885 = vmatpush.bf16.msra.mxu0 0
  %1886 = vmatpush.bf16.msra.mxu0 0
  %1887 = vmatpush.bf16.msra.mxu0 0
  %1888 = vmatpush.bf16.msra.mxu0 0
  %1889 = vmatpush.bf16.msra.mxu0 0
  %1890 = vmatpush.bf16.msra.mxu0 %v1744
  %1891 = vmatmul.bf16.gmra.mxu0 %v1717
  %v1892 = vpop.f32.mrf.mxu0
  %v1893 = vadd.f32 %v1520, %v1892
  %v1894 = vpop.f32.mrf.mxu0
  %1895 = vdwg.mxu0
  %1896 = vmatpush.bf16.msra.mxu0 0
  %1897 = vmatpush.bf16.msra.mxu0 0
  %1898 = vmatpush.bf16.msra.mxu0 0
  %1899 = vmatpush.bf16.msra.mxu0 0
  %1900 = vmatpush.bf16.msra.mxu0 0
  %1901 = vmatpush.bf16.msra.mxu0 0
  %1902 = vmatpush.bf16.msra.mxu0 0
  %1903 = vmatpush.bf16.msra.mxu0 %v1747
  %1904 = vmatmul.bf16.gmra.mxu0 %v1717
  %v1905 = vpop.f32.mrf.mxu0
  %v1906 = vadd.f32 %v1533, %v1905
  %v1907 = vpop.f32.mrf.mxu0
  %1908 = vdwg.mxu0
  %1909 = vmatpush.bf16.msra.mxu0 0
  %1910 = vmatpush.bf16.msra.mxu0 0
  %1911 = vmatpush.bf16.msra.mxu0 0
  %1912 = vmatpush.bf16.msra.mxu0 0
  %1913 = vmatpush.bf16.msra.mxu0 0
  %1914 = vmatpush.bf16.msra.mxu0 0
  %1915 = vmatpush.bf16.msra.mxu0 0
  %1916 = vmatpush.bf16.msra.mxu0 %v1750
  %1917 = vmatmul.bf16.gmra.mxu0 %v1717
  %v1918 = vpop.f32.mrf.mxu0
  %v1919 = vadd.f32 %v1546, %v1918
  %v1920 = vpop.f32.mrf.mxu0
  %1921 = vdwg.mxu0
  %1922 = vmatpush.bf16.msra.mxu0 0
  %1923 = vmatpush.bf16.msra.mxu0 0
  %1924 = vmatpush.bf16.msra.mxu0 0
  %1925 = vmatpush.bf16.msra.mxu0 0
  %1926 = vmatpush.bf16.msra.mxu0 0
  %1927 = vmatpush.bf16.msra.mxu0 0
  %1928 = vmatpush.bf16.msra.mxu0 0
  %1929 = vmatpush.bf16.msra.mxu0 %v1753
  %1930 = vmatmul.bf16.gmra.mxu0 %v1717
  %v1931 = vpop.f32.mrf.mxu0
  %v1932 = vadd.f32 %v1559, %v1931
  %v1933 = vpop.f32.mrf.mxu0
  %1934 = vdwg.mxu0
  %1935 = vmatpush.bf16.msra.mxu0 0
  %1936 = vmatpush.bf16.msra.mxu0 0
  %1937 = vmatpush.bf16.msra.mxu0 0
  %1938 = vmatpush.bf16.msra.mxu0 0
  %1939 = vmatpush.bf16.msra.mxu0 0
  %1940 = vmatpush.bf16.msra.mxu0 0
  %1941 = vmatpush.bf16.msra.mxu0 0
  %1942 = vmatpush.bf16.msra.mxu0 %v1756
  %1943 = vmatmul.bf16.gmra.mxu0 %v1717
  %v1944 = vpop.f32.mrf.mxu0
  %v1945 = vadd.f32 %v1572, %v1944
  %v1946 = vpop.f32.mrf.mxu0
  %1947 = vdwg.mxu0
  %1948 = vmatpush.bf16.msra.mxu0 0
  %1949 = vmatpush.bf16.msra.mxu0 0
  %1950 = vmatpush.bf16.msra.mxu0 0
  %1951 = vmatpush.bf16.msra.mxu0 0
  %1952 = vmatpush.bf16.msra.mxu0 0
  %1953 = vmatpush.bf16.msra.mxu0 0
  %1954 = vmatpush.bf16.msra.mxu0 0
  %1955 = vmatpush.bf16.msra.mxu0 %v1759
  %1956 = vmatmul.bf16.gmra.mxu0 %v1717
  %v1957 = vpop.f32.mrf.mxu0
  %v1958 = vadd.f32 %v1585, %v1957
  %v1959 = vpop.f32.mrf.mxu0
  %1960 = vdwg.mxu0
  %1961 = vmatpush.bf16.msra.mxu0 0
  %1962 = vmatpush.bf16.msra.mxu0 0
  %1963 = vmatpush.bf16.msra.mxu0 0
  %1964 = vmatpush.bf16.msra.mxu0 0
  %1965 = vmatpush.bf16.msra.mxu0 0
  %1966 = vmatpush.bf16.msra.mxu0 0
  %1967 = vmatpush.bf16.msra.mxu0 0
  %1968 = vmatpush.bf16.msra.mxu0 %v1762
  %1969 = vmatmul.bf16.gmra.mxu0 %v1717
  %v1970 = vpop.f32.mrf.mxu0
  %v1971 = vadd.f32 %v1598, %v1970
  %v1972 = vpop.f32.mrf.mxu0
  %1973 = vdwg.mxu0
  %1974 = vmatpush.bf16.msra.mxu0 0
  %1975 = vmatpush.bf16.msra.mxu0 0
  %1976 = vmatpush.bf16.msra.mxu0 0
  %1977 = vmatpush.bf16.msra.mxu0 0
  %1978 = vmatpush.bf16.msra.mxu0 0
  %1979 = vmatpush.bf16.msra.mxu0 0
  %1980 = vmatpush.bf16.msra.mxu0 0
  %1981 = vmatpush.bf16.msra.mxu0 %v1765
  %1982 = vmatmul.bf16.gmra.mxu0 %v1717
  %v1983 = vpop.f32.mrf.mxu0
  %v1984 = vadd.f32 %v1611, %v1983
  %v1985 = vpop.f32.mrf.mxu0
  %1986 = vdwg.mxu0
  %1987 = vmatpush.bf16.msra.mxu0 0
  %1988 = vmatpush.bf16.msra.mxu0 0
  %1989 = vmatpush.bf16.msra.mxu0 0
  %1990 = vmatpush.bf16.msra.mxu0 0
  %1991 = vmatpush.bf16.msra.mxu0 0
  %1992 = vmatpush.bf16.msra.mxu0 0
  %1993 = vmatpush.bf16.msra.mxu0 0
  %1994 = vmatpush.bf16.msra.mxu0 %v1768
  %1995 = vmatmul.bf16.gmra.mxu0 %v1717
  %v1996 = vpop.f32.mrf.mxu0
  %v1997 = vadd.f32 %v1624, %v1996
  %v1998 = vpop.f32.mrf.mxu0
  %1999 = vdwg.mxu0
  %2000 = vmatpush.bf16.msra.mxu0 0
  %2001 = vmatpush.bf16.msra.mxu0 0
  %2002 = vmatpush.bf16.msra.mxu0 0
  %2003 = vmatpush.bf16.msra.mxu0 0
  %2004 = vmatpush.bf16.msra.mxu0 0
  %2005 = vmatpush.bf16.msra.mxu0 0
  %2006 = vmatpush.bf16.msra.mxu0 0
  %2007 = vmatpush.bf16.msra.mxu0 %v1771
  %2008 = vmatmul.bf16.gmra.mxu0 %v1717
  %v2009 = vpop.f32.mrf.mxu0
  %v2010 = vadd.f32 %v1637, %v2009
  %v2011 = vpop.f32.mrf.mxu0
  %2012 = vdwg.mxu0
  %2013 = vmatpush.bf16.msra.mxu0 0
  %2014 = vmatpush.bf16.msra.mxu0 0
  %2015 = vmatpush.bf16.msra.mxu0 0
  %2016 = vmatpush.bf16.msra.mxu0 0
  %2017 = vmatpush.bf16.msra.mxu0 0
  %2018 = vmatpush.bf16.msra.mxu0 0
  %2019 = vmatpush.bf16.msra.mxu0 0
  %2020 = vmatpush.bf16.msra.mxu0 %v1774
  %2021 = vmatmul.bf16.gmra.mxu0 %v1717
  %v2022 = vpop.f32.mrf.mxu0
  %v2023 = vadd.f32 %v1650, %v2022
  %v2024 = vpop.f32.mrf.mxu0
  %2025 = vdwg.mxu0
  %2026 = vmatpush.bf16.msra.mxu0 0
  %2027 = vmatpush.bf16.msra.mxu0 0
  %2028 = vmatpush.bf16.msra.mxu0 0
  %2029 = vmatpush.bf16.msra.mxu0 0
  %2030 = vmatpush.bf16.msra.mxu0 0
  %2031 = vmatpush.bf16.msra.mxu0 0
  %2032 = vmatpush.bf16.msra.mxu0 0
  %2033 = vmatpush.bf16.msra.mxu0 %v1777
  %2034 = vmatmul.bf16.gmra.mxu0 %v1717
  %v2035 = vpop.f32.mrf.mxu0
  %v2036 = vadd.f32 %v1663, %v2035
  %v2037 = vpop.f32.mrf.mxu0
  %2038 = vdwg.mxu0
  %s2039 = scalar_lea.vmem %s3, 8
  %v2040 = vld [vmem:[%s2039] sm:$0xf]
  %2041 = vrot.lane.b32.xlu0 %v1258, 126
  %v2042 = vpop.permute.xlu0 %2041
  %2043 = vrot.lane.b32.xlu0 %v1259, 126
  %v2044 = vpop.permute.xlu0 %2043
  %2045 = vrot.lane.b32.xlu0 %v1260, 126
  %v2046 = vpop.permute.xlu0 %2045
  %2047 = vrot.lane.b32.xlu0 %v1261, 126
  %v2048 = vpop.permute.xlu0 %2047
  %2049 = vrot.lane.b32.xlu0 %v1262, 126
  %v2050 = vpop.permute.xlu0 %2049
  %2051 = vrot.lane.b32.xlu0 %v1263, 126
  %v2052 = vpop.permute.xlu0 %2051
  %2053 = vrot.lane.b32.xlu0 %v1264, 126
  %v2054 = vpop.permute.xlu0 %2053
  %2055 = vrot.lane.b32.xlu0 %v1265, 126
  %v2056 = vpop.permute.xlu0 %2055
  %2057 = vrot.lane.b32.xlu0 %v1266, 126
  %v2058 = vpop.permute.xlu0 %2057
  %2059 = vrot.lane.b32.xlu0 %v1267, 126
  %v2060 = vpop.permute.xlu0 %2059
  %2061 = vrot.lane.b32.xlu0 %v1268, 126
  %v2062 = vpop.permute.xlu0 %2061
  %2063 = vrot.lane.b32.xlu0 %v1269, 126
  %v2064 = vpop.permute.xlu0 %2063
  %2065 = vrot.lane.b32.xlu0 %v1270, 126
  %v2066 = vpop.permute.xlu0 %2065
  %2067 = vrot.lane.b32.xlu0 %v1271, 126
  %v2068 = vpop.permute.xlu0 %2067
  %2069 = vrot.lane.b32.xlu0 %v1272, 126
  %v2070 = vpop.permute.xlu0 %2069
  %2071 = vrot.lane.b32.xlu0 %v1273, 126
  %v2072 = vpop.permute.xlu0 %2071
  %2073 = vrot.lane.b32.xlu0 %v1274, 126
  %v2074 = vpop.permute.xlu0 %2073
  %2075 = vrot.lane.b32.xlu0 %v1275, 126
  %v2076 = vpop.permute.xlu0 %2075
  %2077 = vrot.lane.b32.xlu0 %v1276, 126
  %v2078 = vpop.permute.xlu0 %2077
  %2079 = vrot.lane.b32.xlu0 %v1277, 126
  %v2080 = vpop.permute.xlu0 %2079
  %2081 = vrot.lane.b32.xlu0 %v1278, 126
  %v2082 = vpop.permute.xlu0 %2081
  %vm2083 = vcmask 1031168
  %v2084 = vsel %vm2083, %v2042, %v2044
  %v2085 = vsel %vm2083, %v2044, %v2046
  %v2086 = vsel %vm2083, %v2046, %v2048
  %v2087 = vsel %vm2083, %v2048, %v2050
  %v2088 = vsel %vm2083, %v2050, %v2052
  %v2089 = vsel %vm2083, %v2052, %v2054
  %v2090 = vsel %vm2083, %v2054, %v2056
  %v2091 = vsel %vm2083, %v2056, %v2058
  %v2092 = vsel %vm2083, %v2058, %v2060
  %v2093 = vsel %vm2083, %v2060, %v2062
  %v2094 = vsel %vm2083, %v2062, %v2064
  %v2095 = vsel %vm2083, %v2064, %v2066
  %v2096 = vsel %vm2083, %v2066, %v2068
  %v2097 = vsel %vm2083, %v2068, %v2070
  %v2098 = vsel %vm2083, %v2070, %v2072
  %v2099 = vsel %vm2083, %v2072, %v2074
  %v2100 = vsel %vm2083, %v2074, %v2076
  %v2101 = vsel %vm2083, %v2076, %v2078
  %v2102 = vsel %vm2083, %v2078, %v2080
  %v2103 = vsel %vm2083, %v2080, %v2082
  %v2105 = vsel %vm1341, %v2040, 0
  %v2108 = vsel %vm1345, %v2084, 0
  %v2111 = vsel %vm1345, %v2085, 0
  %v2114 = vsel %vm1345, %v2086, 0
  %v2117 = vsel %vm1345, %v2087, 0
  %v2120 = vsel %vm1345, %v2088, 0
  %v2123 = vsel %vm1345, %v2089, 0
  %v2126 = vsel %vm1345, %v2090, 0
  %v2129 = vsel %vm1345, %v2091, 0
  %v2132 = vsel %vm1345, %v2092, 0
  %v2135 = vsel %vm1345, %v2093, 0
  %v2138 = vsel %vm1345, %v2094, 0
  %v2141 = vsel %vm1345, %v2095, 0
  %v2144 = vsel %vm1345, %v2096, 0
  %v2147 = vsel %vm1345, %v2097, 0
  %v2150 = vsel %vm1345, %v2098, 0
  %v2153 = vsel %vm1345, %v2099, 0
  %v2156 = vsel %vm1345, %v2100, 0
  %v2159 = vsel %vm1345, %v2101, 0
  %v2162 = vsel %vm1345, %v2102, 0
  %v2165 = vsel %vm1345, %v2103, 0
  %2167 = vmatpush.bf16.msra.mxu0 0
  %2168 = vmatpush.bf16.msra.mxu0 0
  %2169 = vmatpush.bf16.msra.mxu0 0
  %2170 = vmatpush.bf16.msra.mxu0 0
  %2171 = vmatpush.bf16.msra.mxu0 0
  %2172 = vmatpush.bf16.msra.mxu0 0
  %2173 = vmatpush.bf16.msra.mxu0 0
  %2174 = vmatpush.bf16.msra.mxu0 %v2108
  %2175 = vmatmul.bf16.gmra.mxu0 %v2105
  %v2176 = vpop.f32.mrf.mxu0
  %v2177 = vadd.f32 0.0, %v2176
  %v2178 = vpop.f32.mrf.mxu0
  %2179 = vdwg.mxu0
  %2180 = vmatpush.bf16.msra.mxu0 0
  %2181 = vmatpush.bf16.msra.mxu0 0
  %2182 = vmatpush.bf16.msra.mxu0 0
  %2183 = vmatpush.bf16.msra.mxu0 0
  %2184 = vmatpush.bf16.msra.mxu0 0
  %2185 = vmatpush.bf16.msra.mxu0 0
  %2186 = vmatpush.bf16.msra.mxu0 0
  %2187 = vmatpush.bf16.msra.mxu0 %v2111
  %2188 = vmatmul.bf16.gmra.mxu0 %v2105
  %v2189 = vpop.f32.mrf.mxu0
  %v2190 = vadd.f32 0.0, %v2189
  %v2191 = vpop.f32.mrf.mxu0
  %2192 = vdwg.mxu0
  %2193 = vmatpush.bf16.msra.mxu0 0
  %2194 = vmatpush.bf16.msra.mxu0 0
  %2195 = vmatpush.bf16.msra.mxu0 0
  %2196 = vmatpush.bf16.msra.mxu0 0
  %2197 = vmatpush.bf16.msra.mxu0 0
  %2198 = vmatpush.bf16.msra.mxu0 0
  %2199 = vmatpush.bf16.msra.mxu0 0
  %2200 = vmatpush.bf16.msra.mxu0 %v2114
  %2201 = vmatmul.bf16.gmra.mxu0 %v2105
  %v2202 = vpop.f32.mrf.mxu0
  %v2203 = vadd.f32 0.0, %v2202
  %v2204 = vpop.f32.mrf.mxu0
  %2205 = vdwg.mxu0
  %2206 = vmatpush.bf16.msra.mxu0 0
  %2207 = vmatpush.bf16.msra.mxu0 0
  %2208 = vmatpush.bf16.msra.mxu0 0
  %2209 = vmatpush.bf16.msra.mxu0 0
  %2210 = vmatpush.bf16.msra.mxu0 0
  %2211 = vmatpush.bf16.msra.mxu0 0
  %2212 = vmatpush.bf16.msra.mxu0 0
  %2213 = vmatpush.bf16.msra.mxu0 %v2117
  %2214 = vmatmul.bf16.gmra.mxu0 %v2105
  %v2215 = vpop.f32.mrf.mxu0
  %v2216 = vadd.f32 0.0, %v2215
  %v2217 = vpop.f32.mrf.mxu0
  %2218 = vdwg.mxu0
  %2219 = vmatpush.bf16.msra.mxu0 0
  %2220 = vmatpush.bf16.msra.mxu0 0
  %2221 = vmatpush.bf16.msra.mxu0 0
  %2222 = vmatpush.bf16.msra.mxu0 0
  %2223 = vmatpush.bf16.msra.mxu0 0
  %2224 = vmatpush.bf16.msra.mxu0 0
  %2225 = vmatpush.bf16.msra.mxu0 0
  %2226 = vmatpush.bf16.msra.mxu0 %v2120
  %2227 = vmatmul.bf16.gmra.mxu0 %v2105
  %v2228 = vpop.f32.mrf.mxu0
  %v2229 = vadd.f32 0.0, %v2228
  %v2230 = vpop.f32.mrf.mxu0
  %2231 = vdwg.mxu0
  %2232 = vmatpush.bf16.msra.mxu0 0
  %2233 = vmatpush.bf16.msra.mxu0 0
  %2234 = vmatpush.bf16.msra.mxu0 0
  %2235 = vmatpush.bf16.msra.mxu0 0
  %2236 = vmatpush.bf16.msra.mxu0 0
  %2237 = vmatpush.bf16.msra.mxu0 0
  %2238 = vmatpush.bf16.msra.mxu0 0
  %2239 = vmatpush.bf16.msra.mxu0 %v2123
  %2240 = vmatmul.bf16.gmra.mxu0 %v2105
  %v2241 = vpop.f32.mrf.mxu0
  %v2242 = vadd.f32 0.0, %v2241
  %v2243 = vpop.f32.mrf.mxu0
  %2244 = vdwg.mxu0
  %2245 = vmatpush.bf16.msra.mxu0 0
  %2246 = vmatpush.bf16.msra.mxu0 0
  %2247 = vmatpush.bf16.msra.mxu0 0
  %2248 = vmatpush.bf16.msra.mxu0 0
  %2249 = vmatpush.bf16.msra.mxu0 0
  %2250 = vmatpush.bf16.msra.mxu0 0
  %2251 = vmatpush.bf16.msra.mxu0 0
  %2252 = vmatpush.bf16.msra.mxu0 %v2126
  %2253 = vmatmul.bf16.gmra.mxu0 %v2105
  %v2254 = vpop.f32.mrf.mxu0
  %v2255 = vadd.f32 0.0, %v2254
  %v2256 = vpop.f32.mrf.mxu0
  %2257 = vdwg.mxu0
  %2258 = vmatpush.bf16.msra.mxu0 0
  %2259 = vmatpush.bf16.msra.mxu0 0
  %2260 = vmatpush.bf16.msra.mxu0 0
  %2261 = vmatpush.bf16.msra.mxu0 0
  %2262 = vmatpush.bf16.msra.mxu0 0
  %2263 = vmatpush.bf16.msra.mxu0 0
  %2264 = vmatpush.bf16.msra.mxu0 0
  %2265 = vmatpush.bf16.msra.mxu0 %v2129
  %2266 = vmatmul.bf16.gmra.mxu0 %v2105
  %v2267 = vpop.f32.mrf.mxu0
  %v2268 = vadd.f32 0.0, %v2267
  %v2269 = vpop.f32.mrf.mxu0
  %2270 = vdwg.mxu0
  %2271 = vmatpush.bf16.msra.mxu0 0
  %2272 = vmatpush.bf16.msra.mxu0 0
  %2273 = vmatpush.bf16.msra.mxu0 0
  %2274 = vmatpush.bf16.msra.mxu0 0
  %2275 = vmatpush.bf16.msra.mxu0 0
  %2276 = vmatpush.bf16.msra.mxu0 0
  %2277 = vmatpush.bf16.msra.mxu0 0
  %2278 = vmatpush.bf16.msra.mxu0 %v2132
  %2279 = vmatmul.bf16.gmra.mxu0 %v2105
  %v2280 = vpop.f32.mrf.mxu0
  %v2281 = vadd.f32 0.0, %v2280
  %v2282 = vpop.f32.mrf.mxu0
  %2283 = vdwg.mxu0
  %2284 = vmatpush.bf16.msra.mxu0 0
  %2285 = vmatpush.bf16.msra.mxu0 0
  %2286 = vmatpush.bf16.msra.mxu0 0
  %2287 = vmatpush.bf16.msra.mxu0 0
  %2288 = vmatpush.bf16.msra.mxu0 0
  %2289 = vmatpush.bf16.msra.mxu0 0
  %2290 = vmatpush.bf16.msra.mxu0 0
  %2291 = vmatpush.bf16.msra.mxu0 %v2135
  %2292 = vmatmul.bf16.gmra.mxu0 %v2105
  %v2293 = vpop.f32.mrf.mxu0
  %v2294 = vadd.f32 0.0, %v2293
  %v2295 = vpop.f32.mrf.mxu0
  %2296 = vdwg.mxu0
  %2297 = vmatpush.bf16.msra.mxu0 0
  %2298 = vmatpush.bf16.msra.mxu0 0
  %2299 = vmatpush.bf16.msra.mxu0 0
  %2300 = vmatpush.bf16.msra.mxu0 0
  %2301 = vmatpush.bf16.msra.mxu0 0
  %2302 = vmatpush.bf16.msra.mxu0 0
  %2303 = vmatpush.bf16.msra.mxu0 0
  %2304 = vmatpush.bf16.msra.mxu0 %v2138
  %2305 = vmatmul.bf16.gmra.mxu0 %v2105
  %v2306 = vpop.f32.mrf.mxu0
  %v2307 = vadd.f32 0.0, %v2306
  %v2308 = vpop.f32.mrf.mxu0
  %2309 = vdwg.mxu0
  %2310 = vmatpush.bf16.msra.mxu0 0
  %2311 = vmatpush.bf16.msra.mxu0 0
  %2312 = vmatpush.bf16.msra.mxu0 0
  %2313 = vmatpush.bf16.msra.mxu0 0
  %2314 = vmatpush.bf16.msra.mxu0 0
  %2315 = vmatpush.bf16.msra.mxu0 0
  %2316 = vmatpush.bf16.msra.mxu0 0
  %2317 = vmatpush.bf16.msra.mxu0 %v2141
  %2318 = vmatmul.bf16.gmra.mxu0 %v2105
  %v2319 = vpop.f32.mrf.mxu0
  %v2320 = vadd.f32 0.0, %v2319
  %v2321 = vpop.f32.mrf.mxu0
  %2322 = vdwg.mxu0
  %2323 = vmatpush.bf16.msra.mxu0 0
  %2324 = vmatpush.bf16.msra.mxu0 0
  %2325 = vmatpush.bf16.msra.mxu0 0
  %2326 = vmatpush.bf16.msra.mxu0 0
  %2327 = vmatpush.bf16.msra.mxu0 0
  %2328 = vmatpush.bf16.msra.mxu0 0
  %2329 = vmatpush.bf16.msra.mxu0 0
  %2330 = vmatpush.bf16.msra.mxu0 %v2144
  %2331 = vmatmul.bf16.gmra.mxu0 %v2105
  %v2332 = vpop.f32.mrf.mxu0
  %v2333 = vadd.f32 0.0, %v2332
  %v2334 = vpop.f32.mrf.mxu0
  %2335 = vdwg.mxu0
  %2336 = vmatpush.bf16.msra.mxu0 0
  %2337 = vmatpush.bf16.msra.mxu0 0
  %2338 = vmatpush.bf16.msra.mxu0 0
  %2339 = vmatpush.bf16.msra.mxu0 0
  %2340 = vmatpush.bf16.msra.mxu0 0
  %2341 = vmatpush.bf16.msra.mxu0 0
  %2342 = vmatpush.bf16.msra.mxu0 0
  %2343 = vmatpush.bf16.msra.mxu0 %v2147
  %2344 = vmatmul.bf16.gmra.mxu0 %v2105
  %v2345 = vpop.f32.mrf.mxu0
  %v2346 = vadd.f32 0.0, %v2345
  %v2347 = vpop.f32.mrf.mxu0
  %2348 = vdwg.mxu0
  %2349 = vmatpush.bf16.msra.mxu0 0
  %2350 = vmatpush.bf16.msra.mxu0 0
  %2351 = vmatpush.bf16.msra.mxu0 0
  %2352 = vmatpush.bf16.msra.mxu0 0
  %2353 = vmatpush.bf16.msra.mxu0 0
  %2354 = vmatpush.bf16.msra.mxu0 0
  %2355 = vmatpush.bf16.msra.mxu0 0
  %2356 = vmatpush.bf16.msra.mxu0 %v2150
  %2357 = vmatmul.bf16.gmra.mxu0 %v2105
  %v2358 = vpop.f32.mrf.mxu0
  %v2359 = vadd.f32 0.0, %v2358
  %v2360 = vpop.f32.mrf.mxu0
  %2361 = vdwg.mxu0
  %2362 = vmatpush.bf16.msra.mxu0 0
  %2363 = vmatpush.bf16.msra.mxu0 0
  %2364 = vmatpush.bf16.msra.mxu0 0
  %2365 = vmatpush.bf16.msra.mxu0 0
  %2366 = vmatpush.bf16.msra.mxu0 0
  %2367 = vmatpush.bf16.msra.mxu0 0
  %2368 = vmatpush.bf16.msra.mxu0 0
  %2369 = vmatpush.bf16.msra.mxu0 %v2153
  %2370 = vmatmul.bf16.gmra.mxu0 %v2105
  %v2371 = vpop.f32.mrf.mxu0
  %v2372 = vadd.f32 0.0, %v2371
  %v2373 = vpop.f32.mrf.mxu0
  %2374 = vdwg.mxu0
  %2375 = vmatpush.bf16.msra.mxu0 0
  %2376 = vmatpush.bf16.msra.mxu0 0
  %2377 = vmatpush.bf16.msra.mxu0 0
  %2378 = vmatpush.bf16.msra.mxu0 0
  %2379 = vmatpush.bf16.msra.mxu0 0
  %2380 = vmatpush.bf16.msra.mxu0 0
  %2381 = vmatpush.bf16.msra.mxu0 0
  %2382 = vmatpush.bf16.msra.mxu0 %v2156
  %2383 = vmatmul.bf16.gmra.mxu0 %v2105
  %v2384 = vpop.f32.mrf.mxu0
  %v2385 = vadd.f32 0.0, %v2384
  %v2386 = vpop.f32.mrf.mxu0
  %2387 = vdwg.mxu0
  %2388 = vmatpush.bf16.msra.mxu0 0
  %2389 = vmatpush.bf16.msra.mxu0 0
  %2390 = vmatpush.bf16.msra.mxu0 0
  %2391 = vmatpush.bf16.msra.mxu0 0
  %2392 = vmatpush.bf16.msra.mxu0 0
  %2393 = vmatpush.bf16.msra.mxu0 0
  %2394 = vmatpush.bf16.msra.mxu0 0
  %2395 = vmatpush.bf16.msra.mxu0 %v2159
  %2396 = vmatmul.bf16.gmra.mxu0 %v2105
  %v2397 = vpop.f32.mrf.mxu0
  %v2398 = vadd.f32 0.0, %v2397
  %v2399 = vpop.f32.mrf.mxu0
  %2400 = vdwg.mxu0
  %2401 = vmatpush.bf16.msra.mxu0 0
  %2402 = vmatpush.bf16.msra.mxu0 0
  %2403 = vmatpush.bf16.msra.mxu0 0
  %2404 = vmatpush.bf16.msra.mxu0 0
  %2405 = vmatpush.bf16.msra.mxu0 0
  %2406 = vmatpush.bf16.msra.mxu0 0
  %2407 = vmatpush.bf16.msra.mxu0 0
  %2408 = vmatpush.bf16.msra.mxu0 %v2162
  %2409 = vmatmul.bf16.gmra.mxu0 %v2105
  %v2410 = vpop.f32.mrf.mxu0
  %v2411 = vadd.f32 0.0, %v2410
  %v2412 = vpop.f32.mrf.mxu0
  %2413 = vdwg.mxu0
  %2414 = vmatpush.bf16.msra.mxu0 0
  %2415 = vmatpush.bf16.msra.mxu0 0
  %2416 = vmatpush.bf16.msra.mxu0 0
  %2417 = vmatpush.bf16.msra.mxu0 0
  %2418 = vmatpush.bf16.msra.mxu0 0
  %2419 = vmatpush.bf16.msra.mxu0 0
  %2420 = vmatpush.bf16.msra.mxu0 0
  %2421 = vmatpush.bf16.msra.mxu0 %v2165
  %2422 = vmatmul.bf16.gmra.mxu0 %v2105
  %v2423 = vpop.f32.mrf.mxu0
  %v2424 = vadd.f32 0.0, %v2423
  %v2425 = vpop.f32.mrf.mxu0
  %2426 = vdwg.mxu0
  %v2427 = vadd.f32 %v1789, %v2177
  %v2428 = vadd.f32 %v1802, %v2190
  %v2429 = vadd.f32 %v1815, %v2203
  %v2430 = vadd.f32 %v1828, %v2216
  %v2431 = vadd.f32 %v1841, %v2229
  %v2432 = vadd.f32 %v1854, %v2242
  %v2433 = vadd.f32 %v1867, %v2255
  %v2434 = vadd.f32 %v1880, %v2268
  %v2435 = vadd.f32 %v1893, %v2281
  %v2436 = vadd.f32 %v1906, %v2294
  %v2437 = vadd.f32 %v1919, %v2307
  %v2438 = vadd.f32 %v1932, %v2320
  %v2439 = vadd.f32 %v1945, %v2333
  %v2440 = vadd.f32 %v1958, %v2346
  %v2441 = vadd.f32 %v1971, %v2359
  %v2442 = vadd.f32 %v1984, %v2372
  %v2443 = vadd.f32 %v1997, %v2385
  %v2444 = vadd.f32 %v2010, %v2398
  %v2445 = vadd.f32 %v2023, %v2411
  %v2446 = vadd.f32 %v2036, %v2424
  %s2447 = scalar_lea.vmem %s3, 12
  %v2448 = vld [vmem:[%s2447] sm:$0xf]
  %2449 = vrot.lane.b32.xlu0 %v1258, 94
  %v2450 = vpop.permute.xlu0 %2449
  %2451 = vrot.lane.b32.xlu0 %v1259, 94
  %v2452 = vpop.permute.xlu0 %2451
  %2453 = vrot.lane.b32.xlu0 %v1260, 94
  %v2454 = vpop.permute.xlu0 %2453
  %2455 = vrot.lane.b32.xlu0 %v1261, 94
  %v2456 = vpop.permute.xlu0 %2455
  %2457 = vrot.lane.b32.xlu0 %v1262, 94
  %v2458 = vpop.permute.xlu0 %2457
  %2459 = vrot.lane.b32.xlu0 %v1263, 94
  %v2460 = vpop.permute.xlu0 %2459
  %2461 = vrot.lane.b32.xlu0 %v1264, 94
  %v2462 = vpop.permute.xlu0 %2461
  %2463 = vrot.lane.b32.xlu0 %v1265, 94
  %v2464 = vpop.permute.xlu0 %2463
  %2465 = vrot.lane.b32.xlu0 %v1266, 94
  %v2466 = vpop.permute.xlu0 %2465
  %2467 = vrot.lane.b32.xlu0 %v1267, 94
  %v2468 = vpop.permute.xlu0 %2467
  %2469 = vrot.lane.b32.xlu0 %v1268, 94
  %v2470 = vpop.permute.xlu0 %2469
  %2471 = vrot.lane.b32.xlu0 %v1269, 94
  %v2472 = vpop.permute.xlu0 %2471
  %2473 = vrot.lane.b32.xlu0 %v1270, 94
  %v2474 = vpop.permute.xlu0 %2473
  %2475 = vrot.lane.b32.xlu0 %v1271, 94
  %v2476 = vpop.permute.xlu0 %2475
  %2477 = vrot.lane.b32.xlu0 %v1272, 94
  %v2478 = vpop.permute.xlu0 %2477
  %2479 = vrot.lane.b32.xlu0 %v1273, 94
  %v2480 = vpop.permute.xlu0 %2479
  %2481 = vrot.lane.b32.xlu0 %v1274, 94
  %v2482 = vpop.permute.xlu0 %2481
  %2483 = vrot.lane.b32.xlu0 %v1275, 94
  %v2484 = vpop.permute.xlu0 %2483
  %2485 = vrot.lane.b32.xlu0 %v1276, 94
  %v2486 = vpop.permute.xlu0 %2485
  %2487 = vrot.lane.b32.xlu0 %v1277, 94
  %v2488 = vpop.permute.xlu0 %2487
  %2489 = vrot.lane.b32.xlu0 %v1278, 94
  %v2490 = vpop.permute.xlu0 %2489
  %vm2491 = vcmask 769024
  %v2492 = vsel %vm2491, %v2450, %v2452
  %v2493 = vsel %vm2491, %v2452, %v2454
  %v2494 = vsel %vm2491, %v2454, %v2456
  %v2495 = vsel %vm2491, %v2456, %v2458
  %v2496 = vsel %vm2491, %v2458, %v2460
  %v2497 = vsel %vm2491, %v2460, %v2462
  %v2498 = vsel %vm2491, %v2462, %v2464
  %v2499 = vsel %vm2491, %v2464, %v2466
  %v2500 = vsel %vm2491, %v2466, %v2468
  %v2501 = vsel %vm2491, %v2468, %v2470
  %v2502 = vsel %vm2491, %v2470, %v2472
  %v2503 = vsel %vm2491, %v2472, %v2474
  %v2504 = vsel %vm2491, %v2474, %v2476
  %v2505 = vsel %vm2491, %v2476, %v2478
  %v2506 = vsel %vm2491, %v2478, %v2480
  %v2507 = vsel %vm2491, %v2480, %v2482
  %v2508 = vsel %vm2491, %v2482, %v2484
  %v2509 = vsel %vm2491, %v2484, %v2486
  %v2510 = vsel %vm2491, %v2486, %v2488
  %v2511 = vsel %vm2491, %v2488, %v2490
  %v2513 = vsel %vm1341, %v2448, 0
  %v2516 = vsel %vm1345, %v2492, 0
  %v2519 = vsel %vm1345, %v2493, 0
  %v2522 = vsel %vm1345, %v2494, 0
  %v2525 = vsel %vm1345, %v2495, 0
  %v2528 = vsel %vm1345, %v2496, 0
  %v2531 = vsel %vm1345, %v2497, 0
  %v2534 = vsel %vm1345, %v2498, 0
  %v2537 = vsel %vm1345, %v2499, 0
  %v2540 = vsel %vm1345, %v2500, 0
  %v2543 = vsel %vm1345, %v2501, 0
  %v2546 = vsel %vm1345, %v2502, 0
  %v2549 = vsel %vm1345, %v2503, 0
  %v2552 = vsel %vm1345, %v2504, 0
  %v2555 = vsel %vm1345, %v2505, 0
  %v2558 = vsel %vm1345, %v2506, 0
  %v2561 = vsel %vm1345, %v2507, 0
  %v2564 = vsel %vm1345, %v2508, 0
  %v2567 = vsel %vm1345, %v2509, 0
  %v2570 = vsel %vm1345, %v2510, 0
  %v2573 = vsel %vm1345, %v2511, 0
  %2575 = vmatpush.bf16.msra.mxu0 0
  %2576 = vmatpush.bf16.msra.mxu0 0
  %2577 = vmatpush.bf16.msra.mxu0 0
  %2578 = vmatpush.bf16.msra.mxu0 0
  %2579 = vmatpush.bf16.msra.mxu0 0
  %2580 = vmatpush.bf16.msra.mxu0 0
  %2581 = vmatpush.bf16.msra.mxu0 0
  %2582 = vmatpush.bf16.msra.mxu0 %v2516
  %2583 = vmatmul.bf16.gmra.mxu0 %v2513
  %v2584 = vpop.f32.mrf.mxu0
  %v2585 = vadd.f32 0.0, %v2584
  %v2586 = vpop.f32.mrf.mxu0
  %2587 = vdwg.mxu0
  %2588 = vmatpush.bf16.msra.mxu0 0
  %2589 = vmatpush.bf16.msra.mxu0 0
  %2590 = vmatpush.bf16.msra.mxu0 0
  %2591 = vmatpush.bf16.msra.mxu0 0
  %2592 = vmatpush.bf16.msra.mxu0 0
  %2593 = vmatpush.bf16.msra.mxu0 0
  %2594 = vmatpush.bf16.msra.mxu0 0
  %2595 = vmatpush.bf16.msra.mxu0 %v2519
  %2596 = vmatmul.bf16.gmra.mxu0 %v2513
  %v2597 = vpop.f32.mrf.mxu0
  %v2598 = vadd.f32 0.0, %v2597
  %v2599 = vpop.f32.mrf.mxu0
  %2600 = vdwg.mxu0
  %2601 = vmatpush.bf16.msra.mxu0 0
  %2602 = vmatpush.bf16.msra.mxu0 0
  %2603 = vmatpush.bf16.msra.mxu0 0
  %2604 = vmatpush.bf16.msra.mxu0 0
  %2605 = vmatpush.bf16.msra.mxu0 0
  %2606 = vmatpush.bf16.msra.mxu0 0
  %2607 = vmatpush.bf16.msra.mxu0 0
  %2608 = vmatpush.bf16.msra.mxu0 %v2522
  %2609 = vmatmul.bf16.gmra.mxu0 %v2513
  %v2610 = vpop.f32.mrf.mxu0
  %v2611 = vadd.f32 0.0, %v2610
  %v2612 = vpop.f32.mrf.mxu0
  %2613 = vdwg.mxu0
  %2614 = vmatpush.bf16.msra.mxu0 0
  %2615 = vmatpush.bf16.msra.mxu0 0
  %2616 = vmatpush.bf16.msra.mxu0 0
  %2617 = vmatpush.bf16.msra.mxu0 0
  %2618 = vmatpush.bf16.msra.mxu0 0
  %2619 = vmatpush.bf16.msra.mxu0 0
  %2620 = vmatpush.bf16.msra.mxu0 0
  %2621 = vmatpush.bf16.msra.mxu0 %v2525
  %2622 = vmatmul.bf16.gmra.mxu0 %v2513
  %v2623 = vpop.f32.mrf.mxu0
  %v2624 = vadd.f32 0.0, %v2623
  %v2625 = vpop.f32.mrf.mxu0
  %2626 = vdwg.mxu0
  %2627 = vmatpush.bf16.msra.mxu0 0
  %2628 = vmatpush.bf16.msra.mxu0 0
  %2629 = vmatpush.bf16.msra.mxu0 0
  %2630 = vmatpush.bf16.msra.mxu0 0
  %2631 = vmatpush.bf16.msra.mxu0 0
  %2632 = vmatpush.bf16.msra.mxu0 0
  %2633 = vmatpush.bf16.msra.mxu0 0
  %2634 = vmatpush.bf16.msra.mxu0 %v2528
  %2635 = vmatmul.bf16.gmra.mxu0 %v2513
  %v2636 = vpop.f32.mrf.mxu0
  %v2637 = vadd.f32 0.0, %v2636
  %v2638 = vpop.f32.mrf.mxu0
  %2639 = vdwg.mxu0
  %2640 = vmatpush.bf16.msra.mxu0 0
  %2641 = vmatpush.bf16.msra.mxu0 0
  %2642 = vmatpush.bf16.msra.mxu0 0
  %2643 = vmatpush.bf16.msra.mxu0 0
  %2644 = vmatpush.bf16.msra.mxu0 0
  %2645 = vmatpush.bf16.msra.mxu0 0
  %2646 = vmatpush.bf16.msra.mxu0 0
  %2647 = vmatpush.bf16.msra.mxu0 %v2531
  %2648 = vmatmul.bf16.gmra.mxu0 %v2513
  %v2649 = vpop.f32.mrf.mxu0
  %v2650 = vadd.f32 0.0, %v2649
  %v2651 = vpop.f32.mrf.mxu0
  %2652 = vdwg.mxu0
  %2653 = vmatpush.bf16.msra.mxu0 0
  %2654 = vmatpush.bf16.msra.mxu0 0
  %2655 = vmatpush.bf16.msra.mxu0 0
  %2656 = vmatpush.bf16.msra.mxu0 0
  %2657 = vmatpush.bf16.msra.mxu0 0
  %2658 = vmatpush.bf16.msra.mxu0 0
  %2659 = vmatpush.bf16.msra.mxu0 0
  %2660 = vmatpush.bf16.msra.mxu0 %v2534
  %2661 = vmatmul.bf16.gmra.mxu0 %v2513
  %v2662 = vpop.f32.mrf.mxu0
  %v2663 = vadd.f32 0.0, %v2662
  %v2664 = vpop.f32.mrf.mxu0
  %2665 = vdwg.mxu0
  %2666 = vmatpush.bf16.msra.mxu0 0
  %2667 = vmatpush.bf16.msra.mxu0 0
  %2668 = vmatpush.bf16.msra.mxu0 0
  %2669 = vmatpush.bf16.msra.mxu0 0
  %2670 = vmatpush.bf16.msra.mxu0 0
  %2671 = vmatpush.bf16.msra.mxu0 0
  %2672 = vmatpush.bf16.msra.mxu0 0
  %2673 = vmatpush.bf16.msra.mxu0 %v2537
  %2674 = vmatmul.bf16.gmra.mxu0 %v2513
  %v2675 = vpop.f32.mrf.mxu0
  %v2676 = vadd.f32 0.0, %v2675
  %v2677 = vpop.f32.mrf.mxu0
  %2678 = vdwg.mxu0
  %2679 = vmatpush.bf16.msra.mxu0 0
  %2680 = vmatpush.bf16.msra.mxu0 0
  %2681 = vmatpush.bf16.msra.mxu0 0
  %2682 = vmatpush.bf16.msra.mxu0 0
  %2683 = vmatpush.bf16.msra.mxu0 0
  %2684 = vmatpush.bf16.msra.mxu0 0
  %2685 = vmatpush.bf16.msra.mxu0 0
  %2686 = vmatpush.bf16.msra.mxu0 %v2540
  %2687 = vmatmul.bf16.gmra.mxu0 %v2513
  %v2688 = vpop.f32.mrf.mxu0
  %v2689 = vadd.f32 0.0, %v2688
  %v2690 = vpop.f32.mrf.mxu0
  %2691 = vdwg.mxu0
  %2692 = vmatpush.bf16.msra.mxu0 0
  %2693 = vmatpush.bf16.msra.mxu0 0
  %2694 = vmatpush.bf16.msra.mxu0 0
  %2695 = vmatpush.bf16.msra.mxu0 0
  %2696 = vmatpush.bf16.msra.mxu0 0
  %2697 = vmatpush.bf16.msra.mxu0 0
  %2698 = vmatpush.bf16.msra.mxu0 0
  %2699 = vmatpush.bf16.msra.mxu0 %v2543
  %2700 = vmatmul.bf16.gmra.mxu0 %v2513
  %v2701 = vpop.f32.mrf.mxu0
  %v2702 = vadd.f32 0.0, %v2701
  %v2703 = vpop.f32.mrf.mxu0
  %2704 = vdwg.mxu0
  %2705 = vmatpush.bf16.msra.mxu0 0
  %2706 = vmatpush.bf16.msra.mxu0 0
  %2707 = vmatpush.bf16.msra.mxu0 0
  %2708 = vmatpush.bf16.msra.mxu0 0
  %2709 = vmatpush.bf16.msra.mxu0 0
  %2710 = vmatpush.bf16.msra.mxu0 0
  %2711 = vmatpush.bf16.msra.mxu0 0
  %2712 = vmatpush.bf16.msra.mxu0 %v2546
  %2713 = vmatmul.bf16.gmra.mxu0 %v2513
  %v2714 = vpop.f32.mrf.mxu0
  %v2715 = vadd.f32 0.0, %v2714
  %v2716 = vpop.f32.mrf.mxu0
  %2717 = vdwg.mxu0
  %2718 = vmatpush.bf16.msra.mxu0 0
  %2719 = vmatpush.bf16.msra.mxu0 0
  %2720 = vmatpush.bf16.msra.mxu0 0
  %2721 = vmatpush.bf16.msra.mxu0 0
  %2722 = vmatpush.bf16.msra.mxu0 0
  %2723 = vmatpush.bf16.msra.mxu0 0
  %2724 = vmatpush.bf16.msra.mxu0 0
  %2725 = vmatpush.bf16.msra.mxu0 %v2549
  %2726 = vmatmul.bf16.gmra.mxu0 %v2513
  %v2727 = vpop.f32.mrf.mxu0
  %v2728 = vadd.f32 0.0, %v2727
  %v2729 = vpop.f32.mrf.mxu0
  %2730 = vdwg.mxu0
  %2731 = vmatpush.bf16.msra.mxu0 0
  %2732 = vmatpush.bf16.msra.mxu0 0
  %2733 = vmatpush.bf16.msra.mxu0 0
  %2734 = vmatpush.bf16.msra.mxu0 0
  %2735 = vmatpush.bf16.msra.mxu0 0
  %2736 = vmatpush.bf16.msra.mxu0 0
  %2737 = vmatpush.bf16.msra.mxu0 0
  %2738 = vmatpush.bf16.msra.mxu0 %v2552
  %2739 = vmatmul.bf16.gmra.mxu0 %v2513
  %v2740 = vpop.f32.mrf.mxu0
  %v2741 = vadd.f32 0.0, %v2740
  %v2742 = vpop.f32.mrf.mxu0
  %2743 = vdwg.mxu0
  %2744 = vmatpush.bf16.msra.mxu0 0
  %2745 = vmatpush.bf16.msra.mxu0 0
  %2746 = vmatpush.bf16.msra.mxu0 0
  %2747 = vmatpush.bf16.msra.mxu0 0
  %2748 = vmatpush.bf16.msra.mxu0 0
  %2749 = vmatpush.bf16.msra.mxu0 0
  %2750 = vmatpush.bf16.msra.mxu0 0
  %2751 = vmatpush.bf16.msra.mxu0 %v2555
  %2752 = vmatmul.bf16.gmra.mxu0 %v2513
  %v2753 = vpop.f32.mrf.mxu0
  %v2754 = vadd.f32 0.0, %v2753
  %v2755 = vpop.f32.mrf.mxu0
  %2756 = vdwg.mxu0
  %2757 = vmatpush.bf16.msra.mxu0 0
  %2758 = vmatpush.bf16.msra.mxu0 0
  %2759 = vmatpush.bf16.msra.mxu0 0
  %2760 = vmatpush.bf16.msra.mxu0 0
  %2761 = vmatpush.bf16.msra.mxu0 0
  %2762 = vmatpush.bf16.msra.mxu0 0
  %2763 = vmatpush.bf16.msra.mxu0 0
  %2764 = vmatpush.bf16.msra.mxu0 %v2558
  %2765 = vmatmul.bf16.gmra.mxu0 %v2513
  %v2766 = vpop.f32.mrf.mxu0
  %v2767 = vadd.f32 0.0, %v2766
  %v2768 = vpop.f32.mrf.mxu0
  %2769 = vdwg.mxu0
  %2770 = vmatpush.bf16.msra.mxu0 0
  %2771 = vmatpush.bf16.msra.mxu0 0
  %2772 = vmatpush.bf16.msra.mxu0 0
  %2773 = vmatpush.bf16.msra.mxu0 0
  %2774 = vmatpush.bf16.msra.mxu0 0
  %2775 = vmatpush.bf16.msra.mxu0 0
  %2776 = vmatpush.bf16.msra.mxu0 0
  %2777 = vmatpush.bf16.msra.mxu0 %v2561
  %2778 = vmatmul.bf16.gmra.mxu0 %v2513
  %v2779 = vpop.f32.mrf.mxu0
  %v2780 = vadd.f32 0.0, %v2779
  %v2781 = vpop.f32.mrf.mxu0
  %2782 = vdwg.mxu0
  %2783 = vmatpush.bf16.msra.mxu0 0
  %2784 = vmatpush.bf16.msra.mxu0 0
  %2785 = vmatpush.bf16.msra.mxu0 0
  %2786 = vmatpush.bf16.msra.mxu0 0
  %2787 = vmatpush.bf16.msra.mxu0 0
  %2788 = vmatpush.bf16.msra.mxu0 0
  %2789 = vmatpush.bf16.msra.mxu0 0
  %2790 = vmatpush.bf16.msra.mxu0 %v2564
  %2791 = vmatmul.bf16.gmra.mxu0 %v2513
  %v2792 = vpop.f32.mrf.mxu0
  %v2793 = vadd.f32 0.0, %v2792
  %v2794 = vpop.f32.mrf.mxu0
  %2795 = vdwg.mxu0
  %2796 = vmatpush.bf16.msra.mxu0 0
  %2797 = vmatpush.bf16.msra.mxu0 0
  %2798 = vmatpush.bf16.msra.mxu0 0
  %2799 = vmatpush.bf16.msra.mxu0 0
  %2800 = vmatpush.bf16.msra.mxu0 0
  %2801 = vmatpush.bf16.msra.mxu0 0
  %2802 = vmatpush.bf16.msra.mxu0 0
  %2803 = vmatpush.bf16.msra.mxu0 %v2567
  %2804 = vmatmul.bf16.gmra.mxu0 %v2513
  %v2805 = vpop.f32.mrf.mxu0
  %v2806 = vadd.f32 0.0, %v2805
  %v2807 = vpop.f32.mrf.mxu0
  %2808 = vdwg.mxu0
  %2809 = vmatpush.bf16.msra.mxu0 0
  %2810 = vmatpush.bf16.msra.mxu0 0
  %2811 = vmatpush.bf16.msra.mxu0 0
  %2812 = vmatpush.bf16.msra.mxu0 0
  %2813 = vmatpush.bf16.msra.mxu0 0
  %2814 = vmatpush.bf16.msra.mxu0 0
  %2815 = vmatpush.bf16.msra.mxu0 0
  %2816 = vmatpush.bf16.msra.mxu0 %v2570
  %2817 = vmatmul.bf16.gmra.mxu0 %v2513
  %v2818 = vpop.f32.mrf.mxu0
  %v2819 = vadd.f32 0.0, %v2818
  %v2820 = vpop.f32.mrf.mxu0
  %2821 = vdwg.mxu0
  %2822 = vmatpush.bf16.msra.mxu0 0
  %2823 = vmatpush.bf16.msra.mxu0 0
  %2824 = vmatpush.bf16.msra.mxu0 0
  %2825 = vmatpush.bf16.msra.mxu0 0
  %2826 = vmatpush.bf16.msra.mxu0 0
  %2827 = vmatpush.bf16.msra.mxu0 0
  %2828 = vmatpush.bf16.msra.mxu0 0
  %2829 = vmatpush.bf16.msra.mxu0 %v2573
  %2830 = vmatmul.bf16.gmra.mxu0 %v2513
  %v2831 = vpop.f32.mrf.mxu0
  %v2832 = vadd.f32 0.0, %v2831
  %v2833 = vpop.f32.mrf.mxu0
  %2834 = vdwg.mxu0
  %v2835 = vadd.f32 %v2427, %v2585
  %v2836 = vadd.f32 %v2428, %v2598
  %v2837 = vadd.f32 %v2429, %v2611
  %v2838 = vadd.f32 %v2430, %v2624
  %v2839 = vadd.f32 %v2431, %v2637
  %v2840 = vadd.f32 %v2432, %v2650
  %v2841 = vadd.f32 %v2433, %v2663
  %v2842 = vadd.f32 %v2434, %v2676
  %v2843 = vadd.f32 %v2435, %v2689
  %v2844 = vadd.f32 %v2436, %v2702
  %v2845 = vadd.f32 %v2437, %v2715
  %v2846 = vadd.f32 %v2438, %v2728
  %v2847 = vadd.f32 %v2439, %v2741
  %v2848 = vadd.f32 %v2440, %v2754
  %v2849 = vadd.f32 %v2441, %v2767
  %v2850 = vadd.f32 %v2442, %v2780
  %v2851 = vadd.f32 %v2443, %v2793
  %v2852 = vadd.f32 %v2444, %v2806
  %v2853 = vadd.f32 %v2445, %v2819
  %v2854 = vadd.f32 %v2446, %v2832
  %s2855 = scalar_lea.vmem %s3, 16
  %v2856 = vld [vmem:[%s2855] sm:$0xf]
  %2857 = vrot.lane.b32.xlu0 %v1258, 93
  %v2858 = vpop.permute.xlu0 %2857
  %2859 = vrot.lane.b32.xlu0 %v1259, 93
  %v2860 = vpop.permute.xlu0 %2859
  %2861 = vrot.lane.b32.xlu0 %v1260, 93
  %v2862 = vpop.permute.xlu0 %2861
  %2863 = vrot.lane.b32.xlu0 %v1261, 93
  %v2864 = vpop.permute.xlu0 %2863
  %2865 = vrot.lane.b32.xlu0 %v1262, 93
  %v2866 = vpop.permute.xlu0 %2865
  %2867 = vrot.lane.b32.xlu0 %v1263, 93
  %v2868 = vpop.permute.xlu0 %2867
  %2869 = vrot.lane.b32.xlu0 %v1264, 93
  %v2870 = vpop.permute.xlu0 %2869
  %2871 = vrot.lane.b32.xlu0 %v1265, 93
  %v2872 = vpop.permute.xlu0 %2871
  %2873 = vrot.lane.b32.xlu0 %v1266, 93
  %v2874 = vpop.permute.xlu0 %2873
  %2875 = vrot.lane.b32.xlu0 %v1267, 93
  %v2876 = vpop.permute.xlu0 %2875
  %2877 = vrot.lane.b32.xlu0 %v1268, 93
  %v2878 = vpop.permute.xlu0 %2877
  %2879 = vrot.lane.b32.xlu0 %v1269, 93
  %v2880 = vpop.permute.xlu0 %2879
  %2881 = vrot.lane.b32.xlu0 %v1270, 93
  %v2882 = vpop.permute.xlu0 %2881
  %2883 = vrot.lane.b32.xlu0 %v1271, 93
  %v2884 = vpop.permute.xlu0 %2883
  %2885 = vrot.lane.b32.xlu0 %v1272, 93
  %v2886 = vpop.permute.xlu0 %2885
  %2887 = vrot.lane.b32.xlu0 %v1273, 93
  %v2888 = vpop.permute.xlu0 %2887
  %2889 = vrot.lane.b32.xlu0 %v1274, 93
  %v2890 = vpop.permute.xlu0 %2889
  %2891 = vrot.lane.b32.xlu0 %v1275, 93
  %v2892 = vpop.permute.xlu0 %2891
  %2893 = vrot.lane.b32.xlu0 %v1276, 93
  %v2894 = vpop.permute.xlu0 %2893
  %2895 = vrot.lane.b32.xlu0 %v1277, 93
  %v2896 = vpop.permute.xlu0 %2895
  %2897 = vrot.lane.b32.xlu0 %v1278, 93
  %v2898 = vpop.permute.xlu0 %2897
  %vm2899 = vcmask 760832
  %v2900 = vsel %vm2899, %v2858, %v2860
  %v2901 = vsel %vm2899, %v2860, %v2862
  %v2902 = vsel %vm2899, %v2862, %v2864
  %v2903 = vsel %vm2899, %v2864, %v2866
  %v2904 = vsel %vm2899, %v2866, %v2868
  %v2905 = vsel %vm2899, %v2868, %v2870
  %v2906 = vsel %vm2899, %v2870, %v2872
  %v2907 = vsel %vm2899, %v2872, %v2874
  %v2908 = vsel %vm2899, %v2874, %v2876
  %v2909 = vsel %vm2899, %v2876, %v2878
  %v2910 = vsel %vm2899, %v2878, %v2880
  %v2911 = vsel %vm2899, %v2880, %v2882
  %v2912 = vsel %vm2899, %v2882, %v2884
  %v2913 = vsel %vm2899, %v2884, %v2886
  %v2914 = vsel %vm2899, %v2886, %v2888
  %v2915 = vsel %vm2899, %v2888, %v2890
  %v2916 = vsel %vm2899, %v2890, %v2892
  %v2917 = vsel %vm2899, %v2892, %v2894
  %v2918 = vsel %vm2899, %v2894, %v2896
  %v2919 = vsel %vm2899, %v2896, %v2898
  %v2921 = vsel %vm1341, %v2856, 0
  %v2924 = vsel %vm1345, %v2900, 0
  %v2927 = vsel %vm1345, %v2901, 0
  %v2930 = vsel %vm1345, %v2902, 0
  %v2933 = vsel %vm1345, %v2903, 0
  %v2936 = vsel %vm1345, %v2904, 0
  %v2939 = vsel %vm1345, %v2905, 0
  %v2942 = vsel %vm1345, %v2906, 0
  %v2945 = vsel %vm1345, %v2907, 0
  %v2948 = vsel %vm1345, %v2908, 0
  %v2951 = vsel %vm1345, %v2909, 0
  %v2954 = vsel %vm1345, %v2910, 0
  %v2957 = vsel %vm1345, %v2911, 0
  %v2960 = vsel %vm1345, %v2912, 0
  %v2963 = vsel %vm1345, %v2913, 0
  %v2966 = vsel %vm1345, %v2914, 0
  %v2969 = vsel %vm1345, %v2915, 0
  %v2972 = vsel %vm1345, %v2916, 0
  %v2975 = vsel %vm1345, %v2917, 0
  %v2978 = vsel %vm1345, %v2918, 0
  %v2981 = vsel %vm1345, %v2919, 0
  %2983 = vmatpush.bf16.msra.mxu0 0
  %2984 = vmatpush.bf16.msra.mxu0 0
  %2985 = vmatpush.bf16.msra.mxu0 0
  %2986 = vmatpush.bf16.msra.mxu0 0
  %2987 = vmatpush.bf16.msra.mxu0 0
  %2988 = vmatpush.bf16.msra.mxu0 0
  %2989 = vmatpush.bf16.msra.mxu0 0
  %2990 = vmatpush.bf16.msra.mxu0 %v2924
  %2991 = vmatmul.bf16.gmra.mxu0 %v2921
  %v2992 = vpop.f32.mrf.mxu0
  %v2993 = vadd.f32 0.0, %v2992
  %v2994 = vpop.f32.mrf.mxu0
  %2995 = vdwg.mxu0
  %2996 = vmatpush.bf16.msra.mxu0 0
  %2997 = vmatpush.bf16.msra.mxu0 0
  %2998 = vmatpush.bf16.msra.mxu0 0
  %2999 = vmatpush.bf16.msra.mxu0 0
  %3000 = vmatpush.bf16.msra.mxu0 0
  %3001 = vmatpush.bf16.msra.mxu0 0
  %3002 = vmatpush.bf16.msra.mxu0 0
  %3003 = vmatpush.bf16.msra.mxu0 %v2927
  %3004 = vmatmul.bf16.gmra.mxu0 %v2921
  %v3005 = vpop.f32.mrf.mxu0
  %v3006 = vadd.f32 0.0, %v3005
  %v3007 = vpop.f32.mrf.mxu0
  %3008 = vdwg.mxu0
  %3009 = vmatpush.bf16.msra.mxu0 0
  %3010 = vmatpush.bf16.msra.mxu0 0
  %3011 = vmatpush.bf16.msra.mxu0 0
  %3012 = vmatpush.bf16.msra.mxu0 0
  %3013 = vmatpush.bf16.msra.mxu0 0
  %3014 = vmatpush.bf16.msra.mxu0 0
  %3015 = vmatpush.bf16.msra.mxu0 0
  %3016 = vmatpush.bf16.msra.mxu0 %v2930
  %3017 = vmatmul.bf16.gmra.mxu0 %v2921
  %v3018 = vpop.f32.mrf.mxu0
  %v3019 = vadd.f32 0.0, %v3018
  %v3020 = vpop.f32.mrf.mxu0
  %3021 = vdwg.mxu0
  %3022 = vmatpush.bf16.msra.mxu0 0
  %3023 = vmatpush.bf16.msra.mxu0 0
  %3024 = vmatpush.bf16.msra.mxu0 0
  %3025 = vmatpush.bf16.msra.mxu0 0
  %3026 = vmatpush.bf16.msra.mxu0 0
  %3027 = vmatpush.bf16.msra.mxu0 0
  %3028 = vmatpush.bf16.msra.mxu0 0
  %3029 = vmatpush.bf16.msra.mxu0 %v2933
  %3030 = vmatmul.bf16.gmra.mxu0 %v2921
  %v3031 = vpop.f32.mrf.mxu0
  %v3032 = vadd.f32 0.0, %v3031
  %v3033 = vpop.f32.mrf.mxu0
  %3034 = vdwg.mxu0
  %3035 = vmatpush.bf16.msra.mxu0 0
  %3036 = vmatpush.bf16.msra.mxu0 0
  %3037 = vmatpush.bf16.msra.mxu0 0
  %3038 = vmatpush.bf16.msra.mxu0 0
  %3039 = vmatpush.bf16.msra.mxu0 0
  %3040 = vmatpush.bf16.msra.mxu0 0
  %3041 = vmatpush.bf16.msra.mxu0 0
  %3042 = vmatpush.bf16.msra.mxu0 %v2936
  %3043 = vmatmul.bf16.gmra.mxu0 %v2921
  %v3044 = vpop.f32.mrf.mxu0
  %v3045 = vadd.f32 0.0, %v3044
  %v3046 = vpop.f32.mrf.mxu0
  %3047 = vdwg.mxu0
  %3048 = vmatpush.bf16.msra.mxu0 0
  %3049 = vmatpush.bf16.msra.mxu0 0
  %3050 = vmatpush.bf16.msra.mxu0 0
  %3051 = vmatpush.bf16.msra.mxu0 0
  %3052 = vmatpush.bf16.msra.mxu0 0
  %3053 = vmatpush.bf16.msra.mxu0 0
  %3054 = vmatpush.bf16.msra.mxu0 0
  %3055 = vmatpush.bf16.msra.mxu0 %v2939
  %3056 = vmatmul.bf16.gmra.mxu0 %v2921
  %v3057 = vpop.f32.mrf.mxu0
  %v3058 = vadd.f32 0.0, %v3057
  %v3059 = vpop.f32.mrf.mxu0
  %3060 = vdwg.mxu0
  %3061 = vmatpush.bf16.msra.mxu0 0
  %3062 = vmatpush.bf16.msra.mxu0 0
  %3063 = vmatpush.bf16.msra.mxu0 0
  %3064 = vmatpush.bf16.msra.mxu0 0
  %3065 = vmatpush.bf16.msra.mxu0 0
  %3066 = vmatpush.bf16.msra.mxu0 0
  %3067 = vmatpush.bf16.msra.mxu0 0
  %3068 = vmatpush.bf16.msra.mxu0 %v2942
  %3069 = vmatmul.bf16.gmra.mxu0 %v2921
  %v3070 = vpop.f32.mrf.mxu0
  %v3071 = vadd.f32 0.0, %v3070
  %v3072 = vpop.f32.mrf.mxu0
  %3073 = vdwg.mxu0
  %3074 = vmatpush.bf16.msra.mxu0 0
  %3075 = vmatpush.bf16.msra.mxu0 0
  %3076 = vmatpush.bf16.msra.mxu0 0
  %3077 = vmatpush.bf16.msra.mxu0 0
  %3078 = vmatpush.bf16.msra.mxu0 0
  %3079 = vmatpush.bf16.msra.mxu0 0
  %3080 = vmatpush.bf16.msra.mxu0 0
  %3081 = vmatpush.bf16.msra.mxu0 %v2945
  %3082 = vmatmul.bf16.gmra.mxu0 %v2921
  %v3083 = vpop.f32.mrf.mxu0
  %v3084 = vadd.f32 0.0, %v3083
  %v3085 = vpop.f32.mrf.mxu0
  %3086 = vdwg.mxu0
  %3087 = vmatpush.bf16.msra.mxu0 0
  %3088 = vmatpush.bf16.msra.mxu0 0
  %3089 = vmatpush.bf16.msra.mxu0 0
  %3090 = vmatpush.bf16.msra.mxu0 0
  %3091 = vmatpush.bf16.msra.mxu0 0
  %3092 = vmatpush.bf16.msra.mxu0 0
  %3093 = vmatpush.bf16.msra.mxu0 0
  %3094 = vmatpush.bf16.msra.mxu0 %v2948
  %3095 = vmatmul.bf16.gmra.mxu0 %v2921
  %v3096 = vpop.f32.mrf.mxu0
  %v3097 = vadd.f32 0.0, %v3096
  %v3098 = vpop.f32.mrf.mxu0
  %3099 = vdwg.mxu0
  %3100 = vmatpush.bf16.msra.mxu0 0
  %3101 = vmatpush.bf16.msra.mxu0 0
  %3102 = vmatpush.bf16.msra.mxu0 0
  %3103 = vmatpush.bf16.msra.mxu0 0
  %3104 = vmatpush.bf16.msra.mxu0 0
  %3105 = vmatpush.bf16.msra.mxu0 0
  %3106 = vmatpush.bf16.msra.mxu0 0
  %3107 = vmatpush.bf16.msra.mxu0 %v2951
  %3108 = vmatmul.bf16.gmra.mxu0 %v2921
  %v3109 = vpop.f32.mrf.mxu0
  %v3110 = vadd.f32 0.0, %v3109
  %v3111 = vpop.f32.mrf.mxu0
  %3112 = vdwg.mxu0
  %3113 = vmatpush.bf16.msra.mxu0 0
  %3114 = vmatpush.bf16.msra.mxu0 0
  %3115 = vmatpush.bf16.msra.mxu0 0
  %3116 = vmatpush.bf16.msra.mxu0 0
  %3117 = vmatpush.bf16.msra.mxu0 0
  %3118 = vmatpush.bf16.msra.mxu0 0
  %3119 = vmatpush.bf16.msra.mxu0 0
  %3120 = vmatpush.bf16.msra.mxu0 %v2954
  %3121 = vmatmul.bf16.gmra.mxu0 %v2921
  %v3122 = vpop.f32.mrf.mxu0
  %v3123 = vadd.f32 0.0, %v3122
  %v3124 = vpop.f32.mrf.mxu0
  %3125 = vdwg.mxu0
  %3126 = vmatpush.bf16.msra.mxu0 0
  %3127 = vmatpush.bf16.msra.mxu0 0
  %3128 = vmatpush.bf16.msra.mxu0 0
  %3129 = vmatpush.bf16.msra.mxu0 0
  %3130 = vmatpush.bf16.msra.mxu0 0
  %3131 = vmatpush.bf16.msra.mxu0 0
  %3132 = vmatpush.bf16.msra.mxu0 0
  %3133 = vmatpush.bf16.msra.mxu0 %v2957
  %3134 = vmatmul.bf16.gmra.mxu0 %v2921
  %v3135 = vpop.f32.mrf.mxu0
  %v3136 = vadd.f32 0.0, %v3135
  %v3137 = vpop.f32.mrf.mxu0
  %3138 = vdwg.mxu0
  %3139 = vmatpush.bf16.msra.mxu0 0
  %3140 = vmatpush.bf16.msra.mxu0 0
  %3141 = vmatpush.bf16.msra.mxu0 0
  %3142 = vmatpush.bf16.msra.mxu0 0
  %3143 = vmatpush.bf16.msra.mxu0 0
  %3144 = vmatpush.bf16.msra.mxu0 0
  %3145 = vmatpush.bf16.msra.mxu0 0
  %3146 = vmatpush.bf16.msra.mxu0 %v2960
  %3147 = vmatmul.bf16.gmra.mxu0 %v2921
  %v3148 = vpop.f32.mrf.mxu0
  %v3149 = vadd.f32 0.0, %v3148
  %v3150 = vpop.f32.mrf.mxu0
  %3151 = vdwg.mxu0
  %3152 = vmatpush.bf16.msra.mxu0 0
  %3153 = vmatpush.bf16.msra.mxu0 0
  %3154 = vmatpush.bf16.msra.mxu0 0
  %3155 = vmatpush.bf16.msra.mxu0 0
  %3156 = vmatpush.bf16.msra.mxu0 0
  %3157 = vmatpush.bf16.msra.mxu0 0
  %3158 = vmatpush.bf16.msra.mxu0 0
  %3159 = vmatpush.bf16.msra.mxu0 %v2963
  %3160 = vmatmul.bf16.gmra.mxu0 %v2921
  %v3161 = vpop.f32.mrf.mxu0
  %v3162 = vadd.f32 0.0, %v3161
  %v3163 = vpop.f32.mrf.mxu0
  %3164 = vdwg.mxu0
  %3165 = vmatpush.bf16.msra.mxu0 0
  %3166 = vmatpush.bf16.msra.mxu0 0
  %3167 = vmatpush.bf16.msra.mxu0 0
  %3168 = vmatpush.bf16.msra.mxu0 0
  %3169 = vmatpush.bf16.msra.mxu0 0
  %3170 = vmatpush.bf16.msra.mxu0 0
  %3171 = vmatpush.bf16.msra.mxu0 0
  %3172 = vmatpush.bf16.msra.mxu0 %v2966
  %3173 = vmatmul.bf16.gmra.mxu0 %v2921
  %v3174 = vpop.f32.mrf.mxu0
  %v3175 = vadd.f32 0.0, %v3174
  %v3176 = vpop.f32.mrf.mxu0
  %3177 = vdwg.mxu0
  %3178 = vmatpush.bf16.msra.mxu0 0
  %3179 = vmatpush.bf16.msra.mxu0 0
  %3180 = vmatpush.bf16.msra.mxu0 0
  %3181 = vmatpush.bf16.msra.mxu0 0
  %3182 = vmatpush.bf16.msra.mxu0 0
  %3183 = vmatpush.bf16.msra.mxu0 0
  %3184 = vmatpush.bf16.msra.mxu0 0
  %3185 = vmatpush.bf16.msra.mxu0 %v2969
  %3186 = vmatmul.bf16.gmra.mxu0 %v2921
  %v3187 = vpop.f32.mrf.mxu0
  %v3188 = vadd.f32 0.0, %v3187
  %v3189 = vpop.f32.mrf.mxu0
  %3190 = vdwg.mxu0
  %3191 = vmatpush.bf16.msra.mxu0 0
  %3192 = vmatpush.bf16.msra.mxu0 0
  %3193 = vmatpush.bf16.msra.mxu0 0
  %3194 = vmatpush.bf16.msra.mxu0 0
  %3195 = vmatpush.bf16.msra.mxu0 0
  %3196 = vmatpush.bf16.msra.mxu0 0
  %3197 = vmatpush.bf16.msra.mxu0 0
  %3198 = vmatpush.bf16.msra.mxu0 %v2972
  %3199 = vmatmul.bf16.gmra.mxu0 %v2921
  %v3200 = vpop.f32.mrf.mxu0
  %v3201 = vadd.f32 0.0, %v3200
  %v3202 = vpop.f32.mrf.mxu0
  %3203 = vdwg.mxu0
  %3204 = vmatpush.bf16.msra.mxu0 0
  %3205 = vmatpush.bf16.msra.mxu0 0
  %3206 = vmatpush.bf16.msra.mxu0 0
  %3207 = vmatpush.bf16.msra.mxu0 0
  %3208 = vmatpush.bf16.msra.mxu0 0
  %3209 = vmatpush.bf16.msra.mxu0 0
  %3210 = vmatpush.bf16.msra.mxu0 0
  %3211 = vmatpush.bf16.msra.mxu0 %v2975
  %3212 = vmatmul.bf16.gmra.mxu0 %v2921
  %v3213 = vpop.f32.mrf.mxu0
  %v3214 = vadd.f32 0.0, %v3213
  %v3215 = vpop.f32.mrf.mxu0
  %3216 = vdwg.mxu0
  %3217 = vmatpush.bf16.msra.mxu0 0
  %3218 = vmatpush.bf16.msra.mxu0 0
  %3219 = vmatpush.bf16.msra.mxu0 0
  %3220 = vmatpush.bf16.msra.mxu0 0
  %3221 = vmatpush.bf16.msra.mxu0 0
  %3222 = vmatpush.bf16.msra.mxu0 0
  %3223 = vmatpush.bf16.msra.mxu0 0
  %3224 = vmatpush.bf16.msra.mxu0 %v2978
  %3225 = vmatmul.bf16.gmra.mxu0 %v2921
  %v3226 = vpop.f32.mrf.mxu0
  %v3227 = vadd.f32 0.0, %v3226
  %v3228 = vpop.f32.mrf.mxu0
  %3229 = vdwg.mxu0
  %3230 = vmatpush.bf16.msra.mxu0 0
  %3231 = vmatpush.bf16.msra.mxu0 0
  %3232 = vmatpush.bf16.msra.mxu0 0
  %3233 = vmatpush.bf16.msra.mxu0 0
  %3234 = vmatpush.bf16.msra.mxu0 0
  %3235 = vmatpush.bf16.msra.mxu0 0
  %3236 = vmatpush.bf16.msra.mxu0 0
  %3237 = vmatpush.bf16.msra.mxu0 %v2981
  %3238 = vmatmul.bf16.gmra.mxu0 %v2921
  %v3239 = vpop.f32.mrf.mxu0
  %v3240 = vadd.f32 0.0, %v3239
  %v3241 = vpop.f32.mrf.mxu0
  %3242 = vdwg.mxu0
  %v3243 = vadd.f32 %v2835, %v2993
  %v3244 = vadd.f32 %v2836, %v3006
  %v3245 = vadd.f32 %v2837, %v3019
  %v3246 = vadd.f32 %v2838, %v3032
  %v3247 = vadd.f32 %v2839, %v3045
  %v3248 = vadd.f32 %v2840, %v3058
  %v3249 = vadd.f32 %v2841, %v3071
  %v3250 = vadd.f32 %v2842, %v3084
  %v3251 = vadd.f32 %v2843, %v3097
  %v3252 = vadd.f32 %v2844, %v3110
  %v3253 = vadd.f32 %v2845, %v3123
  %v3254 = vadd.f32 %v2846, %v3136
  %v3255 = vadd.f32 %v2847, %v3149
  %v3256 = vadd.f32 %v2848, %v3162
  %v3257 = vadd.f32 %v2849, %v3175
  %v3258 = vadd.f32 %v2850, %v3188
  %v3259 = vadd.f32 %v2851, %v3201
  %v3260 = vadd.f32 %v2852, %v3214
  %v3261 = vadd.f32 %v2853, %v3227
  %v3262 = vadd.f32 %v2854, %v3240
  %s3263 = scalar_lea.vmem %s3, 20
  %v3264 = vld [vmem:[%s3263] sm:$0xf]
  %3265 = vrot.lane.b32.xlu0 %v1258, 92
  %v3266 = vpop.permute.xlu0 %3265
  %3267 = vrot.lane.b32.xlu0 %v1259, 92
  %v3268 = vpop.permute.xlu0 %3267
  %3269 = vrot.lane.b32.xlu0 %v1260, 92
  %v3270 = vpop.permute.xlu0 %3269
  %3271 = vrot.lane.b32.xlu0 %v1261, 92
  %v3272 = vpop.permute.xlu0 %3271
  %3273 = vrot.lane.b32.xlu0 %v1262, 92
  %v3274 = vpop.permute.xlu0 %3273
  %3275 = vrot.lane.b32.xlu0 %v1263, 92
  %v3276 = vpop.permute.xlu0 %3275
  %3277 = vrot.lane.b32.xlu0 %v1264, 92
  %v3278 = vpop.permute.xlu0 %3277
  %3279 = vrot.lane.b32.xlu0 %v1265, 92
  %v3280 = vpop.permute.xlu0 %3279
  %3281 = vrot.lane.b32.xlu0 %v1266, 92
  %v3282 = vpop.permute.xlu0 %3281
  %3283 = vrot.lane.b32.xlu0 %v1267, 92
  %v3284 = vpop.permute.xlu0 %3283
  %3285 = vrot.lane.b32.xlu0 %v1268, 92
  %v3286 = vpop.permute.xlu0 %3285
  %3287 = vrot.lane.b32.xlu0 %v1269, 92
  %v3288 = vpop.permute.xlu0 %3287
  %3289 = vrot.lane.b32.xlu0 %v1270, 92
  %v3290 = vpop.permute.xlu0 %3289
  %3291 = vrot.lane.b32.xlu0 %v1271, 92
  %v3292 = vpop.permute.xlu0 %3291
  %3293 = vrot.lane.b32.xlu0 %v1272, 92
  %v3294 = vpop.permute.xlu0 %3293
  %3295 = vrot.lane.b32.xlu0 %v1273, 92
  %v3296 = vpop.permute.xlu0 %3295
  %3297 = vrot.lane.b32.xlu0 %v1274, 92
  %v3298 = vpop.permute.xlu0 %3297
  %3299 = vrot.lane.b32.xlu0 %v1275, 92
  %v3300 = vpop.permute.xlu0 %3299
  %3301 = vrot.lane.b32.xlu0 %v1276, 92
  %v3302 = vpop.permute.xlu0 %3301
  %3303 = vrot.lane.b32.xlu0 %v1277, 92
  %v3304 = vpop.permute.xlu0 %3303
  %3305 = vrot.lane.b32.xlu0 %v1278, 92
  %v3306 = vpop.permute.xlu0 %3305
  %vm3307 = vcmask 752640
  %v3308 = vsel %vm3307, %v3266, %v3268
  %v3309 = vsel %vm3307, %v3268, %v3270
  %v3310 = vsel %vm3307, %v3270, %v3272
  %v3311 = vsel %vm3307, %v3272, %v3274
  %v3312 = vsel %vm3307, %v3274, %v3276
  %v3313 = vsel %vm3307, %v3276, %v3278
  %v3314 = vsel %vm3307, %v3278, %v3280
  %v3315 = vsel %vm3307, %v3280, %v3282
  %v3316 = vsel %vm3307, %v3282, %v3284
  %v3317 = vsel %vm3307, %v3284, %v3286
  %v3318 = vsel %vm3307, %v3286, %v3288
  %v3319 = vsel %vm3307, %v3288, %v3290
  %v3320 = vsel %vm3307, %v3290, %v3292
  %v3321 = vsel %vm3307, %v3292, %v3294
  %v3322 = vsel %vm3307, %v3294, %v3296
  %v3323 = vsel %vm3307, %v3296, %v3298
  %v3324 = vsel %vm3307, %v3298, %v3300
  %v3325 = vsel %vm3307, %v3300, %v3302
  %v3326 = vsel %vm3307, %v3302, %v3304
  %v3327 = vsel %vm3307, %v3304, %v3306
  %v3329 = vsel %vm1341, %v3264, 0
  %v3332 = vsel %vm1345, %v3308, 0
  %v3335 = vsel %vm1345, %v3309, 0
  %v3338 = vsel %vm1345, %v3310, 0
  %v3341 = vsel %vm1345, %v3311, 0
  %v3344 = vsel %vm1345, %v3312, 0
  %v3347 = vsel %vm1345, %v3313, 0
  %v3350 = vsel %vm1345, %v3314, 0
  %v3353 = vsel %vm1345, %v3315, 0
  %v3356 = vsel %vm1345, %v3316, 0
  %v3359 = vsel %vm1345, %v3317, 0
  %v3362 = vsel %vm1345, %v3318, 0
  %v3365 = vsel %vm1345, %v3319, 0
  %v3368 = vsel %vm1345, %v3320, 0
  %v3371 = vsel %vm1345, %v3321, 0
  %v3374 = vsel %vm1345, %v3322, 0
  %v3377 = vsel %vm1345, %v3323, 0
  %v3380 = vsel %vm1345, %v3324, 0
  %v3383 = vsel %vm1345, %v3325, 0
  %v3386 = vsel %vm1345, %v3326, 0
  %v3389 = vsel %vm1345, %v3327, 0
  %3391 = vmatpush.bf16.msra.mxu0 0
  %3392 = vmatpush.bf16.msra.mxu0 0
  %3393 = vmatpush.bf16.msra.mxu0 0
  %3394 = vmatpush.bf16.msra.mxu0 0
  %3395 = vmatpush.bf16.msra.mxu0 0
  %3396 = vmatpush.bf16.msra.mxu0 0
  %3397 = vmatpush.bf16.msra.mxu0 0
  %3398 = vmatpush.bf16.msra.mxu0 %v3332
  %3399 = vmatmul.bf16.gmra.mxu0 %v3329
  %v3400 = vpop.f32.mrf.mxu0
  %v3401 = vadd.f32 0.0, %v3400
  %v3402 = vpop.f32.mrf.mxu0
  %3403 = vdwg.mxu0
  %3404 = vmatpush.bf16.msra.mxu0 0
  %3405 = vmatpush.bf16.msra.mxu0 0
  %3406 = vmatpush.bf16.msra.mxu0 0
  %3407 = vmatpush.bf16.msra.mxu0 0
  %3408 = vmatpush.bf16.msra.mxu0 0
  %3409 = vmatpush.bf16.msra.mxu0 0
  %3410 = vmatpush.bf16.msra.mxu0 0
  %3411 = vmatpush.bf16.msra.mxu0 %v3335
  %3412 = vmatmul.bf16.gmra.mxu0 %v3329
  %v3413 = vpop.f32.mrf.mxu0
  %v3414 = vadd.f32 0.0, %v3413
  %v3415 = vpop.f32.mrf.mxu0
  %3416 = vdwg.mxu0
  %3417 = vmatpush.bf16.msra.mxu0 0
  %3418 = vmatpush.bf16.msra.mxu0 0
  %3419 = vmatpush.bf16.msra.mxu0 0
  %3420 = vmatpush.bf16.msra.mxu0 0
  %3421 = vmatpush.bf16.msra.mxu0 0
  %3422 = vmatpush.bf16.msra.mxu0 0
  %3423 = vmatpush.bf16.msra.mxu0 0
  %3424 = vmatpush.bf16.msra.mxu0 %v3338
  %3425 = vmatmul.bf16.gmra.mxu0 %v3329
  %v3426 = vpop.f32.mrf.mxu0
  %v3427 = vadd.f32 0.0, %v3426
  %v3428 = vpop.f32.mrf.mxu0
  %3429 = vdwg.mxu0
  %3430 = vmatpush.bf16.msra.mxu0 0
  %3431 = vmatpush.bf16.msra.mxu0 0
  %3432 = vmatpush.bf16.msra.mxu0 0
  %3433 = vmatpush.bf16.msra.mxu0 0
  %3434 = vmatpush.bf16.msra.mxu0 0
  %3435 = vmatpush.bf16.msra.mxu0 0
  %3436 = vmatpush.bf16.msra.mxu0 0
  %3437 = vmatpush.bf16.msra.mxu0 %v3341
  %3438 = vmatmul.bf16.gmra.mxu0 %v3329
  %v3439 = vpop.f32.mrf.mxu0
  %v3440 = vadd.f32 0.0, %v3439
  %v3441 = vpop.f32.mrf.mxu0
  %3442 = vdwg.mxu0
  %3443 = vmatpush.bf16.msra.mxu0 0
  %3444 = vmatpush.bf16.msra.mxu0 0
  %3445 = vmatpush.bf16.msra.mxu0 0
  %3446 = vmatpush.bf16.msra.mxu0 0
  %3447 = vmatpush.bf16.msra.mxu0 0
  %3448 = vmatpush.bf16.msra.mxu0 0
  %3449 = vmatpush.bf16.msra.mxu0 0
  %3450 = vmatpush.bf16.msra.mxu0 %v3344
  %3451 = vmatmul.bf16.gmra.mxu0 %v3329
  %v3452 = vpop.f32.mrf.mxu0
  %v3453 = vadd.f32 0.0, %v3452
  %v3454 = vpop.f32.mrf.mxu0
  %3455 = vdwg.mxu0
  %3456 = vmatpush.bf16.msra.mxu0 0
  %3457 = vmatpush.bf16.msra.mxu0 0
  %3458 = vmatpush.bf16.msra.mxu0 0
  %3459 = vmatpush.bf16.msra.mxu0 0
  %3460 = vmatpush.bf16.msra.mxu0 0
  %3461 = vmatpush.bf16.msra.mxu0 0
  %3462 = vmatpush.bf16.msra.mxu0 0
  %3463 = vmatpush.bf16.msra.mxu0 %v3347
  %3464 = vmatmul.bf16.gmra.mxu0 %v3329
  %v3465 = vpop.f32.mrf.mxu0
  %v3466 = vadd.f32 0.0, %v3465
  %v3467 = vpop.f32.mrf.mxu0
  %3468 = vdwg.mxu0
  %3469 = vmatpush.bf16.msra.mxu0 0
  %3470 = vmatpush.bf16.msra.mxu0 0
  %3471 = vmatpush.bf16.msra.mxu0 0
  %3472 = vmatpush.bf16.msra.mxu0 0
  %3473 = vmatpush.bf16.msra.mxu0 0
  %3474 = vmatpush.bf16.msra.mxu0 0
  %3475 = vmatpush.bf16.msra.mxu0 0
  %3476 = vmatpush.bf16.msra.mxu0 %v3350
  %3477 = vmatmul.bf16.gmra.mxu0 %v3329
  %v3478 = vpop.f32.mrf.mxu0
  %v3479 = vadd.f32 0.0, %v3478
  %v3480 = vpop.f32.mrf.mxu0
  %3481 = vdwg.mxu0
  %3482 = vmatpush.bf16.msra.mxu0 0
  %3483 = vmatpush.bf16.msra.mxu0 0
  %3484 = vmatpush.bf16.msra.mxu0 0
  %3485 = vmatpush.bf16.msra.mxu0 0
  %3486 = vmatpush.bf16.msra.mxu0 0
  %3487 = vmatpush.bf16.msra.mxu0 0
  %3488 = vmatpush.bf16.msra.mxu0 0
  %3489 = vmatpush.bf16.msra.mxu0 %v3353
  %3490 = vmatmul.bf16.gmra.mxu0 %v3329
  %v3491 = vpop.f32.mrf.mxu0
  %v3492 = vadd.f32 0.0, %v3491
  %v3493 = vpop.f32.mrf.mxu0
  %3494 = vdwg.mxu0
  %3495 = vmatpush.bf16.msra.mxu0 0
  %3496 = vmatpush.bf16.msra.mxu0 0
  %3497 = vmatpush.bf16.msra.mxu0 0
  %3498 = vmatpush.bf16.msra.mxu0 0
  %3499 = vmatpush.bf16.msra.mxu0 0
  %3500 = vmatpush.bf16.msra.mxu0 0
  %3501 = vmatpush.bf16.msra.mxu0 0
  %3502 = vmatpush.bf16.msra.mxu0 %v3356
  %3503 = vmatmul.bf16.gmra.mxu0 %v3329
  %v3504 = vpop.f32.mrf.mxu0
  %v3505 = vadd.f32 0.0, %v3504
  %v3506 = vpop.f32.mrf.mxu0
  %3507 = vdwg.mxu0
  %3508 = vmatpush.bf16.msra.mxu0 0
  %3509 = vmatpush.bf16.msra.mxu0 0
  %3510 = vmatpush.bf16.msra.mxu0 0
  %3511 = vmatpush.bf16.msra.mxu0 0
  %3512 = vmatpush.bf16.msra.mxu0 0
  %3513 = vmatpush.bf16.msra.mxu0 0
  %3514 = vmatpush.bf16.msra.mxu0 0
  %3515 = vmatpush.bf16.msra.mxu0 %v3359
  %3516 = vmatmul.bf16.gmra.mxu0 %v3329
  %v3517 = vpop.f32.mrf.mxu0
  %v3518 = vadd.f32 0.0, %v3517
  %v3519 = vpop.f32.mrf.mxu0
  %3520 = vdwg.mxu0
  %3521 = vmatpush.bf16.msra.mxu0 0
  %3522 = vmatpush.bf16.msra.mxu0 0
  %3523 = vmatpush.bf16.msra.mxu0 0
  %3524 = vmatpush.bf16.msra.mxu0 0
  %3525 = vmatpush.bf16.msra.mxu0 0
  %3526 = vmatpush.bf16.msra.mxu0 0
  %3527 = vmatpush.bf16.msra.mxu0 0
  %3528 = vmatpush.bf16.msra.mxu0 %v3362
  %3529 = vmatmul.bf16.gmra.mxu0 %v3329
  %v3530 = vpop.f32.mrf.mxu0
  %v3531 = vadd.f32 0.0, %v3530
  %v3532 = vpop.f32.mrf.mxu0
  %3533 = vdwg.mxu0
  %3534 = vmatpush.bf16.msra.mxu0 0
  %3535 = vmatpush.bf16.msra.mxu0 0
  %3536 = vmatpush.bf16.msra.mxu0 0
  %3537 = vmatpush.bf16.msra.mxu0 0
  %3538 = vmatpush.bf16.msra.mxu0 0
  %3539 = vmatpush.bf16.msra.mxu0 0
  %3540 = vmatpush.bf16.msra.mxu0 0
  %3541 = vmatpush.bf16.msra.mxu0 %v3365
  %3542 = vmatmul.bf16.gmra.mxu0 %v3329
  %v3543 = vpop.f32.mrf.mxu0
  %v3544 = vadd.f32 0.0, %v3543
  %v3545 = vpop.f32.mrf.mxu0
  %3546 = vdwg.mxu0
  %3547 = vmatpush.bf16.msra.mxu0 0
  %3548 = vmatpush.bf16.msra.mxu0 0
  %3549 = vmatpush.bf16.msra.mxu0 0
  %3550 = vmatpush.bf16.msra.mxu0 0
  %3551 = vmatpush.bf16.msra.mxu0 0
  %3552 = vmatpush.bf16.msra.mxu0 0
  %3553 = vmatpush.bf16.msra.mxu0 0
  %3554 = vmatpush.bf16.msra.mxu0 %v3368
  %3555 = vmatmul.bf16.gmra.mxu0 %v3329
  %v3556 = vpop.f32.mrf.mxu0
  %v3557 = vadd.f32 0.0, %v3556
  %v3558 = vpop.f32.mrf.mxu0
  %3559 = vdwg.mxu0
  %3560 = vmatpush.bf16.msra.mxu0 0
  %3561 = vmatpush.bf16.msra.mxu0 0
  %3562 = vmatpush.bf16.msra.mxu0 0
  %3563 = vmatpush.bf16.msra.mxu0 0
  %3564 = vmatpush.bf16.msra.mxu0 0
  %3565 = vmatpush.bf16.msra.mxu0 0
  %3566 = vmatpush.bf16.msra.mxu0 0
  %3567 = vmatpush.bf16.msra.mxu0 %v3371
  %3568 = vmatmul.bf16.gmra.mxu0 %v3329
  %v3569 = vpop.f32.mrf.mxu0
  %v3570 = vadd.f32 0.0, %v3569
  %v3571 = vpop.f32.mrf.mxu0
  %3572 = vdwg.mxu0
  %3573 = vmatpush.bf16.msra.mxu0 0
  %3574 = vmatpush.bf16.msra.mxu0 0
  %3575 = vmatpush.bf16.msra.mxu0 0
  %3576 = vmatpush.bf16.msra.mxu0 0
  %3577 = vmatpush.bf16.msra.mxu0 0
  %3578 = vmatpush.bf16.msra.mxu0 0
  %3579 = vmatpush.bf16.msra.mxu0 0
  %3580 = vmatpush.bf16.msra.mxu0 %v3374
  %3581 = vmatmul.bf16.gmra.mxu0 %v3329
  %v3582 = vpop.f32.mrf.mxu0
  %v3583 = vadd.f32 0.0, %v3582
  %v3584 = vpop.f32.mrf.mxu0
  %3585 = vdwg.mxu0
  %3586 = vmatpush.bf16.msra.mxu0 0
  %3587 = vmatpush.bf16.msra.mxu0 0
  %3588 = vmatpush.bf16.msra.mxu0 0
  %3589 = vmatpush.bf16.msra.mxu0 0
  %3590 = vmatpush.bf16.msra.mxu0 0
  %3591 = vmatpush.bf16.msra.mxu0 0
  %3592 = vmatpush.bf16.msra.mxu0 0
  %3593 = vmatpush.bf16.msra.mxu0 %v3377
  %3594 = vmatmul.bf16.gmra.mxu0 %v3329
  %v3595 = vpop.f32.mrf.mxu0
  %v3596 = vadd.f32 0.0, %v3595
  %v3597 = vpop.f32.mrf.mxu0
  %3598 = vdwg.mxu0
  %3599 = vmatpush.bf16.msra.mxu0 0
  %3600 = vmatpush.bf16.msra.mxu0 0
  %3601 = vmatpush.bf16.msra.mxu0 0
  %3602 = vmatpush.bf16.msra.mxu0 0
  %3603 = vmatpush.bf16.msra.mxu0 0
  %3604 = vmatpush.bf16.msra.mxu0 0
  %3605 = vmatpush.bf16.msra.mxu0 0
  %3606 = vmatpush.bf16.msra.mxu0 %v3380
  %3607 = vmatmul.bf16.gmra.mxu0 %v3329
  %v3608 = vpop.f32.mrf.mxu0
  %v3609 = vadd.f32 0.0, %v3608
  %v3610 = vpop.f32.mrf.mxu0
  %3611 = vdwg.mxu0
  %3612 = vmatpush.bf16.msra.mxu0 0
  %3613 = vmatpush.bf16.msra.mxu0 0
  %3614 = vmatpush.bf16.msra.mxu0 0
  %3615 = vmatpush.bf16.msra.mxu0 0
  %3616 = vmatpush.bf16.msra.mxu0 0
  %3617 = vmatpush.bf16.msra.mxu0 0
  %3618 = vmatpush.bf16.msra.mxu0 0
  %3619 = vmatpush.bf16.msra.mxu0 %v3383
  %3620 = vmatmul.bf16.gmra.mxu0 %v3329
  %v3621 = vpop.f32.mrf.mxu0
  %v3622 = vadd.f32 0.0, %v3621
  %v3623 = vpop.f32.mrf.mxu0
  %3624 = vdwg.mxu0
  %3625 = vmatpush.bf16.msra.mxu0 0
  %3626 = vmatpush.bf16.msra.mxu0 0
  %3627 = vmatpush.bf16.msra.mxu0 0
  %3628 = vmatpush.bf16.msra.mxu0 0
  %3629 = vmatpush.bf16.msra.mxu0 0
  %3630 = vmatpush.bf16.msra.mxu0 0
  %3631 = vmatpush.bf16.msra.mxu0 0
  %3632 = vmatpush.bf16.msra.mxu0 %v3386
  %3633 = vmatmul.bf16.gmra.mxu0 %v3329
  %v3634 = vpop.f32.mrf.mxu0
  %v3635 = vadd.f32 0.0, %v3634
  %v3636 = vpop.f32.mrf.mxu0
  %3637 = vdwg.mxu0
  %3638 = vmatpush.bf16.msra.mxu0 0
  %3639 = vmatpush.bf16.msra.mxu0 0
  %3640 = vmatpush.bf16.msra.mxu0 0
  %3641 = vmatpush.bf16.msra.mxu0 0
  %3642 = vmatpush.bf16.msra.mxu0 0
  %3643 = vmatpush.bf16.msra.mxu0 0
  %3644 = vmatpush.bf16.msra.mxu0 0
  %3645 = vmatpush.bf16.msra.mxu0 %v3389
  %3646 = vmatmul.bf16.gmra.mxu0 %v3329
  %v3647 = vpop.f32.mrf.mxu0
  %v3648 = vadd.f32 0.0, %v3647
  %v3649 = vpop.f32.mrf.mxu0
  %3650 = vdwg.mxu0
  %v3651 = vadd.f32 %v3243, %v3401
  %v3652 = vadd.f32 %v3244, %v3414
  %v3653 = vadd.f32 %v3245, %v3427
  %v3654 = vadd.f32 %v3246, %v3440
  %v3655 = vadd.f32 %v3247, %v3453
  %v3656 = vadd.f32 %v3248, %v3466
  %v3657 = vadd.f32 %v3249, %v3479
  %v3658 = vadd.f32 %v3250, %v3492
  %v3659 = vadd.f32 %v3251, %v3505
  %v3660 = vadd.f32 %v3252, %v3518
  %v3661 = vadd.f32 %v3253, %v3531
  %v3662 = vadd.f32 %v3254, %v3544
  %v3663 = vadd.f32 %v3255, %v3557
  %v3664 = vadd.f32 %v3256, %v3570
  %v3665 = vadd.f32 %v3257, %v3583
  %v3666 = vadd.f32 %v3258, %v3596
  %v3667 = vadd.f32 %v3259, %v3609
  %v3668 = vadd.f32 %v3260, %v3622
  %v3669 = vadd.f32 %v3261, %v3635
  %v3670 = vadd.f32 %v3262, %v3648
  %s3671 = scalar_lea.vmem %s3, 24
  %v3672 = vld [vmem:[%s3671] sm:$0xf]
  %3673 = vrot.lane.b32.xlu0 %v1258, 60
  %v3674 = vpop.permute.xlu0 %3673
  %3675 = vrot.lane.b32.xlu0 %v1259, 60
  %v3676 = vpop.permute.xlu0 %3675
  %3677 = vrot.lane.b32.xlu0 %v1260, 60
  %v3678 = vpop.permute.xlu0 %3677
  %3679 = vrot.lane.b32.xlu0 %v1261, 60
  %v3680 = vpop.permute.xlu0 %3679
  %3681 = vrot.lane.b32.xlu0 %v1262, 60
  %v3682 = vpop.permute.xlu0 %3681
  %3683 = vrot.lane.b32.xlu0 %v1263, 60
  %v3684 = vpop.permute.xlu0 %3683
  %3685 = vrot.lane.b32.xlu0 %v1264, 60
  %v3686 = vpop.permute.xlu0 %3685
  %3687 = vrot.lane.b32.xlu0 %v1265, 60
  %v3688 = vpop.permute.xlu0 %3687
  %3689 = vrot.lane.b32.xlu0 %v1266, 60
  %v3690 = vpop.permute.xlu0 %3689
  %3691 = vrot.lane.b32.xlu0 %v1267, 60
  %v3692 = vpop.permute.xlu0 %3691
  %3693 = vrot.lane.b32.xlu0 %v1268, 60
  %v3694 = vpop.permute.xlu0 %3693
  %3695 = vrot.lane.b32.xlu0 %v1269, 60
  %v3696 = vpop.permute.xlu0 %3695
  %3697 = vrot.lane.b32.xlu0 %v1270, 60
  %v3698 = vpop.permute.xlu0 %3697
  %3699 = vrot.lane.b32.xlu0 %v1271, 60
  %v3700 = vpop.permute.xlu0 %3699
  %3701 = vrot.lane.b32.xlu0 %v1272, 60
  %v3702 = vpop.permute.xlu0 %3701
  %3703 = vrot.lane.b32.xlu0 %v1273, 60
  %v3704 = vpop.permute.xlu0 %3703
  %3705 = vrot.lane.b32.xlu0 %v1274, 60
  %v3706 = vpop.permute.xlu0 %3705
  %3707 = vrot.lane.b32.xlu0 %v1275, 60
  %v3708 = vpop.permute.xlu0 %3707
  %3709 = vrot.lane.b32.xlu0 %v1276, 60
  %v3710 = vpop.permute.xlu0 %3709
  %3711 = vrot.lane.b32.xlu0 %v1277, 60
  %v3712 = vpop.permute.xlu0 %3711
  %3713 = vrot.lane.b32.xlu0 %v1278, 60
  %v3714 = vpop.permute.xlu0 %3713
  %vm3715 = vcmask 490496
  %v3716 = vsel %vm3715, %v3674, %v3676
  %v3717 = vsel %vm3715, %v3676, %v3678
  %v3718 = vsel %vm3715, %v3678, %v3680
  %v3719 = vsel %vm3715, %v3680, %v3682
  %v3720 = vsel %vm3715, %v3682, %v3684
  %v3721 = vsel %vm3715, %v3684, %v3686
  %v3722 = vsel %vm3715, %v3686, %v3688
  %v3723 = vsel %vm3715, %v3688, %v3690
  %v3724 = vsel %vm3715, %v3690, %v3692
  %v3725 = vsel %vm3715, %v3692, %v3694
  %v3726 = vsel %vm3715, %v3694, %v3696
  %v3727 = vsel %vm3715, %v3696, %v3698
  %v3728 = vsel %vm3715, %v3698, %v3700
  %v3729 = vsel %vm3715, %v3700, %v3702
  %v3730 = vsel %vm3715, %v3702, %v3704
  %v3731 = vsel %vm3715, %v3704, %v3706
  %v3732 = vsel %vm3715, %v3706, %v3708
  %v3733 = vsel %vm3715, %v3708, %v3710
  %v3734 = vsel %vm3715, %v3710, %v3712
  %v3735 = vsel %vm3715, %v3712, %v3714
  %v3737 = vsel %vm1341, %v3672, 0
  %v3740 = vsel %vm1345, %v3716, 0
  %v3743 = vsel %vm1345, %v3717, 0
  %v3746 = vsel %vm1345, %v3718, 0
  %v3749 = vsel %vm1345, %v3719, 0
  %v3752 = vsel %vm1345, %v3720, 0
  %v3755 = vsel %vm1345, %v3721, 0
  %v3758 = vsel %vm1345, %v3722, 0
  %v3761 = vsel %vm1345, %v3723, 0
  %v3764 = vsel %vm1345, %v3724, 0
  %v3767 = vsel %vm1345, %v3725, 0
  %v3770 = vsel %vm1345, %v3726, 0
  %v3773 = vsel %vm1345, %v3727, 0
  %v3776 = vsel %vm1345, %v3728, 0
  %v3779 = vsel %vm1345, %v3729, 0
  %v3782 = vsel %vm1345, %v3730, 0
  %v3785 = vsel %vm1345, %v3731, 0
  %v3788 = vsel %vm1345, %v3732, 0
  %v3791 = vsel %vm1345, %v3733, 0
  %v3794 = vsel %vm1345, %v3734, 0
  %v3797 = vsel %vm1345, %v3735, 0
  %3799 = vmatpush.bf16.msra.mxu0 0
  %3800 = vmatpush.bf16.msra.mxu0 0
  %3801 = vmatpush.bf16.msra.mxu0 0
  %3802 = vmatpush.bf16.msra.mxu0 0
  %3803 = vmatpush.bf16.msra.mxu0 0
  %3804 = vmatpush.bf16.msra.mxu0 0
  %3805 = vmatpush.bf16.msra.mxu0 0
  %3806 = vmatpush.bf16.msra.mxu0 %v3740
  %3807 = vmatmul.bf16.gmra.mxu0 %v3737
  %v3808 = vpop.f32.mrf.mxu0
  %v3809 = vadd.f32 0.0, %v3808
  %v3810 = vpop.f32.mrf.mxu0
  %3811 = vdwg.mxu0
  %3812 = vmatpush.bf16.msra.mxu0 0
  %3813 = vmatpush.bf16.msra.mxu0 0
  %3814 = vmatpush.bf16.msra.mxu0 0
  %3815 = vmatpush.bf16.msra.mxu0 0
  %3816 = vmatpush.bf16.msra.mxu0 0
  %3817 = vmatpush.bf16.msra.mxu0 0
  %3818 = vmatpush.bf16.msra.mxu0 0
  %3819 = vmatpush.bf16.msra.mxu0 %v3743
  %3820 = vmatmul.bf16.gmra.mxu0 %v3737
  %v3821 = vpop.f32.mrf.mxu0
  %v3822 = vadd.f32 0.0, %v3821
  %v3823 = vpop.f32.mrf.mxu0
  %3824 = vdwg.mxu0
  %3825 = vmatpush.bf16.msra.mxu0 0
  %3826 = vmatpush.bf16.msra.mxu0 0
  %3827 = vmatpush.bf16.msra.mxu0 0
  %3828 = vmatpush.bf16.msra.mxu0 0
  %3829 = vmatpush.bf16.msra.mxu0 0
  %3830 = vmatpush.bf16.msra.mxu0 0
  %3831 = vmatpush.bf16.msra.mxu0 0
  %3832 = vmatpush.bf16.msra.mxu0 %v3746
  %3833 = vmatmul.bf16.gmra.mxu0 %v3737
  %v3834 = vpop.f32.mrf.mxu0
  %v3835 = vadd.f32 0.0, %v3834
  %v3836 = vpop.f32.mrf.mxu0
  %3837 = vdwg.mxu0
  %3838 = vmatpush.bf16.msra.mxu0 0
  %3839 = vmatpush.bf16.msra.mxu0 0
  %3840 = vmatpush.bf16.msra.mxu0 0
  %3841 = vmatpush.bf16.msra.mxu0 0
  %3842 = vmatpush.bf16.msra.mxu0 0
  %3843 = vmatpush.bf16.msra.mxu0 0
  %3844 = vmatpush.bf16.msra.mxu0 0
  %3845 = vmatpush.bf16.msra.mxu0 %v3749
  %3846 = vmatmul.bf16.gmra.mxu0 %v3737
  %v3847 = vpop.f32.mrf.mxu0
  %v3848 = vadd.f32 0.0, %v3847
  %v3849 = vpop.f32.mrf.mxu0
  %3850 = vdwg.mxu0
  %3851 = vmatpush.bf16.msra.mxu0 0
  %3852 = vmatpush.bf16.msra.mxu0 0
  %3853 = vmatpush.bf16.msra.mxu0 0
  %3854 = vmatpush.bf16.msra.mxu0 0
  %3855 = vmatpush.bf16.msra.mxu0 0
  %3856 = vmatpush.bf16.msra.mxu0 0
  %3857 = vmatpush.bf16.msra.mxu0 0
  %3858 = vmatpush.bf16.msra.mxu0 %v3752
  %3859 = vmatmul.bf16.gmra.mxu0 %v3737
  %v3860 = vpop.f32.mrf.mxu0
  %v3861 = vadd.f32 0.0, %v3860
  %v3862 = vpop.f32.mrf.mxu0
  %3863 = vdwg.mxu0
  %3864 = vmatpush.bf16.msra.mxu0 0
  %3865 = vmatpush.bf16.msra.mxu0 0
  %3866 = vmatpush.bf16.msra.mxu0 0
  %3867 = vmatpush.bf16.msra.mxu0 0
  %3868 = vmatpush.bf16.msra.mxu0 0
  %3869 = vmatpush.bf16.msra.mxu0 0
  %3870 = vmatpush.bf16.msra.mxu0 0
  %3871 = vmatpush.bf16.msra.mxu0 %v3755
  %3872 = vmatmul.bf16.gmra.mxu0 %v3737
  %v3873 = vpop.f32.mrf.mxu0
  %v3874 = vadd.f32 0.0, %v3873
  %v3875 = vpop.f32.mrf.mxu0
  %3876 = vdwg.mxu0
  %3877 = vmatpush.bf16.msra.mxu0 0
  %3878 = vmatpush.bf16.msra.mxu0 0
  %3879 = vmatpush.bf16.msra.mxu0 0
  %3880 = vmatpush.bf16.msra.mxu0 0
  %3881 = vmatpush.bf16.msra.mxu0 0
  %3882 = vmatpush.bf16.msra.mxu0 0
  %3883 = vmatpush.bf16.msra.mxu0 0
  %3884 = vmatpush.bf16.msra.mxu0 %v3758
  %3885 = vmatmul.bf16.gmra.mxu0 %v3737
  %v3886 = vpop.f32.mrf.mxu0
  %v3887 = vadd.f32 0.0, %v3886
  %v3888 = vpop.f32.mrf.mxu0
  %3889 = vdwg.mxu0
  %3890 = vmatpush.bf16.msra.mxu0 0
  %3891 = vmatpush.bf16.msra.mxu0 0
  %3892 = vmatpush.bf16.msra.mxu0 0
  %3893 = vmatpush.bf16.msra.mxu0 0
  %3894 = vmatpush.bf16.msra.mxu0 0
  %3895 = vmatpush.bf16.msra.mxu0 0
  %3896 = vmatpush.bf16.msra.mxu0 0
  %3897 = vmatpush.bf16.msra.mxu0 %v3761
  %3898 = vmatmul.bf16.gmra.mxu0 %v3737
  %v3899 = vpop.f32.mrf.mxu0
  %v3900 = vadd.f32 0.0, %v3899
  %v3901 = vpop.f32.mrf.mxu0
  %3902 = vdwg.mxu0
  %3903 = vmatpush.bf16.msra.mxu0 0
  %3904 = vmatpush.bf16.msra.mxu0 0
  %3905 = vmatpush.bf16.msra.mxu0 0
  %3906 = vmatpush.bf16.msra.mxu0 0
  %3907 = vmatpush.bf16.msra.mxu0 0
  %3908 = vmatpush.bf16.msra.mxu0 0
  %3909 = vmatpush.bf16.msra.mxu0 0
  %3910 = vmatpush.bf16.msra.mxu0 %v3764
  %3911 = vmatmul.bf16.gmra.mxu0 %v3737
  %v3912 = vpop.f32.mrf.mxu0
  %v3913 = vadd.f32 0.0, %v3912
  %v3914 = vpop.f32.mrf.mxu0
  %3915 = vdwg.mxu0
  %3916 = vmatpush.bf16.msra.mxu0 0
  %3917 = vmatpush.bf16.msra.mxu0 0
  %3918 = vmatpush.bf16.msra.mxu0 0
  %3919 = vmatpush.bf16.msra.mxu0 0
  %3920 = vmatpush.bf16.msra.mxu0 0
  %3921 = vmatpush.bf16.msra.mxu0 0
  %3922 = vmatpush.bf16.msra.mxu0 0
  %3923 = vmatpush.bf16.msra.mxu0 %v3767
  %3924 = vmatmul.bf16.gmra.mxu0 %v3737
  %v3925 = vpop.f32.mrf.mxu0
  %v3926 = vadd.f32 0.0, %v3925
  %v3927 = vpop.f32.mrf.mxu0
  %3928 = vdwg.mxu0
  %3929 = vmatpush.bf16.msra.mxu0 0
  %3930 = vmatpush.bf16.msra.mxu0 0
  %3931 = vmatpush.bf16.msra.mxu0 0
  %3932 = vmatpush.bf16.msra.mxu0 0
  %3933 = vmatpush.bf16.msra.mxu0 0
  %3934 = vmatpush.bf16.msra.mxu0 0
  %3935 = vmatpush.bf16.msra.mxu0 0
  %3936 = vmatpush.bf16.msra.mxu0 %v3770
  %3937 = vmatmul.bf16.gmra.mxu0 %v3737
  %v3938 = vpop.f32.mrf.mxu0
  %v3939 = vadd.f32 0.0, %v3938
  %v3940 = vpop.f32.mrf.mxu0
  %3941 = vdwg.mxu0
  %3942 = vmatpush.bf16.msra.mxu0 0
  %3943 = vmatpush.bf16.msra.mxu0 0
  %3944 = vmatpush.bf16.msra.mxu0 0
  %3945 = vmatpush.bf16.msra.mxu0 0
  %3946 = vmatpush.bf16.msra.mxu0 0
  %3947 = vmatpush.bf16.msra.mxu0 0
  %3948 = vmatpush.bf16.msra.mxu0 0
  %3949 = vmatpush.bf16.msra.mxu0 %v3773
  %3950 = vmatmul.bf16.gmra.mxu0 %v3737
  %v3951 = vpop.f32.mrf.mxu0
  %v3952 = vadd.f32 0.0, %v3951
  %v3953 = vpop.f32.mrf.mxu0
  %3954 = vdwg.mxu0
  %3955 = vmatpush.bf16.msra.mxu0 0
  %3956 = vmatpush.bf16.msra.mxu0 0
  %3957 = vmatpush.bf16.msra.mxu0 0
  %3958 = vmatpush.bf16.msra.mxu0 0
  %3959 = vmatpush.bf16.msra.mxu0 0
  %3960 = vmatpush.bf16.msra.mxu0 0
  %3961 = vmatpush.bf16.msra.mxu0 0
  %3962 = vmatpush.bf16.msra.mxu0 %v3776
  %3963 = vmatmul.bf16.gmra.mxu0 %v3737
  %v3964 = vpop.f32.mrf.mxu0
  %v3965 = vadd.f32 0.0, %v3964
  %v3966 = vpop.f32.mrf.mxu0
  %3967 = vdwg.mxu0
  %3968 = vmatpush.bf16.msra.mxu0 0
  %3969 = vmatpush.bf16.msra.mxu0 0
  %3970 = vmatpush.bf16.msra.mxu0 0
  %3971 = vmatpush.bf16.msra.mxu0 0
  %3972 = vmatpush.bf16.msra.mxu0 0
  %3973 = vmatpush.bf16.msra.mxu0 0
  %3974 = vmatpush.bf16.msra.mxu0 0
  %3975 = vmatpush.bf16.msra.mxu0 %v3779
  %3976 = vmatmul.bf16.gmra.mxu0 %v3737
  %v3977 = vpop.f32.mrf.mxu0
  %v3978 = vadd.f32 0.0, %v3977
  %v3979 = vpop.f32.mrf.mxu0
  %3980 = vdwg.mxu0
  %3981 = vmatpush.bf16.msra.mxu0 0
  %3982 = vmatpush.bf16.msra.mxu0 0
  %3983 = vmatpush.bf16.msra.mxu0 0
  %3984 = vmatpush.bf16.msra.mxu0 0
  %3985 = vmatpush.bf16.msra.mxu0 0
  %3986 = vmatpush.bf16.msra.mxu0 0
  %3987 = vmatpush.bf16.msra.mxu0 0
  %3988 = vmatpush.bf16.msra.mxu0 %v3782
  %3989 = vmatmul.bf16.gmra.mxu0 %v3737
  %v3990 = vpop.f32.mrf.mxu0
  %v3991 = vadd.f32 0.0, %v3990
  %v3992 = vpop.f32.mrf.mxu0
  %3993 = vdwg.mxu0
  %3994 = vmatpush.bf16.msra.mxu0 0
  %3995 = vmatpush.bf16.msra.mxu0 0
  %3996 = vmatpush.bf16.msra.mxu0 0
  %3997 = vmatpush.bf16.msra.mxu0 0
  %3998 = vmatpush.bf16.msra.mxu0 0
  %3999 = vmatpush.bf16.msra.mxu0 0
  %4000 = vmatpush.bf16.msra.mxu0 0
  %4001 = vmatpush.bf16.msra.mxu0 %v3785
  %4002 = vmatmul.bf16.gmra.mxu0 %v3737
  %v4003 = vpop.f32.mrf.mxu0
  %v4004 = vadd.f32 0.0, %v4003
  %v4005 = vpop.f32.mrf.mxu0
  %4006 = vdwg.mxu0
  %4007 = vmatpush.bf16.msra.mxu0 0
  %4008 = vmatpush.bf16.msra.mxu0 0
  %4009 = vmatpush.bf16.msra.mxu0 0
  %4010 = vmatpush.bf16.msra.mxu0 0
  %4011 = vmatpush.bf16.msra.mxu0 0
  %4012 = vmatpush.bf16.msra.mxu0 0
  %4013 = vmatpush.bf16.msra.mxu0 0
  %4014 = vmatpush.bf16.msra.mxu0 %v3788
  %4015 = vmatmul.bf16.gmra.mxu0 %v3737
  %v4016 = vpop.f32.mrf.mxu0
  %v4017 = vadd.f32 0.0, %v4016
  %v4018 = vpop.f32.mrf.mxu0
  %4019 = vdwg.mxu0
  %4020 = vmatpush.bf16.msra.mxu0 0
  %4021 = vmatpush.bf16.msra.mxu0 0
  %4022 = vmatpush.bf16.msra.mxu0 0
  %4023 = vmatpush.bf16.msra.mxu0 0
  %4024 = vmatpush.bf16.msra.mxu0 0
  %4025 = vmatpush.bf16.msra.mxu0 0
  %4026 = vmatpush.bf16.msra.mxu0 0
  %4027 = vmatpush.bf16.msra.mxu0 %v3791
  %4028 = vmatmul.bf16.gmra.mxu0 %v3737
  %v4029 = vpop.f32.mrf.mxu0
  %v4030 = vadd.f32 0.0, %v4029
  %v4031 = vpop.f32.mrf.mxu0
  %4032 = vdwg.mxu0
  %4033 = vmatpush.bf16.msra.mxu0 0
  %4034 = vmatpush.bf16.msra.mxu0 0
  %4035 = vmatpush.bf16.msra.mxu0 0
  %4036 = vmatpush.bf16.msra.mxu0 0
  %4037 = vmatpush.bf16.msra.mxu0 0
  %4038 = vmatpush.bf16.msra.mxu0 0
  %4039 = vmatpush.bf16.msra.mxu0 0
  %4040 = vmatpush.bf16.msra.mxu0 %v3794
  %4041 = vmatmul.bf16.gmra.mxu0 %v3737
  %v4042 = vpop.f32.mrf.mxu0
  %v4043 = vadd.f32 0.0, %v4042
  %v4044 = vpop.f32.mrf.mxu0
  %4045 = vdwg.mxu0
  %4046 = vmatpush.bf16.msra.mxu0 0
  %4047 = vmatpush.bf16.msra.mxu0 0
  %4048 = vmatpush.bf16.msra.mxu0 0
  %4049 = vmatpush.bf16.msra.mxu0 0
  %4050 = vmatpush.bf16.msra.mxu0 0
  %4051 = vmatpush.bf16.msra.mxu0 0
  %4052 = vmatpush.bf16.msra.mxu0 0
  %4053 = vmatpush.bf16.msra.mxu0 %v3797
  %4054 = vmatmul.bf16.gmra.mxu0 %v3737
  %v4055 = vpop.f32.mrf.mxu0
  %v4056 = vadd.f32 0.0, %v4055
  %v4057 = vpop.f32.mrf.mxu0
  %4058 = vdwg.mxu0
  %v4059 = vadd.f32 %v3651, %v3809
  %v4060 = vadd.f32 %v3652, %v3822
  %v4061 = vadd.f32 %v3653, %v3835
  %v4062 = vadd.f32 %v3654, %v3848
  %v4063 = vadd.f32 %v3655, %v3861
  %v4064 = vadd.f32 %v3656, %v3874
  %v4065 = vadd.f32 %v3657, %v3887
  %v4066 = vadd.f32 %v3658, %v3900
  %v4067 = vadd.f32 %v3659, %v3913
  %v4068 = vadd.f32 %v3660, %v3926
  %v4069 = vadd.f32 %v3661, %v3939
  %v4070 = vadd.f32 %v3662, %v3952
  %v4071 = vadd.f32 %v3663, %v3965
  %v4072 = vadd.f32 %v3664, %v3978
  %v4073 = vadd.f32 %v3665, %v3991
  %v4074 = vadd.f32 %v3666, %v4004
  %v4075 = vadd.f32 %v3667, %v4017
  %v4076 = vadd.f32 %v3668, %v4030
  %v4077 = vadd.f32 %v3669, %v4043
  %v4078 = vadd.f32 %v3670, %v4056
  %s4079 = scalar_lea.vmem %s3, 28
  %v4080 = vld [vmem:[%s4079] sm:$0xf]
  %4081 = vrot.lane.b32.xlu0 %v1258, 59
  %v4082 = vpop.permute.xlu0 %4081
  %4083 = vrot.lane.b32.xlu0 %v1259, 59
  %v4084 = vpop.permute.xlu0 %4083
  %4085 = vrot.lane.b32.xlu0 %v1260, 59
  %v4086 = vpop.permute.xlu0 %4085
  %4087 = vrot.lane.b32.xlu0 %v1261, 59
  %v4088 = vpop.permute.xlu0 %4087
  %4089 = vrot.lane.b32.xlu0 %v1262, 59
  %v4090 = vpop.permute.xlu0 %4089
  %4091 = vrot.lane.b32.xlu0 %v1263, 59
  %v4092 = vpop.permute.xlu0 %4091
  %4093 = vrot.lane.b32.xlu0 %v1264, 59
  %v4094 = vpop.permute.xlu0 %4093
  %4095 = vrot.lane.b32.xlu0 %v1265, 59
  %v4096 = vpop.permute.xlu0 %4095
  %4097 = vrot.lane.b32.xlu0 %v1266, 59
  %v4098 = vpop.permute.xlu0 %4097
  %4099 = vrot.lane.b32.xlu0 %v1267, 59
  %v4100 = vpop.permute.xlu0 %4099
  %4101 = vrot.lane.b32.xlu0 %v1268, 59
  %v4102 = vpop.permute.xlu0 %4101
  %4103 = vrot.lane.b32.xlu0 %v1269, 59
  %v4104 = vpop.permute.xlu0 %4103
  %4105 = vrot.lane.b32.xlu0 %v1270, 59
  %v4106 = vpop.permute.xlu0 %4105
  %4107 = vrot.lane.b32.xlu0 %v1271, 59
  %v4108 = vpop.permute.xlu0 %4107
  %4109 = vrot.lane.b32.xlu0 %v1272, 59
  %v4110 = vpop.permute.xlu0 %4109
  %4111 = vrot.lane.b32.xlu0 %v1273, 59
  %v4112 = vpop.permute.xlu0 %4111
  %4113 = vrot.lane.b32.xlu0 %v1274, 59
  %v4114 = vpop.permute.xlu0 %4113
  %4115 = vrot.lane.b32.xlu0 %v1275, 59
  %v4116 = vpop.permute.xlu0 %4115
  %4117 = vrot.lane.b32.xlu0 %v1276, 59
  %v4118 = vpop.permute.xlu0 %4117
  %4119 = vrot.lane.b32.xlu0 %v1277, 59
  %v4120 = vpop.permute.xlu0 %4119
  %4121 = vrot.lane.b32.xlu0 %v1278, 59
  %v4122 = vpop.permute.xlu0 %4121
  %vm4123 = vcmask 482304
  %v4124 = vsel %vm4123, %v4082, %v4084
  %v4125 = vsel %vm4123, %v4084, %v4086
  %v4126 = vsel %vm4123, %v4086, %v4088
  %v4127 = vsel %vm4123, %v4088, %v4090
  %v4128 = vsel %vm4123, %v4090, %v4092
  %v4129 = vsel %vm4123, %v4092, %v4094
  %v4130 = vsel %vm4123, %v4094, %v4096
  %v4131 = vsel %vm4123, %v4096, %v4098
  %v4132 = vsel %vm4123, %v4098, %v4100
  %v4133 = vsel %vm4123, %v4100, %v4102
  %v4134 = vsel %vm4123, %v4102, %v4104
  %v4135 = vsel %vm4123, %v4104, %v4106
  %v4136 = vsel %vm4123, %v4106, %v4108
  %v4137 = vsel %vm4123, %v4108, %v4110
  %v4138 = vsel %vm4123, %v4110, %v4112
  %v4139 = vsel %vm4123, %v4112, %v4114
  %v4140 = vsel %vm4123, %v4114, %v4116
  %v4141 = vsel %vm4123, %v4116, %v4118
  %v4142 = vsel %vm4123, %v4118, %v4120
  %v4143 = vsel %vm4123, %v4120, %v4122
  %v4145 = vsel %vm1341, %v4080, 0
  %v4148 = vsel %vm1345, %v4124, 0
  %v4151 = vsel %vm1345, %v4125, 0
  %v4154 = vsel %vm1345, %v4126, 0
  %v4157 = vsel %vm1345, %v4127, 0
  %v4160 = vsel %vm1345, %v4128, 0
  %v4163 = vsel %vm1345, %v4129, 0
  %v4166 = vsel %vm1345, %v4130, 0
  %v4169 = vsel %vm1345, %v4131, 0
  %v4172 = vsel %vm1345, %v4132, 0
  %v4175 = vsel %vm1345, %v4133, 0
  %v4178 = vsel %vm1345, %v4134, 0
  %v4181 = vsel %vm1345, %v4135, 0
  %v4184 = vsel %vm1345, %v4136, 0
  %v4187 = vsel %vm1345, %v4137, 0
  %v4190 = vsel %vm1345, %v4138, 0
  %v4193 = vsel %vm1345, %v4139, 0
  %v4196 = vsel %vm1345, %v4140, 0
  %v4199 = vsel %vm1345, %v4141, 0
  %v4202 = vsel %vm1345, %v4142, 0
  %v4205 = vsel %vm1345, %v4143, 0
  %4207 = vmatpush.bf16.msra.mxu0 0
  %4208 = vmatpush.bf16.msra.mxu0 0
  %4209 = vmatpush.bf16.msra.mxu0 0
  %4210 = vmatpush.bf16.msra.mxu0 0
  %4211 = vmatpush.bf16.msra.mxu0 0
  %4212 = vmatpush.bf16.msra.mxu0 0
  %4213 = vmatpush.bf16.msra.mxu0 0
  %4214 = vmatpush.bf16.msra.mxu0 %v4148
  %4215 = vmatmul.bf16.gmra.mxu0 %v4145
  %v4216 = vpop.f32.mrf.mxu0
  %v4217 = vadd.f32 0.0, %v4216
  %v4218 = vpop.f32.mrf.mxu0
  %4219 = vdwg.mxu0
  %4220 = vmatpush.bf16.msra.mxu0 0
  %4221 = vmatpush.bf16.msra.mxu0 0
  %4222 = vmatpush.bf16.msra.mxu0 0
  %4223 = vmatpush.bf16.msra.mxu0 0
  %4224 = vmatpush.bf16.msra.mxu0 0
  %4225 = vmatpush.bf16.msra.mxu0 0
  %4226 = vmatpush.bf16.msra.mxu0 0
  %4227 = vmatpush.bf16.msra.mxu0 %v4151
  %4228 = vmatmul.bf16.gmra.mxu0 %v4145
  %v4229 = vpop.f32.mrf.mxu0
  %v4230 = vadd.f32 0.0, %v4229
  %v4231 = vpop.f32.mrf.mxu0
  %4232 = vdwg.mxu0
  %4233 = vmatpush.bf16.msra.mxu0 0
  %4234 = vmatpush.bf16.msra.mxu0 0
  %4235 = vmatpush.bf16.msra.mxu0 0
  %4236 = vmatpush.bf16.msra.mxu0 0
  %4237 = vmatpush.bf16.msra.mxu0 0
  %4238 = vmatpush.bf16.msra.mxu0 0
  %4239 = vmatpush.bf16.msra.mxu0 0
  %4240 = vmatpush.bf16.msra.mxu0 %v4154
  %4241 = vmatmul.bf16.gmra.mxu0 %v4145
  %v4242 = vpop.f32.mrf.mxu0
  %v4243 = vadd.f32 0.0, %v4242
  %v4244 = vpop.f32.mrf.mxu0
  %4245 = vdwg.mxu0
  %4246 = vmatpush.bf16.msra.mxu0 0
  %4247 = vmatpush.bf16.msra.mxu0 0
  %4248 = vmatpush.bf16.msra.mxu0 0
  %4249 = vmatpush.bf16.msra.mxu0 0
  %4250 = vmatpush.bf16.msra.mxu0 0
  %4251 = vmatpush.bf16.msra.mxu0 0
  %4252 = vmatpush.bf16.msra.mxu0 0
  %4253 = vmatpush.bf16.msra.mxu0 %v4157
  %4254 = vmatmul.bf16.gmra.mxu0 %v4145
  %v4255 = vpop.f32.mrf.mxu0
  %v4256 = vadd.f32 0.0, %v4255
  %v4257 = vpop.f32.mrf.mxu0
  %4258 = vdwg.mxu0
  %4259 = vmatpush.bf16.msra.mxu0 0
  %4260 = vmatpush.bf16.msra.mxu0 0
  %4261 = vmatpush.bf16.msra.mxu0 0
  %4262 = vmatpush.bf16.msra.mxu0 0
  %4263 = vmatpush.bf16.msra.mxu0 0
  %4264 = vmatpush.bf16.msra.mxu0 0
  %4265 = vmatpush.bf16.msra.mxu0 0
  %4266 = vmatpush.bf16.msra.mxu0 %v4160
  %4267 = vmatmul.bf16.gmra.mxu0 %v4145
  %v4268 = vpop.f32.mrf.mxu0
  %v4269 = vadd.f32 0.0, %v4268
  %v4270 = vpop.f32.mrf.mxu0
  %4271 = vdwg.mxu0
  %4272 = vmatpush.bf16.msra.mxu0 0
  %4273 = vmatpush.bf16.msra.mxu0 0
  %4274 = vmatpush.bf16.msra.mxu0 0
  %4275 = vmatpush.bf16.msra.mxu0 0
  %4276 = vmatpush.bf16.msra.mxu0 0
  %4277 = vmatpush.bf16.msra.mxu0 0
  %4278 = vmatpush.bf16.msra.mxu0 0
  %4279 = vmatpush.bf16.msra.mxu0 %v4163
  %4280 = vmatmul.bf16.gmra.mxu0 %v4145
  %v4281 = vpop.f32.mrf.mxu0
  %v4282 = vadd.f32 0.0, %v4281
  %v4283 = vpop.f32.mrf.mxu0
  %4284 = vdwg.mxu0
  %4285 = vmatpush.bf16.msra.mxu0 0
  %4286 = vmatpush.bf16.msra.mxu0 0
  %4287 = vmatpush.bf16.msra.mxu0 0
  %4288 = vmatpush.bf16.msra.mxu0 0
  %4289 = vmatpush.bf16.msra.mxu0 0
  %4290 = vmatpush.bf16.msra.mxu0 0
  %4291 = vmatpush.bf16.msra.mxu0 0
  %4292 = vmatpush.bf16.msra.mxu0 %v4166
  %4293 = vmatmul.bf16.gmra.mxu0 %v4145
  %v4294 = vpop.f32.mrf.mxu0
  %v4295 = vadd.f32 0.0, %v4294
  %v4296 = vpop.f32.mrf.mxu0
  %4297 = vdwg.mxu0
  %4298 = vmatpush.bf16.msra.mxu0 0
  %4299 = vmatpush.bf16.msra.mxu0 0
  %4300 = vmatpush.bf16.msra.mxu0 0
  %4301 = vmatpush.bf16.msra.mxu0 0
  %4302 = vmatpush.bf16.msra.mxu0 0
  %4303 = vmatpush.bf16.msra.mxu0 0
  %4304 = vmatpush.bf16.msra.mxu0 0
  %4305 = vmatpush.bf16.msra.mxu0 %v4169
  %4306 = vmatmul.bf16.gmra.mxu0 %v4145
  %v4307 = vpop.f32.mrf.mxu0
  %v4308 = vadd.f32 0.0, %v4307
  %v4309 = vpop.f32.mrf.mxu0
  %4310 = vdwg.mxu0
  %4311 = vmatpush.bf16.msra.mxu0 0
  %4312 = vmatpush.bf16.msra.mxu0 0
  %4313 = vmatpush.bf16.msra.mxu0 0
  %4314 = vmatpush.bf16.msra.mxu0 0
  %4315 = vmatpush.bf16.msra.mxu0 0
  %4316 = vmatpush.bf16.msra.mxu0 0
  %4317 = vmatpush.bf16.msra.mxu0 0
  %4318 = vmatpush.bf16.msra.mxu0 %v4172
  %4319 = vmatmul.bf16.gmra.mxu0 %v4145
  %v4320 = vpop.f32.mrf.mxu0
  %v4321 = vadd.f32 0.0, %v4320
  %v4322 = vpop.f32.mrf.mxu0
  %4323 = vdwg.mxu0
  %4324 = vmatpush.bf16.msra.mxu0 0
  %4325 = vmatpush.bf16.msra.mxu0 0
  %4326 = vmatpush.bf16.msra.mxu0 0
  %4327 = vmatpush.bf16.msra.mxu0 0
  %4328 = vmatpush.bf16.msra.mxu0 0
  %4329 = vmatpush.bf16.msra.mxu0 0
  %4330 = vmatpush.bf16.msra.mxu0 0
  %4331 = vmatpush.bf16.msra.mxu0 %v4175
  %4332 = vmatmul.bf16.gmra.mxu0 %v4145
  %v4333 = vpop.f32.mrf.mxu0
  %v4334 = vadd.f32 0.0, %v4333
  %v4335 = vpop.f32.mrf.mxu0
  %4336 = vdwg.mxu0
  %4337 = vmatpush.bf16.msra.mxu0 0
  %4338 = vmatpush.bf16.msra.mxu0 0
  %4339 = vmatpush.bf16.msra.mxu0 0
  %4340 = vmatpush.bf16.msra.mxu0 0
  %4341 = vmatpush.bf16.msra.mxu0 0
  %4342 = vmatpush.bf16.msra.mxu0 0
  %4343 = vmatpush.bf16.msra.mxu0 0
  %4344 = vmatpush.bf16.msra.mxu0 %v4178
  %4345 = vmatmul.bf16.gmra.mxu0 %v4145
  %v4346 = vpop.f32.mrf.mxu0
  %v4347 = vadd.f32 0.0, %v4346
  %v4348 = vpop.f32.mrf.mxu0
  %4349 = vdwg.mxu0
  %4350 = vmatpush.bf16.msra.mxu0 0
  %4351 = vmatpush.bf16.msra.mxu0 0
  %4352 = vmatpush.bf16.msra.mxu0 0
  %4353 = vmatpush.bf16.msra.mxu0 0
  %4354 = vmatpush.bf16.msra.mxu0 0
  %4355 = vmatpush.bf16.msra.mxu0 0
  %4356 = vmatpush.bf16.msra.mxu0 0
  %4357 = vmatpush.bf16.msra.mxu0 %v4181
  %4358 = vmatmul.bf16.gmra.mxu0 %v4145
  %v4359 = vpop.f32.mrf.mxu0
  %v4360 = vadd.f32 0.0, %v4359
  %v4361 = vpop.f32.mrf.mxu0
  %4362 = vdwg.mxu0
  %4363 = vmatpush.bf16.msra.mxu0 0
  %4364 = vmatpush.bf16.msra.mxu0 0
  %4365 = vmatpush.bf16.msra.mxu0 0
  %4366 = vmatpush.bf16.msra.mxu0 0
  %4367 = vmatpush.bf16.msra.mxu0 0
  %4368 = vmatpush.bf16.msra.mxu0 0
  %4369 = vmatpush.bf16.msra.mxu0 0
  %4370 = vmatpush.bf16.msra.mxu0 %v4184
  %4371 = vmatmul.bf16.gmra.mxu0 %v4145
  %v4372 = vpop.f32.mrf.mxu0
  %v4373 = vadd.f32 0.0, %v4372
  %v4374 = vpop.f32.mrf.mxu0
  %4375 = vdwg.mxu0
  %4376 = vmatpush.bf16.msra.mxu0 0
  %4377 = vmatpush.bf16.msra.mxu0 0
  %4378 = vmatpush.bf16.msra.mxu0 0
  %4379 = vmatpush.bf16.msra.mxu0 0
  %4380 = vmatpush.bf16.msra.mxu0 0
  %4381 = vmatpush.bf16.msra.mxu0 0
  %4382 = vmatpush.bf16.msra.mxu0 0
  %4383 = vmatpush.bf16.msra.mxu0 %v4187
  %4384 = vmatmul.bf16.gmra.mxu0 %v4145
  %v4385 = vpop.f32.mrf.mxu0
  %v4386 = vadd.f32 0.0, %v4385
  %v4387 = vpop.f32.mrf.mxu0
  %4388 = vdwg.mxu0
  %4389 = vmatpush.bf16.msra.mxu0 0
  %4390 = vmatpush.bf16.msra.mxu0 0
  %4391 = vmatpush.bf16.msra.mxu0 0
  %4392 = vmatpush.bf16.msra.mxu0 0
  %4393 = vmatpush.bf16.msra.mxu0 0
  %4394 = vmatpush.bf16.msra.mxu0 0
  %4395 = vmatpush.bf16.msra.mxu0 0
  %4396 = vmatpush.bf16.msra.mxu0 %v4190
  %4397 = vmatmul.bf16.gmra.mxu0 %v4145
  %v4398 = vpop.f32.mrf.mxu0
  %v4399 = vadd.f32 0.0, %v4398
  %v4400 = vpop.f32.mrf.mxu0
  %4401 = vdwg.mxu0
  %4402 = vmatpush.bf16.msra.mxu0 0
  %4403 = vmatpush.bf16.msra.mxu0 0
  %4404 = vmatpush.bf16.msra.mxu0 0
  %4405 = vmatpush.bf16.msra.mxu0 0
  %4406 = vmatpush.bf16.msra.mxu0 0
  %4407 = vmatpush.bf16.msra.mxu0 0
  %4408 = vmatpush.bf16.msra.mxu0 0
  %4409 = vmatpush.bf16.msra.mxu0 %v4193
  %4410 = vmatmul.bf16.gmra.mxu0 %v4145
  %v4411 = vpop.f32.mrf.mxu0
  %v4412 = vadd.f32 0.0, %v4411
  %v4413 = vpop.f32.mrf.mxu0
  %4414 = vdwg.mxu0
  %4415 = vmatpush.bf16.msra.mxu0 0
  %4416 = vmatpush.bf16.msra.mxu0 0
  %4417 = vmatpush.bf16.msra.mxu0 0
  %4418 = vmatpush.bf16.msra.mxu0 0
  %4419 = vmatpush.bf16.msra.mxu0 0
  %4420 = vmatpush.bf16.msra.mxu0 0
  %4421 = vmatpush.bf16.msra.mxu0 0
  %4422 = vmatpush.bf16.msra.mxu0 %v4196
  %4423 = vmatmul.bf16.gmra.mxu0 %v4145
  %v4424 = vpop.f32.mrf.mxu0
  %v4425 = vadd.f32 0.0, %v4424
  %v4426 = vpop.f32.mrf.mxu0
  %4427 = vdwg.mxu0
  %4428 = vmatpush.bf16.msra.mxu0 0
  %4429 = vmatpush.bf16.msra.mxu0 0
  %4430 = vmatpush.bf16.msra.mxu0 0
  %4431 = vmatpush.bf16.msra.mxu0 0
  %4432 = vmatpush.bf16.msra.mxu0 0
  %4433 = vmatpush.bf16.msra.mxu0 0
  %4434 = vmatpush.bf16.msra.mxu0 0
  %4435 = vmatpush.bf16.msra.mxu0 %v4199
  %4436 = vmatmul.bf16.gmra.mxu0 %v4145
  %v4437 = vpop.f32.mrf.mxu0
  %v4438 = vadd.f32 0.0, %v4437
  %v4439 = vpop.f32.mrf.mxu0
  %4440 = vdwg.mxu0
  %4441 = vmatpush.bf16.msra.mxu0 0
  %4442 = vmatpush.bf16.msra.mxu0 0
  %4443 = vmatpush.bf16.msra.mxu0 0
  %4444 = vmatpush.bf16.msra.mxu0 0
  %4445 = vmatpush.bf16.msra.mxu0 0
  %4446 = vmatpush.bf16.msra.mxu0 0
  %4447 = vmatpush.bf16.msra.mxu0 0
  %4448 = vmatpush.bf16.msra.mxu0 %v4202
  %4449 = vmatmul.bf16.gmra.mxu0 %v4145
  %v4450 = vpop.f32.mrf.mxu0
  %v4451 = vadd.f32 0.0, %v4450
  %v4452 = vpop.f32.mrf.mxu0
  %4453 = vdwg.mxu0
  %4454 = vmatpush.bf16.msra.mxu0 0
  %4455 = vmatpush.bf16.msra.mxu0 0
  %4456 = vmatpush.bf16.msra.mxu0 0
  %4457 = vmatpush.bf16.msra.mxu0 0
  %4458 = vmatpush.bf16.msra.mxu0 0
  %4459 = vmatpush.bf16.msra.mxu0 0
  %4460 = vmatpush.bf16.msra.mxu0 0
  %4461 = vmatpush.bf16.msra.mxu0 %v4205
  %4462 = vmatmul.bf16.gmra.mxu0 %v4145
  %v4463 = vpop.f32.mrf.mxu0
  %v4464 = vadd.f32 0.0, %v4463
  %v4465 = vpop.f32.mrf.mxu0
  %4466 = vdwg.mxu0
  %v4467 = vadd.f32 %v4059, %v4217
  %v4468 = vadd.f32 %v4060, %v4230
  %v4469 = vadd.f32 %v4061, %v4243
  %v4470 = vadd.f32 %v4062, %v4256
  %v4471 = vadd.f32 %v4063, %v4269
  %v4472 = vadd.f32 %v4064, %v4282
  %v4473 = vadd.f32 %v4065, %v4295
  %v4474 = vadd.f32 %v4066, %v4308
  %v4475 = vadd.f32 %v4067, %v4321
  %v4476 = vadd.f32 %v4068, %v4334
  %v4477 = vadd.f32 %v4069, %v4347
  %v4478 = vadd.f32 %v4070, %v4360
  %v4479 = vadd.f32 %v4071, %v4373
  %v4480 = vadd.f32 %v4072, %v4386
  %v4481 = vadd.f32 %v4073, %v4399
  %v4482 = vadd.f32 %v4074, %v4412
  %v4483 = vadd.f32 %v4075, %v4425
  %v4484 = vadd.f32 %v4076, %v4438
  %v4485 = vadd.f32 %v4077, %v4451
  %v4486 = vadd.f32 %v4078, %v4464
  %s4487 = scalar_lea.vmem %s3, 32
  %v4488 = vld [vmem:[%s4487] sm:$0xf]
  %4489 = vrot.lane.b32.xlu0 %v1258, 58
  %v4490 = vpop.permute.xlu0 %4489
  %4491 = vrot.lane.b32.xlu0 %v1259, 58
  %v4492 = vpop.permute.xlu0 %4491
  %4493 = vrot.lane.b32.xlu0 %v1260, 58
  %v4494 = vpop.permute.xlu0 %4493
  %4495 = vrot.lane.b32.xlu0 %v1261, 58
  %v4496 = vpop.permute.xlu0 %4495
  %4497 = vrot.lane.b32.xlu0 %v1262, 58
  %v4498 = vpop.permute.xlu0 %4497
  %4499 = vrot.lane.b32.xlu0 %v1263, 58
  %v4500 = vpop.permute.xlu0 %4499
  %4501 = vrot.lane.b32.xlu0 %v1264, 58
  %v4502 = vpop.permute.xlu0 %4501
  %4503 = vrot.lane.b32.xlu0 %v1265, 58
  %v4504 = vpop.permute.xlu0 %4503
  %4505 = vrot.lane.b32.xlu0 %v1266, 58
  %v4506 = vpop.permute.xlu0 %4505
  %4507 = vrot.lane.b32.xlu0 %v1267, 58
  %v4508 = vpop.permute.xlu0 %4507
  %4509 = vrot.lane.b32.xlu0 %v1268, 58
  %v4510 = vpop.permute.xlu0 %4509
  %4511 = vrot.lane.b32.xlu0 %v1269, 58
  %v4512 = vpop.permute.xlu0 %4511
  %4513 = vrot.lane.b32.xlu0 %v1270, 58
  %v4514 = vpop.permute.xlu0 %4513
  %4515 = vrot.lane.b32.xlu0 %v1271, 58
  %v4516 = vpop.permute.xlu0 %4515
  %4517 = vrot.lane.b32.xlu0 %v1272, 58
  %v4518 = vpop.permute.xlu0 %4517
  %4519 = vrot.lane.b32.xlu0 %v1273, 58
  %v4520 = vpop.permute.xlu0 %4519
  %4521 = vrot.lane.b32.xlu0 %v1274, 58
  %v4522 = vpop.permute.xlu0 %4521
  %4523 = vrot.lane.b32.xlu0 %v1275, 58
  %v4524 = vpop.permute.xlu0 %4523
  %4525 = vrot.lane.b32.xlu0 %v1276, 58
  %v4526 = vpop.permute.xlu0 %4525
  %4527 = vrot.lane.b32.xlu0 %v1277, 58
  %v4528 = vpop.permute.xlu0 %4527
  %4529 = vrot.lane.b32.xlu0 %v1278, 58
  %v4530 = vpop.permute.xlu0 %4529
  %vm4531 = vcmask 474112
  %v4532 = vsel %vm4531, %v4490, %v4492
  %v4533 = vsel %vm4531, %v4492, %v4494
  %v4534 = vsel %vm4531, %v4494, %v4496
  %v4535 = vsel %vm4531, %v4496, %v4498
  %v4536 = vsel %vm4531, %v4498, %v4500
  %v4537 = vsel %vm4531, %v4500, %v4502
  %v4538 = vsel %vm4531, %v4502, %v4504
  %v4539 = vsel %vm4531, %v4504, %v4506
  %v4540 = vsel %vm4531, %v4506, %v4508
  %v4541 = vsel %vm4531, %v4508, %v4510
  %v4542 = vsel %vm4531, %v4510, %v4512
  %v4543 = vsel %vm4531, %v4512, %v4514
  %v4544 = vsel %vm4531, %v4514, %v4516
  %v4545 = vsel %vm4531, %v4516, %v4518
  %v4546 = vsel %vm4531, %v4518, %v4520
  %v4547 = vsel %vm4531, %v4520, %v4522
  %v4548 = vsel %vm4531, %v4522, %v4524
  %v4549 = vsel %vm4531, %v4524, %v4526
  %v4550 = vsel %vm4531, %v4526, %v4528
  %v4551 = vsel %vm4531, %v4528, %v4530
  %v4553 = vsel %vm1341, %v4488, 0
  %v4556 = vsel %vm1345, %v4532, 0
  %v4559 = vsel %vm1345, %v4533, 0
  %v4562 = vsel %vm1345, %v4534, 0
  %v4565 = vsel %vm1345, %v4535, 0
  %v4568 = vsel %vm1345, %v4536, 0
  %v4571 = vsel %vm1345, %v4537, 0
  %v4574 = vsel %vm1345, %v4538, 0
  %v4577 = vsel %vm1345, %v4539, 0
  %v4580 = vsel %vm1345, %v4540, 0
  %v4583 = vsel %vm1345, %v4541, 0
  %v4586 = vsel %vm1345, %v4542, 0
  %v4589 = vsel %vm1345, %v4543, 0
  %v4592 = vsel %vm1345, %v4544, 0
  %v4595 = vsel %vm1345, %v4545, 0
  %v4598 = vsel %vm1345, %v4546, 0
  %v4601 = vsel %vm1345, %v4547, 0
  %v4604 = vsel %vm1345, %v4548, 0
  %v4607 = vsel %vm1345, %v4549, 0
  %v4610 = vsel %vm1345, %v4550, 0
  %v4613 = vsel %vm1345, %v4551, 0
  %4615 = vmatpush.bf16.msra.mxu0 0
  %4616 = vmatpush.bf16.msra.mxu0 0
  %4617 = vmatpush.bf16.msra.mxu0 0
  %4618 = vmatpush.bf16.msra.mxu0 0
  %4619 = vmatpush.bf16.msra.mxu0 0
  %4620 = vmatpush.bf16.msra.mxu0 0
  %4621 = vmatpush.bf16.msra.mxu0 0
  %4622 = vmatpush.bf16.msra.mxu0 %v4556
  %4623 = vmatmul.bf16.gmra.mxu0 %v4553
  %v4624 = vpop.f32.mrf.mxu0
  %v4625 = vadd.f32 0.0, %v4624
  %v4626 = vpop.f32.mrf.mxu0
  %4627 = vdwg.mxu0
  %4628 = vmatpush.bf16.msra.mxu0 0
  %4629 = vmatpush.bf16.msra.mxu0 0
  %4630 = vmatpush.bf16.msra.mxu0 0
  %4631 = vmatpush.bf16.msra.mxu0 0
  %4632 = vmatpush.bf16.msra.mxu0 0
  %4633 = vmatpush.bf16.msra.mxu0 0
  %4634 = vmatpush.bf16.msra.mxu0 0
  %4635 = vmatpush.bf16.msra.mxu0 %v4559
  %4636 = vmatmul.bf16.gmra.mxu0 %v4553
  %v4637 = vpop.f32.mrf.mxu0
  %v4638 = vadd.f32 0.0, %v4637
  %v4639 = vpop.f32.mrf.mxu0
  %4640 = vdwg.mxu0
  %4641 = vmatpush.bf16.msra.mxu0 0
  %4642 = vmatpush.bf16.msra.mxu0 0
  %4643 = vmatpush.bf16.msra.mxu0 0
  %4644 = vmatpush.bf16.msra.mxu0 0
  %4645 = vmatpush.bf16.msra.mxu0 0
  %4646 = vmatpush.bf16.msra.mxu0 0
  %4647 = vmatpush.bf16.msra.mxu0 0
  %4648 = vmatpush.bf16.msra.mxu0 %v4562
  %4649 = vmatmul.bf16.gmra.mxu0 %v4553
  %v4650 = vpop.f32.mrf.mxu0
  %v4651 = vadd.f32 0.0, %v4650
  %v4652 = vpop.f32.mrf.mxu0
  %4653 = vdwg.mxu0
  %4654 = vmatpush.bf16.msra.mxu0 0
  %4655 = vmatpush.bf16.msra.mxu0 0
  %4656 = vmatpush.bf16.msra.mxu0 0
  %4657 = vmatpush.bf16.msra.mxu0 0
  %4658 = vmatpush.bf16.msra.mxu0 0
  %4659 = vmatpush.bf16.msra.mxu0 0
  %4660 = vmatpush.bf16.msra.mxu0 0
  %4661 = vmatpush.bf16.msra.mxu0 %v4565
  %4662 = vmatmul.bf16.gmra.mxu0 %v4553
  %v4663 = vpop.f32.mrf.mxu0
  %v4664 = vadd.f32 0.0, %v4663
  %v4665 = vpop.f32.mrf.mxu0
  %4666 = vdwg.mxu0
  %4667 = vmatpush.bf16.msra.mxu0 0
  %4668 = vmatpush.bf16.msra.mxu0 0
  %4669 = vmatpush.bf16.msra.mxu0 0
  %4670 = vmatpush.bf16.msra.mxu0 0
  %4671 = vmatpush.bf16.msra.mxu0 0
  %4672 = vmatpush.bf16.msra.mxu0 0
  %4673 = vmatpush.bf16.msra.mxu0 0
  %4674 = vmatpush.bf16.msra.mxu0 %v4568
  %4675 = vmatmul.bf16.gmra.mxu0 %v4553
  %v4676 = vpop.f32.mrf.mxu0
  %v4677 = vadd.f32 0.0, %v4676
  %v4678 = vpop.f32.mrf.mxu0
  %4679 = vdwg.mxu0
  %4680 = vmatpush.bf16.msra.mxu0 0
  %4681 = vmatpush.bf16.msra.mxu0 0
  %4682 = vmatpush.bf16.msra.mxu0 0
  %4683 = vmatpush.bf16.msra.mxu0 0
  %4684 = vmatpush.bf16.msra.mxu0 0
  %4685 = vmatpush.bf16.msra.mxu0 0
  %4686 = vmatpush.bf16.msra.mxu0 0
  %4687 = vmatpush.bf16.msra.mxu0 %v4571
  %4688 = vmatmul.bf16.gmra.mxu0 %v4553
  %v4689 = vpop.f32.mrf.mxu0
  %v4690 = vadd.f32 0.0, %v4689
  %v4691 = vpop.f32.mrf.mxu0
  %4692 = vdwg.mxu0
  %4693 = vmatpush.bf16.msra.mxu0 0
  %4694 = vmatpush.bf16.msra.mxu0 0
  %4695 = vmatpush.bf16.msra.mxu0 0
  %4696 = vmatpush.bf16.msra.mxu0 0
  %4697 = vmatpush.bf16.msra.mxu0 0
  %4698 = vmatpush.bf16.msra.mxu0 0
  %4699 = vmatpush.bf16.msra.mxu0 0
  %4700 = vmatpush.bf16.msra.mxu0 %v4574
  %4701 = vmatmul.bf16.gmra.mxu0 %v4553
  %v4702 = vpop.f32.mrf.mxu0
  %v4703 = vadd.f32 0.0, %v4702
  %v4704 = vpop.f32.mrf.mxu0
  %4705 = vdwg.mxu0
  %4706 = vmatpush.bf16.msra.mxu0 0
  %4707 = vmatpush.bf16.msra.mxu0 0
  %4708 = vmatpush.bf16.msra.mxu0 0
  %4709 = vmatpush.bf16.msra.mxu0 0
  %4710 = vmatpush.bf16.msra.mxu0 0
  %4711 = vmatpush.bf16.msra.mxu0 0
  %4712 = vmatpush.bf16.msra.mxu0 0
  %4713 = vmatpush.bf16.msra.mxu0 %v4577
  %4714 = vmatmul.bf16.gmra.mxu0 %v4553
  %v4715 = vpop.f32.mrf.mxu0
  %v4716 = vadd.f32 0.0, %v4715
  %v4717 = vpop.f32.mrf.mxu0
  %4718 = vdwg.mxu0
  %4719 = vmatpush.bf16.msra.mxu0 0
  %4720 = vmatpush.bf16.msra.mxu0 0
  %4721 = vmatpush.bf16.msra.mxu0 0
  %4722 = vmatpush.bf16.msra.mxu0 0
  %4723 = vmatpush.bf16.msra.mxu0 0
  %4724 = vmatpush.bf16.msra.mxu0 0
  %4725 = vmatpush.bf16.msra.mxu0 0
  %4726 = vmatpush.bf16.msra.mxu0 %v4580
  %4727 = vmatmul.bf16.gmra.mxu0 %v4553
  %v4728 = vpop.f32.mrf.mxu0
  %v4729 = vadd.f32 0.0, %v4728
  %v4730 = vpop.f32.mrf.mxu0
  %4731 = vdwg.mxu0
  %4732 = vmatpush.bf16.msra.mxu0 0
  %4733 = vmatpush.bf16.msra.mxu0 0
  %4734 = vmatpush.bf16.msra.mxu0 0
  %4735 = vmatpush.bf16.msra.mxu0 0
  %4736 = vmatpush.bf16.msra.mxu0 0
  %4737 = vmatpush.bf16.msra.mxu0 0
  %4738 = vmatpush.bf16.msra.mxu0 0
  %4739 = vmatpush.bf16.msra.mxu0 %v4583
  %4740 = vmatmul.bf16.gmra.mxu0 %v4553
  %v4741 = vpop.f32.mrf.mxu0
  %v4742 = vadd.f32 0.0, %v4741
  %v4743 = vpop.f32.mrf.mxu0
  %4744 = vdwg.mxu0
  %4745 = vmatpush.bf16.msra.mxu0 0
  %4746 = vmatpush.bf16.msra.mxu0 0
  %4747 = vmatpush.bf16.msra.mxu0 0
  %4748 = vmatpush.bf16.msra.mxu0 0
  %4749 = vmatpush.bf16.msra.mxu0 0
  %4750 = vmatpush.bf16.msra.mxu0 0
  %4751 = vmatpush.bf16.msra.mxu0 0
  %4752 = vmatpush.bf16.msra.mxu0 %v4586
  %4753 = vmatmul.bf16.gmra.mxu0 %v4553
  %v4754 = vpop.f32.mrf.mxu0
  %v4755 = vadd.f32 0.0, %v4754
  %v4756 = vpop.f32.mrf.mxu0
  %4757 = vdwg.mxu0
  %4758 = vmatpush.bf16.msra.mxu0 0
  %4759 = vmatpush.bf16.msra.mxu0 0
  %4760 = vmatpush.bf16.msra.mxu0 0
  %4761 = vmatpush.bf16.msra.mxu0 0
  %4762 = vmatpush.bf16.msra.mxu0 0
  %4763 = vmatpush.bf16.msra.mxu0 0
  %4764 = vmatpush.bf16.msra.mxu0 0
  %4765 = vmatpush.bf16.msra.mxu0 %v4589
  %4766 = vmatmul.bf16.gmra.mxu0 %v4553
  %v4767 = vpop.f32.mrf.mxu0
  %v4768 = vadd.f32 0.0, %v4767
  %v4769 = vpop.f32.mrf.mxu0
  %4770 = vdwg.mxu0
  %4771 = vmatpush.bf16.msra.mxu0 0
  %4772 = vmatpush.bf16.msra.mxu0 0
  %4773 = vmatpush.bf16.msra.mxu0 0
  %4774 = vmatpush.bf16.msra.mxu0 0
  %4775 = vmatpush.bf16.msra.mxu0 0
  %4776 = vmatpush.bf16.msra.mxu0 0
  %4777 = vmatpush.bf16.msra.mxu0 0
  %4778 = vmatpush.bf16.msra.mxu0 %v4592
  %4779 = vmatmul.bf16.gmra.mxu0 %v4553
  %v4780 = vpop.f32.mrf.mxu0
  %v4781 = vadd.f32 0.0, %v4780
  %v4782 = vpop.f32.mrf.mxu0
  %4783 = vdwg.mxu0
  %4784 = vmatpush.bf16.msra.mxu0 0
  %4785 = vmatpush.bf16.msra.mxu0 0
  %4786 = vmatpush.bf16.msra.mxu0 0
  %4787 = vmatpush.bf16.msra.mxu0 0
  %4788 = vmatpush.bf16.msra.mxu0 0
  %4789 = vmatpush.bf16.msra.mxu0 0
  %4790 = vmatpush.bf16.msra.mxu0 0
  %4791 = vmatpush.bf16.msra.mxu0 %v4595
  %4792 = vmatmul.bf16.gmra.mxu0 %v4553
  %v4793 = vpop.f32.mrf.mxu0
  %v4794 = vadd.f32 0.0, %v4793
  %v4795 = vpop.f32.mrf.mxu0
  %4796 = vdwg.mxu0
  %4797 = vmatpush.bf16.msra.mxu0 0
  %4798 = vmatpush.bf16.msra.mxu0 0
  %4799 = vmatpush.bf16.msra.mxu0 0
  %4800 = vmatpush.bf16.msra.mxu0 0
  %4801 = vmatpush.bf16.msra.mxu0 0
  %4802 = vmatpush.bf16.msra.mxu0 0
  %4803 = vmatpush.bf16.msra.mxu0 0
  %4804 = vmatpush.bf16.msra.mxu0 %v4598
  %4805 = vmatmul.bf16.gmra.mxu0 %v4553
  %v4806 = vpop.f32.mrf.mxu0
  %v4807 = vadd.f32 0.0, %v4806
  %v4808 = vpop.f32.mrf.mxu0
  %4809 = vdwg.mxu0
  %4810 = vmatpush.bf16.msra.mxu0 0
  %4811 = vmatpush.bf16.msra.mxu0 0
  %4812 = vmatpush.bf16.msra.mxu0 0
  %4813 = vmatpush.bf16.msra.mxu0 0
  %4814 = vmatpush.bf16.msra.mxu0 0
  %4815 = vmatpush.bf16.msra.mxu0 0
  %4816 = vmatpush.bf16.msra.mxu0 0
  %4817 = vmatpush.bf16.msra.mxu0 %v4601
  %4818 = vmatmul.bf16.gmra.mxu0 %v4553
  %v4819 = vpop.f32.mrf.mxu0
  %v4820 = vadd.f32 0.0, %v4819
  %v4821 = vpop.f32.mrf.mxu0
  %4822 = vdwg.mxu0
  %4823 = vmatpush.bf16.msra.mxu0 0
  %4824 = vmatpush.bf16.msra.mxu0 0
  %4825 = vmatpush.bf16.msra.mxu0 0
  %4826 = vmatpush.bf16.msra.mxu0 0
  %4827 = vmatpush.bf16.msra.mxu0 0
  %4828 = vmatpush.bf16.msra.mxu0 0
  %4829 = vmatpush.bf16.msra.mxu0 0
  %4830 = vmatpush.bf16.msra.mxu0 %v4604
  %4831 = vmatmul.bf16.gmra.mxu0 %v4553
  %v4832 = vpop.f32.mrf.mxu0
  %v4833 = vadd.f32 0.0, %v4832
  %v4834 = vpop.f32.mrf.mxu0
  %4835 = vdwg.mxu0
  %4836 = vmatpush.bf16.msra.mxu0 0
  %4837 = vmatpush.bf16.msra.mxu0 0
  %4838 = vmatpush.bf16.msra.mxu0 0
  %4839 = vmatpush.bf16.msra.mxu0 0
  %4840 = vmatpush.bf16.msra.mxu0 0
  %4841 = vmatpush.bf16.msra.mxu0 0
  %4842 = vmatpush.bf16.msra.mxu0 0
  %4843 = vmatpush.bf16.msra.mxu0 %v4607
  %4844 = vmatmul.bf16.gmra.mxu0 %v4553
  %v4845 = vpop.f32.mrf.mxu0
  %v4846 = vadd.f32 0.0, %v4845
  %v4847 = vpop.f32.mrf.mxu0
  %4848 = vdwg.mxu0
  %4849 = vmatpush.bf16.msra.mxu0 0
  %4850 = vmatpush.bf16.msra.mxu0 0
  %4851 = vmatpush.bf16.msra.mxu0 0
  %4852 = vmatpush.bf16.msra.mxu0 0
  %4853 = vmatpush.bf16.msra.mxu0 0
  %4854 = vmatpush.bf16.msra.mxu0 0
  %4855 = vmatpush.bf16.msra.mxu0 0
  %4856 = vmatpush.bf16.msra.mxu0 %v4610
  %4857 = vmatmul.bf16.gmra.mxu0 %v4553
  %v4858 = vpop.f32.mrf.mxu0
  %v4859 = vadd.f32 0.0, %v4858
  %v4860 = vpop.f32.mrf.mxu0
  %4861 = vdwg.mxu0
  %4862 = vmatpush.bf16.msra.mxu0 0
  %4863 = vmatpush.bf16.msra.mxu0 0
  %4864 = vmatpush.bf16.msra.mxu0 0
  %4865 = vmatpush.bf16.msra.mxu0 0
  %4866 = vmatpush.bf16.msra.mxu0 0
  %4867 = vmatpush.bf16.msra.mxu0 0
  %4868 = vmatpush.bf16.msra.mxu0 0
  %4869 = vmatpush.bf16.msra.mxu0 %v4613
  %4870 = vmatmul.bf16.gmra.mxu0 %v4553
  %v4871 = vpop.f32.mrf.mxu0
  %v4872 = vadd.f32 0.0, %v4871
  %v4873 = vpop.f32.mrf.mxu0
  %4874 = vdwg.mxu0
  %v4875 = vadd.f32 %v4467, %v4625
  %v4876 = vadd.f32 %v4468, %v4638
  %v4877 = vadd.f32 %v4469, %v4651
  %v4878 = vadd.f32 %v4470, %v4664
  %v4879 = vadd.f32 %v4471, %v4677
  %v4880 = vadd.f32 %v4472, %v4690
  %v4881 = vadd.f32 %v4473, %v4703
  %v4882 = vadd.f32 %v4474, %v4716
  %v4883 = vadd.f32 %v4475, %v4729
  %v4884 = vadd.f32 %v4476, %v4742
  %v4885 = vadd.f32 %v4477, %v4755
  %v4886 = vadd.f32 %v4478, %v4768
  %v4887 = vadd.f32 %v4479, %v4781
  %v4888 = vadd.f32 %v4480, %v4794
  %v4889 = vadd.f32 %v4481, %v4807
  %v4890 = vadd.f32 %v4482, %v4820
  %v4891 = vadd.f32 %v4483, %v4833
  %v4892 = vadd.f32 %v4484, %v4846
  %v4893 = vadd.f32 %v4485, %v4859
  %v4894 = vadd.f32 %v4486, %v4872
  %v4895 = vld [vmem:[%s4] sm:$0xff]
  %4897 = vset.pattern.permute.xlu0 0
  %4898 = vperm.xlu0 %4897, %v4895
  %v4899 = vpop.permute.xlu0 %4898
  %v4901 = vadd.f32 %v4875, %v4899
  %v4902 = vadd.f32 %v4876, %v4899
  %v4903 = vadd.f32 %v4877, %v4899
  %v4904 = vadd.f32 %v4878, %v4899
  %v4905 = vadd.f32 %v4879, %v4899
  %v4906 = vadd.f32 %v4880, %v4899
  %v4907 = vadd.f32 %v4881, %v4899
  %v4908 = vadd.f32 %v4882, %v4899
  %v4909 = vadd.f32 %v4883, %v4899
  %v4910 = vadd.f32 %v4884, %v4899
  %v4911 = vadd.f32 %v4885, %v4899
  %v4912 = vadd.f32 %v4886, %v4899
  %v4913 = vadd.f32 %v4887, %v4899
  %v4914 = vadd.f32 %v4888, %v4899
  %v4915 = vadd.f32 %v4889, %v4899
  %v4916 = vadd.f32 %v4890, %v4899
  %v4917 = vadd.f32 %v4891, %v4899
  %v4918 = vadd.f32 %v4892, %v4899
  %v4919 = vadd.f32 %v4893, %v4899
  %v4920 = vadd.f32 %v4894, %v4899
  %v4921 = vld [vmem:[%s2] sm:$0xff]
  %v4922 = vld [vmem:[%s2 + $0x8] sm:$0xff]
  %v4923 = vld [vmem:[%s2 + $0x10] sm:$0xf]
  %v4927 = vperm.slane %v4921, 0
  %v4928 = vperm.slane %v4921, 1
  %v4929 = vperm.slane %v4921, 2
  %v4930 = vperm.slane %v4921, 3
  %v4931 = vperm.slane %v4921, 4
  %v4932 = vperm.slane %v4921, 5
  %v4933 = vperm.slane %v4921, 6
  %v4934 = vperm.slane %v4921, 7
  %v4935 = vperm.slane %v4922, 0
  %v4936 = vperm.slane %v4922, 1
  %v4937 = vperm.slane %v4922, 2
  %v4938 = vperm.slane %v4922, 3
  %v4939 = vperm.slane %v4922, 4
  %v4940 = vperm.slane %v4922, 5
  %v4941 = vperm.slane %v4922, 6
  %v4942 = vperm.slane %v4922, 7
  %v4943 = vperm.slane %v4923, 0
  %v4944 = vperm.slane %v4923, 1
  %v4945 = vperm.slane %v4923, 2
  %v4946 = vperm.slane %v4923, 3
  %v4967 = vmul.f32 %v4901, %v4927
  %v4968 = vmul.f32 %v4902, %v4928
  %v4969 = vmul.f32 %v4903, %v4929
  %v4970 = vmul.f32 %v4904, %v4930
  %v4971 = vmul.f32 %v4905, %v4931
  %v4972 = vmul.f32 %v4906, %v4932
  %v4973 = vmul.f32 %v4907, %v4933
  %v4974 = vmul.f32 %v4908, %v4934
  %v4975 = vmul.f32 %v4909, %v4935
  %v4976 = vmul.f32 %v4910, %v4936
  %v4977 = vmul.f32 %v4911, %v4937
  %v4978 = vmul.f32 %v4912, %v4938
  %v4979 = vmul.f32 %v4913, %v4939
  %v4980 = vmul.f32 %v4914, %v4940
  %v4981 = vmul.f32 %v4915, %v4941
  %v4982 = vmul.f32 %v4916, %v4942
  %v4983 = vmul.f32 %v4917, %v4943
  %v4984 = vmul.f32 %v4918, %v4944
  %v4985 = vmul.f32 %v4919, %v4945
  %v4986 = vmul.f32 %v4920, %v4946
  %v4987 = vpack.c.bf16 %v4968, %v4967
  %v4988 = vpack.c.bf16 %v4970, %v4969
  %v4989 = vpack.c.bf16 %v4972, %v4971
  %v4990 = vpack.c.bf16 %v4974, %v4973
  %v4991 = vpack.c.bf16 %v4976, %v4975
  %v4992 = vpack.c.bf16 %v4978, %v4977
  %v4993 = vpack.c.bf16 %v4980, %v4979
  %v4994 = vpack.c.bf16 %v4982, %v4981
  %v4995 = vpack.c.bf16 %v4984, %v4983
  %v4996 = vpack.c.bf16 %v4986, %v4985
  %5002 = vrot.lane.b32.xlu0 %v4987, 35
  %v5003 = vpop.permute.xlu0 %5002
  %5004 = vrot.lane.b32.xlu0 %v4988, 35
  %v5005 = vpop.permute.xlu0 %5004
  %5006 = vrot.lane.b32.xlu0 %v4989, 35
  %v5007 = vpop.permute.xlu0 %5006
  %5008 = vrot.lane.b32.xlu0 %v4990, 35
  %v5009 = vpop.permute.xlu0 %5008
  %5010 = vrot.lane.b32.xlu0 %v4991, 35
  %v5011 = vpop.permute.xlu0 %5010
  %v5012 = vrot.slane %v5003, 4
  %v5013 = vrot.slane %v5005, 4
  %v5014 = vrot.slane %v5007, 4
  %v5015 = vrot.slane %v5009, 4
  %v5016 = vrot.slane %v5011, 4
  %vm5017 = vcmask 285696
  %v5018 = vsel %vm5017, %v5012, %v5003
  %vm5019 = vcmask 1043456
  %v5020 = vsel %vm5019, %v5012, %v5013
  %v5021 = vsel %vm5017, %v5020, %v5005
  %v5022 = vsel %vm5019, %v5013, %v5014
  %v5023 = vsel %vm5017, %v5022, %v5007
  %v5024 = vsel %vm5019, %v5014, %v5015
  %v5025 = vsel %vm5017, %v5024, %v5009
  %v5026 = vsel %vm5019, %v5015, %v5016
  %v5027 = vsel %vm5017, %v5026, %v5011
  %vm5033 = vcmask 1043736
  %vm5034 = vcmask 1047556
  %vm5035 = vmor %vm5034, %vm5033
  %5036 = vst.msk [vmem:[#allocation3] sm:$0xff] %vm5035, %v5018
  %5037 = vst [vmem:[#allocation3 + $0x8] sm:$0xff] %v5021
  %5038 = vst [vmem:[#allocation3 + $0x10] sm:$0xff] %v5023
  %5039 = vst [vmem:[#allocation3 + $0x18] sm:$0xff] %v5025
  %vm5040 = vcmask 318468
  %vm5041 = vmor %vm5040, %vm1345
  %5042 = vst.msk [vmem:[#allocation3 + $0x20] sm:$0xff] %vm5041, %v5027
  %5048 = vrot.lane.b32.xlu0 %v4992, 35
  %v5049 = vpop.permute.xlu0 %5048
  %5050 = vrot.lane.b32.xlu0 %v4993, 35
  %v5051 = vpop.permute.xlu0 %5050
  %5052 = vrot.lane.b32.xlu0 %v4994, 35
  %v5053 = vpop.permute.xlu0 %5052
  %5054 = vrot.lane.b32.xlu0 %v4995, 35
  %v5055 = vpop.permute.xlu0 %5054
  %5056 = vrot.lane.b32.xlu0 %v4996, 35
  %v5057 = vpop.permute.xlu0 %5056
  %v5058 = vrot.slane %v5049, 4
  %v5059 = vrot.slane %v5051, 4
  %v5060 = vrot.slane %v5053, 4
  %v5061 = vrot.slane %v5055, 4
  %v5062 = vrot.slane %v5057, 4
  %v5063 = vsel %vm5019, %v5016, %v5058
  %v5064 = vsel %vm5017, %v5011, %v5063
  %v5065 = vsel %vm5019, %v5058, %v5059
  %v5066 = vsel %vm5017, %v5049, %v5065
  %v5067 = vsel %vm5019, %v5059, %v5060
  %v5068 = vsel %vm5017, %v5051, %v5067
  %v5069 = vsel %vm5019, %v5060, %v5061
  %v5070 = vsel %vm5017, %v5053, %v5069
  %v5071 = vsel %vm5019, %v5061, %v5062
  %v5072 = vsel %vm5017, %v5055, %v5071
  %vm5078 = vmor %vm5034, %vm623
  %5079 = vst.msk [vmem:[#allocation3 + $0x24] sm:$0xff] %vm5078, %v5064
  %5080 = vst [vmem:[#allocation3 + $0x2c] sm:$0xff] %v5066
  %5081 = vst [vmem:[#allocation3 + $0x34] sm:$0xff] %v5068
  %5082 = vst [vmem:[#allocation3 + $0x3c] sm:$0xff] %v5070
  %vm5083 = vcmask 924676
  %vm5084 = vmor %vm5083, %vm1345
  %5085 = vst.msk [vmem:[#allocation3 + $0x44] sm:$0xff] %vm5084, %v5072
  %v5086 = vld [vmem:[%s5] sm:$0xf]
  %v5087 = vld [vmem:[#allocation3] sm:$0xff]
  %v5088 = vld [vmem:[#allocation3 + $0x8] sm:$0xff]
  %v5089 = vld [vmem:[#allocation3 + $0x10] sm:$0xff]
  %v5090 = vld [vmem:[#allocation3 + $0x18] sm:$0xff]
  %v5091 = vld [vmem:[#allocation3 + $0x20] sm:$0xff]
  %v5092 = vld [vmem:[#allocation3 + $0x28] sm:$0xff]
  %v5093 = vld [vmem:[#allocation3 + $0x30] sm:$0xff]
  %v5094 = vld [vmem:[#allocation3 + $0x38] sm:$0xff]
  %v5095 = vld [vmem:[#allocation3 + $0x40] sm:$0xff]
  %v5096 = vld [vmem:[#allocation3 + $0x48] sm:$0xff]
  %s5097 = scalar_lea.vmem %s5, 4
  %v5098 = vld [vmem:[%s5097] sm:$0xf]
  %v5099 = vld [vmem:[#allocation3] sm:$0xff]
  %v5100 = vld [vmem:[#allocation3 + $0x8] sm:$0xff]
  %v5101 = vld [vmem:[#allocation3 + $0x10] sm:$0xff]
  %v5102 = vld [vmem:[#allocation3 + $0x18] sm:$0xff]
  %v5103 = vld [vmem:[#allocation3 + $0x20] sm:$0xff]
  %v5104 = vld [vmem:[#allocation3 + $0x28] sm:$0xff]
  %v5105 = vld [vmem:[#allocation3 + $0x30] sm:$0xff]
  %v5106 = vld [vmem:[#allocation3 + $0x38] sm:$0xff]
  %v5107 = vld [vmem:[#allocation3 + $0x40] sm:$0xff]
  %v5108 = vld [vmem:[#allocation3 + $0x48] sm:$0xff]
  %v5109 = vld [vmem:[#allocation3 + $0x50] sm:$0xf]
  %v5121 = vunpack.c.l.b16 %v5099
  %v5122 = vunpack.c.h.b16 %v5099
  %v5123 = vunpack.c.l.b16 %v5100
  %v5124 = vunpack.c.h.b16 %v5100
  %v5125 = vunpack.c.l.b16 %v5101
  %v5126 = vunpack.c.h.b16 %v5101
  %v5127 = vunpack.c.l.b16 %v5102
  %v5128 = vunpack.c.h.b16 %v5102
  %v5129 = vunpack.c.l.b16 %v5103
  %v5130 = vunpack.c.h.b16 %v5103
  %v5131 = vunpack.c.l.b16 %v5104
  %v5132 = vunpack.c.h.b16 %v5104
  %v5133 = vunpack.c.l.b16 %v5105
  %v5134 = vunpack.c.h.b16 %v5105
  %v5135 = vunpack.c.l.b16 %v5106
  %v5136 = vunpack.c.h.b16 %v5106
  %v5137 = vunpack.c.l.b16 %v5107
  %v5138 = vunpack.c.h.b16 %v5107
  %v5139 = vunpack.c.l.b16 %v5108
  %v5140 = vunpack.c.h.b16 %v5108
  %v5141 = vunpack.c.l.b16 %v5109
  %v5142 = vpack.c.b16 %v5121, %v5121
  %v5143 = vpack.c.b16 %v5122, %v5122
  %v5144 = vpack.c.b16 %v5123, %v5123
  %v5145 = vpack.c.b16 %v5124, %v5124
  %v5146 = vpack.c.b16 %v5125, %v5125
  %v5147 = vpack.c.b16 %v5126, %v5126
  %v5148 = vpack.c.b16 %v5127, %v5127
  %v5149 = vpack.c.b16 %v5128, %v5128
  %v5150 = vpack.c.b16 %v5129, %v5129
  %v5151 = vpack.c.b16 %v5130, %v5130
  %v5152 = vpack.c.b16 %v5131, %v5131
  %v5153 = vpack.c.b16 %v5132, %v5132
  %v5154 = vpack.c.b16 %v5133, %v5133
  %v5155 = vpack.c.b16 %v5134, %v5134
  %v5156 = vpack.c.b16 %v5135, %v5135
  %v5157 = vpack.c.b16 %v5136, %v5136
  %v5158 = vpack.c.b16 %v5137, %v5137
  %v5159 = vpack.c.b16 %v5138, %v5138
  %v5160 = vpack.c.b16 %v5139, %v5139
  %v5161 = vpack.c.b16 %v5140, %v5140
  %v5162 = vpack.c.b16 %v5141, %v5141
  %5163 = vrot.lane.b32.xlu0 %v5142, 127
  %v5164 = vpop.permute.xlu0 %5163
  %5165 = vrot.lane.b32.xlu0 %v5143, 127
  %v5166 = vpop.permute.xlu0 %5165
  %5167 = vrot.lane.b32.xlu0 %v5144, 127
  %v5168 = vpop.permute.xlu0 %5167
  %5169 = vrot.lane.b32.xlu0 %v5145, 127
  %v5170 = vpop.permute.xlu0 %5169
  %5171 = vrot.lane.b32.xlu0 %v5146, 127
  %v5172 = vpop.permute.xlu0 %5171
  %5173 = vrot.lane.b32.xlu0 %v5147, 127
  %v5174 = vpop.permute.xlu0 %5173
  %5175 = vrot.lane.b32.xlu0 %v5148, 127
  %v5176 = vpop.permute.xlu0 %5175
  %5177 = vrot.lane.b32.xlu0 %v5149, 127
  %v5178 = vpop.permute.xlu0 %5177
  %5179 = vrot.lane.b32.xlu0 %v5150, 127
  %v5180 = vpop.permute.xlu0 %5179
  %5181 = vrot.lane.b32.xlu0 %v5151, 127
  %v5182 = vpop.permute.xlu0 %5181
  %5183 = vrot.lane.b32.xlu0 %v5152, 127
  %v5184 = vpop.permute.xlu0 %5183
  %5185 = vrot.lane.b32.xlu0 %v5153, 127
  %v5186 = vpop.permute.xlu0 %5185
  %5187 = vrot.lane.b32.xlu0 %v5154, 127
  %v5188 = vpop.permute.xlu0 %5187
  %5189 = vrot.lane.b32.xlu0 %v5155, 127
  %v5190 = vpop.permute.xlu0 %5189
  %5191 = vrot.lane.b32.xlu0 %v5156, 127
  %v5192 = vpop.permute.xlu0 %5191
  %5193 = vrot.lane.b32.xlu0 %v5157, 127
  %v5194 = vpop.permute.xlu0 %5193
  %5195 = vrot.lane.b32.xlu0 %v5158, 127
  %v5196 = vpop.permute.xlu0 %5195
  %5197 = vrot.lane.b32.xlu0 %v5159, 127
  %v5198 = vpop.permute.xlu0 %5197
  %5199 = vrot.lane.b32.xlu0 %v5160, 127
  %v5200 = vpop.permute.xlu0 %5199
  %5201 = vrot.lane.b32.xlu0 %v5161, 127
  %v5202 = vpop.permute.xlu0 %5201
  %5203 = vrot.lane.b32.xlu0 %v5162, 127
  %v5204 = vpop.permute.xlu0 %5203
  %v5205 = vsel %vm526, %v5164, %v5166
  %v5206 = vsel %vm526, %v5166, %v5168
  %v5207 = vsel %vm526, %v5168, %v5170
  %v5208 = vsel %vm526, %v5170, %v5172
  %v5209 = vsel %vm526, %v5172, %v5174
  %v5210 = vsel %vm526, %v5174, %v5176
  %v5211 = vsel %vm526, %v5176, %v5178
  %v5212 = vsel %vm526, %v5178, %v5180
  %v5213 = vsel %vm526, %v5180, %v5182
  %v5214 = vsel %vm526, %v5182, %v5184
  %v5215 = vsel %vm526, %v5184, %v5186
  %v5216 = vsel %vm526, %v5186, %v5188
  %v5217 = vsel %vm526, %v5188, %v5190
  %v5218 = vsel %vm526, %v5190, %v5192
  %v5219 = vsel %vm526, %v5192, %v5194
  %v5220 = vsel %vm526, %v5194, %v5196
  %v5221 = vsel %vm526, %v5196, %v5198
  %v5222 = vsel %vm526, %v5198, %v5200
  %v5223 = vsel %vm526, %v5200, %v5202
  %v5224 = vsel %vm526, %v5202, %v5204
  %v5226 = vsel %vm1341, %v5098, 0
  %v5229 = vsel %vm1345, %v5205, 0
  %v5232 = vsel %vm1345, %v5206, 0
  %v5235 = vsel %vm1345, %v5207, 0
  %v5238 = vsel %vm1345, %v5208, 0
  %v5241 = vsel %vm1345, %v5209, 0
  %v5244 = vsel %vm1345, %v5210, 0
  %v5247 = vsel %vm1345, %v5211, 0
  %v5250 = vsel %vm1345, %v5212, 0
  %v5253 = vsel %vm1345, %v5213, 0
  %v5256 = vsel %vm1345, %v5214, 0
  %v5259 = vsel %vm1345, %v5215, 0
  %v5262 = vsel %vm1345, %v5216, 0
  %v5265 = vsel %vm1345, %v5217, 0
  %v5268 = vsel %vm1345, %v5218, 0
  %v5271 = vsel %vm1345, %v5219, 0
  %v5274 = vsel %vm1345, %v5220, 0
  %v5277 = vsel %vm1345, %v5221, 0
  %v5280 = vsel %vm1345, %v5222, 0
  %v5283 = vsel %vm1345, %v5223, 0
  %v5286 = vsel %vm1345, %v5224, 0
  %5288 = vmatpush.bf16.msra.mxu0 0
  %5289 = vmatpush.bf16.msra.mxu0 0
  %5290 = vmatpush.bf16.msra.mxu0 0
  %5291 = vmatpush.bf16.msra.mxu0 0
  %5292 = vmatpush.bf16.msra.mxu0 0
  %5293 = vmatpush.bf16.msra.mxu0 0
  %5294 = vmatpush.bf16.msra.mxu0 0
  %5295 = vmatpush.bf16.msra.mxu0 %v5229
  %5296 = vmatmul.bf16.gmra.mxu0 %v5226
  %v5297 = vpop.f32.mrf.mxu0
  %v5298 = vadd.f32 0.0, %v5297
  %v5299 = vpop.f32.mrf.mxu0
  %5300 = vdwg.mxu0
  %5301 = vmatpush.bf16.msra.mxu0 0
  %5302 = vmatpush.bf16.msra.mxu0 0
  %5303 = vmatpush.bf16.msra.mxu0 0
  %5304 = vmatpush.bf16.msra.mxu0 0
  %5305 = vmatpush.bf16.msra.mxu0 0
  %5306 = vmatpush.bf16.msra.mxu0 0
  %5307 = vmatpush.bf16.msra.mxu0 0
  %5308 = vmatpush.bf16.msra.mxu0 %v5232
  %5309 = vmatmul.bf16.gmra.mxu0 %v5226
  %v5310 = vpop.f32.mrf.mxu0
  %v5311 = vadd.f32 0.0, %v5310
  %v5312 = vpop.f32.mrf.mxu0
  %5313 = vdwg.mxu0
  %5314 = vmatpush.bf16.msra.mxu0 0
  %5315 = vmatpush.bf16.msra.mxu0 0
  %5316 = vmatpush.bf16.msra.mxu0 0
  %5317 = vmatpush.bf16.msra.mxu0 0
  %5318 = vmatpush.bf16.msra.mxu0 0
  %5319 = vmatpush.bf16.msra.mxu0 0
  %5320 = vmatpush.bf16.msra.mxu0 0
  %5321 = vmatpush.bf16.msra.mxu0 %v5235
  %5322 = vmatmul.bf16.gmra.mxu0 %v5226
  %v5323 = vpop.f32.mrf.mxu0
  %v5324 = vadd.f32 0.0, %v5323
  %v5325 = vpop.f32.mrf.mxu0
  %5326 = vdwg.mxu0
  %5327 = vmatpush.bf16.msra.mxu0 0
  %5328 = vmatpush.bf16.msra.mxu0 0
  %5329 = vmatpush.bf16.msra.mxu0 0
  %5330 = vmatpush.bf16.msra.mxu0 0
  %5331 = vmatpush.bf16.msra.mxu0 0
  %5332 = vmatpush.bf16.msra.mxu0 0
  %5333 = vmatpush.bf16.msra.mxu0 0
  %5334 = vmatpush.bf16.msra.mxu0 %v5238
  %5335 = vmatmul.bf16.gmra.mxu0 %v5226
  %v5336 = vpop.f32.mrf.mxu0
  %v5337 = vadd.f32 0.0, %v5336
  %v5338 = vpop.f32.mrf.mxu0
  %5339 = vdwg.mxu0
  %5340 = vmatpush.bf16.msra.mxu0 0
  %5341 = vmatpush.bf16.msra.mxu0 0
  %5342 = vmatpush.bf16.msra.mxu0 0
  %5343 = vmatpush.bf16.msra.mxu0 0
  %5344 = vmatpush.bf16.msra.mxu0 0
  %5345 = vmatpush.bf16.msra.mxu0 0
  %5346 = vmatpush.bf16.msra.mxu0 0
  %5347 = vmatpush.bf16.msra.mxu0 %v5241
  %5348 = vmatmul.bf16.gmra.mxu0 %v5226
  %v5349 = vpop.f32.mrf.mxu0
  %v5350 = vadd.f32 0.0, %v5349
  %v5351 = vpop.f32.mrf.mxu0
  %5352 = vdwg.mxu0
  %5353 = vmatpush.bf16.msra.mxu0 0
  %5354 = vmatpush.bf16.msra.mxu0 0
  %5355 = vmatpush.bf16.msra.mxu0 0
  %5356 = vmatpush.bf16.msra.mxu0 0
  %5357 = vmatpush.bf16.msra.mxu0 0
  %5358 = vmatpush.bf16.msra.mxu0 0
  %5359 = vmatpush.bf16.msra.mxu0 0
  %5360 = vmatpush.bf16.msra.mxu0 %v5244
  %5361 = vmatmul.bf16.gmra.mxu0 %v5226
  %v5362 = vpop.f32.mrf.mxu0
  %v5363 = vadd.f32 0.0, %v5362
  %v5364 = vpop.f32.mrf.mxu0
  %5365 = vdwg.mxu0
  %5366 = vmatpush.bf16.msra.mxu0 0
  %5367 = vmatpush.bf16.msra.mxu0 0
  %5368 = vmatpush.bf16.msra.mxu0 0
  %5369 = vmatpush.bf16.msra.mxu0 0
  %5370 = vmatpush.bf16.msra.mxu0 0
  %5371 = vmatpush.bf16.msra.mxu0 0
  %5372 = vmatpush.bf16.msra.mxu0 0
  %5373 = vmatpush.bf16.msra.mxu0 %v5247
  %5374 = vmatmul.bf16.gmra.mxu0 %v5226
  %v5375 = vpop.f32.mrf.mxu0
  %v5376 = vadd.f32 0.0, %v5375
  %v5377 = vpop.f32.mrf.mxu0
  %5378 = vdwg.mxu0
  %5379 = vmatpush.bf16.msra.mxu0 0
  %5380 = vmatpush.bf16.msra.mxu0 0
  %5381 = vmatpush.bf16.msra.mxu0 0
  %5382 = vmatpush.bf16.msra.mxu0 0
  %5383 = vmatpush.bf16.msra.mxu0 0
  %5384 = vmatpush.bf16.msra.mxu0 0
  %5385 = vmatpush.bf16.msra.mxu0 0
  %5386 = vmatpush.bf16.msra.mxu0 %v5250
  %5387 = vmatmul.bf16.gmra.mxu0 %v5226
  %v5388 = vpop.f32.mrf.mxu0
  %v5389 = vadd.f32 0.0, %v5388
  %v5390 = vpop.f32.mrf.mxu0
  %5391 = vdwg.mxu0
  %5392 = vmatpush.bf16.msra.mxu0 0
  %5393 = vmatpush.bf16.msra.mxu0 0
  %5394 = vmatpush.bf16.msra.mxu0 0
  %5395 = vmatpush.bf16.msra.mxu0 0
  %5396 = vmatpush.bf16.msra.mxu0 0
  %5397 = vmatpush.bf16.msra.mxu0 0
  %5398 = vmatpush.bf16.msra.mxu0 0
  %5399 = vmatpush.bf16.msra.mxu0 %v5253
  %5400 = vmatmul.bf16.gmra.mxu0 %v5226
  %v5401 = vpop.f32.mrf.mxu0
  %v5402 = vadd.f32 0.0, %v5401
  %v5403 = vpop.f32.mrf.mxu0
  %5404 = vdwg.mxu0
  %5405 = vmatpush.bf16.msra.mxu0 0
  %5406 = vmatpush.bf16.msra.mxu0 0
  %5407 = vmatpush.bf16.msra.mxu0 0
  %5408 = vmatpush.bf16.msra.mxu0 0
  %5409 = vmatpush.bf16.msra.mxu0 0
  %5410 = vmatpush.bf16.msra.mxu0 0
  %5411 = vmatpush.bf16.msra.mxu0 0
  %5412 = vmatpush.bf16.msra.mxu0 %v5256
  %5413 = vmatmul.bf16.gmra.mxu0 %v5226
  %v5414 = vpop.f32.mrf.mxu0
  %v5415 = vadd.f32 0.0, %v5414
  %v5416 = vpop.f32.mrf.mxu0
  %5417 = vdwg.mxu0
  %5418 = vmatpush.bf16.msra.mxu0 0
  %5419 = vmatpush.bf16.msra.mxu0 0
  %5420 = vmatpush.bf16.msra.mxu0 0
  %5421 = vmatpush.bf16.msra.mxu0 0
  %5422 = vmatpush.bf16.msra.mxu0 0
  %5423 = vmatpush.bf16.msra.mxu0 0
  %5424 = vmatpush.bf16.msra.mxu0 0
  %5425 = vmatpush.bf16.msra.mxu0 %v5259
  %5426 = vmatmul.bf16.gmra.mxu0 %v5226
  %v5427 = vpop.f32.mrf.mxu0
  %v5428 = vadd.f32 0.0, %v5427
  %v5429 = vpop.f32.mrf.mxu0
  %5430 = vdwg.mxu0
  %5431 = vmatpush.bf16.msra.mxu0 0
  %5432 = vmatpush.bf16.msra.mxu0 0
  %5433 = vmatpush.bf16.msra.mxu0 0
  %5434 = vmatpush.bf16.msra.mxu0 0
  %5435 = vmatpush.bf16.msra.mxu0 0
  %5436 = vmatpush.bf16.msra.mxu0 0
  %5437 = vmatpush.bf16.msra.mxu0 0
  %5438 = vmatpush.bf16.msra.mxu0 %v5262
  %5439 = vmatmul.bf16.gmra.mxu0 %v5226
  %v5440 = vpop.f32.mrf.mxu0
  %v5441 = vadd.f32 0.0, %v5440
  %v5442 = vpop.f32.mrf.mxu0
  %5443 = vdwg.mxu0
  %5444 = vmatpush.bf16.msra.mxu0 0
  %5445 = vmatpush.bf16.msra.mxu0 0
  %5446 = vmatpush.bf16.msra.mxu0 0
  %5447 = vmatpush.bf16.msra.mxu0 0
  %5448 = vmatpush.bf16.msra.mxu0 0
  %5449 = vmatpush.bf16.msra.mxu0 0
  %5450 = vmatpush.bf16.msra.mxu0 0
  %5451 = vmatpush.bf16.msra.mxu0 %v5265
  %5452 = vmatmul.bf16.gmra.mxu0 %v5226
  %v5453 = vpop.f32.mrf.mxu0
  %v5454 = vadd.f32 0.0, %v5453
  %v5455 = vpop.f32.mrf.mxu0
  %5456 = vdwg.mxu0
  %5457 = vmatpush.bf16.msra.mxu0 0
  %5458 = vmatpush.bf16.msra.mxu0 0
  %5459 = vmatpush.bf16.msra.mxu0 0
  %5460 = vmatpush.bf16.msra.mxu0 0
  %5461 = vmatpush.bf16.msra.mxu0 0
  %5462 = vmatpush.bf16.msra.mxu0 0
  %5463 = vmatpush.bf16.msra.mxu0 0
  %5464 = vmatpush.bf16.msra.mxu0 %v5268
  %5465 = vmatmul.bf16.gmra.mxu0 %v5226
  %v5466 = vpop.f32.mrf.mxu0
  %v5467 = vadd.f32 0.0, %v5466
  %v5468 = vpop.f32.mrf.mxu0
  %5469 = vdwg.mxu0
  %5470 = vmatpush.bf16.msra.mxu0 0
  %5471 = vmatpush.bf16.msra.mxu0 0
  %5472 = vmatpush.bf16.msra.mxu0 0
  %5473 = vmatpush.bf16.msra.mxu0 0
  %5474 = vmatpush.bf16.msra.mxu0 0
  %5475 = vmatpush.bf16.msra.mxu0 0
  %5476 = vmatpush.bf16.msra.mxu0 0
  %5477 = vmatpush.bf16.msra.mxu0 %v5271
  %5478 = vmatmul.bf16.gmra.mxu0 %v5226
  %v5479 = vpop.f32.mrf.mxu0
  %v5480 = vadd.f32 0.0, %v5479
  %v5481 = vpop.f32.mrf.mxu0
  %5482 = vdwg.mxu0
  %5483 = vmatpush.bf16.msra.mxu0 0
  %5484 = vmatpush.bf16.msra.mxu0 0
  %5485 = vmatpush.bf16.msra.mxu0 0
  %5486 = vmatpush.bf16.msra.mxu0 0
  %5487 = vmatpush.bf16.msra.mxu0 0
  %5488 = vmatpush.bf16.msra.mxu0 0
  %5489 = vmatpush.bf16.msra.mxu0 0
  %5490 = vmatpush.bf16.msra.mxu0 %v5274
  %5491 = vmatmul.bf16.gmra.mxu0 %v5226
  %v5492 = vpop.f32.mrf.mxu0
  %v5493 = vadd.f32 0.0, %v5492
  %v5494 = vpop.f32.mrf.mxu0
  %5495 = vdwg.mxu0
  %5496 = vmatpush.bf16.msra.mxu0 0
  %5497 = vmatpush.bf16.msra.mxu0 0
  %5498 = vmatpush.bf16.msra.mxu0 0
  %5499 = vmatpush.bf16.msra.mxu0 0
  %5500 = vmatpush.bf16.msra.mxu0 0
  %5501 = vmatpush.bf16.msra.mxu0 0
  %5502 = vmatpush.bf16.msra.mxu0 0
  %5503 = vmatpush.bf16.msra.mxu0 %v5277
  %5504 = vmatmul.bf16.gmra.mxu0 %v5226
  %v5505 = vpop.f32.mrf.mxu0
  %v5506 = vadd.f32 0.0, %v5505
  %v5507 = vpop.f32.mrf.mxu0
  %5508 = vdwg.mxu0
  %5509 = vmatpush.bf16.msra.mxu0 0
  %5510 = vmatpush.bf16.msra.mxu0 0
  %5511 = vmatpush.bf16.msra.mxu0 0
  %5512 = vmatpush.bf16.msra.mxu0 0
  %5513 = vmatpush.bf16.msra.mxu0 0
  %5514 = vmatpush.bf16.msra.mxu0 0
  %5515 = vmatpush.bf16.msra.mxu0 0
  %5516 = vmatpush.bf16.msra.mxu0 %v5280
  %5517 = vmatmul.bf16.gmra.mxu0 %v5226
  %v5518 = vpop.f32.mrf.mxu0
  %v5519 = vadd.f32 0.0, %v5518
  %v5520 = vpop.f32.mrf.mxu0
  %5521 = vdwg.mxu0
  %5522 = vmatpush.bf16.msra.mxu0 0
  %5523 = vmatpush.bf16.msra.mxu0 0
  %5524 = vmatpush.bf16.msra.mxu0 0
  %5525 = vmatpush.bf16.msra.mxu0 0
  %5526 = vmatpush.bf16.msra.mxu0 0
  %5527 = vmatpush.bf16.msra.mxu0 0
  %5528 = vmatpush.bf16.msra.mxu0 0
  %5529 = vmatpush.bf16.msra.mxu0 %v5283
  %5530 = vmatmul.bf16.gmra.mxu0 %v5226
  %v5531 = vpop.f32.mrf.mxu0
  %v5532 = vadd.f32 0.0, %v5531
  %v5533 = vpop.f32.mrf.mxu0
  %5534 = vdwg.mxu0
  %5535 = vmatpush.bf16.msra.mxu0 0
  %5536 = vmatpush.bf16.msra.mxu0 0
  %5537 = vmatpush.bf16.msra.mxu0 0
  %5538 = vmatpush.bf16.msra.mxu0 0
  %5539 = vmatpush.bf16.msra.mxu0 0
  %5540 = vmatpush.bf16.msra.mxu0 0
  %5541 = vmatpush.bf16.msra.mxu0 0
  %5542 = vmatpush.bf16.msra.mxu0 %v5286
  %5543 = vmatmul.bf16.gmra.mxu0 %v5226
  %v5544 = vpop.f32.mrf.mxu0
  %v5545 = vadd.f32 0.0, %v5544
  %v5546 = vpop.f32.mrf.mxu0
  %5547 = vdwg.mxu0
  %v5558 = vunpack.c.l.b16 %v5087
  %v5559 = vunpack.c.h.b16 %v5087
  %v5560 = vunpack.c.l.b16 %v5088
  %v5561 = vunpack.c.h.b16 %v5088
  %v5562 = vunpack.c.l.b16 %v5089
  %v5563 = vunpack.c.h.b16 %v5089
  %v5564 = vunpack.c.l.b16 %v5090
  %v5565 = vunpack.c.h.b16 %v5090
  %v5566 = vunpack.c.l.b16 %v5091
  %v5567 = vunpack.c.h.b16 %v5091
  %v5568 = vunpack.c.l.b16 %v5092
  %v5569 = vunpack.c.h.b16 %v5092
  %v5570 = vunpack.c.l.b16 %v5093
  %v5571 = vunpack.c.h.b16 %v5093
  %v5572 = vunpack.c.l.b16 %v5094
  %v5573 = vunpack.c.h.b16 %v5094
  %v5574 = vunpack.c.l.b16 %v5095
  %v5575 = vunpack.c.h.b16 %v5095
  %v5576 = vunpack.c.l.b16 %v5096
  %v5577 = vunpack.c.h.b16 %v5096
  %v5578 = vpack.c.b16 %v5558, %v5558
  %v5579 = vpack.c.b16 %v5559, %v5559
  %v5580 = vpack.c.b16 %v5560, %v5560
  %v5581 = vpack.c.b16 %v5561, %v5561
  %v5582 = vpack.c.b16 %v5562, %v5562
  %v5583 = vpack.c.b16 %v5563, %v5563
  %v5584 = vpack.c.b16 %v5564, %v5564
  %v5585 = vpack.c.b16 %v5565, %v5565
  %v5586 = vpack.c.b16 %v5566, %v5566
  %v5587 = vpack.c.b16 %v5567, %v5567
  %v5588 = vpack.c.b16 %v5568, %v5568
  %v5589 = vpack.c.b16 %v5569, %v5569
  %v5590 = vpack.c.b16 %v5570, %v5570
  %v5591 = vpack.c.b16 %v5571, %v5571
  %v5592 = vpack.c.b16 %v5572, %v5572
  %v5593 = vpack.c.b16 %v5573, %v5573
  %v5594 = vpack.c.b16 %v5574, %v5574
  %v5595 = vpack.c.b16 %v5575, %v5575
  %v5596 = vpack.c.b16 %v5576, %v5576
  %v5597 = vpack.c.b16 %v5577, %v5577
  %v5599 = vsel %vm1341, %v5086, 0
  %v5602 = vsel %vm1345, %v5578, 0
  %v5605 = vsel %vm1345, %v5579, 0
  %v5608 = vsel %vm1345, %v5580, 0
  %v5611 = vsel %vm1345, %v5581, 0
  %v5614 = vsel %vm1345, %v5582, 0
  %v5617 = vsel %vm1345, %v5583, 0
  %v5620 = vsel %vm1345, %v5584, 0
  %v5623 = vsel %vm1345, %v5585, 0
  %v5626 = vsel %vm1345, %v5586, 0
  %v5629 = vsel %vm1345, %v5587, 0
  %v5632 = vsel %vm1345, %v5588, 0
  %v5635 = vsel %vm1345, %v5589, 0
  %v5638 = vsel %vm1345, %v5590, 0
  %v5641 = vsel %vm1345, %v5591, 0
  %v5644 = vsel %vm1345, %v5592, 0
  %v5647 = vsel %vm1345, %v5593, 0
  %v5650 = vsel %vm1345, %v5594, 0
  %v5653 = vsel %vm1345, %v5595, 0
  %v5656 = vsel %vm1345, %v5596, 0
  %v5659 = vsel %vm1345, %v5597, 0
  %5661 = vmatpush.bf16.msra.mxu0 0
  %5662 = vmatpush.bf16.msra.mxu0 0
  %5663 = vmatpush.bf16.msra.mxu0 0
  %5664 = vmatpush.bf16.msra.mxu0 0
  %5665 = vmatpush.bf16.msra.mxu0 0
  %5666 = vmatpush.bf16.msra.mxu0 0
  %5667 = vmatpush.bf16.msra.mxu0 0
  %5668 = vmatpush.bf16.msra.mxu0 %v5602
  %5669 = vmatmul.bf16.gmra.mxu0 %v5599
  %v5670 = vpop.f32.mrf.mxu0
  %v5671 = vadd.f32 %v5298, %v5670
  %v5672 = vpop.f32.mrf.mxu0
  %5673 = vdwg.mxu0
  %5674 = vmatpush.bf16.msra.mxu0 0
  %5675 = vmatpush.bf16.msra.mxu0 0
  %5676 = vmatpush.bf16.msra.mxu0 0
  %5677 = vmatpush.bf16.msra.mxu0 0
  %5678 = vmatpush.bf16.msra.mxu0 0
  %5679 = vmatpush.bf16.msra.mxu0 0
  %5680 = vmatpush.bf16.msra.mxu0 0
  %5681 = vmatpush.bf16.msra.mxu0 %v5605
  %5682 = vmatmul.bf16.gmra.mxu0 %v5599
  %v5683 = vpop.f32.mrf.mxu0
  %v5684 = vadd.f32 %v5311, %v5683
  %v5685 = vpop.f32.mrf.mxu0
  %5686 = vdwg.mxu0
  %5687 = vmatpush.bf16.msra.mxu0 0
  %5688 = vmatpush.bf16.msra.mxu0 0
  %5689 = vmatpush.bf16.msra.mxu0 0
  %5690 = vmatpush.bf16.msra.mxu0 0
  %5691 = vmatpush.bf16.msra.mxu0 0
  %5692 = vmatpush.bf16.msra.mxu0 0
  %5693 = vmatpush.bf16.msra.mxu0 0
  %5694 = vmatpush.bf16.msra.mxu0 %v5608
  %5695 = vmatmul.bf16.gmra.mxu0 %v5599
  %v5696 = vpop.f32.mrf.mxu0
  %v5697 = vadd.f32 %v5324, %v5696
  %v5698 = vpop.f32.mrf.mxu0
  %5699 = vdwg.mxu0
  %5700 = vmatpush.bf16.msra.mxu0 0
  %5701 = vmatpush.bf16.msra.mxu0 0
  %5702 = vmatpush.bf16.msra.mxu0 0
  %5703 = vmatpush.bf16.msra.mxu0 0
  %5704 = vmatpush.bf16.msra.mxu0 0
  %5705 = vmatpush.bf16.msra.mxu0 0
  %5706 = vmatpush.bf16.msra.mxu0 0
  %5707 = vmatpush.bf16.msra.mxu0 %v5611
  %5708 = vmatmul.bf16.gmra.mxu0 %v5599
  %v5709 = vpop.f32.mrf.mxu0
  %v5710 = vadd.f32 %v5337, %v5709
  %v5711 = vpop.f32.mrf.mxu0
  %5712 = vdwg.mxu0
  %5713 = vmatpush.bf16.msra.mxu0 0
  %5714 = vmatpush.bf16.msra.mxu0 0
  %5715 = vmatpush.bf16.msra.mxu0 0
  %5716 = vmatpush.bf16.msra.mxu0 0
  %5717 = vmatpush.bf16.msra.mxu0 0
  %5718 = vmatpush.bf16.msra.mxu0 0
  %5719 = vmatpush.bf16.msra.mxu0 0
  %5720 = vmatpush.bf16.msra.mxu0 %v5614
  %5721 = vmatmul.bf16.gmra.mxu0 %v5599
  %v5722 = vpop.f32.mrf.mxu0
  %v5723 = vadd.f32 %v5350, %v5722
  %v5724 = vpop.f32.mrf.mxu0
  %5725 = vdwg.mxu0
  %5726 = vmatpush.bf16.msra.mxu0 0
  %5727 = vmatpush.bf16.msra.mxu0 0
  %5728 = vmatpush.bf16.msra.mxu0 0
  %5729 = vmatpush.bf16.msra.mxu0 0
  %5730 = vmatpush.bf16.msra.mxu0 0
  %5731 = vmatpush.bf16.msra.mxu0 0
  %5732 = vmatpush.bf16.msra.mxu0 0
  %5733 = vmatpush.bf16.msra.mxu0 %v5617
  %5734 = vmatmul.bf16.gmra.mxu0 %v5599
  %v5735 = vpop.f32.mrf.mxu0
  %v5736 = vadd.f32 %v5363, %v5735
  %v5737 = vpop.f32.mrf.mxu0
  %5738 = vdwg.mxu0
  %5739 = vmatpush.bf16.msra.mxu0 0
  %5740 = vmatpush.bf16.msra.mxu0 0
  %5741 = vmatpush.bf16.msra.mxu0 0
  %5742 = vmatpush.bf16.msra.mxu0 0
  %5743 = vmatpush.bf16.msra.mxu0 0
  %5744 = vmatpush.bf16.msra.mxu0 0
  %5745 = vmatpush.bf16.msra.mxu0 0
  %5746 = vmatpush.bf16.msra.mxu0 %v5620
  %5747 = vmatmul.bf16.gmra.mxu0 %v5599
  %v5748 = vpop.f32.mrf.mxu0
  %v5749 = vadd.f32 %v5376, %v5748
  %v5750 = vpop.f32.mrf.mxu0
  %5751 = vdwg.mxu0
  %5752 = vmatpush.bf16.msra.mxu0 0
  %5753 = vmatpush.bf16.msra.mxu0 0
  %5754 = vmatpush.bf16.msra.mxu0 0
  %5755 = vmatpush.bf16.msra.mxu0 0
  %5756 = vmatpush.bf16.msra.mxu0 0
  %5757 = vmatpush.bf16.msra.mxu0 0
  %5758 = vmatpush.bf16.msra.mxu0 0
  %5759 = vmatpush.bf16.msra.mxu0 %v5623
  %5760 = vmatmul.bf16.gmra.mxu0 %v5599
  %v5761 = vpop.f32.mrf.mxu0
  %v5762 = vadd.f32 %v5389, %v5761
  %v5763 = vpop.f32.mrf.mxu0
  %5764 = vdwg.mxu0
  %5765 = vmatpush.bf16.msra.mxu0 0
  %5766 = vmatpush.bf16.msra.mxu0 0
  %5767 = vmatpush.bf16.msra.mxu0 0
  %5768 = vmatpush.bf16.msra.mxu0 0
  %5769 = vmatpush.bf16.msra.mxu0 0
  %5770 = vmatpush.bf16.msra.mxu0 0
  %5771 = vmatpush.bf16.msra.mxu0 0
  %5772 = vmatpush.bf16.msra.mxu0 %v5626
  %5773 = vmatmul.bf16.gmra.mxu0 %v5599
  %v5774 = vpop.f32.mrf.mxu0
  %v5775 = vadd.f32 %v5402, %v5774
  %v5776 = vpop.f32.mrf.mxu0
  %5777 = vdwg.mxu0
  %5778 = vmatpush.bf16.msra.mxu0 0
  %5779 = vmatpush.bf16.msra.mxu0 0
  %5780 = vmatpush.bf16.msra.mxu0 0
  %5781 = vmatpush.bf16.msra.mxu0 0
  %5782 = vmatpush.bf16.msra.mxu0 0
  %5783 = vmatpush.bf16.msra.mxu0 0
  %5784 = vmatpush.bf16.msra.mxu0 0
  %5785 = vmatpush.bf16.msra.mxu0 %v5629
  %5786 = vmatmul.bf16.gmra.mxu0 %v5599
  %v5787 = vpop.f32.mrf.mxu0
  %v5788 = vadd.f32 %v5415, %v5787
  %v5789 = vpop.f32.mrf.mxu0
  %5790 = vdwg.mxu0
  %5791 = vmatpush.bf16.msra.mxu0 0
  %5792 = vmatpush.bf16.msra.mxu0 0
  %5793 = vmatpush.bf16.msra.mxu0 0
  %5794 = vmatpush.bf16.msra.mxu0 0
  %5795 = vmatpush.bf16.msra.mxu0 0
  %5796 = vmatpush.bf16.msra.mxu0 0
  %5797 = vmatpush.bf16.msra.mxu0 0
  %5798 = vmatpush.bf16.msra.mxu0 %v5632
  %5799 = vmatmul.bf16.gmra.mxu0 %v5599
  %v5800 = vpop.f32.mrf.mxu0
  %v5801 = vadd.f32 %v5428, %v5800
  %v5802 = vpop.f32.mrf.mxu0
  %5803 = vdwg.mxu0
  %5804 = vmatpush.bf16.msra.mxu0 0
  %5805 = vmatpush.bf16.msra.mxu0 0
  %5806 = vmatpush.bf16.msra.mxu0 0
  %5807 = vmatpush.bf16.msra.mxu0 0
  %5808 = vmatpush.bf16.msra.mxu0 0
  %5809 = vmatpush.bf16.msra.mxu0 0
  %5810 = vmatpush.bf16.msra.mxu0 0
  %5811 = vmatpush.bf16.msra.mxu0 %v5635
  %5812 = vmatmul.bf16.gmra.mxu0 %v5599
  %v5813 = vpop.f32.mrf.mxu0
  %v5814 = vadd.f32 %v5441, %v5813
  %v5815 = vpop.f32.mrf.mxu0
  %5816 = vdwg.mxu0
  %5817 = vmatpush.bf16.msra.mxu0 0
  %5818 = vmatpush.bf16.msra.mxu0 0
  %5819 = vmatpush.bf16.msra.mxu0 0
  %5820 = vmatpush.bf16.msra.mxu0 0
  %5821 = vmatpush.bf16.msra.mxu0 0
  %5822 = vmatpush.bf16.msra.mxu0 0
  %5823 = vmatpush.bf16.msra.mxu0 0
  %5824 = vmatpush.bf16.msra.mxu0 %v5638
  %5825 = vmatmul.bf16.gmra.mxu0 %v5599
  %v5826 = vpop.f32.mrf.mxu0
  %v5827 = vadd.f32 %v5454, %v5826
  %v5828 = vpop.f32.mrf.mxu0
  %5829 = vdwg.mxu0
  %5830 = vmatpush.bf16.msra.mxu0 0
  %5831 = vmatpush.bf16.msra.mxu0 0
  %5832 = vmatpush.bf16.msra.mxu0 0
  %5833 = vmatpush.bf16.msra.mxu0 0
  %5834 = vmatpush.bf16.msra.mxu0 0
  %5835 = vmatpush.bf16.msra.mxu0 0
  %5836 = vmatpush.bf16.msra.mxu0 0
  %5837 = vmatpush.bf16.msra.mxu0 %v5641
  %5838 = vmatmul.bf16.gmra.mxu0 %v5599
  %v5839 = vpop.f32.mrf.mxu0
  %v5840 = vadd.f32 %v5467, %v5839
  %v5841 = vpop.f32.mrf.mxu0
  %5842 = vdwg.mxu0
  %5843 = vmatpush.bf16.msra.mxu0 0
  %5844 = vmatpush.bf16.msra.mxu0 0
  %5845 = vmatpush.bf16.msra.mxu0 0
  %5846 = vmatpush.bf16.msra.mxu0 0
  %5847 = vmatpush.bf16.msra.mxu0 0
  %5848 = vmatpush.bf16.msra.mxu0 0
  %5849 = vmatpush.bf16.msra.mxu0 0
  %5850 = vmatpush.bf16.msra.mxu0 %v5644
  %5851 = vmatmul.bf16.gmra.mxu0 %v5599
  %v5852 = vpop.f32.mrf.mxu0
  %v5853 = vadd.f32 %v5480, %v5852
  %v5854 = vpop.f32.mrf.mxu0
  %5855 = vdwg.mxu0
  %5856 = vmatpush.bf16.msra.mxu0 0
  %5857 = vmatpush.bf16.msra.mxu0 0
  %5858 = vmatpush.bf16.msra.mxu0 0
  %5859 = vmatpush.bf16.msra.mxu0 0
  %5860 = vmatpush.bf16.msra.mxu0 0
  %5861 = vmatpush.bf16.msra.mxu0 0
  %5862 = vmatpush.bf16.msra.mxu0 0
  %5863 = vmatpush.bf16.msra.mxu0 %v5647
  %5864 = vmatmul.bf16.gmra.mxu0 %v5599
  %v5865 = vpop.f32.mrf.mxu0
  %v5866 = vadd.f32 %v5493, %v5865
  %v5867 = vpop.f32.mrf.mxu0
  %5868 = vdwg.mxu0
  %5869 = vmatpush.bf16.msra.mxu0 0
  %5870 = vmatpush.bf16.msra.mxu0 0
  %5871 = vmatpush.bf16.msra.mxu0 0
  %5872 = vmatpush.bf16.msra.mxu0 0
  %5873 = vmatpush.bf16.msra.mxu0 0
  %5874 = vmatpush.bf16.msra.mxu0 0
  %5875 = vmatpush.bf16.msra.mxu0 0
  %5876 = vmatpush.bf16.msra.mxu0 %v5650
  %5877 = vmatmul.bf16.gmra.mxu0 %v5599
  %v5878 = vpop.f32.mrf.mxu0
  %v5879 = vadd.f32 %v5506, %v5878
  %v5880 = vpop.f32.mrf.mxu0
  %5881 = vdwg.mxu0
  %5882 = vmatpush.bf16.msra.mxu0 0
  %5883 = vmatpush.bf16.msra.mxu0 0
  %5884 = vmatpush.bf16.msra.mxu0 0
  %5885 = vmatpush.bf16.msra.mxu0 0
  %5886 = vmatpush.bf16.msra.mxu0 0
  %5887 = vmatpush.bf16.msra.mxu0 0
  %5888 = vmatpush.bf16.msra.mxu0 0
  %5889 = vmatpush.bf16.msra.mxu0 %v5653
  %5890 = vmatmul.bf16.gmra.mxu0 %v5599
  %v5891 = vpop.f32.mrf.mxu0
  %v5892 = vadd.f32 %v5519, %v5891
  %v5893 = vpop.f32.mrf.mxu0
  %5894 = vdwg.mxu0
  %5895 = vmatpush.bf16.msra.mxu0 0
  %5896 = vmatpush.bf16.msra.mxu0 0
  %5897 = vmatpush.bf16.msra.mxu0 0
  %5898 = vmatpush.bf16.msra.mxu0 0
  %5899 = vmatpush.bf16.msra.mxu0 0
  %5900 = vmatpush.bf16.msra.mxu0 0
  %5901 = vmatpush.bf16.msra.mxu0 0
  %5902 = vmatpush.bf16.msra.mxu0 %v5656
  %5903 = vmatmul.bf16.gmra.mxu0 %v5599
  %v5904 = vpop.f32.mrf.mxu0
  %v5905 = vadd.f32 %v5532, %v5904
  %v5906 = vpop.f32.mrf.mxu0
  %5907 = vdwg.mxu0
  %5908 = vmatpush.bf16.msra.mxu0 0
  %5909 = vmatpush.bf16.msra.mxu0 0
  %5910 = vmatpush.bf16.msra.mxu0 0
  %5911 = vmatpush.bf16.msra.mxu0 0
  %5912 = vmatpush.bf16.msra.mxu0 0
  %5913 = vmatpush.bf16.msra.mxu0 0
  %5914 = vmatpush.bf16.msra.mxu0 0
  %5915 = vmatpush.bf16.msra.mxu0 %v5659
  %5916 = vmatmul.bf16.gmra.mxu0 %v5599
  %v5917 = vpop.f32.mrf.mxu0
  %v5918 = vadd.f32 %v5545, %v5917
  %v5919 = vpop.f32.mrf.mxu0
  %5920 = vdwg.mxu0
  %s5921 = scalar_lea.vmem %s5, 8
  %v5922 = vld [vmem:[%s5921] sm:$0xf]
  %5923 = vrot.lane.b32.xlu0 %v5142, 126
  %v5924 = vpop.permute.xlu0 %5923
  %5925 = vrot.lane.b32.xlu0 %v5143, 126
  %v5926 = vpop.permute.xlu0 %5925
  %5927 = vrot.lane.b32.xlu0 %v5144, 126
  %v5928 = vpop.permute.xlu0 %5927
  %5929 = vrot.lane.b32.xlu0 %v5145, 126
  %v5930 = vpop.permute.xlu0 %5929
  %5931 = vrot.lane.b32.xlu0 %v5146, 126
  %v5932 = vpop.permute.xlu0 %5931
  %5933 = vrot.lane.b32.xlu0 %v5147, 126
  %v5934 = vpop.permute.xlu0 %5933
  %5935 = vrot.lane.b32.xlu0 %v5148, 126
  %v5936 = vpop.permute.xlu0 %5935
  %5937 = vrot.lane.b32.xlu0 %v5149, 126
  %v5938 = vpop.permute.xlu0 %5937
  %5939 = vrot.lane.b32.xlu0 %v5150, 126
  %v5940 = vpop.permute.xlu0 %5939
  %5941 = vrot.lane.b32.xlu0 %v5151, 126
  %v5942 = vpop.permute.xlu0 %5941
  %5943 = vrot.lane.b32.xlu0 %v5152, 126
  %v5944 = vpop.permute.xlu0 %5943
  %5945 = vrot.lane.b32.xlu0 %v5153, 126
  %v5946 = vpop.permute.xlu0 %5945
  %5947 = vrot.lane.b32.xlu0 %v5154, 126
  %v5948 = vpop.permute.xlu0 %5947
  %5949 = vrot.lane.b32.xlu0 %v5155, 126
  %v5950 = vpop.permute.xlu0 %5949
  %5951 = vrot.lane.b32.xlu0 %v5156, 126
  %v5952 = vpop.permute.xlu0 %5951
  %5953 = vrot.lane.b32.xlu0 %v5157, 126
  %v5954 = vpop.permute.xlu0 %5953
  %5955 = vrot.lane.b32.xlu0 %v5158, 126
  %v5956 = vpop.permute.xlu0 %5955
  %5957 = vrot.lane.b32.xlu0 %v5159, 126
  %v5958 = vpop.permute.xlu0 %5957
  %5959 = vrot.lane.b32.xlu0 %v5160, 126
  %v5960 = vpop.permute.xlu0 %5959
  %5961 = vrot.lane.b32.xlu0 %v5161, 126
  %v5962 = vpop.permute.xlu0 %5961
  %5963 = vrot.lane.b32.xlu0 %v5162, 126
  %v5964 = vpop.permute.xlu0 %5963
  %v5965 = vsel %vm2083, %v5924, %v5926
  %v5966 = vsel %vm2083, %v5926, %v5928
  %v5967 = vsel %vm2083, %v5928, %v5930
  %v5968 = vsel %vm2083, %v5930, %v5932
  %v5969 = vsel %vm2083, %v5932, %v5934
  %v5970 = vsel %vm2083, %v5934, %v5936
  %v5971 = vsel %vm2083, %v5936, %v5938
  %v5972 = vsel %vm2083, %v5938, %v5940
  %v5973 = vsel %vm2083, %v5940, %v5942
  %v5974 = vsel %vm2083, %v5942, %v5944
  %v5975 = vsel %vm2083, %v5944, %v5946
  %v5976 = vsel %vm2083, %v5946, %v5948
  %v5977 = vsel %vm2083, %v5948, %v5950
  %v5978 = vsel %vm2083, %v5950, %v5952
  %v5979 = vsel %vm2083, %v5952, %v5954
  %v5980 = vsel %vm2083, %v5954, %v5956
  %v5981 = vsel %vm2083, %v5956, %v5958
  %v5982 = vsel %vm2083, %v5958, %v5960
  %v5983 = vsel %vm2083, %v5960, %v5962
  %v5984 = vsel %vm2083, %v5962, %v5964
  %v5986 = vsel %vm1341, %v5922, 0
  %v5989 = vsel %vm1345, %v5965, 0
  %v5992 = vsel %vm1345, %v5966, 0
  %v5995 = vsel %vm1345, %v5967, 0
  %v5998 = vsel %vm1345, %v5968, 0
  %v6001 = vsel %vm1345, %v5969, 0
  %v6004 = vsel %vm1345, %v5970, 0
  %v6007 = vsel %vm1345, %v5971, 0
  %v6010 = vsel %vm1345, %v5972, 0
  %v6013 = vsel %vm1345, %v5973, 0
  %v6016 = vsel %vm1345, %v5974, 0
  %v6019 = vsel %vm1345, %v5975, 0
  %v6022 = vsel %vm1345, %v5976, 0
  %v6025 = vsel %vm1345, %v5977, 0
  %v6028 = vsel %vm1345, %v5978, 0
  %v6031 = vsel %vm1345, %v5979, 0
  %v6034 = vsel %vm1345, %v5980, 0
  %v6037 = vsel %vm1345, %v5981, 0
  %v6040 = vsel %vm1345, %v5982, 0
  %v6043 = vsel %vm1345, %v5983, 0
  %v6046 = vsel %vm1345, %v5984, 0
  %6048 = vmatpush.bf16.msra.mxu0 0
  %6049 = vmatpush.bf16.msra.mxu0 0
  %6050 = vmatpush.bf16.msra.mxu0 0
  %6051 = vmatpush.bf16.msra.mxu0 0
  %6052 = vmatpush.bf16.msra.mxu0 0
  %6053 = vmatpush.bf16.msra.mxu0 0
  %6054 = vmatpush.bf16.msra.mxu0 0
  %6055 = vmatpush.bf16.msra.mxu0 %v5989
  %6056 = vmatmul.bf16.gmra.mxu0 %v5986
  %v6057 = vpop.f32.mrf.mxu0
  %v6058 = vadd.f32 0.0, %v6057
  %v6059 = vpop.f32.mrf.mxu0
  %6060 = vdwg.mxu0
  %6061 = vmatpush.bf16.msra.mxu0 0
  %6062 = vmatpush.bf16.msra.mxu0 0
  %6063 = vmatpush.bf16.msra.mxu0 0
  %6064 = vmatpush.bf16.msra.mxu0 0
  %6065 = vmatpush.bf16.msra.mxu0 0
  %6066 = vmatpush.bf16.msra.mxu0 0
  %6067 = vmatpush.bf16.msra.mxu0 0
  %6068 = vmatpush.bf16.msra.mxu0 %v5992
  %6069 = vmatmul.bf16.gmra.mxu0 %v5986
  %v6070 = vpop.f32.mrf.mxu0
  %v6071 = vadd.f32 0.0, %v6070
  %v6072 = vpop.f32.mrf.mxu0
  %6073 = vdwg.mxu0
  %6074 = vmatpush.bf16.msra.mxu0 0
  %6075 = vmatpush.bf16.msra.mxu0 0
  %6076 = vmatpush.bf16.msra.mxu0 0
  %6077 = vmatpush.bf16.msra.mxu0 0
  %6078 = vmatpush.bf16.msra.mxu0 0
  %6079 = vmatpush.bf16.msra.mxu0 0
  %6080 = vmatpush.bf16.msra.mxu0 0
  %6081 = vmatpush.bf16.msra.mxu0 %v5995
  %6082 = vmatmul.bf16.gmra.mxu0 %v5986
  %v6083 = vpop.f32.mrf.mxu0
  %v6084 = vadd.f32 0.0, %v6083
  %v6085 = vpop.f32.mrf.mxu0
  %6086 = vdwg.mxu0
  %6087 = vmatpush.bf16.msra.mxu0 0
  %6088 = vmatpush.bf16.msra.mxu0 0
  %6089 = vmatpush.bf16.msra.mxu0 0
  %6090 = vmatpush.bf16.msra.mxu0 0
  %6091 = vmatpush.bf16.msra.mxu0 0
  %6092 = vmatpush.bf16.msra.mxu0 0
  %6093 = vmatpush.bf16.msra.mxu0 0
  %6094 = vmatpush.bf16.msra.mxu0 %v5998
  %6095 = vmatmul.bf16.gmra.mxu0 %v5986
  %v6096 = vpop.f32.mrf.mxu0
  %v6097 = vadd.f32 0.0, %v6096
  %v6098 = vpop.f32.mrf.mxu0
  %6099 = vdwg.mxu0
  %6100 = vmatpush.bf16.msra.mxu0 0
  %6101 = vmatpush.bf16.msra.mxu0 0
  %6102 = vmatpush.bf16.msra.mxu0 0
  %6103 = vmatpush.bf16.msra.mxu0 0
  %6104 = vmatpush.bf16.msra.mxu0 0
  %6105 = vmatpush.bf16.msra.mxu0 0
  %6106 = vmatpush.bf16.msra.mxu0 0
  %6107 = vmatpush.bf16.msra.mxu0 %v6001
  %6108 = vmatmul.bf16.gmra.mxu0 %v5986
  %v6109 = vpop.f32.mrf.mxu0
  %v6110 = vadd.f32 0.0, %v6109
  %v6111 = vpop.f32.mrf.mxu0
  %6112 = vdwg.mxu0
  %6113 = vmatpush.bf16.msra.mxu0 0
  %6114 = vmatpush.bf16.msra.mxu0 0
  %6115 = vmatpush.bf16.msra.mxu0 0
  %6116 = vmatpush.bf16.msra.mxu0 0
  %6117 = vmatpush.bf16.msra.mxu0 0
  %6118 = vmatpush.bf16.msra.mxu0 0
  %6119 = vmatpush.bf16.msra.mxu0 0
  %6120 = vmatpush.bf16.msra.mxu0 %v6004
  %6121 = vmatmul.bf16.gmra.mxu0 %v5986
  %v6122 = vpop.f32.mrf.mxu0
  %v6123 = vadd.f32 0.0, %v6122
  %v6124 = vpop.f32.mrf.mxu0
  %6125 = vdwg.mxu0
  %6126 = vmatpush.bf16.msra.mxu0 0
  %6127 = vmatpush.bf16.msra.mxu0 0
  %6128 = vmatpush.bf16.msra.mxu0 0
  %6129 = vmatpush.bf16.msra.mxu0 0
  %6130 = vmatpush.bf16.msra.mxu0 0
  %6131 = vmatpush.bf16.msra.mxu0 0
  %6132 = vmatpush.bf16.msra.mxu0 0
  %6133 = vmatpush.bf16.msra.mxu0 %v6007
  %6134 = vmatmul.bf16.gmra.mxu0 %v5986
  %v6135 = vpop.f32.mrf.mxu0
  %v6136 = vadd.f32 0.0, %v6135
  %v6137 = vpop.f32.mrf.mxu0
  %6138 = vdwg.mxu0
  %6139 = vmatpush.bf16.msra.mxu0 0
  %6140 = vmatpush.bf16.msra.mxu0 0
  %6141 = vmatpush.bf16.msra.mxu0 0
  %6142 = vmatpush.bf16.msra.mxu0 0
  %6143 = vmatpush.bf16.msra.mxu0 0
  %6144 = vmatpush.bf16.msra.mxu0 0
  %6145 = vmatpush.bf16.msra.mxu0 0
  %6146 = vmatpush.bf16.msra.mxu0 %v6010
  %6147 = vmatmul.bf16.gmra.mxu0 %v5986
  %v6148 = vpop.f32.mrf.mxu0
  %v6149 = vadd.f32 0.0, %v6148
  %v6150 = vpop.f32.mrf.mxu0
  %6151 = vdwg.mxu0
  %6152 = vmatpush.bf16.msra.mxu0 0
  %6153 = vmatpush.bf16.msra.mxu0 0
  %6154 = vmatpush.bf16.msra.mxu0 0
  %6155 = vmatpush.bf16.msra.mxu0 0
  %6156 = vmatpush.bf16.msra.mxu0 0
  %6157 = vmatpush.bf16.msra.mxu0 0
  %6158 = vmatpush.bf16.msra.mxu0 0
  %6159 = vmatpush.bf16.msra.mxu0 %v6013
  %6160 = vmatmul.bf16.gmra.mxu0 %v5986
  %v6161 = vpop.f32.mrf.mxu0
  %v6162 = vadd.f32 0.0, %v6161
  %v6163 = vpop.f32.mrf.mxu0
  %6164 = vdwg.mxu0
  %6165 = vmatpush.bf16.msra.mxu0 0
  %6166 = vmatpush.bf16.msra.mxu0 0
  %6167 = vmatpush.bf16.msra.mxu0 0
  %6168 = vmatpush.bf16.msra.mxu0 0
  %6169 = vmatpush.bf16.msra.mxu0 0
  %6170 = vmatpush.bf16.msra.mxu0 0
  %6171 = vmatpush.bf16.msra.mxu0 0
  %6172 = vmatpush.bf16.msra.mxu0 %v6016
  %6173 = vmatmul.bf16.gmra.mxu0 %v5986
  %v6174 = vpop.f32.mrf.mxu0
  %v6175 = vadd.f32 0.0, %v6174
  %v6176 = vpop.f32.mrf.mxu0
  %6177 = vdwg.mxu0
  %6178 = vmatpush.bf16.msra.mxu0 0
  %6179 = vmatpush.bf16.msra.mxu0 0
  %6180 = vmatpush.bf16.msra.mxu0 0
  %6181 = vmatpush.bf16.msra.mxu0 0
  %6182 = vmatpush.bf16.msra.mxu0 0
  %6183 = vmatpush.bf16.msra.mxu0 0
  %6184 = vmatpush.bf16.msra.mxu0 0
  %6185 = vmatpush.bf16.msra.mxu0 %v6019
  %6186 = vmatmul.bf16.gmra.mxu0 %v5986
  %v6187 = vpop.f32.mrf.mxu0
  %v6188 = vadd.f32 0.0, %v6187
  %v6189 = vpop.f32.mrf.mxu0
  %6190 = vdwg.mxu0
  %6191 = vmatpush.bf16.msra.mxu0 0
  %6192 = vmatpush.bf16.msra.mxu0 0
  %6193 = vmatpush.bf16.msra.mxu0 0
  %6194 = vmatpush.bf16.msra.mxu0 0
  %6195 = vmatpush.bf16.msra.mxu0 0
  %6196 = vmatpush.bf16.msra.mxu0 0
  %6197 = vmatpush.bf16.msra.mxu0 0
  %6198 = vmatpush.bf16.msra.mxu0 %v6022
  %6199 = vmatmul.bf16.gmra.mxu0 %v5986
  %v6200 = vpop.f32.mrf.mxu0
  %v6201 = vadd.f32 0.0, %v6200
  %v6202 = vpop.f32.mrf.mxu0
  %6203 = vdwg.mxu0
  %6204 = vmatpush.bf16.msra.mxu0 0
  %6205 = vmatpush.bf16.msra.mxu0 0
  %6206 = vmatpush.bf16.msra.mxu0 0
  %6207 = vmatpush.bf16.msra.mxu0 0
  %6208 = vmatpush.bf16.msra.mxu0 0
  %6209 = vmatpush.bf16.msra.mxu0 0
  %6210 = vmatpush.bf16.msra.mxu0 0
  %6211 = vmatpush.bf16.msra.mxu0 %v6025
  %6212 = vmatmul.bf16.gmra.mxu0 %v5986
  %v6213 = vpop.f32.mrf.mxu0
  %v6214 = vadd.f32 0.0, %v6213
  %v6215 = vpop.f32.mrf.mxu0
  %6216 = vdwg.mxu0
  %6217 = vmatpush.bf16.msra.mxu0 0
  %6218 = vmatpush.bf16.msra.mxu0 0
  %6219 = vmatpush.bf16.msra.mxu0 0
  %6220 = vmatpush.bf16.msra.mxu0 0
  %6221 = vmatpush.bf16.msra.mxu0 0
  %6222 = vmatpush.bf16.msra.mxu0 0
  %6223 = vmatpush.bf16.msra.mxu0 0
  %6224 = vmatpush.bf16.msra.mxu0 %v6028
  %6225 = vmatmul.bf16.gmra.mxu0 %v5986
  %v6226 = vpop.f32.mrf.mxu0
  %v6227 = vadd.f32 0.0, %v6226
  %v6228 = vpop.f32.mrf.mxu0
  %6229 = vdwg.mxu0
  %6230 = vmatpush.bf16.msra.mxu0 0
  %6231 = vmatpush.bf16.msra.mxu0 0
  %6232 = vmatpush.bf16.msra.mxu0 0
  %6233 = vmatpush.bf16.msra.mxu0 0
  %6234 = vmatpush.bf16.msra.mxu0 0
  %6235 = vmatpush.bf16.msra.mxu0 0
  %6236 = vmatpush.bf16.msra.mxu0 0
  %6237 = vmatpush.bf16.msra.mxu0 %v6031
  %6238 = vmatmul.bf16.gmra.mxu0 %v5986
  %v6239 = vpop.f32.mrf.mxu0
  %v6240 = vadd.f32 0.0, %v6239
  %v6241 = vpop.f32.mrf.mxu0
  %6242 = vdwg.mxu0
  %6243 = vmatpush.bf16.msra.mxu0 0
  %6244 = vmatpush.bf16.msra.mxu0 0
  %6245 = vmatpush.bf16.msra.mxu0 0
  %6246 = vmatpush.bf16.msra.mxu0 0
  %6247 = vmatpush.bf16.msra.mxu0 0
  %6248 = vmatpush.bf16.msra.mxu0 0
  %6249 = vmatpush.bf16.msra.mxu0 0
  %6250 = vmatpush.bf16.msra.mxu0 %v6034
  %6251 = vmatmul.bf16.gmra.mxu0 %v5986
  %v6252 = vpop.f32.mrf.mxu0
  %v6253 = vadd.f32 0.0, %v6252
  %v6254 = vpop.f32.mrf.mxu0
  %6255 = vdwg.mxu0
  %6256 = vmatpush.bf16.msra.mxu0 0
  %6257 = vmatpush.bf16.msra.mxu0 0
  %6258 = vmatpush.bf16.msra.mxu0 0
  %6259 = vmatpush.bf16.msra.mxu0 0
  %6260 = vmatpush.bf16.msra.mxu0 0
  %6261 = vmatpush.bf16.msra.mxu0 0
  %6262 = vmatpush.bf16.msra.mxu0 0
  %6263 = vmatpush.bf16.msra.mxu0 %v6037
  %6264 = vmatmul.bf16.gmra.mxu0 %v5986
  %v6265 = vpop.f32.mrf.mxu0
  %v6266 = vadd.f32 0.0, %v6265
  %v6267 = vpop.f32.mrf.mxu0
  %6268 = vdwg.mxu0
  %6269 = vmatpush.bf16.msra.mxu0 0
  %6270 = vmatpush.bf16.msra.mxu0 0
  %6271 = vmatpush.bf16.msra.mxu0 0
  %6272 = vmatpush.bf16.msra.mxu0 0
  %6273 = vmatpush.bf16.msra.mxu0 0
  %6274 = vmatpush.bf16.msra.mxu0 0
  %6275 = vmatpush.bf16.msra.mxu0 0
  %6276 = vmatpush.bf16.msra.mxu0 %v6040
  %6277 = vmatmul.bf16.gmra.mxu0 %v5986
  %v6278 = vpop.f32.mrf.mxu0
  %v6279 = vadd.f32 0.0, %v6278
  %v6280 = vpop.f32.mrf.mxu0
  %6281 = vdwg.mxu0
  %6282 = vmatpush.bf16.msra.mxu0 0
  %6283 = vmatpush.bf16.msra.mxu0 0
  %6284 = vmatpush.bf16.msra.mxu0 0
  %6285 = vmatpush.bf16.msra.mxu0 0
  %6286 = vmatpush.bf16.msra.mxu0 0
  %6287 = vmatpush.bf16.msra.mxu0 0
  %6288 = vmatpush.bf16.msra.mxu0 0
  %6289 = vmatpush.bf16.msra.mxu0 %v6043
  %6290 = vmatmul.bf16.gmra.mxu0 %v5986
  %v6291 = vpop.f32.mrf.mxu0
  %v6292 = vadd.f32 0.0, %v6291
  %v6293 = vpop.f32.mrf.mxu0
  %6294 = vdwg.mxu0
  %6295 = vmatpush.bf16.msra.mxu0 0
  %6296 = vmatpush.bf16.msra.mxu0 0
  %6297 = vmatpush.bf16.msra.mxu0 0
  %6298 = vmatpush.bf16.msra.mxu0 0
  %6299 = vmatpush.bf16.msra.mxu0 0
  %6300 = vmatpush.bf16.msra.mxu0 0
  %6301 = vmatpush.bf16.msra.mxu0 0
  %6302 = vmatpush.bf16.msra.mxu0 %v6046
  %6303 = vmatmul.bf16.gmra.mxu0 %v5986
  %v6304 = vpop.f32.mrf.mxu0
  %v6305 = vadd.f32 0.0, %v6304
  %v6306 = vpop.f32.mrf.mxu0
  %6307 = vdwg.mxu0
  %v6308 = vadd.f32 %v5671, %v6058
  %v6309 = vadd.f32 %v5684, %v6071
  %v6310 = vadd.f32 %v5697, %v6084
  %v6311 = vadd.f32 %v5710, %v6097
  %v6312 = vadd.f32 %v5723, %v6110
  %v6313 = vadd.f32 %v5736, %v6123
  %v6314 = vadd.f32 %v5749, %v6136
  %v6315 = vadd.f32 %v5762, %v6149
  %v6316 = vadd.f32 %v5775, %v6162
  %v6317 = vadd.f32 %v5788, %v6175
  %v6318 = vadd.f32 %v5801, %v6188
  %v6319 = vadd.f32 %v5814, %v6201
  %v6320 = vadd.f32 %v5827, %v6214
  %v6321 = vadd.f32 %v5840, %v6227
  %v6322 = vadd.f32 %v5853, %v6240
  %v6323 = vadd.f32 %v5866, %v6253
  %v6324 = vadd.f32 %v5879, %v6266
  %v6325 = vadd.f32 %v5892, %v6279
  %v6326 = vadd.f32 %v5905, %v6292
  %v6327 = vadd.f32 %v5918, %v6305
  %s6328 = scalar_lea.vmem %s5, 12
  %v6329 = vld [vmem:[%s6328] sm:$0xf]
  %6330 = vrot.lane.b32.xlu0 %v5142, 94
  %v6331 = vpop.permute.xlu0 %6330
  %6332 = vrot.lane.b32.xlu0 %v5143, 94
  %v6333 = vpop.permute.xlu0 %6332
  %6334 = vrot.lane.b32.xlu0 %v5144, 94
  %v6335 = vpop.permute.xlu0 %6334
  %6336 = vrot.lane.b32.xlu0 %v5145, 94
  %v6337 = vpop.permute.xlu0 %6336
  %6338 = vrot.lane.b32.xlu0 %v5146, 94
  %v6339 = vpop.permute.xlu0 %6338
  %6340 = vrot.lane.b32.xlu0 %v5147, 94
  %v6341 = vpop.permute.xlu0 %6340
  %6342 = vrot.lane.b32.xlu0 %v5148, 94
  %v6343 = vpop.permute.xlu0 %6342
  %6344 = vrot.lane.b32.xlu0 %v5149, 94
  %v6345 = vpop.permute.xlu0 %6344
  %6346 = vrot.lane.b32.xlu0 %v5150, 94
  %v6347 = vpop.permute.xlu0 %6346
  %6348 = vrot.lane.b32.xlu0 %v5151, 94
  %v6349 = vpop.permute.xlu0 %6348
  %6350 = vrot.lane.b32.xlu0 %v5152, 94
  %v6351 = vpop.permute.xlu0 %6350
  %6352 = vrot.lane.b32.xlu0 %v5153, 94
  %v6353 = vpop.permute.xlu0 %6352
  %6354 = vrot.lane.b32.xlu0 %v5154, 94
  %v6355 = vpop.permute.xlu0 %6354
  %6356 = vrot.lane.b32.xlu0 %v5155, 94
  %v6357 = vpop.permute.xlu0 %6356
  %6358 = vrot.lane.b32.xlu0 %v5156, 94
  %v6359 = vpop.permute.xlu0 %6358
  %6360 = vrot.lane.b32.xlu0 %v5157, 94
  %v6361 = vpop.permute.xlu0 %6360
  %6362 = vrot.lane.b32.xlu0 %v5158, 94
  %v6363 = vpop.permute.xlu0 %6362
  %6364 = vrot.lane.b32.xlu0 %v5159, 94
  %v6365 = vpop.permute.xlu0 %6364
  %6366 = vrot.lane.b32.xlu0 %v5160, 94
  %v6367 = vpop.permute.xlu0 %6366
  %6368 = vrot.lane.b32.xlu0 %v5161, 94
  %v6369 = vpop.permute.xlu0 %6368
  %6370 = vrot.lane.b32.xlu0 %v5162, 94
  %v6371 = vpop.permute.xlu0 %6370
  %v6372 = vsel %vm2491, %v6331, %v6333
  %v6373 = vsel %vm2491, %v6333, %v6335
  %v6374 = vsel %vm2491, %v6335, %v6337
  %v6375 = vsel %vm2491, %v6337, %v6339
  %v6376 = vsel %vm2491, %v6339, %v6341
  %v6377 = vsel %vm2491, %v6341, %v6343
  %v6378 = vsel %vm2491, %v6343, %v6345
  %v6379 = vsel %vm2491, %v6345, %v6347
  %v6380 = vsel %vm2491, %v6347, %v6349
  %v6381 = vsel %vm2491, %v6349, %v6351
  %v6382 = vsel %vm2491, %v6351, %v6353
  %v6383 = vsel %vm2491, %v6353, %v6355
  %v6384 = vsel %vm2491, %v6355, %v6357
  %v6385 = vsel %vm2491, %v6357, %v6359
  %v6386 = vsel %vm2491, %v6359, %v6361
  %v6387 = vsel %vm2491, %v6361, %v6363
  %v6388 = vsel %vm2491, %v6363, %v6365
  %v6389 = vsel %vm2491, %v6365, %v6367
  %v6390 = vsel %vm2491, %v6367, %v6369
  %v6391 = vsel %vm2491, %v6369, %v6371
  %v6393 = vsel %vm1341, %v6329, 0
  %v6396 = vsel %vm1345, %v6372, 0
  %v6399 = vsel %vm1345, %v6373, 0
  %v6402 = vsel %vm1345, %v6374, 0
  %v6405 = vsel %vm1345, %v6375, 0
  %v6408 = vsel %vm1345, %v6376, 0
  %v6411 = vsel %vm1345, %v6377, 0
  %v6414 = vsel %vm1345, %v6378, 0
  %v6417 = vsel %vm1345, %v6379, 0
  %v6420 = vsel %vm1345, %v6380, 0
  %v6423 = vsel %vm1345, %v6381, 0
  %v6426 = vsel %vm1345, %v6382, 0
  %v6429 = vsel %vm1345, %v6383, 0
  %v6432 = vsel %vm1345, %v6384, 0
  %v6435 = vsel %vm1345, %v6385, 0
  %v6438 = vsel %vm1345, %v6386, 0
  %v6441 = vsel %vm1345, %v6387, 0
  %v6444 = vsel %vm1345, %v6388, 0
  %v6447 = vsel %vm1345, %v6389, 0
  %v6450 = vsel %vm1345, %v6390, 0
  %v6453 = vsel %vm1345, %v6391, 0
  %6455 = vmatpush.bf16.msra.mxu0 0
  %6456 = vmatpush.bf16.msra.mxu0 0
  %6457 = vmatpush.bf16.msra.mxu0 0
  %6458 = vmatpush.bf16.msra.mxu0 0
  %6459 = vmatpush.bf16.msra.mxu0 0
  %6460 = vmatpush.bf16.msra.mxu0 0
  %6461 = vmatpush.bf16.msra.mxu0 0
  %6462 = vmatpush.bf16.msra.mxu0 %v6396
  %6463 = vmatmul.bf16.gmra.mxu0 %v6393
  %v6464 = vpop.f32.mrf.mxu0
  %v6465 = vadd.f32 0.0, %v6464
  %v6466 = vpop.f32.mrf.mxu0
  %6467 = vdwg.mxu0
  %6468 = vmatpush.bf16.msra.mxu0 0
  %6469 = vmatpush.bf16.msra.mxu0 0
  %6470 = vmatpush.bf16.msra.mxu0 0
  %6471 = vmatpush.bf16.msra.mxu0 0
  %6472 = vmatpush.bf16.msra.mxu0 0
  %6473 = vmatpush.bf16.msra.mxu0 0
  %6474 = vmatpush.bf16.msra.mxu0 0
  %6475 = vmatpush.bf16.msra.mxu0 %v6399
  %6476 = vmatmul.bf16.gmra.mxu0 %v6393
  %v6477 = vpop.f32.mrf.mxu0
  %v6478 = vadd.f32 0.0, %v6477
  %v6479 = vpop.f32.mrf.mxu0
  %6480 = vdwg.mxu0
  %6481 = vmatpush.bf16.msra.mxu0 0
  %6482 = vmatpush.bf16.msra.mxu0 0
  %6483 = vmatpush.bf16.msra.mxu0 0
  %6484 = vmatpush.bf16.msra.mxu0 0
  %6485 = vmatpush.bf16.msra.mxu0 0
  %6486 = vmatpush.bf16.msra.mxu0 0
  %6487 = vmatpush.bf16.msra.mxu0 0
  %6488 = vmatpush.bf16.msra.mxu0 %v6402
  %6489 = vmatmul.bf16.gmra.mxu0 %v6393
  %v6490 = vpop.f32.mrf.mxu0
  %v6491 = vadd.f32 0.0, %v6490
  %v6492 = vpop.f32.mrf.mxu0
  %6493 = vdwg.mxu0
  %6494 = vmatpush.bf16.msra.mxu0 0
  %6495 = vmatpush.bf16.msra.mxu0 0
  %6496 = vmatpush.bf16.msra.mxu0 0
  %6497 = vmatpush.bf16.msra.mxu0 0
  %6498 = vmatpush.bf16.msra.mxu0 0
  %6499 = vmatpush.bf16.msra.mxu0 0
  %6500 = vmatpush.bf16.msra.mxu0 0
  %6501 = vmatpush.bf16.msra.mxu0 %v6405
  %6502 = vmatmul.bf16.gmra.mxu0 %v6393
  %v6503 = vpop.f32.mrf.mxu0
  %v6504 = vadd.f32 0.0, %v6503
  %v6505 = vpop.f32.mrf.mxu0
  %6506 = vdwg.mxu0
  %6507 = vmatpush.bf16.msra.mxu0 0
  %6508 = vmatpush.bf16.msra.mxu0 0
  %6509 = vmatpush.bf16.msra.mxu0 0
  %6510 = vmatpush.bf16.msra.mxu0 0
  %6511 = vmatpush.bf16.msra.mxu0 0
  %6512 = vmatpush.bf16.msra.mxu0 0
  %6513 = vmatpush.bf16.msra.mxu0 0
  %6514 = vmatpush.bf16.msra.mxu0 %v6408
  %6515 = vmatmul.bf16.gmra.mxu0 %v6393
  %v6516 = vpop.f32.mrf.mxu0
  %v6517 = vadd.f32 0.0, %v6516
  %v6518 = vpop.f32.mrf.mxu0
  %6519 = vdwg.mxu0
  %6520 = vmatpush.bf16.msra.mxu0 0
  %6521 = vmatpush.bf16.msra.mxu0 0
  %6522 = vmatpush.bf16.msra.mxu0 0
  %6523 = vmatpush.bf16.msra.mxu0 0
  %6524 = vmatpush.bf16.msra.mxu0 0
  %6525 = vmatpush.bf16.msra.mxu0 0
  %6526 = vmatpush.bf16.msra.mxu0 0
  %6527 = vmatpush.bf16.msra.mxu0 %v6411
  %6528 = vmatmul.bf16.gmra.mxu0 %v6393
  %v6529 = vpop.f32.mrf.mxu0
  %v6530 = vadd.f32 0.0, %v6529
  %v6531 = vpop.f32.mrf.mxu0
  %6532 = vdwg.mxu0
  %6533 = vmatpush.bf16.msra.mxu0 0
  %6534 = vmatpush.bf16.msra.mxu0 0
  %6535 = vmatpush.bf16.msra.mxu0 0
  %6536 = vmatpush.bf16.msra.mxu0 0
  %6537 = vmatpush.bf16.msra.mxu0 0
  %6538 = vmatpush.bf16.msra.mxu0 0
  %6539 = vmatpush.bf16.msra.mxu0 0
  %6540 = vmatpush.bf16.msra.mxu0 %v6414
  %6541 = vmatmul.bf16.gmra.mxu0 %v6393
  %v6542 = vpop.f32.mrf.mxu0
  %v6543 = vadd.f32 0.0, %v6542
  %v6544 = vpop.f32.mrf.mxu0
  %6545 = vdwg.mxu0
  %6546 = vmatpush.bf16.msra.mxu0 0
  %6547 = vmatpush.bf16.msra.mxu0 0
  %6548 = vmatpush.bf16.msra.mxu0 0
  %6549 = vmatpush.bf16.msra.mxu0 0
  %6550 = vmatpush.bf16.msra.mxu0 0
  %6551 = vmatpush.bf16.msra.mxu0 0
  %6552 = vmatpush.bf16.msra.mxu0 0
  %6553 = vmatpush.bf16.msra.mxu0 %v6417
  %6554 = vmatmul.bf16.gmra.mxu0 %v6393
  %v6555 = vpop.f32.mrf.mxu0
  %v6556 = vadd.f32 0.0, %v6555
  %v6557 = vpop.f32.mrf.mxu0
  %6558 = vdwg.mxu0
  %6559 = vmatpush.bf16.msra.mxu0 0
  %6560 = vmatpush.bf16.msra.mxu0 0
  %6561 = vmatpush.bf16.msra.mxu0 0
  %6562 = vmatpush.bf16.msra.mxu0 0
  %6563 = vmatpush.bf16.msra.mxu0 0
  %6564 = vmatpush.bf16.msra.mxu0 0
  %6565 = vmatpush.bf16.msra.mxu0 0
  %6566 = vmatpush.bf16.msra.mxu0 %v6420
  %6567 = vmatmul.bf16.gmra.mxu0 %v6393
  %v6568 = vpop.f32.mrf.mxu0
  %v6569 = vadd.f32 0.0, %v6568
  %v6570 = vpop.f32.mrf.mxu0
  %6571 = vdwg.mxu0
  %6572 = vmatpush.bf16.msra.mxu0 0
  %6573 = vmatpush.bf16.msra.mxu0 0
  %6574 = vmatpush.bf16.msra.mxu0 0
  %6575 = vmatpush.bf16.msra.mxu0 0
  %6576 = vmatpush.bf16.msra.mxu0 0
  %6577 = vmatpush.bf16.msra.mxu0 0
  %6578 = vmatpush.bf16.msra.mxu0 0
  %6579 = vmatpush.bf16.msra.mxu0 %v6423
  %6580 = vmatmul.bf16.gmra.mxu0 %v6393
  %v6581 = vpop.f32.mrf.mxu0
  %v6582 = vadd.f32 0.0, %v6581
  %v6583 = vpop.f32.mrf.mxu0
  %6584 = vdwg.mxu0
  %6585 = vmatpush.bf16.msra.mxu0 0
  %6586 = vmatpush.bf16.msra.mxu0 0
  %6587 = vmatpush.bf16.msra.mxu0 0
  %6588 = vmatpush.bf16.msra.mxu0 0
  %6589 = vmatpush.bf16.msra.mxu0 0
  %6590 = vmatpush.bf16.msra.mxu0 0
  %6591 = vmatpush.bf16.msra.mxu0 0
  %6592 = vmatpush.bf16.msra.mxu0 %v6426
  %6593 = vmatmul.bf16.gmra.mxu0 %v6393
  %v6594 = vpop.f32.mrf.mxu0
  %v6595 = vadd.f32 0.0, %v6594
  %v6596 = vpop.f32.mrf.mxu0
  %6597 = vdwg.mxu0
  %6598 = vmatpush.bf16.msra.mxu0 0
  %6599 = vmatpush.bf16.msra.mxu0 0
  %6600 = vmatpush.bf16.msra.mxu0 0
  %6601 = vmatpush.bf16.msra.mxu0 0
  %6602 = vmatpush.bf16.msra.mxu0 0
  %6603 = vmatpush.bf16.msra.mxu0 0
  %6604 = vmatpush.bf16.msra.mxu0 0
  %6605 = vmatpush.bf16.msra.mxu0 %v6429
  %6606 = vmatmul.bf16.gmra.mxu0 %v6393
  %v6607 = vpop.f32.mrf.mxu0
  %v6608 = vadd.f32 0.0, %v6607
  %v6609 = vpop.f32.mrf.mxu0
  %6610 = vdwg.mxu0
  %6611 = vmatpush.bf16.msra.mxu0 0
  %6612 = vmatpush.bf16.msra.mxu0 0
  %6613 = vmatpush.bf16.msra.mxu0 0
  %6614 = vmatpush.bf16.msra.mxu0 0
  %6615 = vmatpush.bf16.msra.mxu0 0
  %6616 = vmatpush.bf16.msra.mxu0 0
  %6617 = vmatpush.bf16.msra.mxu0 0
  %6618 = vmatpush.bf16.msra.mxu0 %v6432
  %6619 = vmatmul.bf16.gmra.mxu0 %v6393
  %v6620 = vpop.f32.mrf.mxu0
  %v6621 = vadd.f32 0.0, %v6620
  %v6622 = vpop.f32.mrf.mxu0
  %6623 = vdwg.mxu0
  %6624 = vmatpush.bf16.msra.mxu0 0
  %6625 = vmatpush.bf16.msra.mxu0 0
  %6626 = vmatpush.bf16.msra.mxu0 0
  %6627 = vmatpush.bf16.msra.mxu0 0
  %6628 = vmatpush.bf16.msra.mxu0 0
  %6629 = vmatpush.bf16.msra.mxu0 0
  %6630 = vmatpush.bf16.msra.mxu0 0
  %6631 = vmatpush.bf16.msra.mxu0 %v6435
  %6632 = vmatmul.bf16.gmra.mxu0 %v6393
  %v6633 = vpop.f32.mrf.mxu0
  %v6634 = vadd.f32 0.0, %v6633
  %v6635 = vpop.f32.mrf.mxu0
  %6636 = vdwg.mxu0
  %6637 = vmatpush.bf16.msra.mxu0 0
  %6638 = vmatpush.bf16.msra.mxu0 0
  %6639 = vmatpush.bf16.msra.mxu0 0
  %6640 = vmatpush.bf16.msra.mxu0 0
  %6641 = vmatpush.bf16.msra.mxu0 0
  %6642 = vmatpush.bf16.msra.mxu0 0
  %6643 = vmatpush.bf16.msra.mxu0 0
  %6644 = vmatpush.bf16.msra.mxu0 %v6438
  %6645 = vmatmul.bf16.gmra.mxu0 %v6393
  %v6646 = vpop.f32.mrf.mxu0
  %v6647 = vadd.f32 0.0, %v6646
  %v6648 = vpop.f32.mrf.mxu0
  %6649 = vdwg.mxu0
  %6650 = vmatpush.bf16.msra.mxu0 0
  %6651 = vmatpush.bf16.msra.mxu0 0
  %6652 = vmatpush.bf16.msra.mxu0 0
  %6653 = vmatpush.bf16.msra.mxu0 0
  %6654 = vmatpush.bf16.msra.mxu0 0
  %6655 = vmatpush.bf16.msra.mxu0 0
  %6656 = vmatpush.bf16.msra.mxu0 0
  %6657 = vmatpush.bf16.msra.mxu0 %v6441
  %6658 = vmatmul.bf16.gmra.mxu0 %v6393
  %v6659 = vpop.f32.mrf.mxu0
  %v6660 = vadd.f32 0.0, %v6659
  %v6661 = vpop.f32.mrf.mxu0
  %6662 = vdwg.mxu0
  %6663 = vmatpush.bf16.msra.mxu0 0
  %6664 = vmatpush.bf16.msra.mxu0 0
  %6665 = vmatpush.bf16.msra.mxu0 0
  %6666 = vmatpush.bf16.msra.mxu0 0
  %6667 = vmatpush.bf16.msra.mxu0 0
  %6668 = vmatpush.bf16.msra.mxu0 0
  %6669 = vmatpush.bf16.msra.mxu0 0
  %6670 = vmatpush.bf16.msra.mxu0 %v6444
  %6671 = vmatmul.bf16.gmra.mxu0 %v6393
  %v6672 = vpop.f32.mrf.mxu0
  %v6673 = vadd.f32 0.0, %v6672
  %v6674 = vpop.f32.mrf.mxu0
  %6675 = vdwg.mxu0
  %6676 = vmatpush.bf16.msra.mxu0 0
  %6677 = vmatpush.bf16.msra.mxu0 0
  %6678 = vmatpush.bf16.msra.mxu0 0
  %6679 = vmatpush.bf16.msra.mxu0 0
  %6680 = vmatpush.bf16.msra.mxu0 0
  %6681 = vmatpush.bf16.msra.mxu0 0
  %6682 = vmatpush.bf16.msra.mxu0 0
  %6683 = vmatpush.bf16.msra.mxu0 %v6447
  %6684 = vmatmul.bf16.gmra.mxu0 %v6393
  %v6685 = vpop.f32.mrf.mxu0
  %v6686 = vadd.f32 0.0, %v6685
  %v6687 = vpop.f32.mrf.mxu0
  %6688 = vdwg.mxu0
  %6689 = vmatpush.bf16.msra.mxu0 0
  %6690 = vmatpush.bf16.msra.mxu0 0
  %6691 = vmatpush.bf16.msra.mxu0 0
  %6692 = vmatpush.bf16.msra.mxu0 0
  %6693 = vmatpush.bf16.msra.mxu0 0
  %6694 = vmatpush.bf16.msra.mxu0 0
  %6695 = vmatpush.bf16.msra.mxu0 0
  %6696 = vmatpush.bf16.msra.mxu0 %v6450
  %6697 = vmatmul.bf16.gmra.mxu0 %v6393
  %v6698 = vpop.f32.mrf.mxu0
  %v6699 = vadd.f32 0.0, %v6698
  %v6700 = vpop.f32.mrf.mxu0
  %6701 = vdwg.mxu0
  %6702 = vmatpush.bf16.msra.mxu0 0
  %6703 = vmatpush.bf16.msra.mxu0 0
  %6704 = vmatpush.bf16.msra.mxu0 0
  %6705 = vmatpush.bf16.msra.mxu0 0
  %6706 = vmatpush.bf16.msra.mxu0 0
  %6707 = vmatpush.bf16.msra.mxu0 0
  %6708 = vmatpush.bf16.msra.mxu0 0
  %6709 = vmatpush.bf16.msra.mxu0 %v6453
  %6710 = vmatmul.bf16.gmra.mxu0 %v6393
  %v6711 = vpop.f32.mrf.mxu0
  %v6712 = vadd.f32 0.0, %v6711
  %v6713 = vpop.f32.mrf.mxu0
  %6714 = vdwg.mxu0
  %v6715 = vadd.f32 %v6308, %v6465
  %v6716 = vadd.f32 %v6309, %v6478
  %v6717 = vadd.f32 %v6310, %v6491
  %v6718 = vadd.f32 %v6311, %v6504
  %v6719 = vadd.f32 %v6312, %v6517
  %v6720 = vadd.f32 %v6313, %v6530
  %v6721 = vadd.f32 %v6314, %v6543
  %v6722 = vadd.f32 %v6315, %v6556
  %v6723 = vadd.f32 %v6316, %v6569
  %v6724 = vadd.f32 %v6317, %v6582
  %v6725 = vadd.f32 %v6318, %v6595
  %v6726 = vadd.f32 %v6319, %v6608
  %v6727 = vadd.f32 %v6320, %v6621
  %v6728 = vadd.f32 %v6321, %v6634
  %v6729 = vadd.f32 %v6322, %v6647
  %v6730 = vadd.f32 %v6323, %v6660
  %v6731 = vadd.f32 %v6324, %v6673
  %v6732 = vadd.f32 %v6325, %v6686
  %v6733 = vadd.f32 %v6326, %v6699
  %v6734 = vadd.f32 %v6327, %v6712
  %s6735 = scalar_lea.vmem %s5, 16
  %v6736 = vld [vmem:[%s6735] sm:$0xf]
  %6737 = vrot.lane.b32.xlu0 %v5142, 93
  %v6738 = vpop.permute.xlu0 %6737
  %6739 = vrot.lane.b32.xlu0 %v5143, 93
  %v6740 = vpop.permute.xlu0 %6739
  %6741 = vrot.lane.b32.xlu0 %v5144, 93
  %v6742 = vpop.permute.xlu0 %6741
  %6743 = vrot.lane.b32.xlu0 %v5145, 93
  %v6744 = vpop.permute.xlu0 %6743
  %6745 = vrot.lane.b32.xlu0 %v5146, 93
  %v6746 = vpop.permute.xlu0 %6745
  %6747 = vrot.lane.b32.xlu0 %v5147, 93
  %v6748 = vpop.permute.xlu0 %6747
  %6749 = vrot.lane.b32.xlu0 %v5148, 93
  %v6750 = vpop.permute.xlu0 %6749
  %6751 = vrot.lane.b32.xlu0 %v5149, 93
  %v6752 = vpop.permute.xlu0 %6751
  %6753 = vrot.lane.b32.xlu0 %v5150, 93
  %v6754 = vpop.permute.xlu0 %6753
  %6755 = vrot.lane.b32.xlu0 %v5151, 93
  %v6756 = vpop.permute.xlu0 %6755
  %6757 = vrot.lane.b32.xlu0 %v5152, 93
  %v6758 = vpop.permute.xlu0 %6757
  %6759 = vrot.lane.b32.xlu0 %v5153, 93
  %v6760 = vpop.permute.xlu0 %6759
  %6761 = vrot.lane.b32.xlu0 %v5154, 93
  %v6762 = vpop.permute.xlu0 %6761
  %6763 = vrot.lane.b32.xlu0 %v5155, 93
  %v6764 = vpop.permute.xlu0 %6763
  %6765 = vrot.lane.b32.xlu0 %v5156, 93
  %v6766 = vpop.permute.xlu0 %6765
  %6767 = vrot.lane.b32.xlu0 %v5157, 93
  %v6768 = vpop.permute.xlu0 %6767
  %6769 = vrot.lane.b32.xlu0 %v5158, 93
  %v6770 = vpop.permute.xlu0 %6769
  %6771 = vrot.lane.b32.xlu0 %v5159, 93
  %v6772 = vpop.permute.xlu0 %6771
  %6773 = vrot.lane.b32.xlu0 %v5160, 93
  %v6774 = vpop.permute.xlu0 %6773
  %6775 = vrot.lane.b32.xlu0 %v5161, 93
  %v6776 = vpop.permute.xlu0 %6775
  %6777 = vrot.lane.b32.xlu0 %v5162, 93
  %v6778 = vpop.permute.xlu0 %6777
  %v6779 = vsel %vm2899, %v6738, %v6740
  %v6780 = vsel %vm2899, %v6740, %v6742
  %v6781 = vsel %vm2899, %v6742, %v6744
  %v6782 = vsel %vm2899, %v6744, %v6746
  %v6783 = vsel %vm2899, %v6746, %v6748
  %v6784 = vsel %vm2899, %v6748, %v6750
  %v6785 = vsel %vm2899, %v6750, %v6752
  %v6786 = vsel %vm2899, %v6752, %v6754
  %v6787 = vsel %vm2899, %v6754, %v6756
  %v6788 = vsel %vm2899, %v6756, %v6758
  %v6789 = vsel %vm2899, %v6758, %v6760
  %v6790 = vsel %vm2899, %v6760, %v6762
  %v6791 = vsel %vm2899, %v6762, %v6764
  %v6792 = vsel %vm2899, %v6764, %v6766
  %v6793 = vsel %vm2899, %v6766, %v6768
  %v6794 = vsel %vm2899, %v6768, %v6770
  %v6795 = vsel %vm2899, %v6770, %v6772
  %v6796 = vsel %vm2899, %v6772, %v6774
  %v6797 = vsel %vm2899, %v6774, %v6776
  %v6798 = vsel %vm2899, %v6776, %v6778
  %v6800 = vsel %vm1341, %v6736, 0
  %v6803 = vsel %vm1345, %v6779, 0
  %v6806 = vsel %vm1345, %v6780, 0
  %v6809 = vsel %vm1345, %v6781, 0
  %v6812 = vsel %vm1345, %v6782, 0
  %v6815 = vsel %vm1345, %v6783, 0
  %v6818 = vsel %vm1345, %v6784, 0
  %v6821 = vsel %vm1345, %v6785, 0
  %v6824 = vsel %vm1345, %v6786, 0
  %v6827 = vsel %vm1345, %v6787, 0
  %v6830 = vsel %vm1345, %v6788, 0
  %v6833 = vsel %vm1345, %v6789, 0
  %v6836 = vsel %vm1345, %v6790, 0
  %v6839 = vsel %vm1345, %v6791, 0
  %v6842 = vsel %vm1345, %v6792, 0
  %v6845 = vsel %vm1345, %v6793, 0
  %v6848 = vsel %vm1345, %v6794, 0
  %v6851 = vsel %vm1345, %v6795, 0
  %v6854 = vsel %vm1345, %v6796, 0
  %v6857 = vsel %vm1345, %v6797, 0
  %v6860 = vsel %vm1345, %v6798, 0
  %6862 = vmatpush.bf16.msra.mxu0 0
  %6863 = vmatpush.bf16.msra.mxu0 0
  %6864 = vmatpush.bf16.msra.mxu0 0
  %6865 = vmatpush.bf16.msra.mxu0 0
  %6866 = vmatpush.bf16.msra.mxu0 0
  %6867 = vmatpush.bf16.msra.mxu0 0
  %6868 = vmatpush.bf16.msra.mxu0 0
  %6869 = vmatpush.bf16.msra.mxu0 %v6803
  %6870 = vmatmul.bf16.gmra.mxu0 %v6800
  %v6871 = vpop.f32.mrf.mxu0
  %v6872 = vadd.f32 0.0, %v6871
  %v6873 = vpop.f32.mrf.mxu0
  %6874 = vdwg.mxu0
  %6875 = vmatpush.bf16.msra.mxu0 0
  %6876 = vmatpush.bf16.msra.mxu0 0
  %6877 = vmatpush.bf16.msra.mxu0 0
  %6878 = vmatpush.bf16.msra.mxu0 0
  %6879 = vmatpush.bf16.msra.mxu0 0
  %6880 = vmatpush.bf16.msra.mxu0 0
  %6881 = vmatpush.bf16.msra.mxu0 0
  %6882 = vmatpush.bf16.msra.mxu0 %v6806
  %6883 = vmatmul.bf16.gmra.mxu0 %v6800
  %v6884 = vpop.f32.mrf.mxu0
  %v6885 = vadd.f32 0.0, %v6884
  %v6886 = vpop.f32.mrf.mxu0
  %6887 = vdwg.mxu0
  %6888 = vmatpush.bf16.msra.mxu0 0
  %6889 = vmatpush.bf16.msra.mxu0 0
  %6890 = vmatpush.bf16.msra.mxu0 0
  %6891 = vmatpush.bf16.msra.mxu0 0
  %6892 = vmatpush.bf16.msra.mxu0 0
  %6893 = vmatpush.bf16.msra.mxu0 0
  %6894 = vmatpush.bf16.msra.mxu0 0
  %6895 = vmatpush.bf16.msra.mxu0 %v6809
  %6896 = vmatmul.bf16.gmra.mxu0 %v6800
  %v6897 = vpop.f32.mrf.mxu0
  %v6898 = vadd.f32 0.0, %v6897
  %v6899 = vpop.f32.mrf.mxu0
  %6900 = vdwg.mxu0
  %6901 = vmatpush.bf16.msra.mxu0 0
  %6902 = vmatpush.bf16.msra.mxu0 0
  %6903 = vmatpush.bf16.msra.mxu0 0
  %6904 = vmatpush.bf16.msra.mxu0 0
  %6905 = vmatpush.bf16.msra.mxu0 0
  %6906 = vmatpush.bf16.msra.mxu0 0
  %6907 = vmatpush.bf16.msra.mxu0 0
  %6908 = vmatpush.bf16.msra.mxu0 %v6812
  %6909 = vmatmul.bf16.gmra.mxu0 %v6800
  %v6910 = vpop.f32.mrf.mxu0
  %v6911 = vadd.f32 0.0, %v6910
  %v6912 = vpop.f32.mrf.mxu0
  %6913 = vdwg.mxu0
  %6914 = vmatpush.bf16.msra.mxu0 0
  %6915 = vmatpush.bf16.msra.mxu0 0
  %6916 = vmatpush.bf16.msra.mxu0 0
  %6917 = vmatpush.bf16.msra.mxu0 0
  %6918 = vmatpush.bf16.msra.mxu0 0
  %6919 = vmatpush.bf16.msra.mxu0 0
  %6920 = vmatpush.bf16.msra.mxu0 0
  %6921 = vmatpush.bf16.msra.mxu0 %v6815
  %6922 = vmatmul.bf16.gmra.mxu0 %v6800
  %v6923 = vpop.f32.mrf.mxu0
  %v6924 = vadd.f32 0.0, %v6923
  %v6925 = vpop.f32.mrf.mxu0
  %6926 = vdwg.mxu0
  %6927 = vmatpush.bf16.msra.mxu0 0
  %6928 = vmatpush.bf16.msra.mxu0 0
  %6929 = vmatpush.bf16.msra.mxu0 0
  %6930 = vmatpush.bf16.msra.mxu0 0
  %6931 = vmatpush.bf16.msra.mxu0 0
  %6932 = vmatpush.bf16.msra.mxu0 0
  %6933 = vmatpush.bf16.msra.mxu0 0
  %6934 = vmatpush.bf16.msra.mxu0 %v6818
  %6935 = vmatmul.bf16.gmra.mxu0 %v6800
  %v6936 = vpop.f32.mrf.mxu0
  %v6937 = vadd.f32 0.0, %v6936
  %v6938 = vpop.f32.mrf.mxu0
  %6939 = vdwg.mxu0
  %6940 = vmatpush.bf16.msra.mxu0 0
  %6941 = vmatpush.bf16.msra.mxu0 0
  %6942 = vmatpush.bf16.msra.mxu0 0
  %6943 = vmatpush.bf16.msra.mxu0 0
  %6944 = vmatpush.bf16.msra.mxu0 0
  %6945 = vmatpush.bf16.msra.mxu0 0
  %6946 = vmatpush.bf16.msra.mxu0 0
  %6947 = vmatpush.bf16.msra.mxu0 %v6821
  %6948 = vmatmul.bf16.gmra.mxu0 %v6800
  %v6949 = vpop.f32.mrf.mxu0
  %v6950 = vadd.f32 0.0, %v6949
  %v6951 = vpop.f32.mrf.mxu0
  %6952 = vdwg.mxu0
  %6953 = vmatpush.bf16.msra.mxu0 0
  %6954 = vmatpush.bf16.msra.mxu0 0
  %6955 = vmatpush.bf16.msra.mxu0 0
  %6956 = vmatpush.bf16.msra.mxu0 0
  %6957 = vmatpush.bf16.msra.mxu0 0
  %6958 = vmatpush.bf16.msra.mxu0 0
  %6959 = vmatpush.bf16.msra.mxu0 0
  %6960 = vmatpush.bf16.msra.mxu0 %v6824
  %6961 = vmatmul.bf16.gmra.mxu0 %v6800
  %v6962 = vpop.f32.mrf.mxu0
  %v6963 = vadd.f32 0.0, %v6962
  %v6964 = vpop.f32.mrf.mxu0
  %6965 = vdwg.mxu0
  %6966 = vmatpush.bf16.msra.mxu0 0
  %6967 = vmatpush.bf16.msra.mxu0 0
  %6968 = vmatpush.bf16.msra.mxu0 0
  %6969 = vmatpush.bf16.msra.mxu0 0
  %6970 = vmatpush.bf16.msra.mxu0 0
  %6971 = vmatpush.bf16.msra.mxu0 0
  %6972 = vmatpush.bf16.msra.mxu0 0
  %6973 = vmatpush.bf16.msra.mxu0 %v6827
  %6974 = vmatmul.bf16.gmra.mxu0 %v6800
  %v6975 = vpop.f32.mrf.mxu0
  %v6976 = vadd.f32 0.0, %v6975
  %v6977 = vpop.f32.mrf.mxu0
  %6978 = vdwg.mxu0
  %6979 = vmatpush.bf16.msra.mxu0 0
  %6980 = vmatpush.bf16.msra.mxu0 0
  %6981 = vmatpush.bf16.msra.mxu0 0
  %6982 = vmatpush.bf16.msra.mxu0 0
  %6983 = vmatpush.bf16.msra.mxu0 0
  %6984 = vmatpush.bf16.msra.mxu0 0
  %6985 = vmatpush.bf16.msra.mxu0 0
  %6986 = vmatpush.bf16.msra.mxu0 %v6830
  %6987 = vmatmul.bf16.gmra.mxu0 %v6800
  %v6988 = vpop.f32.mrf.mxu0
  %v6989 = vadd.f32 0.0, %v6988
  %v6990 = vpop.f32.mrf.mxu0
  %6991 = vdwg.mxu0
  %6992 = vmatpush.bf16.msra.mxu0 0
  %6993 = vmatpush.bf16.msra.mxu0 0
  %6994 = vmatpush.bf16.msra.mxu0 0
  %6995 = vmatpush.bf16.msra.mxu0 0
  %6996 = vmatpush.bf16.msra.mxu0 0
  %6997 = vmatpush.bf16.msra.mxu0 0
  %6998 = vmatpush.bf16.msra.mxu0 0
  %6999 = vmatpush.bf16.msra.mxu0 %v6833
  %7000 = vmatmul.bf16.gmra.mxu0 %v6800
  %v7001 = vpop.f32.mrf.mxu0
  %v7002 = vadd.f32 0.0, %v7001
  %v7003 = vpop.f32.mrf.mxu0
  %7004 = vdwg.mxu0
  %7005 = vmatpush.bf16.msra.mxu0 0
  %7006 = vmatpush.bf16.msra.mxu0 0
  %7007 = vmatpush.bf16.msra.mxu0 0
  %7008 = vmatpush.bf16.msra.mxu0 0
  %7009 = vmatpush.bf16.msra.mxu0 0
  %7010 = vmatpush.bf16.msra.mxu0 0
  %7011 = vmatpush.bf16.msra.mxu0 0
  %7012 = vmatpush.bf16.msra.mxu0 %v6836
  %7013 = vmatmul.bf16.gmra.mxu0 %v6800
  %v7014 = vpop.f32.mrf.mxu0
  %v7015 = vadd.f32 0.0, %v7014
  %v7016 = vpop.f32.mrf.mxu0
  %7017 = vdwg.mxu0
  %7018 = vmatpush.bf16.msra.mxu0 0
  %7019 = vmatpush.bf16.msra.mxu0 0
  %7020 = vmatpush.bf16.msra.mxu0 0
  %7021 = vmatpush.bf16.msra.mxu0 0
  %7022 = vmatpush.bf16.msra.mxu0 0
  %7023 = vmatpush.bf16.msra.mxu0 0
  %7024 = vmatpush.bf16.msra.mxu0 0
  %7025 = vmatpush.bf16.msra.mxu0 %v6839
  %7026 = vmatmul.bf16.gmra.mxu0 %v6800
  %v7027 = vpop.f32.mrf.mxu0
  %v7028 = vadd.f32 0.0, %v7027
  %v7029 = vpop.f32.mrf.mxu0
  %7030 = vdwg.mxu0
  %7031 = vmatpush.bf16.msra.mxu0 0
  %7032 = vmatpush.bf16.msra.mxu0 0
  %7033 = vmatpush.bf16.msra.mxu0 0
  %7034 = vmatpush.bf16.msra.mxu0 0
  %7035 = vmatpush.bf16.msra.mxu0 0
  %7036 = vmatpush.bf16.msra.mxu0 0
  %7037 = vmatpush.bf16.msra.mxu0 0
  %7038 = vmatpush.bf16.msra.mxu0 %v6842
  %7039 = vmatmul.bf16.gmra.mxu0 %v6800
  %v7040 = vpop.f32.mrf.mxu0
  %v7041 = vadd.f32 0.0, %v7040
  %v7042 = vpop.f32.mrf.mxu0
  %7043 = vdwg.mxu0
  %7044 = vmatpush.bf16.msra.mxu0 0
  %7045 = vmatpush.bf16.msra.mxu0 0
  %7046 = vmatpush.bf16.msra.mxu0 0
  %7047 = vmatpush.bf16.msra.mxu0 0
  %7048 = vmatpush.bf16.msra.mxu0 0
  %7049 = vmatpush.bf16.msra.mxu0 0
  %7050 = vmatpush.bf16.msra.mxu0 0
  %7051 = vmatpush.bf16.msra.mxu0 %v6845
  %7052 = vmatmul.bf16.gmra.mxu0 %v6800
  %v7053 = vpop.f32.mrf.mxu0
  %v7054 = vadd.f32 0.0, %v7053
  %v7055 = vpop.f32.mrf.mxu0
  %7056 = vdwg.mxu0
  %7057 = vmatpush.bf16.msra.mxu0 0
  %7058 = vmatpush.bf16.msra.mxu0 0
  %7059 = vmatpush.bf16.msra.mxu0 0
  %7060 = vmatpush.bf16.msra.mxu0 0
  %7061 = vmatpush.bf16.msra.mxu0 0
  %7062 = vmatpush.bf16.msra.mxu0 0
  %7063 = vmatpush.bf16.msra.mxu0 0
  %7064 = vmatpush.bf16.msra.mxu0 %v6848
  %7065 = vmatmul.bf16.gmra.mxu0 %v6800
  %v7066 = vpop.f32.mrf.mxu0
  %v7067 = vadd.f32 0.0, %v7066
  %v7068 = vpop.f32.mrf.mxu0
  %7069 = vdwg.mxu0
  %7070 = vmatpush.bf16.msra.mxu0 0
  %7071 = vmatpush.bf16.msra.mxu0 0
  %7072 = vmatpush.bf16.msra.mxu0 0
  %7073 = vmatpush.bf16.msra.mxu0 0
  %7074 = vmatpush.bf16.msra.mxu0 0
  %7075 = vmatpush.bf16.msra.mxu0 0
  %7076 = vmatpush.bf16.msra.mxu0 0
  %7077 = vmatpush.bf16.msra.mxu0 %v6851
  %7078 = vmatmul.bf16.gmra.mxu0 %v6800
  %v7079 = vpop.f32.mrf.mxu0
  %v7080 = vadd.f32 0.0, %v7079
  %v7081 = vpop.f32.mrf.mxu0
  %7082 = vdwg.mxu0
  %7083 = vmatpush.bf16.msra.mxu0 0
  %7084 = vmatpush.bf16.msra.mxu0 0
  %7085 = vmatpush.bf16.msra.mxu0 0
  %7086 = vmatpush.bf16.msra.mxu0 0
  %7087 = vmatpush.bf16.msra.mxu0 0
  %7088 = vmatpush.bf16.msra.mxu0 0
  %7089 = vmatpush.bf16.msra.mxu0 0
  %7090 = vmatpush.bf16.msra.mxu0 %v6854
  %7091 = vmatmul.bf16.gmra.mxu0 %v6800
  %v7092 = vpop.f32.mrf.mxu0
  %v7093 = vadd.f32 0.0, %v7092
  %v7094 = vpop.f32.mrf.mxu0
  %7095 = vdwg.mxu0
  %7096 = vmatpush.bf16.msra.mxu0 0
  %7097 = vmatpush.bf16.msra.mxu0 0
  %7098 = vmatpush.bf16.msra.mxu0 0
  %7099 = vmatpush.bf16.msra.mxu0 0
  %7100 = vmatpush.bf16.msra.mxu0 0
  %7101 = vmatpush.bf16.msra.mxu0 0
  %7102 = vmatpush.bf16.msra.mxu0 0
  %7103 = vmatpush.bf16.msra.mxu0 %v6857
  %7104 = vmatmul.bf16.gmra.mxu0 %v6800
  %v7105 = vpop.f32.mrf.mxu0
  %v7106 = vadd.f32 0.0, %v7105
  %v7107 = vpop.f32.mrf.mxu0
  %7108 = vdwg.mxu0
  %7109 = vmatpush.bf16.msra.mxu0 0
  %7110 = vmatpush.bf16.msra.mxu0 0
  %7111 = vmatpush.bf16.msra.mxu0 0
  %7112 = vmatpush.bf16.msra.mxu0 0
  %7113 = vmatpush.bf16.msra.mxu0 0
  %7114 = vmatpush.bf16.msra.mxu0 0
  %7115 = vmatpush.bf16.msra.mxu0 0
  %7116 = vmatpush.bf16.msra.mxu0 %v6860
  %7117 = vmatmul.bf16.gmra.mxu0 %v6800
  %v7118 = vpop.f32.mrf.mxu0
  %v7119 = vadd.f32 0.0, %v7118
  %v7120 = vpop.f32.mrf.mxu0
  %7121 = vdwg.mxu0
  %v7122 = vadd.f32 %v6715, %v6872
  %v7123 = vadd.f32 %v6716, %v6885
  %v7124 = vadd.f32 %v6717, %v6898
  %v7125 = vadd.f32 %v6718, %v6911
  %v7126 = vadd.f32 %v6719, %v6924
  %v7127 = vadd.f32 %v6720, %v6937
  %v7128 = vadd.f32 %v6721, %v6950
  %v7129 = vadd.f32 %v6722, %v6963
  %v7130 = vadd.f32 %v6723, %v6976
  %v7131 = vadd.f32 %v6724, %v6989
  %v7132 = vadd.f32 %v6725, %v7002
  %v7133 = vadd.f32 %v6726, %v7015
  %v7134 = vadd.f32 %v6727, %v7028
  %v7135 = vadd.f32 %v6728, %v7041
  %v7136 = vadd.f32 %v6729, %v7054
  %v7137 = vadd.f32 %v6730, %v7067
  %v7138 = vadd.f32 %v6731, %v7080
  %v7139 = vadd.f32 %v6732, %v7093
  %v7140 = vadd.f32 %v6733, %v7106
  %v7141 = vadd.f32 %v6734, %v7119
  %s7142 = scalar_lea.vmem %s5, 20
  %v7143 = vld [vmem:[%s7142] sm:$0xf]
  %7144 = vrot.lane.b32.xlu0 %v5142, 92
  %v7145 = vpop.permute.xlu0 %7144
  %7146 = vrot.lane.b32.xlu0 %v5143, 92
  %v7147 = vpop.permute.xlu0 %7146
  %7148 = vrot.lane.b32.xlu0 %v5144, 92
  %v7149 = vpop.permute.xlu0 %7148
  %7150 = vrot.lane.b32.xlu0 %v5145, 92
  %v7151 = vpop.permute.xlu0 %7150
  %7152 = vrot.lane.b32.xlu0 %v5146, 92
  %v7153 = vpop.permute.xlu0 %7152
  %7154 = vrot.lane.b32.xlu0 %v5147, 92
  %v7155 = vpop.permute.xlu0 %7154
  %7156 = vrot.lane.b32.xlu0 %v5148, 92
  %v7157 = vpop.permute.xlu0 %7156
  %7158 = vrot.lane.b32.xlu0 %v5149, 92
  %v7159 = vpop.permute.xlu0 %7158
  %7160 = vrot.lane.b32.xlu0 %v5150, 92
  %v7161 = vpop.permute.xlu0 %7160
  %7162 = vrot.lane.b32.xlu0 %v5151, 92
  %v7163 = vpop.permute.xlu0 %7162
  %7164 = vrot.lane.b32.xlu0 %v5152, 92
  %v7165 = vpop.permute.xlu0 %7164
  %7166 = vrot.lane.b32.xlu0 %v5153, 92
  %v7167 = vpop.permute.xlu0 %7166
  %7168 = vrot.lane.b32.xlu0 %v5154, 92
  %v7169 = vpop.permute.xlu0 %7168
  %7170 = vrot.lane.b32.xlu0 %v5155, 92
  %v7171 = vpop.permute.xlu0 %7170
  %7172 = vrot.lane.b32.xlu0 %v5156, 92
  %v7173 = vpop.permute.xlu0 %7172
  %7174 = vrot.lane.b32.xlu0 %v5157, 92
  %v7175 = vpop.permute.xlu0 %7174
  %7176 = vrot.lane.b32.xlu0 %v5158, 92
  %v7177 = vpop.permute.xlu0 %7176
  %7178 = vrot.lane.b32.xlu0 %v5159, 92
  %v7179 = vpop.permute.xlu0 %7178
  %7180 = vrot.lane.b32.xlu0 %v5160, 92
  %v7181 = vpop.permute.xlu0 %7180
  %7182 = vrot.lane.b32.xlu0 %v5161, 92
  %v7183 = vpop.permute.xlu0 %7182
  %7184 = vrot.lane.b32.xlu0 %v5162, 92
  %v7185 = vpop.permute.xlu0 %7184
  %v7186 = vsel %vm3307, %v7145, %v7147
  %v7187 = vsel %vm3307, %v7147, %v7149
  %v7188 = vsel %vm3307, %v7149, %v7151
  %v7189 = vsel %vm3307, %v7151, %v7153
  %v7190 = vsel %vm3307, %v7153, %v7155
  %v7191 = vsel %vm3307, %v7155, %v7157
  %v7192 = vsel %vm3307, %v7157, %v7159
  %v7193 = vsel %vm3307, %v7159, %v7161
  %v7194 = vsel %vm3307, %v7161, %v7163
  %v7195 = vsel %vm3307, %v7163, %v7165
  %v7196 = vsel %vm3307, %v7165, %v7167
  %v7197 = vsel %vm3307, %v7167, %v7169
  %v7198 = vsel %vm3307, %v7169, %v7171
  %v7199 = vsel %vm3307, %v7171, %v7173
  %v7200 = vsel %vm3307, %v7173, %v7175
  %v7201 = vsel %vm3307, %v7175, %v7177
  %v7202 = vsel %vm3307, %v7177, %v7179
  %v7203 = vsel %vm3307, %v7179, %v7181
  %v7204 = vsel %vm3307, %v7181, %v7183
  %v7205 = vsel %vm3307, %v7183, %v7185
  %v7207 = vsel %vm1341, %v7143, 0
  %v7210 = vsel %vm1345, %v7186, 0
  %v7213 = vsel %vm1345, %v7187, 0
  %v7216 = vsel %vm1345, %v7188, 0
  %v7219 = vsel %vm1345, %v7189, 0
  %v7222 = vsel %vm1345, %v7190, 0
  %v7225 = vsel %vm1345, %v7191, 0
  %v7228 = vsel %vm1345, %v7192, 0
  %v7231 = vsel %vm1345, %v7193, 0
  %v7234 = vsel %vm1345, %v7194, 0
  %v7237 = vsel %vm1345, %v7195, 0
  %v7240 = vsel %vm1345, %v7196, 0
  %v7243 = vsel %vm1345, %v7197, 0
  %v7246 = vsel %vm1345, %v7198, 0
  %v7249 = vsel %vm1345, %v7199, 0
  %v7252 = vsel %vm1345, %v7200, 0
  %v7255 = vsel %vm1345, %v7201, 0
  %v7258 = vsel %vm1345, %v7202, 0
  %v7261 = vsel %vm1345, %v7203, 0
  %v7264 = vsel %vm1345, %v7204, 0
  %v7267 = vsel %vm1345, %v7205, 0
  %7269 = vmatpush.bf16.msra.mxu0 0
  %7270 = vmatpush.bf16.msra.mxu0 0
  %7271 = vmatpush.bf16.msra.mxu0 0
  %7272 = vmatpush.bf16.msra.mxu0 0
  %7273 = vmatpush.bf16.msra.mxu0 0
  %7274 = vmatpush.bf16.msra.mxu0 0
  %7275 = vmatpush.bf16.msra.mxu0 0
  %7276 = vmatpush.bf16.msra.mxu0 %v7210
  %7277 = vmatmul.bf16.gmra.mxu0 %v7207
  %v7278 = vpop.f32.mrf.mxu0
  %v7279 = vadd.f32 0.0, %v7278
  %v7280 = vpop.f32.mrf.mxu0
  %7281 = vdwg.mxu0
  %7282 = vmatpush.bf16.msra.mxu0 0
  %7283 = vmatpush.bf16.msra.mxu0 0
  %7284 = vmatpush.bf16.msra.mxu0 0
  %7285 = vmatpush.bf16.msra.mxu0 0
  %7286 = vmatpush.bf16.msra.mxu0 0
  %7287 = vmatpush.bf16.msra.mxu0 0
  %7288 = vmatpush.bf16.msra.mxu0 0
  %7289 = vmatpush.bf16.msra.mxu0 %v7213
  %7290 = vmatmul.bf16.gmra.mxu0 %v7207
  %v7291 = vpop.f32.mrf.mxu0
  %v7292 = vadd.f32 0.0, %v7291
  %v7293 = vpop.f32.mrf.mxu0
  %7294 = vdwg.mxu0
  %7295 = vmatpush.bf16.msra.mxu0 0
  %7296 = vmatpush.bf16.msra.mxu0 0
  %7297 = vmatpush.bf16.msra.mxu0 0
  %7298 = vmatpush.bf16.msra.mxu0 0
  %7299 = vmatpush.bf16.msra.mxu0 0
  %7300 = vmatpush.bf16.msra.mxu0 0
  %7301 = vmatpush.bf16.msra.mxu0 0
  %7302 = vmatpush.bf16.msra.mxu0 %v7216
  %7303 = vmatmul.bf16.gmra.mxu0 %v7207
  %v7304 = vpop.f32.mrf.mxu0
  %v7305 = vadd.f32 0.0, %v7304
  %v7306 = vpop.f32.mrf.mxu0
  %7307 = vdwg.mxu0
  %7308 = vmatpush.bf16.msra.mxu0 0
  %7309 = vmatpush.bf16.msra.mxu0 0
  %7310 = vmatpush.bf16.msra.mxu0 0
  %7311 = vmatpush.bf16.msra.mxu0 0
  %7312 = vmatpush.bf16.msra.mxu0 0
  %7313 = vmatpush.bf16.msra.mxu0 0
  %7314 = vmatpush.bf16.msra.mxu0 0
  %7315 = vmatpush.bf16.msra.mxu0 %v7219
  %7316 = vmatmul.bf16.gmra.mxu0 %v7207
  %v7317 = vpop.f32.mrf.mxu0
  %v7318 = vadd.f32 0.0, %v7317
  %v7319 = vpop.f32.mrf.mxu0
  %7320 = vdwg.mxu0
  %7321 = vmatpush.bf16.msra.mxu0 0
  %7322 = vmatpush.bf16.msra.mxu0 0
  %7323 = vmatpush.bf16.msra.mxu0 0
  %7324 = vmatpush.bf16.msra.mxu0 0
  %7325 = vmatpush.bf16.msra.mxu0 0
  %7326 = vmatpush.bf16.msra.mxu0 0
  %7327 = vmatpush.bf16.msra.mxu0 0
  %7328 = vmatpush.bf16.msra.mxu0 %v7222
  %7329 = vmatmul.bf16.gmra.mxu0 %v7207
  %v7330 = vpop.f32.mrf.mxu0
  %v7331 = vadd.f32 0.0, %v7330
  %v7332 = vpop.f32.mrf.mxu0
  %7333 = vdwg.mxu0
  %7334 = vmatpush.bf16.msra.mxu0 0
  %7335 = vmatpush.bf16.msra.mxu0 0
  %7336 = vmatpush.bf16.msra.mxu0 0
  %7337 = vmatpush.bf16.msra.mxu0 0
  %7338 = vmatpush.bf16.msra.mxu0 0
  %7339 = vmatpush.bf16.msra.mxu0 0
  %7340 = vmatpush.bf16.msra.mxu0 0
  %7341 = vmatpush.bf16.msra.mxu0 %v7225
  %7342 = vmatmul.bf16.gmra.mxu0 %v7207
  %v7343 = vpop.f32.mrf.mxu0
  %v7344 = vadd.f32 0.0, %v7343
  %v7345 = vpop.f32.mrf.mxu0
  %7346 = vdwg.mxu0
  %7347 = vmatpush.bf16.msra.mxu0 0
  %7348 = vmatpush.bf16.msra.mxu0 0
  %7349 = vmatpush.bf16.msra.mxu0 0
  %7350 = vmatpush.bf16.msra.mxu0 0
  %7351 = vmatpush.bf16.msra.mxu0 0
  %7352 = vmatpush.bf16.msra.mxu0 0
  %7353 = vmatpush.bf16.msra.mxu0 0
  %7354 = vmatpush.bf16.msra.mxu0 %v7228
  %7355 = vmatmul.bf16.gmra.mxu0 %v7207
  %v7356 = vpop.f32.mrf.mxu0
  %v7357 = vadd.f32 0.0, %v7356
  %v7358 = vpop.f32.mrf.mxu0
  %7359 = vdwg.mxu0
  %7360 = vmatpush.bf16.msra.mxu0 0
  %7361 = vmatpush.bf16.msra.mxu0 0
  %7362 = vmatpush.bf16.msra.mxu0 0
  %7363 = vmatpush.bf16.msra.mxu0 0
  %7364 = vmatpush.bf16.msra.mxu0 0
  %7365 = vmatpush.bf16.msra.mxu0 0
  %7366 = vmatpush.bf16.msra.mxu0 0
  %7367 = vmatpush.bf16.msra.mxu0 %v7231
  %7368 = vmatmul.bf16.gmra.mxu0 %v7207
  %v7369 = vpop.f32.mrf.mxu0
  %v7370 = vadd.f32 0.0, %v7369
  %v7371 = vpop.f32.mrf.mxu0
  %7372 = vdwg.mxu0
  %7373 = vmatpush.bf16.msra.mxu0 0
  %7374 = vmatpush.bf16.msra.mxu0 0
  %7375 = vmatpush.bf16.msra.mxu0 0
  %7376 = vmatpush.bf16.msra.mxu0 0
  %7377 = vmatpush.bf16.msra.mxu0 0
  %7378 = vmatpush.bf16.msra.mxu0 0
  %7379 = vmatpush.bf16.msra.mxu0 0
  %7380 = vmatpush.bf16.msra.mxu0 %v7234
  %7381 = vmatmul.bf16.gmra.mxu0 %v7207
  %v7382 = vpop.f32.mrf.mxu0
  %v7383 = vadd.f32 0.0, %v7382
  %v7384 = vpop.f32.mrf.mxu0
  %7385 = vdwg.mxu0
  %7386 = vmatpush.bf16.msra.mxu0 0
  %7387 = vmatpush.bf16.msra.mxu0 0
  %7388 = vmatpush.bf16.msra.mxu0 0
  %7389 = vmatpush.bf16.msra.mxu0 0
  %7390 = vmatpush.bf16.msra.mxu0 0
  %7391 = vmatpush.bf16.msra.mxu0 0
  %7392 = vmatpush.bf16.msra.mxu0 0
  %7393 = vmatpush.bf16.msra.mxu0 %v7237
  %7394 = vmatmul.bf16.gmra.mxu0 %v7207
  %v7395 = vpop.f32.mrf.mxu0
  %v7396 = vadd.f32 0.0, %v7395
  %v7397 = vpop.f32.mrf.mxu0
  %7398 = vdwg.mxu0
  %7399 = vmatpush.bf16.msra.mxu0 0
  %7400 = vmatpush.bf16.msra.mxu0 0
  %7401 = vmatpush.bf16.msra.mxu0 0
  %7402 = vmatpush.bf16.msra.mxu0 0
  %7403 = vmatpush.bf16.msra.mxu0 0
  %7404 = vmatpush.bf16.msra.mxu0 0
  %7405 = vmatpush.bf16.msra.mxu0 0
  %7406 = vmatpush.bf16.msra.mxu0 %v7240
  %7407 = vmatmul.bf16.gmra.mxu0 %v7207
  %v7408 = vpop.f32.mrf.mxu0
  %v7409 = vadd.f32 0.0, %v7408
  %v7410 = vpop.f32.mrf.mxu0
  %7411 = vdwg.mxu0
  %7412 = vmatpush.bf16.msra.mxu0 0
  %7413 = vmatpush.bf16.msra.mxu0 0
  %7414 = vmatpush.bf16.msra.mxu0 0
  %7415 = vmatpush.bf16.msra.mxu0 0
  %7416 = vmatpush.bf16.msra.mxu0 0
  %7417 = vmatpush.bf16.msra.mxu0 0
  %7418 = vmatpush.bf16.msra.mxu0 0
  %7419 = vmatpush.bf16.msra.mxu0 %v7243
  %7420 = vmatmul.bf16.gmra.mxu0 %v7207
  %v7421 = vpop.f32.mrf.mxu0
  %v7422 = vadd.f32 0.0, %v7421
  %v7423 = vpop.f32.mrf.mxu0
  %7424 = vdwg.mxu0
  %7425 = vmatpush.bf16.msra.mxu0 0
  %7426 = vmatpush.bf16.msra.mxu0 0
  %7427 = vmatpush.bf16.msra.mxu0 0
  %7428 = vmatpush.bf16.msra.mxu0 0
  %7429 = vmatpush.bf16.msra.mxu0 0
  %7430 = vmatpush.bf16.msra.mxu0 0
  %7431 = vmatpush.bf16.msra.mxu0 0
  %7432 = vmatpush.bf16.msra.mxu0 %v7246
  %7433 = vmatmul.bf16.gmra.mxu0 %v7207
  %v7434 = vpop.f32.mrf.mxu0
  %v7435 = vadd.f32 0.0, %v7434
  %v7436 = vpop.f32.mrf.mxu0
  %7437 = vdwg.mxu0
  %7438 = vmatpush.bf16.msra.mxu0 0
  %7439 = vmatpush.bf16.msra.mxu0 0
  %7440 = vmatpush.bf16.msra.mxu0 0
  %7441 = vmatpush.bf16.msra.mxu0 0
  %7442 = vmatpush.bf16.msra.mxu0 0
  %7443 = vmatpush.bf16.msra.mxu0 0
  %7444 = vmatpush.bf16.msra.mxu0 0
  %7445 = vmatpush.bf16.msra.mxu0 %v7249
  %7446 = vmatmul.bf16.gmra.mxu0 %v7207
  %v7447 = vpop.f32.mrf.mxu0
  %v7448 = vadd.f32 0.0, %v7447
  %v7449 = vpop.f32.mrf.mxu0
  %7450 = vdwg.mxu0
  %7451 = vmatpush.bf16.msra.mxu0 0
  %7452 = vmatpush.bf16.msra.mxu0 0
  %7453 = vmatpush.bf16.msra.mxu0 0
  %7454 = vmatpush.bf16.msra.mxu0 0
  %7455 = vmatpush.bf16.msra.mxu0 0
  %7456 = vmatpush.bf16.msra.mxu0 0
  %7457 = vmatpush.bf16.msra.mxu0 0
  %7458 = vmatpush.bf16.msra.mxu0 %v7252
  %7459 = vmatmul.bf16.gmra.mxu0 %v7207
  %v7460 = vpop.f32.mrf.mxu0
  %v7461 = vadd.f32 0.0, %v7460
  %v7462 = vpop.f32.mrf.mxu0
  %7463 = vdwg.mxu0
  %7464 = vmatpush.bf16.msra.mxu0 0
  %7465 = vmatpush.bf16.msra.mxu0 0
  %7466 = vmatpush.bf16.msra.mxu0 0
  %7467 = vmatpush.bf16.msra.mxu0 0
  %7468 = vmatpush.bf16.msra.mxu0 0
  %7469 = vmatpush.bf16.msra.mxu0 0
  %7470 = vmatpush.bf16.msra.mxu0 0
  %7471 = vmatpush.bf16.msra.mxu0 %v7255
  %7472 = vmatmul.bf16.gmra.mxu0 %v7207
  %v7473 = vpop.f32.mrf.mxu0
  %v7474 = vadd.f32 0.0, %v7473
  %v7475 = vpop.f32.mrf.mxu0
  %7476 = vdwg.mxu0
  %7477 = vmatpush.bf16.msra.mxu0 0
  %7478 = vmatpush.bf16.msra.mxu0 0
  %7479 = vmatpush.bf16.msra.mxu0 0
  %7480 = vmatpush.bf16.msra.mxu0 0
  %7481 = vmatpush.bf16.msra.mxu0 0
  %7482 = vmatpush.bf16.msra.mxu0 0
  %7483 = vmatpush.bf16.msra.mxu0 0
  %7484 = vmatpush.bf16.msra.mxu0 %v7258
  %7485 = vmatmul.bf16.gmra.mxu0 %v7207
  %v7486 = vpop.f32.mrf.mxu0
  %v7487 = vadd.f32 0.0, %v7486
  %v7488 = vpop.f32.mrf.mxu0
  %7489 = vdwg.mxu0
  %7490 = vmatpush.bf16.msra.mxu0 0
  %7491 = vmatpush.bf16.msra.mxu0 0
  %7492 = vmatpush.bf16.msra.mxu0 0
  %7493 = vmatpush.bf16.msra.mxu0 0
  %7494 = vmatpush.bf16.msra.mxu0 0
  %7495 = vmatpush.bf16.msra.mxu0 0
  %7496 = vmatpush.bf16.msra.mxu0 0
  %7497 = vmatpush.bf16.msra.mxu0 %v7261
  %7498 = vmatmul.bf16.gmra.mxu0 %v7207
  %v7499 = vpop.f32.mrf.mxu0
  %v7500 = vadd.f32 0.0, %v7499
  %v7501 = vpop.f32.mrf.mxu0
  %7502 = vdwg.mxu0
  %7503 = vmatpush.bf16.msra.mxu0 0
  %7504 = vmatpush.bf16.msra.mxu0 0
  %7505 = vmatpush.bf16.msra.mxu0 0
  %7506 = vmatpush.bf16.msra.mxu0 0
  %7507 = vmatpush.bf16.msra.mxu0 0
  %7508 = vmatpush.bf16.msra.mxu0 0
  %7509 = vmatpush.bf16.msra.mxu0 0
  %7510 = vmatpush.bf16.msra.mxu0 %v7264
  %7511 = vmatmul.bf16.gmra.mxu0 %v7207
  %v7512 = vpop.f32.mrf.mxu0
  %v7513 = vadd.f32 0.0, %v7512
  %v7514 = vpop.f32.mrf.mxu0
  %7515 = vdwg.mxu0
  %7516 = vmatpush.bf16.msra.mxu0 0
  %7517 = vmatpush.bf16.msra.mxu0 0
  %7518 = vmatpush.bf16.msra.mxu0 0
  %7519 = vmatpush.bf16.msra.mxu0 0
  %7520 = vmatpush.bf16.msra.mxu0 0
  %7521 = vmatpush.bf16.msra.mxu0 0
  %7522 = vmatpush.bf16.msra.mxu0 0
  %7523 = vmatpush.bf16.msra.mxu0 %v7267
  %7524 = vmatmul.bf16.gmra.mxu0 %v7207
  %v7525 = vpop.f32.mrf.mxu0
  %v7526 = vadd.f32 0.0, %v7525
  %v7527 = vpop.f32.mrf.mxu0
  %7528 = vdwg.mxu0
  %v7529 = vadd.f32 %v7122, %v7279
  %v7530 = vadd.f32 %v7123, %v7292
  %v7531 = vadd.f32 %v7124, %v7305
  %v7532 = vadd.f32 %v7125, %v7318
  %v7533 = vadd.f32 %v7126, %v7331
  %v7534 = vadd.f32 %v7127, %v7344
  %v7535 = vadd.f32 %v7128, %v7357
  %v7536 = vadd.f32 %v7129, %v7370
  %v7537 = vadd.f32 %v7130, %v7383
  %v7538 = vadd.f32 %v7131, %v7396
  %v7539 = vadd.f32 %v7132, %v7409
  %v7540 = vadd.f32 %v7133, %v7422
  %v7541 = vadd.f32 %v7134, %v7435
  %v7542 = vadd.f32 %v7135, %v7448
  %v7543 = vadd.f32 %v7136, %v7461
  %v7544 = vadd.f32 %v7137, %v7474
  %v7545 = vadd.f32 %v7138, %v7487
  %v7546 = vadd.f32 %v7139, %v7500
  %v7547 = vadd.f32 %v7140, %v7513
  %v7548 = vadd.f32 %v7141, %v7526
  %s7549 = scalar_lea.vmem %s5, 24
  %v7550 = vld [vmem:[%s7549] sm:$0xf]
  %7551 = vrot.lane.b32.xlu0 %v5142, 60
  %v7552 = vpop.permute.xlu0 %7551
  %7553 = vrot.lane.b32.xlu0 %v5143, 60
  %v7554 = vpop.permute.xlu0 %7553
  %7555 = vrot.lane.b32.xlu0 %v5144, 60
  %v7556 = vpop.permute.xlu0 %7555
  %7557 = vrot.lane.b32.xlu0 %v5145, 60
  %v7558 = vpop.permute.xlu0 %7557
  %7559 = vrot.lane.b32.xlu0 %v5146, 60
  %v7560 = vpop.permute.xlu0 %7559
  %7561 = vrot.lane.b32.xlu0 %v5147, 60
  %v7562 = vpop.permute.xlu0 %7561
  %7563 = vrot.lane.b32.xlu0 %v5148, 60
  %v7564 = vpop.permute.xlu0 %7563
  %7565 = vrot.lane.b32.xlu0 %v5149, 60
  %v7566 = vpop.permute.xlu0 %7565
  %7567 = vrot.lane.b32.xlu0 %v5150, 60
  %v7568 = vpop.permute.xlu0 %7567
  %7569 = vrot.lane.b32.xlu0 %v5151, 60
  %v7570 = vpop.permute.xlu0 %7569
  %7571 = vrot.lane.b32.xlu0 %v5152, 60
  %v7572 = vpop.permute.xlu0 %7571
  %7573 = vrot.lane.b32.xlu0 %v5153, 60
  %v7574 = vpop.permute.xlu0 %7573
  %7575 = vrot.lane.b32.xlu0 %v5154, 60
  %v7576 = vpop.permute.xlu0 %7575
  %7577 = vrot.lane.b32.xlu0 %v5155, 60
  %v7578 = vpop.permute.xlu0 %7577
  %7579 = vrot.lane.b32.xlu0 %v5156, 60
  %v7580 = vpop.permute.xlu0 %7579
  %7581 = vrot.lane.b32.xlu0 %v5157, 60
  %v7582 = vpop.permute.xlu0 %7581
  %7583 = vrot.lane.b32.xlu0 %v5158, 60
  %v7584 = vpop.permute.xlu0 %7583
  %7585 = vrot.lane.b32.xlu0 %v5159, 60
  %v7586 = vpop.permute.xlu0 %7585
  %7587 = vrot.lane.b32.xlu0 %v5160, 60
  %v7588 = vpop.permute.xlu0 %7587
  %7589 = vrot.lane.b32.xlu0 %v5161, 60
  %v7590 = vpop.permute.xlu0 %7589
  %7591 = vrot.lane.b32.xlu0 %v5162, 60
  %v7592 = vpop.permute.xlu0 %7591
  %v7593 = vsel %vm3715, %v7552, %v7554
  %v7594 = vsel %vm3715, %v7554, %v7556
  %v7595 = vsel %vm3715, %v7556, %v7558
  %v7596 = vsel %vm3715, %v7558, %v7560
  %v7597 = vsel %vm3715, %v7560, %v7562
  %v7598 = vsel %vm3715, %v7562, %v7564
  %v7599 = vsel %vm3715, %v7564, %v7566
  %v7600 = vsel %vm3715, %v7566, %v7568
  %v7601 = vsel %vm3715, %v7568, %v7570
  %v7602 = vsel %vm3715, %v7570, %v7572
  %v7603 = vsel %vm3715, %v7572, %v7574
  %v7604 = vsel %vm3715, %v7574, %v7576
  %v7605 = vsel %vm3715, %v7576, %v7578
  %v7606 = vsel %vm3715, %v7578, %v7580
  %v7607 = vsel %vm3715, %v7580, %v7582
  %v7608 = vsel %vm3715, %v7582, %v7584
  %v7609 = vsel %vm3715, %v7584, %v7586
  %v7610 = vsel %vm3715, %v7586, %v7588
  %v7611 = vsel %vm3715, %v7588, %v7590
  %v7612 = vsel %vm3715, %v7590, %v7592
  %v7614 = vsel %vm1341, %v7550, 0
  %v7617 = vsel %vm1345, %v7593, 0
  %v7620 = vsel %vm1345, %v7594, 0
  %v7623 = vsel %vm1345, %v7595, 0
  %v7626 = vsel %vm1345, %v7596, 0
  %v7629 = vsel %vm1345, %v7597, 0
  %v7632 = vsel %vm1345, %v7598, 0
  %v7635 = vsel %vm1345, %v7599, 0
  %v7638 = vsel %vm1345, %v7600, 0
  %v7641 = vsel %vm1345, %v7601, 0
  %v7644 = vsel %vm1345, %v7602, 0
  %v7647 = vsel %vm1345, %v7603, 0
  %v7650 = vsel %vm1345, %v7604, 0
  %v7653 = vsel %vm1345, %v7605, 0
  %v7656 = vsel %vm1345, %v7606, 0
  %v7659 = vsel %vm1345, %v7607, 0
  %v7662 = vsel %vm1345, %v7608, 0
  %v7665 = vsel %vm1345, %v7609, 0
  %v7668 = vsel %vm1345, %v7610, 0
  %v7671 = vsel %vm1345, %v7611, 0
  %v7674 = vsel %vm1345, %v7612, 0
  %7676 = vmatpush.bf16.msra.mxu0 0
  %7677 = vmatpush.bf16.msra.mxu0 0
  %7678 = vmatpush.bf16.msra.mxu0 0
  %7679 = vmatpush.bf16.msra.mxu0 0
  %7680 = vmatpush.bf16.msra.mxu0 0
  %7681 = vmatpush.bf16.msra.mxu0 0
  %7682 = vmatpush.bf16.msra.mxu0 0
  %7683 = vmatpush.bf16.msra.mxu0 %v7617
  %7684 = vmatmul.bf16.gmra.mxu0 %v7614
  %v7685 = vpop.f32.mrf.mxu0
  %v7686 = vadd.f32 0.0, %v7685
  %v7687 = vpop.f32.mrf.mxu0
  %7688 = vdwg.mxu0
  %7689 = vmatpush.bf16.msra.mxu0 0
  %7690 = vmatpush.bf16.msra.mxu0 0
  %7691 = vmatpush.bf16.msra.mxu0 0
  %7692 = vmatpush.bf16.msra.mxu0 0
  %7693 = vmatpush.bf16.msra.mxu0 0
  %7694 = vmatpush.bf16.msra.mxu0 0
  %7695 = vmatpush.bf16.msra.mxu0 0
  %7696 = vmatpush.bf16.msra.mxu0 %v7620
  %7697 = vmatmul.bf16.gmra.mxu0 %v7614
  %v7698 = vpop.f32.mrf.mxu0
  %v7699 = vadd.f32 0.0, %v7698
  %v7700 = vpop.f32.mrf.mxu0
  %7701 = vdwg.mxu0
  %7702 = vmatpush.bf16.msra.mxu0 0
  %7703 = vmatpush.bf16.msra.mxu0 0
  %7704 = vmatpush.bf16.msra.mxu0 0
  %7705 = vmatpush.bf16.msra.mxu0 0
  %7706 = vmatpush.bf16.msra.mxu0 0
  %7707 = vmatpush.bf16.msra.mxu0 0
  %7708 = vmatpush.bf16.msra.mxu0 0
  %7709 = vmatpush.bf16.msra.mxu0 %v7623
  %7710 = vmatmul.bf16.gmra.mxu0 %v7614
  %v7711 = vpop.f32.mrf.mxu0
  %v7712 = vadd.f32 0.0, %v7711
  %v7713 = vpop.f32.mrf.mxu0
  %7714 = vdwg.mxu0
  %7715 = vmatpush.bf16.msra.mxu0 0
  %7716 = vmatpush.bf16.msra.mxu0 0
  %7717 = vmatpush.bf16.msra.mxu0 0
  %7718 = vmatpush.bf16.msra.mxu0 0
  %7719 = vmatpush.bf16.msra.mxu0 0
  %7720 = vmatpush.bf16.msra.mxu0 0
  %7721 = vmatpush.bf16.msra.mxu0 0
  %7722 = vmatpush.bf16.msra.mxu0 %v7626
  %7723 = vmatmul.bf16.gmra.mxu0 %v7614
  %v7724 = vpop.f32.mrf.mxu0
  %v7725 = vadd.f32 0.0, %v7724
  %v7726 = vpop.f32.mrf.mxu0
  %7727 = vdwg.mxu0
  %7728 = vmatpush.bf16.msra.mxu0 0
  %7729 = vmatpush.bf16.msra.mxu0 0
  %7730 = vmatpush.bf16.msra.mxu0 0
  %7731 = vmatpush.bf16.msra.mxu0 0
  %7732 = vmatpush.bf16.msra.mxu0 0
  %7733 = vmatpush.bf16.msra.mxu0 0
  %7734 = vmatpush.bf16.msra.mxu0 0
  %7735 = vmatpush.bf16.msra.mxu0 %v7629
  %7736 = vmatmul.bf16.gmra.mxu0 %v7614
  %v7737 = vpop.f32.mrf.mxu0
  %v7738 = vadd.f32 0.0, %v7737
  %v7739 = vpop.f32.mrf.mxu0
  %7740 = vdwg.mxu0
  %7741 = vmatpush.bf16.msra.mxu0 0
  %7742 = vmatpush.bf16.msra.mxu0 0
  %7743 = vmatpush.bf16.msra.mxu0 0
  %7744 = vmatpush.bf16.msra.mxu0 0
  %7745 = vmatpush.bf16.msra.mxu0 0
  %7746 = vmatpush.bf16.msra.mxu0 0
  %7747 = vmatpush.bf16.msra.mxu0 0
  %7748 = vmatpush.bf16.msra.mxu0 %v7632
  %7749 = vmatmul.bf16.gmra.mxu0 %v7614
  %v7750 = vpop.f32.mrf.mxu0
  %v7751 = vadd.f32 0.0, %v7750
  %v7752 = vpop.f32.mrf.mxu0
  %7753 = vdwg.mxu0
  %7754 = vmatpush.bf16.msra.mxu0 0
  %7755 = vmatpush.bf16.msra.mxu0 0
  %7756 = vmatpush.bf16.msra.mxu0 0
  %7757 = vmatpush.bf16.msra.mxu0 0
  %7758 = vmatpush.bf16.msra.mxu0 0
  %7759 = vmatpush.bf16.msra.mxu0 0
  %7760 = vmatpush.bf16.msra.mxu0 0
  %7761 = vmatpush.bf16.msra.mxu0 %v7635
  %7762 = vmatmul.bf16.gmra.mxu0 %v7614
  %v7763 = vpop.f32.mrf.mxu0
  %v7764 = vadd.f32 0.0, %v7763
  %v7765 = vpop.f32.mrf.mxu0
  %7766 = vdwg.mxu0
  %7767 = vmatpush.bf16.msra.mxu0 0
  %7768 = vmatpush.bf16.msra.mxu0 0
  %7769 = vmatpush.bf16.msra.mxu0 0
  %7770 = vmatpush.bf16.msra.mxu0 0
  %7771 = vmatpush.bf16.msra.mxu0 0
  %7772 = vmatpush.bf16.msra.mxu0 0
  %7773 = vmatpush.bf16.msra.mxu0 0
  %7774 = vmatpush.bf16.msra.mxu0 %v7638
  %7775 = vmatmul.bf16.gmra.mxu0 %v7614
  %v7776 = vpop.f32.mrf.mxu0
  %v7777 = vadd.f32 0.0, %v7776
  %v7778 = vpop.f32.mrf.mxu0
  %7779 = vdwg.mxu0
  %7780 = vmatpush.bf16.msra.mxu0 0
  %7781 = vmatpush.bf16.msra.mxu0 0
  %7782 = vmatpush.bf16.msra.mxu0 0
  %7783 = vmatpush.bf16.msra.mxu0 0
  %7784 = vmatpush.bf16.msra.mxu0 0
  %7785 = vmatpush.bf16.msra.mxu0 0
  %7786 = vmatpush.bf16.msra.mxu0 0
  %7787 = vmatpush.bf16.msra.mxu0 %v7641
  %7788 = vmatmul.bf16.gmra.mxu0 %v7614
  %v7789 = vpop.f32.mrf.mxu0
  %v7790 = vadd.f32 0.0, %v7789
  %v7791 = vpop.f32.mrf.mxu0
  %7792 = vdwg.mxu0
  %7793 = vmatpush.bf16.msra.mxu0 0
  %7794 = vmatpush.bf16.msra.mxu0 0
  %7795 = vmatpush.bf16.msra.mxu0 0
  %7796 = vmatpush.bf16.msra.mxu0 0
  %7797 = vmatpush.bf16.msra.mxu0 0
  %7798 = vmatpush.bf16.msra.mxu0 0
  %7799 = vmatpush.bf16.msra.mxu0 0
  %7800 = vmatpush.bf16.msra.mxu0 %v7644
  %7801 = vmatmul.bf16.gmra.mxu0 %v7614
  %v7802 = vpop.f32.mrf.mxu0
  %v7803 = vadd.f32 0.0, %v7802
  %v7804 = vpop.f32.mrf.mxu0
  %7805 = vdwg.mxu0
  %7806 = vmatpush.bf16.msra.mxu0 0
  %7807 = vmatpush.bf16.msra.mxu0 0
  %7808 = vmatpush.bf16.msra.mxu0 0
  %7809 = vmatpush.bf16.msra.mxu0 0
  %7810 = vmatpush.bf16.msra.mxu0 0
  %7811 = vmatpush.bf16.msra.mxu0 0
  %7812 = vmatpush.bf16.msra.mxu0 0
  %7813 = vmatpush.bf16.msra.mxu0 %v7647
  %7814 = vmatmul.bf16.gmra.mxu0 %v7614
  %v7815 = vpop.f32.mrf.mxu0
  %v7816 = vadd.f32 0.0, %v7815
  %v7817 = vpop.f32.mrf.mxu0
  %7818 = vdwg.mxu0
  %7819 = vmatpush.bf16.msra.mxu0 0
  %7820 = vmatpush.bf16.msra.mxu0 0
  %7821 = vmatpush.bf16.msra.mxu0 0
  %7822 = vmatpush.bf16.msra.mxu0 0
  %7823 = vmatpush.bf16.msra.mxu0 0
  %7824 = vmatpush.bf16.msra.mxu0 0
  %7825 = vmatpush.bf16.msra.mxu0 0
  %7826 = vmatpush.bf16.msra.mxu0 %v7650
  %7827 = vmatmul.bf16.gmra.mxu0 %v7614
  %v7828 = vpop.f32.mrf.mxu0
  %v7829 = vadd.f32 0.0, %v7828
  %v7830 = vpop.f32.mrf.mxu0
  %7831 = vdwg.mxu0
  %7832 = vmatpush.bf16.msra.mxu0 0
  %7833 = vmatpush.bf16.msra.mxu0 0
  %7834 = vmatpush.bf16.msra.mxu0 0
  %7835 = vmatpush.bf16.msra.mxu0 0
  %7836 = vmatpush.bf16.msra.mxu0 0
  %7837 = vmatpush.bf16.msra.mxu0 0
  %7838 = vmatpush.bf16.msra.mxu0 0
  %7839 = vmatpush.bf16.msra.mxu0 %v7653
  %7840 = vmatmul.bf16.gmra.mxu0 %v7614
  %v7841 = vpop.f32.mrf.mxu0
  %v7842 = vadd.f32 0.0, %v7841
  %v7843 = vpop.f32.mrf.mxu0
  %7844 = vdwg.mxu0
  %7845 = vmatpush.bf16.msra.mxu0 0
  %7846 = vmatpush.bf16.msra.mxu0 0
  %7847 = vmatpush.bf16.msra.mxu0 0
  %7848 = vmatpush.bf16.msra.mxu0 0
  %7849 = vmatpush.bf16.msra.mxu0 0
  %7850 = vmatpush.bf16.msra.mxu0 0
  %7851 = vmatpush.bf16.msra.mxu0 0
  %7852 = vmatpush.bf16.msra.mxu0 %v7656
  %7853 = vmatmul.bf16.gmra.mxu0 %v7614
  %v7854 = vpop.f32.mrf.mxu0
  %v7855 = vadd.f32 0.0, %v7854
  %v7856 = vpop.f32.mrf.mxu0
  %7857 = vdwg.mxu0
  %7858 = vmatpush.bf16.msra.mxu0 0
  %7859 = vmatpush.bf16.msra.mxu0 0
  %7860 = vmatpush.bf16.msra.mxu0 0
  %7861 = vmatpush.bf16.msra.mxu0 0
  %7862 = vmatpush.bf16.msra.mxu0 0
  %7863 = vmatpush.bf16.msra.mxu0 0
  %7864 = vmatpush.bf16.msra.mxu0 0
  %7865 = vmatpush.bf16.msra.mxu0 %v7659
  %7866 = vmatmul.bf16.gmra.mxu0 %v7614
  %v7867 = vpop.f32.mrf.mxu0
  %v7868 = vadd.f32 0.0, %v7867
  %v7869 = vpop.f32.mrf.mxu0
  %7870 = vdwg.mxu0
  %7871 = vmatpush.bf16.msra.mxu0 0
  %7872 = vmatpush.bf16.msra.mxu0 0
  %7873 = vmatpush.bf16.msra.mxu0 0
  %7874 = vmatpush.bf16.msra.mxu0 0
  %7875 = vmatpush.bf16.msra.mxu0 0
  %7876 = vmatpush.bf16.msra.mxu0 0
  %7877 = vmatpush.bf16.msra.mxu0 0
  %7878 = vmatpush.bf16.msra.mxu0 %v7662
  %7879 = vmatmul.bf16.gmra.mxu0 %v7614
  %v7880 = vpop.f32.mrf.mxu0
  %v7881 = vadd.f32 0.0, %v7880
  %v7882 = vpop.f32.mrf.mxu0
  %7883 = vdwg.mxu0
  %7884 = vmatpush.bf16.msra.mxu0 0
  %7885 = vmatpush.bf16.msra.mxu0 0
  %7886 = vmatpush.bf16.msra.mxu0 0
  %7887 = vmatpush.bf16.msra.mxu0 0
  %7888 = vmatpush.bf16.msra.mxu0 0
  %7889 = vmatpush.bf16.msra.mxu0 0
  %7890 = vmatpush.bf16.msra.mxu0 0
  %7891 = vmatpush.bf16.msra.mxu0 %v7665
  %7892 = vmatmul.bf16.gmra.mxu0 %v7614
  %v7893 = vpop.f32.mrf.mxu0
  %v7894 = vadd.f32 0.0, %v7893
  %v7895 = vpop.f32.mrf.mxu0
  %7896 = vdwg.mxu0
  %7897 = vmatpush.bf16.msra.mxu0 0
  %7898 = vmatpush.bf16.msra.mxu0 0
  %7899 = vmatpush.bf16.msra.mxu0 0
  %7900 = vmatpush.bf16.msra.mxu0 0
  %7901 = vmatpush.bf16.msra.mxu0 0
  %7902 = vmatpush.bf16.msra.mxu0 0
  %7903 = vmatpush.bf16.msra.mxu0 0
  %7904 = vmatpush.bf16.msra.mxu0 %v7668
  %7905 = vmatmul.bf16.gmra.mxu0 %v7614
  %v7906 = vpop.f32.mrf.mxu0
  %v7907 = vadd.f32 0.0, %v7906
  %v7908 = vpop.f32.mrf.mxu0
  %7909 = vdwg.mxu0
  %7910 = vmatpush.bf16.msra.mxu0 0
  %7911 = vmatpush.bf16.msra.mxu0 0
  %7912 = vmatpush.bf16.msra.mxu0 0
  %7913 = vmatpush.bf16.msra.mxu0 0
  %7914 = vmatpush.bf16.msra.mxu0 0
  %7915 = vmatpush.bf16.msra.mxu0 0
  %7916 = vmatpush.bf16.msra.mxu0 0
  %7917 = vmatpush.bf16.msra.mxu0 %v7671
  %7918 = vmatmul.bf16.gmra.mxu0 %v7614
  %v7919 = vpop.f32.mrf.mxu0
  %v7920 = vadd.f32 0.0, %v7919
  %v7921 = vpop.f32.mrf.mxu0
  %7922 = vdwg.mxu0
  %7923 = vmatpush.bf16.msra.mxu0 0
  %7924 = vmatpush.bf16.msra.mxu0 0
  %7925 = vmatpush.bf16.msra.mxu0 0
  %7926 = vmatpush.bf16.msra.mxu0 0
  %7927 = vmatpush.bf16.msra.mxu0 0
  %7928 = vmatpush.bf16.msra.mxu0 0
  %7929 = vmatpush.bf16.msra.mxu0 0
  %7930 = vmatpush.bf16.msra.mxu0 %v7674
  %7931 = vmatmul.bf16.gmra.mxu0 %v7614
  %v7932 = vpop.f32.mrf.mxu0
  %v7933 = vadd.f32 0.0, %v7932
  %v7934 = vpop.f32.mrf.mxu0
  %7935 = vdwg.mxu0
  %v7936 = vadd.f32 %v7529, %v7686
  %v7937 = vadd.f32 %v7530, %v7699
  %v7938 = vadd.f32 %v7531, %v7712
  %v7939 = vadd.f32 %v7532, %v7725
  %v7940 = vadd.f32 %v7533, %v7738
  %v7941 = vadd.f32 %v7534, %v7751
  %v7942 = vadd.f32 %v7535, %v7764
  %v7943 = vadd.f32 %v7536, %v7777
  %v7944 = vadd.f32 %v7537, %v7790
  %v7945 = vadd.f32 %v7538, %v7803
  %v7946 = vadd.f32 %v7539, %v7816
  %v7947 = vadd.f32 %v7540, %v7829
  %v7948 = vadd.f32 %v7541, %v7842
  %v7949 = vadd.f32 %v7542, %v7855
  %v7950 = vadd.f32 %v7543, %v7868
  %v7951 = vadd.f32 %v7544, %v7881
  %v7952 = vadd.f32 %v7545, %v7894
  %v7953 = vadd.f32 %v7546, %v7907
  %v7954 = vadd.f32 %v7547, %v7920
  %v7955 = vadd.f32 %v7548, %v7933
  %s7956 = scalar_lea.vmem %s5, 28
  %v7957 = vld [vmem:[%s7956] sm:$0xf]
  %7958 = vrot.lane.b32.xlu0 %v5142, 59
  %v7959 = vpop.permute.xlu0 %7958
  %7960 = vrot.lane.b32.xlu0 %v5143, 59
  %v7961 = vpop.permute.xlu0 %7960
  %7962 = vrot.lane.b32.xlu0 %v5144, 59
  %v7963 = vpop.permute.xlu0 %7962
  %7964 = vrot.lane.b32.xlu0 %v5145, 59
  %v7965 = vpop.permute.xlu0 %7964
  %7966 = vrot.lane.b32.xlu0 %v5146, 59
  %v7967 = vpop.permute.xlu0 %7966
  %7968 = vrot.lane.b32.xlu0 %v5147, 59
  %v7969 = vpop.permute.xlu0 %7968
  %7970 = vrot.lane.b32.xlu0 %v5148, 59
  %v7971 = vpop.permute.xlu0 %7970
  %7972 = vrot.lane.b32.xlu0 %v5149, 59
  %v7973 = vpop.permute.xlu0 %7972
  %7974 = vrot.lane.b32.xlu0 %v5150, 59
  %v7975 = vpop.permute.xlu0 %7974
  %7976 = vrot.lane.b32.xlu0 %v5151, 59
  %v7977 = vpop.permute.xlu0 %7976
  %7978 = vrot.lane.b32.xlu0 %v5152, 59
  %v7979 = vpop.permute.xlu0 %7978
  %7980 = vrot.lane.b32.xlu0 %v5153, 59
  %v7981 = vpop.permute.xlu0 %7980
  %7982 = vrot.lane.b32.xlu0 %v5154, 59
  %v7983 = vpop.permute.xlu0 %7982
  %7984 = vrot.lane.b32.xlu0 %v5155, 59
  %v7985 = vpop.permute.xlu0 %7984
  %7986 = vrot.lane.b32.xlu0 %v5156, 59
  %v7987 = vpop.permute.xlu0 %7986
  %7988 = vrot.lane.b32.xlu0 %v5157, 59
  %v7989 = vpop.permute.xlu0 %7988
  %7990 = vrot.lane.b32.xlu0 %v5158, 59
  %v7991 = vpop.permute.xlu0 %7990
  %7992 = vrot.lane.b32.xlu0 %v5159, 59
  %v7993 = vpop.permute.xlu0 %7992
  %7994 = vrot.lane.b32.xlu0 %v5160, 59
  %v7995 = vpop.permute.xlu0 %7994
  %7996 = vrot.lane.b32.xlu0 %v5161, 59
  %v7997 = vpop.permute.xlu0 %7996
  %7998 = vrot.lane.b32.xlu0 %v5162, 59
  %v7999 = vpop.permute.xlu0 %7998
  %v8000 = vsel %vm4123, %v7959, %v7961
  %v8001 = vsel %vm4123, %v7961, %v7963
  %v8002 = vsel %vm4123, %v7963, %v7965
  %v8003 = vsel %vm4123, %v7965, %v7967
  %v8004 = vsel %vm4123, %v7967, %v7969
  %v8005 = vsel %vm4123, %v7969, %v7971
  %v8006 = vsel %vm4123, %v7971, %v7973
  %v8007 = vsel %vm4123, %v7973, %v7975
  %v8008 = vsel %vm4123, %v7975, %v7977
  %v8009 = vsel %vm4123, %v7977, %v7979
  %v8010 = vsel %vm4123, %v7979, %v7981
  %v8011 = vsel %vm4123, %v7981, %v7983
  %v8012 = vsel %vm4123, %v7983, %v7985
  %v8013 = vsel %vm4123, %v7985, %v7987
  %v8014 = vsel %vm4123, %v7987, %v7989
  %v8015 = vsel %vm4123, %v7989, %v7991
  %v8016 = vsel %vm4123, %v7991, %v7993
  %v8017 = vsel %vm4123, %v7993, %v7995
  %v8018 = vsel %vm4123, %v7995, %v7997
  %v8019 = vsel %vm4123, %v7997, %v7999
  %v8021 = vsel %vm1341, %v7957, 0
  %v8024 = vsel %vm1345, %v8000, 0
  %v8027 = vsel %vm1345, %v8001, 0
  %v8030 = vsel %vm1345, %v8002, 0
  %v8033 = vsel %vm1345, %v8003, 0
  %v8036 = vsel %vm1345, %v8004, 0
  %v8039 = vsel %vm1345, %v8005, 0
  %v8042 = vsel %vm1345, %v8006, 0
  %v8045 = vsel %vm1345, %v8007, 0
  %v8048 = vsel %vm1345, %v8008, 0
  %v8051 = vsel %vm1345, %v8009, 0
  %v8054 = vsel %vm1345, %v8010, 0
  %v8057 = vsel %vm1345, %v8011, 0
  %v8060 = vsel %vm1345, %v8012, 0
  %v8063 = vsel %vm1345, %v8013, 0
  %v8066 = vsel %vm1345, %v8014, 0
  %v8069 = vsel %vm1345, %v8015, 0
  %v8072 = vsel %vm1345, %v8016, 0
  %v8075 = vsel %vm1345, %v8017, 0
  %v8078 = vsel %vm1345, %v8018, 0
  %v8081 = vsel %vm1345, %v8019, 0
  %8083 = vmatpush.bf16.msra.mxu0 0
  %8084 = vmatpush.bf16.msra.mxu0 0
  %8085 = vmatpush.bf16.msra.mxu0 0
  %8086 = vmatpush.bf16.msra.mxu0 0
  %8087 = vmatpush.bf16.msra.mxu0 0
  %8088 = vmatpush.bf16.msra.mxu0 0
  %8089 = vmatpush.bf16.msra.mxu0 0
  %8090 = vmatpush.bf16.msra.mxu0 %v8024
  %8091 = vmatmul.bf16.gmra.mxu0 %v8021
  %v8092 = vpop.f32.mrf.mxu0
  %v8093 = vadd.f32 0.0, %v8092
  %v8094 = vpop.f32.mrf.mxu0
  %8095 = vdwg.mxu0
  %8096 = vmatpush.bf16.msra.mxu0 0
  %8097 = vmatpush.bf16.msra.mxu0 0
  %8098 = vmatpush.bf16.msra.mxu0 0
  %8099 = vmatpush.bf16.msra.mxu0 0
  %8100 = vmatpush.bf16.msra.mxu0 0
  %8101 = vmatpush.bf16.msra.mxu0 0
  %8102 = vmatpush.bf16.msra.mxu0 0
  %8103 = vmatpush.bf16.msra.mxu0 %v8027
  %8104 = vmatmul.bf16.gmra.mxu0 %v8021
  %v8105 = vpop.f32.mrf.mxu0
  %v8106 = vadd.f32 0.0, %v8105
  %v8107 = vpop.f32.mrf.mxu0
  %8108 = vdwg.mxu0
  %8109 = vmatpush.bf16.msra.mxu0 0
  %8110 = vmatpush.bf16.msra.mxu0 0
  %8111 = vmatpush.bf16.msra.mxu0 0
  %8112 = vmatpush.bf16.msra.mxu0 0
  %8113 = vmatpush.bf16.msra.mxu0 0
  %8114 = vmatpush.bf16.msra.mxu0 0
  %8115 = vmatpush.bf16.msra.mxu0 0
  %8116 = vmatpush.bf16.msra.mxu0 %v8030
  %8117 = vmatmul.bf16.gmra.mxu0 %v8021
  %v8118 = vpop.f32.mrf.mxu0
  %v8119 = vadd.f32 0.0, %v8118
  %v8120 = vpop.f32.mrf.mxu0
  %8121 = vdwg.mxu0
  %8122 = vmatpush.bf16.msra.mxu0 0
  %8123 = vmatpush.bf16.msra.mxu0 0
  %8124 = vmatpush.bf16.msra.mxu0 0
  %8125 = vmatpush.bf16.msra.mxu0 0
  %8126 = vmatpush.bf16.msra.mxu0 0
  %8127 = vmatpush.bf16.msra.mxu0 0
  %8128 = vmatpush.bf16.msra.mxu0 0
  %8129 = vmatpush.bf16.msra.mxu0 %v8033
  %8130 = vmatmul.bf16.gmra.mxu0 %v8021
  %v8131 = vpop.f32.mrf.mxu0
  %v8132 = vadd.f32 0.0, %v8131
  %v8133 = vpop.f32.mrf.mxu0
  %8134 = vdwg.mxu0
  %8135 = vmatpush.bf16.msra.mxu0 0
  %8136 = vmatpush.bf16.msra.mxu0 0
  %8137 = vmatpush.bf16.msra.mxu0 0
  %8138 = vmatpush.bf16.msra.mxu0 0
  %8139 = vmatpush.bf16.msra.mxu0 0
  %8140 = vmatpush.bf16.msra.mxu0 0
  %8141 = vmatpush.bf16.msra.mxu0 0
  %8142 = vmatpush.bf16.msra.mxu0 %v8036
  %8143 = vmatmul.bf16.gmra.mxu0 %v8021
  %v8144 = vpop.f32.mrf.mxu0
  %v8145 = vadd.f32 0.0, %v8144
  %v8146 = vpop.f32.mrf.mxu0
  %8147 = vdwg.mxu0
  %8148 = vmatpush.bf16.msra.mxu0 0
  %8149 = vmatpush.bf16.msra.mxu0 0
  %8150 = vmatpush.bf16.msra.mxu0 0
  %8151 = vmatpush.bf16.msra.mxu0 0
  %8152 = vmatpush.bf16.msra.mxu0 0
  %8153 = vmatpush.bf16.msra.mxu0 0
  %8154 = vmatpush.bf16.msra.mxu0 0
  %8155 = vmatpush.bf16.msra.mxu0 %v8039
  %8156 = vmatmul.bf16.gmra.mxu0 %v8021
  %v8157 = vpop.f32.mrf.mxu0
  %v8158 = vadd.f32 0.0, %v8157
  %v8159 = vpop.f32.mrf.mxu0
  %8160 = vdwg.mxu0
  %8161 = vmatpush.bf16.msra.mxu0 0
  %8162 = vmatpush.bf16.msra.mxu0 0
  %8163 = vmatpush.bf16.msra.mxu0 0
  %8164 = vmatpush.bf16.msra.mxu0 0
  %8165 = vmatpush.bf16.msra.mxu0 0
  %8166 = vmatpush.bf16.msra.mxu0 0
  %8167 = vmatpush.bf16.msra.mxu0 0
  %8168 = vmatpush.bf16.msra.mxu0 %v8042
  %8169 = vmatmul.bf16.gmra.mxu0 %v8021
  %v8170 = vpop.f32.mrf.mxu0
  %v8171 = vadd.f32 0.0, %v8170
  %v8172 = vpop.f32.mrf.mxu0
  %8173 = vdwg.mxu0
  %8174 = vmatpush.bf16.msra.mxu0 0
  %8175 = vmatpush.bf16.msra.mxu0 0
  %8176 = vmatpush.bf16.msra.mxu0 0
  %8177 = vmatpush.bf16.msra.mxu0 0
  %8178 = vmatpush.bf16.msra.mxu0 0
  %8179 = vmatpush.bf16.msra.mxu0 0
  %8180 = vmatpush.bf16.msra.mxu0 0
  %8181 = vmatpush.bf16.msra.mxu0 %v8045
  %8182 = vmatmul.bf16.gmra.mxu0 %v8021
  %v8183 = vpop.f32.mrf.mxu0
  %v8184 = vadd.f32 0.0, %v8183
  %v8185 = vpop.f32.mrf.mxu0
  %8186 = vdwg.mxu0
  %8187 = vmatpush.bf16.msra.mxu0 0
  %8188 = vmatpush.bf16.msra.mxu0 0
  %8189 = vmatpush.bf16.msra.mxu0 0
  %8190 = vmatpush.bf16.msra.mxu0 0
  %8191 = vmatpush.bf16.msra.mxu0 0
  %8192 = vmatpush.bf16.msra.mxu0 0
  %8193 = vmatpush.bf16.msra.mxu0 0
  %8194 = vmatpush.bf16.msra.mxu0 %v8048
  %8195 = vmatmul.bf16.gmra.mxu0 %v8021
  %v8196 = vpop.f32.mrf.mxu0
  %v8197 = vadd.f32 0.0, %v8196
  %v8198 = vpop.f32.mrf.mxu0
  %8199 = vdwg.mxu0
  %8200 = vmatpush.bf16.msra.mxu0 0
  %8201 = vmatpush.bf16.msra.mxu0 0
  %8202 = vmatpush.bf16.msra.mxu0 0
  %8203 = vmatpush.bf16.msra.mxu0 0
  %8204 = vmatpush.bf16.msra.mxu0 0
  %8205 = vmatpush.bf16.msra.mxu0 0
  %8206 = vmatpush.bf16.msra.mxu0 0
  %8207 = vmatpush.bf16.msra.mxu0 %v8051
  %8208 = vmatmul.bf16.gmra.mxu0 %v8021
  %v8209 = vpop.f32.mrf.mxu0
  %v8210 = vadd.f32 0.0, %v8209
  %v8211 = vpop.f32.mrf.mxu0
  %8212 = vdwg.mxu0
  %8213 = vmatpush.bf16.msra.mxu0 0
  %8214 = vmatpush.bf16.msra.mxu0 0
  %8215 = vmatpush.bf16.msra.mxu0 0
  %8216 = vmatpush.bf16.msra.mxu0 0
  %8217 = vmatpush.bf16.msra.mxu0 0
  %8218 = vmatpush.bf16.msra.mxu0 0
  %8219 = vmatpush.bf16.msra.mxu0 0
  %8220 = vmatpush.bf16.msra.mxu0 %v8054
  %8221 = vmatmul.bf16.gmra.mxu0 %v8021
  %v8222 = vpop.f32.mrf.mxu0
  %v8223 = vadd.f32 0.0, %v8222
  %v8224 = vpop.f32.mrf.mxu0
  %8225 = vdwg.mxu0
  %8226 = vmatpush.bf16.msra.mxu0 0
  %8227 = vmatpush.bf16.msra.mxu0 0
  %8228 = vmatpush.bf16.msra.mxu0 0
  %8229 = vmatpush.bf16.msra.mxu0 0
  %8230 = vmatpush.bf16.msra.mxu0 0
  %8231 = vmatpush.bf16.msra.mxu0 0
  %8232 = vmatpush.bf16.msra.mxu0 0
  %8233 = vmatpush.bf16.msra.mxu0 %v8057
  %8234 = vmatmul.bf16.gmra.mxu0 %v8021
  %v8235 = vpop.f32.mrf.mxu0
  %v8236 = vadd.f32 0.0, %v8235
  %v8237 = vpop.f32.mrf.mxu0
  %8238 = vdwg.mxu0
  %8239 = vmatpush.bf16.msra.mxu0 0
  %8240 = vmatpush.bf16.msra.mxu0 0
  %8241 = vmatpush.bf16.msra.mxu0 0
  %8242 = vmatpush.bf16.msra.mxu0 0
  %8243 = vmatpush.bf16.msra.mxu0 0
  %8244 = vmatpush.bf16.msra.mxu0 0
  %8245 = vmatpush.bf16.msra.mxu0 0
  %8246 = vmatpush.bf16.msra.mxu0 %v8060
  %8247 = vmatmul.bf16.gmra.mxu0 %v8021
  %v8248 = vpop.f32.mrf.mxu0
  %v8249 = vadd.f32 0.0, %v8248
  %v8250 = vpop.f32.mrf.mxu0
  %8251 = vdwg.mxu0
  %8252 = vmatpush.bf16.msra.mxu0 0
  %8253 = vmatpush.bf16.msra.mxu0 0
  %8254 = vmatpush.bf16.msra.mxu0 0
  %8255 = vmatpush.bf16.msra.mxu0 0
  %8256 = vmatpush.bf16.msra.mxu0 0
  %8257 = vmatpush.bf16.msra.mxu0 0
  %8258 = vmatpush.bf16.msra.mxu0 0
  %8259 = vmatpush.bf16.msra.mxu0 %v8063
  %8260 = vmatmul.bf16.gmra.mxu0 %v8021
  %v8261 = vpop.f32.mrf.mxu0
  %v8262 = vadd.f32 0.0, %v8261
  %v8263 = vpop.f32.mrf.mxu0
  %8264 = vdwg.mxu0
  %8265 = vmatpush.bf16.msra.mxu0 0
  %8266 = vmatpush.bf16.msra.mxu0 0
  %8267 = vmatpush.bf16.msra.mxu0 0
  %8268 = vmatpush.bf16.msra.mxu0 0
  %8269 = vmatpush.bf16.msra.mxu0 0
  %8270 = vmatpush.bf16.msra.mxu0 0
  %8271 = vmatpush.bf16.msra.mxu0 0
  %8272 = vmatpush.bf16.msra.mxu0 %v8066
  %8273 = vmatmul.bf16.gmra.mxu0 %v8021
  %v8274 = vpop.f32.mrf.mxu0
  %v8275 = vadd.f32 0.0, %v8274
  %v8276 = vpop.f32.mrf.mxu0
  %8277 = vdwg.mxu0
  %8278 = vmatpush.bf16.msra.mxu0 0
  %8279 = vmatpush.bf16.msra.mxu0 0
  %8280 = vmatpush.bf16.msra.mxu0 0
  %8281 = vmatpush.bf16.msra.mxu0 0
  %8282 = vmatpush.bf16.msra.mxu0 0
  %8283 = vmatpush.bf16.msra.mxu0 0
  %8284 = vmatpush.bf16.msra.mxu0 0
  %8285 = vmatpush.bf16.msra.mxu0 %v8069
  %8286 = vmatmul.bf16.gmra.mxu0 %v8021
  %v8287 = vpop.f32.mrf.mxu0
  %v8288 = vadd.f32 0.0, %v8287
  %v8289 = vpop.f32.mrf.mxu0
  %8290 = vdwg.mxu0
  %8291 = vmatpush.bf16.msra.mxu0 0
  %8292 = vmatpush.bf16.msra.mxu0 0
  %8293 = vmatpush.bf16.msra.mxu0 0
  %8294 = vmatpush.bf16.msra.mxu0 0
  %8295 = vmatpush.bf16.msra.mxu0 0
  %8296 = vmatpush.bf16.msra.mxu0 0
  %8297 = vmatpush.bf16.msra.mxu0 0
  %8298 = vmatpush.bf16.msra.mxu0 %v8072
  %8299 = vmatmul.bf16.gmra.mxu0 %v8021
  %v8300 = vpop.f32.mrf.mxu0
  %v8301 = vadd.f32 0.0, %v8300
  %v8302 = vpop.f32.mrf.mxu0
  %8303 = vdwg.mxu0
  %8304 = vmatpush.bf16.msra.mxu0 0
  %8305 = vmatpush.bf16.msra.mxu0 0
  %8306 = vmatpush.bf16.msra.mxu0 0
  %8307 = vmatpush.bf16.msra.mxu0 0
  %8308 = vmatpush.bf16.msra.mxu0 0
  %8309 = vmatpush.bf16.msra.mxu0 0
  %8310 = vmatpush.bf16.msra.mxu0 0
  %8311 = vmatpush.bf16.msra.mxu0 %v8075
  %8312 = vmatmul.bf16.gmra.mxu0 %v8021
  %v8313 = vpop.f32.mrf.mxu0
  %v8314 = vadd.f32 0.0, %v8313
  %v8315 = vpop.f32.mrf.mxu0
  %8316 = vdwg.mxu0
  %8317 = vmatpush.bf16.msra.mxu0 0
  %8318 = vmatpush.bf16.msra.mxu0 0
  %8319 = vmatpush.bf16.msra.mxu0 0
  %8320 = vmatpush.bf16.msra.mxu0 0
  %8321 = vmatpush.bf16.msra.mxu0 0
  %8322 = vmatpush.bf16.msra.mxu0 0
  %8323 = vmatpush.bf16.msra.mxu0 0
  %8324 = vmatpush.bf16.msra.mxu0 %v8078
  %8325 = vmatmul.bf16.gmra.mxu0 %v8021
  %v8326 = vpop.f32.mrf.mxu0
  %v8327 = vadd.f32 0.0, %v8326
  %v8328 = vpop.f32.mrf.mxu0
  %8329 = vdwg.mxu0
  %8330 = vmatpush.bf16.msra.mxu0 0
  %8331 = vmatpush.bf16.msra.mxu0 0
  %8332 = vmatpush.bf16.msra.mxu0 0
  %8333 = vmatpush.bf16.msra.mxu0 0
  %8334 = vmatpush.bf16.msra.mxu0 0
  %8335 = vmatpush.bf16.msra.mxu0 0
  %8336 = vmatpush.bf16.msra.mxu0 0
  %8337 = vmatpush.bf16.msra.mxu0 %v8081
  %8338 = vmatmul.bf16.gmra.mxu0 %v8021
  %v8339 = vpop.f32.mrf.mxu0
  %v8340 = vadd.f32 0.0, %v8339
  %v8341 = vpop.f32.mrf.mxu0
  %8342 = vdwg.mxu0
  %v8343 = vadd.f32 %v7936, %v8093
  %v8344 = vadd.f32 %v7937, %v8106
  %v8345 = vadd.f32 %v7938, %v8119
  %v8346 = vadd.f32 %v7939, %v8132
  %v8347 = vadd.f32 %v7940, %v8145
  %v8348 = vadd.f32 %v7941, %v8158
  %v8349 = vadd.f32 %v7942, %v8171
  %v8350 = vadd.f32 %v7943, %v8184
  %v8351 = vadd.f32 %v7944, %v8197
  %v8352 = vadd.f32 %v7945, %v8210
  %v8353 = vadd.f32 %v7946, %v8223
  %v8354 = vadd.f32 %v7947, %v8236
  %v8355 = vadd.f32 %v7948, %v8249
  %v8356 = vadd.f32 %v7949, %v8262
  %v8357 = vadd.f32 %v7950, %v8275
  %v8358 = vadd.f32 %v7951, %v8288
  %v8359 = vadd.f32 %v7952, %v8301
  %v8360 = vadd.f32 %v7953, %v8314
  %v8361 = vadd.f32 %v7954, %v8327
  %v8362 = vadd.f32 %v7955, %v8340
  %s8363 = scalar_lea.vmem %s5, 32
  %v8364 = vld [vmem:[%s8363] sm:$0xf]
  %8365 = vrot.lane.b32.xlu0 %v5142, 58
  %v8366 = vpop.permute.xlu0 %8365
  %8367 = vrot.lane.b32.xlu0 %v5143, 58
  %v8368 = vpop.permute.xlu0 %8367
  %8369 = vrot.lane.b32.xlu0 %v5144, 58
  %v8370 = vpop.permute.xlu0 %8369
  %8371 = vrot.lane.b32.xlu0 %v5145, 58
  %v8372 = vpop.permute.xlu0 %8371
  %8373 = vrot.lane.b32.xlu0 %v5146, 58
  %v8374 = vpop.permute.xlu0 %8373
  %8375 = vrot.lane.b32.xlu0 %v5147, 58
  %v8376 = vpop.permute.xlu0 %8375
  %8377 = vrot.lane.b32.xlu0 %v5148, 58
  %v8378 = vpop.permute.xlu0 %8377
  %8379 = vrot.lane.b32.xlu0 %v5149, 58
  %v8380 = vpop.permute.xlu0 %8379
  %8381 = vrot.lane.b32.xlu0 %v5150, 58
  %v8382 = vpop.permute.xlu0 %8381
  %8383 = vrot.lane.b32.xlu0 %v5151, 58
  %v8384 = vpop.permute.xlu0 %8383
  %8385 = vrot.lane.b32.xlu0 %v5152, 58
  %v8386 = vpop.permute.xlu0 %8385
  %8387 = vrot.lane.b32.xlu0 %v5153, 58
  %v8388 = vpop.permute.xlu0 %8387
  %8389 = vrot.lane.b32.xlu0 %v5154, 58
  %v8390 = vpop.permute.xlu0 %8389
  %8391 = vrot.lane.b32.xlu0 %v5155, 58
  %v8392 = vpop.permute.xlu0 %8391
  %8393 = vrot.lane.b32.xlu0 %v5156, 58
  %v8394 = vpop.permute.xlu0 %8393
  %8395 = vrot.lane.b32.xlu0 %v5157, 58
  %v8396 = vpop.permute.xlu0 %8395
  %8397 = vrot.lane.b32.xlu0 %v5158, 58
  %v8398 = vpop.permute.xlu0 %8397
  %8399 = vrot.lane.b32.xlu0 %v5159, 58
  %v8400 = vpop.permute.xlu0 %8399
  %8401 = vrot.lane.b32.xlu0 %v5160, 58
  %v8402 = vpop.permute.xlu0 %8401
  %8403 = vrot.lane.b32.xlu0 %v5161, 58
  %v8404 = vpop.permute.xlu0 %8403
  %8405 = vrot.lane.b32.xlu0 %v5162, 58
  %v8406 = vpop.permute.xlu0 %8405
  %v8407 = vsel %vm4531, %v8366, %v8368
  %v8408 = vsel %vm4531, %v8368, %v8370
  %v8409 = vsel %vm4531, %v8370, %v8372
  %v8410 = vsel %vm4531, %v8372, %v8374
  %v8411 = vsel %vm4531, %v8374, %v8376
  %v8412 = vsel %vm4531, %v8376, %v8378
  %v8413 = vsel %vm4531, %v8378, %v8380
  %v8414 = vsel %vm4531, %v8380, %v8382
  %v8415 = vsel %vm4531, %v8382, %v8384
  %v8416 = vsel %vm4531, %v8384, %v8386
  %v8417 = vsel %vm4531, %v8386, %v8388
  %v8418 = vsel %vm4531, %v8388, %v8390
  %v8419 = vsel %vm4531, %v8390, %v8392
  %v8420 = vsel %vm4531, %v8392, %v8394
  %v8421 = vsel %vm4531, %v8394, %v8396
  %v8422 = vsel %vm4531, %v8396, %v8398
  %v8423 = vsel %vm4531, %v8398, %v8400
  %v8424 = vsel %vm4531, %v8400, %v8402
  %v8425 = vsel %vm4531, %v8402, %v8404
  %v8426 = vsel %vm4531, %v8404, %v8406
  %v8428 = vsel %vm1341, %v8364, 0
  %v8431 = vsel %vm1345, %v8407, 0
  %v8434 = vsel %vm1345, %v8408, 0
  %v8437 = vsel %vm1345, %v8409, 0
  %v8440 = vsel %vm1345, %v8410, 0
  %v8443 = vsel %vm1345, %v8411, 0
  %v8446 = vsel %vm1345, %v8412, 0
  %v8449 = vsel %vm1345, %v8413, 0
  %v8452 = vsel %vm1345, %v8414, 0
  %v8455 = vsel %vm1345, %v8415, 0
  %v8458 = vsel %vm1345, %v8416, 0
  %v8461 = vsel %vm1345, %v8417, 0
  %v8464 = vsel %vm1345, %v8418, 0
  %v8467 = vsel %vm1345, %v8419, 0
  %v8470 = vsel %vm1345, %v8420, 0
  %v8473 = vsel %vm1345, %v8421, 0
  %v8476 = vsel %vm1345, %v8422, 0
  %v8479 = vsel %vm1345, %v8423, 0
  %v8482 = vsel %vm1345, %v8424, 0
  %v8485 = vsel %vm1345, %v8425, 0
  %v8488 = vsel %vm1345, %v8426, 0
  %8490 = vmatpush.bf16.msra.mxu0 0
  %8491 = vmatpush.bf16.msra.mxu0 0
  %8492 = vmatpush.bf16.msra.mxu0 0
  %8493 = vmatpush.bf16.msra.mxu0 0
  %8494 = vmatpush.bf16.msra.mxu0 0
  %8495 = vmatpush.bf16.msra.mxu0 0
  %8496 = vmatpush.bf16.msra.mxu0 0
  %8497 = vmatpush.bf16.msra.mxu0 %v8431
  %8498 = vmatmul.bf16.gmra.mxu0 %v8428
  %v8499 = vpop.f32.mrf.mxu0
  %v8500 = vadd.f32 0.0, %v8499
  %v8501 = vpop.f32.mrf.mxu0
  %8502 = vdwg.mxu0
  %8503 = vmatpush.bf16.msra.mxu0 0
  %8504 = vmatpush.bf16.msra.mxu0 0
  %8505 = vmatpush.bf16.msra.mxu0 0
  %8506 = vmatpush.bf16.msra.mxu0 0
  %8507 = vmatpush.bf16.msra.mxu0 0
  %8508 = vmatpush.bf16.msra.mxu0 0
  %8509 = vmatpush.bf16.msra.mxu0 0
  %8510 = vmatpush.bf16.msra.mxu0 %v8434
  %8511 = vmatmul.bf16.gmra.mxu0 %v8428
  %v8512 = vpop.f32.mrf.mxu0
  %v8513 = vadd.f32 0.0, %v8512
  %v8514 = vpop.f32.mrf.mxu0
  %8515 = vdwg.mxu0
  %8516 = vmatpush.bf16.msra.mxu0 0
  %8517 = vmatpush.bf16.msra.mxu0 0
  %8518 = vmatpush.bf16.msra.mxu0 0
  %8519 = vmatpush.bf16.msra.mxu0 0
  %8520 = vmatpush.bf16.msra.mxu0 0
  %8521 = vmatpush.bf16.msra.mxu0 0
  %8522 = vmatpush.bf16.msra.mxu0 0
  %8523 = vmatpush.bf16.msra.mxu0 %v8437
  %8524 = vmatmul.bf16.gmra.mxu0 %v8428
  %v8525 = vpop.f32.mrf.mxu0
  %v8526 = vadd.f32 0.0, %v8525
  %v8527 = vpop.f32.mrf.mxu0
  %8528 = vdwg.mxu0
  %8529 = vmatpush.bf16.msra.mxu0 0
  %8530 = vmatpush.bf16.msra.mxu0 0
  %8531 = vmatpush.bf16.msra.mxu0 0
  %8532 = vmatpush.bf16.msra.mxu0 0
  %8533 = vmatpush.bf16.msra.mxu0 0
  %8534 = vmatpush.bf16.msra.mxu0 0
  %8535 = vmatpush.bf16.msra.mxu0 0
  %8536 = vmatpush.bf16.msra.mxu0 %v8440
  %8537 = vmatmul.bf16.gmra.mxu0 %v8428
  %v8538 = vpop.f32.mrf.mxu0
  %v8539 = vadd.f32 0.0, %v8538
  %v8540 = vpop.f32.mrf.mxu0
  %8541 = vdwg.mxu0
  %8542 = vmatpush.bf16.msra.mxu0 0
  %8543 = vmatpush.bf16.msra.mxu0 0
  %8544 = vmatpush.bf16.msra.mxu0 0
  %8545 = vmatpush.bf16.msra.mxu0 0
  %8546 = vmatpush.bf16.msra.mxu0 0
  %8547 = vmatpush.bf16.msra.mxu0 0
  %8548 = vmatpush.bf16.msra.mxu0 0
  %8549 = vmatpush.bf16.msra.mxu0 %v8443
  %8550 = vmatmul.bf16.gmra.mxu0 %v8428
  %v8551 = vpop.f32.mrf.mxu0
  %v8552 = vadd.f32 0.0, %v8551
  %v8553 = vpop.f32.mrf.mxu0
  %8554 = vdwg.mxu0
  %8555 = vmatpush.bf16.msra.mxu0 0
  %8556 = vmatpush.bf16.msra.mxu0 0
  %8557 = vmatpush.bf16.msra.mxu0 0
  %8558 = vmatpush.bf16.msra.mxu0 0
  %8559 = vmatpush.bf16.msra.mxu0 0
  %8560 = vmatpush.bf16.msra.mxu0 0
  %8561 = vmatpush.bf16.msra.mxu0 0
  %8562 = vmatpush.bf16.msra.mxu0 %v8446
  %8563 = vmatmul.bf16.gmra.mxu0 %v8428
  %v8564 = vpop.f32.mrf.mxu0
  %v8565 = vadd.f32 0.0, %v8564
  %v8566 = vpop.f32.mrf.mxu0
  %8567 = vdwg.mxu0
  %8568 = vmatpush.bf16.msra.mxu0 0
  %8569 = vmatpush.bf16.msra.mxu0 0
  %8570 = vmatpush.bf16.msra.mxu0 0
  %8571 = vmatpush.bf16.msra.mxu0 0
  %8572 = vmatpush.bf16.msra.mxu0 0
  %8573 = vmatpush.bf16.msra.mxu0 0
  %8574 = vmatpush.bf16.msra.mxu0 0
  %8575 = vmatpush.bf16.msra.mxu0 %v8449
  %8576 = vmatmul.bf16.gmra.mxu0 %v8428
  %v8577 = vpop.f32.mrf.mxu0
  %v8578 = vadd.f32 0.0, %v8577
  %v8579 = vpop.f32.mrf.mxu0
  %8580 = vdwg.mxu0
  %8581 = vmatpush.bf16.msra.mxu0 0
  %8582 = vmatpush.bf16.msra.mxu0 0
  %8583 = vmatpush.bf16.msra.mxu0 0
  %8584 = vmatpush.bf16.msra.mxu0 0
  %8585 = vmatpush.bf16.msra.mxu0 0
  %8586 = vmatpush.bf16.msra.mxu0 0
  %8587 = vmatpush.bf16.msra.mxu0 0
  %8588 = vmatpush.bf16.msra.mxu0 %v8452
  %8589 = vmatmul.bf16.gmra.mxu0 %v8428
  %v8590 = vpop.f32.mrf.mxu0
  %v8591 = vadd.f32 0.0, %v8590
  %v8592 = vpop.f32.mrf.mxu0
  %8593 = vdwg.mxu0
  %8594 = vmatpush.bf16.msra.mxu0 0
  %8595 = vmatpush.bf16.msra.mxu0 0
  %8596 = vmatpush.bf16.msra.mxu0 0
  %8597 = vmatpush.bf16.msra.mxu0 0
  %8598 = vmatpush.bf16.msra.mxu0 0
  %8599 = vmatpush.bf16.msra.mxu0 0
  %8600 = vmatpush.bf16.msra.mxu0 0
  %8601 = vmatpush.bf16.msra.mxu0 %v8455
  %8602 = vmatmul.bf16.gmra.mxu0 %v8428
  %v8603 = vpop.f32.mrf.mxu0
  %v8604 = vadd.f32 0.0, %v8603
  %v8605 = vpop.f32.mrf.mxu0
  %8606 = vdwg.mxu0
  %8607 = vmatpush.bf16.msra.mxu0 0
  %8608 = vmatpush.bf16.msra.mxu0 0
  %8609 = vmatpush.bf16.msra.mxu0 0
  %8610 = vmatpush.bf16.msra.mxu0 0
  %8611 = vmatpush.bf16.msra.mxu0 0
  %8612 = vmatpush.bf16.msra.mxu0 0
  %8613 = vmatpush.bf16.msra.mxu0 0
  %8614 = vmatpush.bf16.msra.mxu0 %v8458
  %8615 = vmatmul.bf16.gmra.mxu0 %v8428
  %v8616 = vpop.f32.mrf.mxu0
  %v8617 = vadd.f32 0.0, %v8616
  %v8618 = vpop.f32.mrf.mxu0
  %8619 = vdwg.mxu0
  %8620 = vmatpush.bf16.msra.mxu0 0
  %8621 = vmatpush.bf16.msra.mxu0 0
  %8622 = vmatpush.bf16.msra.mxu0 0
  %8623 = vmatpush.bf16.msra.mxu0 0
  %8624 = vmatpush.bf16.msra.mxu0 0
  %8625 = vmatpush.bf16.msra.mxu0 0
  %8626 = vmatpush.bf16.msra.mxu0 0
  %8627 = vmatpush.bf16.msra.mxu0 %v8461
  %8628 = vmatmul.bf16.gmra.mxu0 %v8428
  %v8629 = vpop.f32.mrf.mxu0
  %v8630 = vadd.f32 0.0, %v8629
  %v8631 = vpop.f32.mrf.mxu0
  %8632 = vdwg.mxu0
  %8633 = vmatpush.bf16.msra.mxu0 0
  %8634 = vmatpush.bf16.msra.mxu0 0
  %8635 = vmatpush.bf16.msra.mxu0 0
  %8636 = vmatpush.bf16.msra.mxu0 0
  %8637 = vmatpush.bf16.msra.mxu0 0
  %8638 = vmatpush.bf16.msra.mxu0 0
  %8639 = vmatpush.bf16.msra.mxu0 0
  %8640 = vmatpush.bf16.msra.mxu0 %v8464
  %8641 = vmatmul.bf16.gmra.mxu0 %v8428
  %v8642 = vpop.f32.mrf.mxu0
  %v8643 = vadd.f32 0.0, %v8642
  %v8644 = vpop.f32.mrf.mxu0
  %8645 = vdwg.mxu0
  %8646 = vmatpush.bf16.msra.mxu0 0
  %8647 = vmatpush.bf16.msra.mxu0 0
  %8648 = vmatpush.bf16.msra.mxu0 0
  %8649 = vmatpush.bf16.msra.mxu0 0
  %8650 = vmatpush.bf16.msra.mxu0 0
  %8651 = vmatpush.bf16.msra.mxu0 0
  %8652 = vmatpush.bf16.msra.mxu0 0
  %8653 = vmatpush.bf16.msra.mxu0 %v8467
  %8654 = vmatmul.bf16.gmra.mxu0 %v8428
  %v8655 = vpop.f32.mrf.mxu0
  %v8656 = vadd.f32 0.0, %v8655
  %v8657 = vpop.f32.mrf.mxu0
  %8658 = vdwg.mxu0
  %8659 = vmatpush.bf16.msra.mxu0 0
  %8660 = vmatpush.bf16.msra.mxu0 0
  %8661 = vmatpush.bf16.msra.mxu0 0
  %8662 = vmatpush.bf16.msra.mxu0 0
  %8663 = vmatpush.bf16.msra.mxu0 0
  %8664 = vmatpush.bf16.msra.mxu0 0
  %8665 = vmatpush.bf16.msra.mxu0 0
  %8666 = vmatpush.bf16.msra.mxu0 %v8470
  %8667 = vmatmul.bf16.gmra.mxu0 %v8428
  %v8668 = vpop.f32.mrf.mxu0
  %v8669 = vadd.f32 0.0, %v8668
  %v8670 = vpop.f32.mrf.mxu0
  %8671 = vdwg.mxu0
  %8672 = vmatpush.bf16.msra.mxu0 0
  %8673 = vmatpush.bf16.msra.mxu0 0
  %8674 = vmatpush.bf16.msra.mxu0 0
  %8675 = vmatpush.bf16.msra.mxu0 0
  %8676 = vmatpush.bf16.msra.mxu0 0
  %8677 = vmatpush.bf16.msra.mxu0 0
  %8678 = vmatpush.bf16.msra.mxu0 0
  %8679 = vmatpush.bf16.msra.mxu0 %v8473
  %8680 = vmatmul.bf16.gmra.mxu0 %v8428
  %v8681 = vpop.f32.mrf.mxu0
  %v8682 = vadd.f32 0.0, %v8681
  %v8683 = vpop.f32.mrf.mxu0
  %8684 = vdwg.mxu0
  %8685 = vmatpush.bf16.msra.mxu0 0
  %8686 = vmatpush.bf16.msra.mxu0 0
  %8687 = vmatpush.bf16.msra.mxu0 0
  %8688 = vmatpush.bf16.msra.mxu0 0
  %8689 = vmatpush.bf16.msra.mxu0 0
  %8690 = vmatpush.bf16.msra.mxu0 0
  %8691 = vmatpush.bf16.msra.mxu0 0
  %8692 = vmatpush.bf16.msra.mxu0 %v8476
  %8693 = vmatmul.bf16.gmra.mxu0 %v8428
  %v8694 = vpop.f32.mrf.mxu0
  %v8695 = vadd.f32 0.0, %v8694
  %v8696 = vpop.f32.mrf.mxu0
  %8697 = vdwg.mxu0
  %8698 = vmatpush.bf16.msra.mxu0 0
  %8699 = vmatpush.bf16.msra.mxu0 0
  %8700 = vmatpush.bf16.msra.mxu0 0
  %8701 = vmatpush.bf16.msra.mxu0 0
  %8702 = vmatpush.bf16.msra.mxu0 0
  %8703 = vmatpush.bf16.msra.mxu0 0
  %8704 = vmatpush.bf16.msra.mxu0 0
  %8705 = vmatpush.bf16.msra.mxu0 %v8479
  %8706 = vmatmul.bf16.gmra.mxu0 %v8428
  %v8707 = vpop.f32.mrf.mxu0
  %v8708 = vadd.f32 0.0, %v8707
  %v8709 = vpop.f32.mrf.mxu0
  %8710 = vdwg.mxu0
  %8711 = vmatpush.bf16.msra.mxu0 0
  %8712 = vmatpush.bf16.msra.mxu0 0
  %8713 = vmatpush.bf16.msra.mxu0 0
  %8714 = vmatpush.bf16.msra.mxu0 0
  %8715 = vmatpush.bf16.msra.mxu0 0
  %8716 = vmatpush.bf16.msra.mxu0 0
  %8717 = vmatpush.bf16.msra.mxu0 0
  %8718 = vmatpush.bf16.msra.mxu0 %v8482
  %8719 = vmatmul.bf16.gmra.mxu0 %v8428
  %v8720 = vpop.f32.mrf.mxu0
  %v8721 = vadd.f32 0.0, %v8720
  %v8722 = vpop.f32.mrf.mxu0
  %8723 = vdwg.mxu0
  %8724 = vmatpush.bf16.msra.mxu0 0
  %8725 = vmatpush.bf16.msra.mxu0 0
  %8726 = vmatpush.bf16.msra.mxu0 0
  %8727 = vmatpush.bf16.msra.mxu0 0
  %8728 = vmatpush.bf16.msra.mxu0 0
  %8729 = vmatpush.bf16.msra.mxu0 0
  %8730 = vmatpush.bf16.msra.mxu0 0
  %8731 = vmatpush.bf16.msra.mxu0 %v8485
  %8732 = vmatmul.bf16.gmra.mxu0 %v8428
  %v8733 = vpop.f32.mrf.mxu0
  %v8734 = vadd.f32 0.0, %v8733
  %v8735 = vpop.f32.mrf.mxu0
  %8736 = vdwg.mxu0
  %8737 = vmatpush.bf16.msra.mxu0 0
  %8738 = vmatpush.bf16.msra.mxu0 0
  %8739 = vmatpush.bf16.msra.mxu0 0
  %8740 = vmatpush.bf16.msra.mxu0 0
  %8741 = vmatpush.bf16.msra.mxu0 0
  %8742 = vmatpush.bf16.msra.mxu0 0
  %8743 = vmatpush.bf16.msra.mxu0 0
  %8744 = vmatpush.bf16.msra.mxu0 %v8488
  %8745 = vmatmul.bf16.gmra.mxu0 %v8428
  %v8746 = vpop.f32.mrf.mxu0
  %v8747 = vadd.f32 0.0, %v8746
  %v8748 = vpop.f32.mrf.mxu0
  %8749 = vdwg.mxu0
  %v8750 = vadd.f32 %v8343, %v8500
  %v8751 = vadd.f32 %v8344, %v8513
  %v8752 = vadd.f32 %v8345, %v8526
  %v8753 = vadd.f32 %v8346, %v8539
  %v8754 = vadd.f32 %v8347, %v8552
  %v8755 = vadd.f32 %v8348, %v8565
  %v8756 = vadd.f32 %v8349, %v8578
  %v8757 = vadd.f32 %v8350, %v8591
  %v8758 = vadd.f32 %v8351, %v8604
  %v8759 = vadd.f32 %v8352, %v8617
  %v8760 = vadd.f32 %v8353, %v8630
  %v8761 = vadd.f32 %v8354, %v8643
  %v8762 = vadd.f32 %v8355, %v8656
  %v8763 = vadd.f32 %v8356, %v8669
  %v8764 = vadd.f32 %v8357, %v8682
  %v8765 = vadd.f32 %v8358, %v8695
  %v8766 = vadd.f32 %v8359, %v8708
  %v8767 = vadd.f32 %v8360, %v8721
  %v8768 = vadd.f32 %v8361, %v8734
  %v8769 = vadd.f32 %v8362, %v8747
  %v8770 = vld [vmem:[%s6] sm:$0xff]
  %8772 = vset.pattern.permute.xlu0 0
  %8773 = vperm.xlu0 %8772, %v8770
  %v8774 = vpop.permute.xlu0 %8773
  %v8776 = vmul.f32 %v8750, %v8774
  %v8777 = vmul.f32 %v8751, %v8774
  %v8778 = vmul.f32 %v8752, %v8774
  %v8779 = vmul.f32 %v8753, %v8774
  %v8780 = vmul.f32 %v8754, %v8774
  %v8781 = vmul.f32 %v8755, %v8774
  %v8782 = vmul.f32 %v8756, %v8774
  %v8783 = vmul.f32 %v8757, %v8774
  %v8784 = vmul.f32 %v8758, %v8774
  %v8785 = vmul.f32 %v8759, %v8774
  %v8786 = vmul.f32 %v8760, %v8774
  %v8787 = vmul.f32 %v8761, %v8774
  %v8788 = vmul.f32 %v8762, %v8774
  %v8789 = vmul.f32 %v8763, %v8774
  %v8790 = vmul.f32 %v8764, %v8774
  %v8791 = vmul.f32 %v8765, %v8774
  %v8792 = vmul.f32 %v8766, %v8774
  %v8793 = vmul.f32 %v8767, %v8774
  %v8794 = vmul.f32 %v8768, %v8774
  %v8795 = vmul.f32 %v8769, %v8774
  %v8796 = vld [vmem:[%s7] sm:$0xff]
  %8798 = vset.pattern.permute.xlu0 0
  %8799 = vperm.xlu0 %8798, %v8796
  %v8800 = vpop.permute.xlu0 %8799
  %v8802 = vadd.f32 %v8776, %v8800
  %v8803 = vadd.f32 %v8777, %v8800
  %v8804 = vadd.f32 %v8778, %v8800
  %v8805 = vadd.f32 %v8779, %v8800
  %v8806 = vadd.f32 %v8780, %v8800
  %v8807 = vadd.f32 %v8781, %v8800
  %v8808 = vadd.f32 %v8782, %v8800
  %v8809 = vadd.f32 %v8783, %v8800
  %v8810 = vadd.f32 %v8784, %v8800
  %v8811 = vadd.f32 %v8785, %v8800
  %v8812 = vadd.f32 %v8786, %v8800
  %v8813 = vadd.f32 %v8787, %v8800
  %v8814 = vadd.f32 %v8788, %v8800
  %v8815 = vadd.f32 %v8789, %v8800
  %v8816 = vadd.f32 %v8790, %v8800
  %v8817 = vadd.f32 %v8791, %v8800
  %v8818 = vadd.f32 %v8792, %v8800
  %v8819 = vadd.f32 %v8793, %v8800
  %v8820 = vadd.f32 %v8794, %v8800
  %v8821 = vadd.f32 %v8795, %v8800
  %8822 = vst [vmem:[%s8] sm:$0xff] %v8802
  %8823 = vst [vmem:[%s8 + $0x8] sm:$0xff] %v8803
  %8824 = vst [vmem:[%s8 + $0x10] sm:$0xff] %v8804
  %8825 = vst [vmem:[%s8 + $0x18] sm:$0xff] %v8805
  %8826 = vst [vmem:[%s8 + $0x20] sm:$0xff] %v8806
  %8827 = vst [vmem:[%s8 + $0x28] sm:$0xff] %v8807
  %8828 = vst [vmem:[%s8 + $0x30] sm:$0xff] %v8808
  %8829 = vst [vmem:[%s8 + $0x38] sm:$0xff] %v8809
  %8830 = vst [vmem:[%s8 + $0x40] sm:$0xff] %v8810
  %8831 = vst [vmem:[%s8 + $0x48] sm:$0xff] %v8811
  %8832 = vst [vmem:[%s8 + $0x50] sm:$0xff] %v8812
  %8833 = vst [vmem:[%s8 + $0x58] sm:$0xff] %v8813
  %8834 = vst [vmem:[%s8 + $0x60] sm:$0xff] %v8814
  %8835 = vst [vmem:[%s8 + $0x68] sm:$0xff] %v8815
  %8836 = vst [vmem:[%s8 + $0x70] sm:$0xff] %v8816
  %8837 = vst [vmem:[%s8 + $0x78] sm:$0xff] %v8817
  %8838 = vst [vmem:[%s8 + $0x80] sm:$0xff] %v8818
  %8839 = vst [vmem:[%s8 + $0x88] sm:$0xff] %v8819
  %8840 = vst [vmem:[%s8 + $0x90] sm:$0xff] %v8820
  %8841 = vst [vmem:[%s8 + $0x98] sm:$0xff] %v8821
  // Predicated region
  $region34: #{up_forward.1} parent=0 // pred_check
    _
  $region35: #{up_forward.1} parent=0 // pred_check_branch
    %8843 = sbr.rel (0) target = $region37
  $region36: #{up_forward.1} parent=0 // pred_region
    _
  $region37: #{up_forward.1} parent=0 // pred_fallthru
    _
  // Predicated region
  $region38: #{up_forward.1} parent=0 // pred_check
    _
  $region39: #{up_forward.1} parent=0 // pred_check_branch
    %8845 = sbr.rel (0) target = $region41
  $region40: #{up_forward.1} parent=0 // pred_region
    _
  $region41: #{up_forward.1} parent=0 // pred_fallthru
    _

</llo_original>
